<compile_context>
chip_gen: v6e
topology: v6e:2x2x1
jax: 0.10.0
libtpu: 0.0.40
codegen_flags: <defaults>
</compile_context>

<pallas_src>
import functools

import jax
import jax.numpy as jnp
from jax import lax
from jax.experimental import pallas as pl
from jax.experimental.pallas import tpu as pltpu

LN_EPS = 1e-12     # tutorial-style LayerNorm eps (PyTorch nn.LayerNorm default would be 1e-5)
MASK_NEG = -1e9    # masked_fill value for the causal mask

# Kernel weight-argument order (keys produced by prepare_params()).
PREP_ORDER = [
    "wq1", "bq1", "wkv1", "bkv1", "wo1r", "bo1", "g1", "be1",
    "wq2", "bq2", "wkv2", "bkv2", "wo2r", "bo2", "g2", "be2",
    "wf1", "bf1", "wf2", "bf2", "g3", "be3",
]


# ----------------------------- one-time parameter prep -----------------------------
def prepare_params(params, n_heads):
    """bf16 casts for MXU weights, wk|wv fusion, wo head-reshape.

    Call once and reuse: keeps the f32->bf16 HBM round trips and concats out of the
    per-call path.
    """
    bf16 = jnp.bfloat16
    D = params["wq1"].shape[0]
    dh = D // n_heads
    prep = {}
    for t in ("1", "2"):
        prep[f"wq{t}"] = params[f"wq{t}"].astype(bf16)
        prep[f"bq{t}"] = params[f"bq{t}"]
        prep[f"wkv{t}"] = jnp.concatenate(
            [params[f"wk{t}"], params[f"wv{t}"]], axis=1).astype(bf16)            # (D, 2D)
        prep[f"bkv{t}"] = jnp.concatenate(
            [params[f"bk{t}"], params[f"bv{t}"]], axis=1)                         # (1, 2D)
        prep[f"wo{t}r"] = params[f"wo{t}"].reshape(n_heads, dh, -1).astype(bf16)  # (H, dh, D)
        prep[f"bo{t}"] = params[f"bo{t}"]
        prep[f"g{t}"] = params[f"g{t}"]
        prep[f"be{t}"] = params[f"be{t}"]
    prep["wf1"] = params["wf1"].astype(bf16)
    prep["bf1"] = params["bf1"]
    prep["wf2"] = params["wf2"].astype(bf16)
    prep["bf2"] = params["bf2"]
    prep["g3"] = params["g3"]
    prep["be3"] = params["be3"]
    return prep


# ----------------------------- in-kernel helpers -----------------------------
def _heads_first(t):
    """(S, H, dh) -> (H, S, dh), lane-layout aware."""
    if hasattr(pltpu, "einshape"):
        return pltpu.einshape("shd->hsd", t)
    return jnp.swapaxes(t, 0, 1)


def _layer_norm(t, gamma, beta):
    # two-pass (centered) variance: no catastrophic cancellation, matches the reference
    mu = jnp.mean(t, axis=-1, keepdims=True)
    c = t - mu
    var = jnp.mean(c * c, axis=-1, keepdims=True)
    return c * lax.rsqrt(var + LN_EPS) * gamma + beta


def _project_kv(src_bf16, wkv, bkv, k_ref, v_ref, n_heads):
    """Fused K|V projection of one K/V source -> heads-first bf16 VMEM scratch."""
    S, D = src_bf16.shape
    dh = D // n_heads
    kv = jnp.dot(src_bf16, wkv, preferred_element_type=jnp.float32) + bkv    # (S, 2D) f32
    k = kv[:, :D].reshape(S, n_heads, dh)
    v = kv[:, D:].reshape(S, n_heads, dh)
    k_ref[...] = _heads_first(k).astype(jnp.bfloat16)                        # (H, S, dh)
    v_ref[...] = _heads_first(v).astype(jnp.bfloat16)


def _attend(q_in, k_ref, v_ref, wq, bq, wo_r, bo, *, n_heads, causal, q_offset):
    """Multi-head attention of (Sq, D) queries against cached heads-first bf16 K/V scratch."""
    Sq, D = q_in.shape
    dh = D // n_heads
    Sk = k_ref.shape[1]
    scale = 1.0 / float(dh) ** 0.5

    # q projection (bf16 x bf16 -> f32 accumulate); fold 1/sqrt(dh) into q (Sq*D mults)
    q = (jnp.dot(q_in.astype(jnp.bfloat16), wq,
                 preferred_element_type=jnp.float32) + bq) * scale
    qh = _heads_first(q.reshape(Sq, n_heads, dh)).astype(jnp.bfloat16)       # (H, Sq, dh)

    # scores: ONE batched matmul over heads against the cached bf16 K
    s = jnp.einsum("hqd,hkd->hqk", qh, k_ref[...],
                   preferred_element_type=jnp.float32)                       # (H, Sq, Sk) f32

    if causal:
        row = lax.broadcasted_iota(jnp.int32, (Sq, Sk), 0) + q_offset        # 2-D mask
        col = lax.broadcasted_iota(jnp.int32, (Sq, Sk), 1)
        s = jnp.where((row >= col)[None, :, :], s, MASK_NEG)                 # bcast over heads

    # numerically stable softmax in f32; normalize the (H,Sq,dh) OUTPUT, not the probs
    s = s - jnp.max(s, axis=-1, keepdims=True)
    p = jnp.exp(s)
    denom = jnp.sum(p, axis=-1, keepdims=True)                               # (H, Sq, 1)
    o = jnp.einsum("hqk,hkd->hqd", p.astype(jnp.bfloat16), v_ref[...],
                   preferred_element_type=jnp.float32)                       # (H, Sq, dh)
    o = o * pl.reciprocal(denom, approx=True)

    # heads-merge + output projection fused: per-head batched matmul, sum over heads
    oh = jnp.einsum("hqd,hde->hqe", o.astype(jnp.bfloat16), wo_r,
                    preferred_element_type=jnp.float32)                      # (H, Sq, D)
    return jnp.sum(oh, axis=0) + bo                                          # (Sq, D) f32


# --------------------------------- the kernel ---------------------------------
def _decoder_layer_kernel(
        enc_ref, xkv_ref, xq_ref,
        wq1_ref, bq1_ref, wkv1_ref, bkv1_ref, wo1_ref, bo1_ref, g1_ref, be1_ref,
        wq2_ref, bq2_ref, wkv2_ref, bkv2_ref, wo2_ref, bo2_ref, g2_ref, be2_ref,
        wf1_ref, bf1_ref, wf2_ref, bf2_ref, g3_ref, be3_ref,
        out_ref,
        k1_ref, v1_ref, k2_ref, v2_ref,
        *, n_heads, tq):
    qi = pl.program_id(1)
    q0 = pl.multiple_of(qi * tq, tq)             # global row offset of this query tile

    # ---- per-batch K/V caches: computed once, at the first query tile of each batch ----
    @pl.when(qi == 0)
    def _():
        _project_kv(xkv_ref[0], wkv1_ref[...], bkv1_ref[0], k1_ref, v1_ref, n_heads)
        _project_kv(enc_ref[0], wkv2_ref[...], bkv2_ref[0], k2_ref, v2_ref, n_heads)

    xq = xq_ref[0]                               # (TQ, D) f32 query / residual rows

    # --- masked self-attention + residual + LayerNorm1 (dropout = identity in eval) ---
    attn = _attend(xq, k1_ref, v1_ref, wq1_ref[...], bq1_ref[0], wo1_ref[...], bo1_ref[0],
                   n_heads=n_heads, causal=True, q_offset=q0)
    x1 = _layer_norm(xq + attn, g1_ref[0], be1_ref[0])

    # --- encoder-decoder attention + residual + LayerNorm2 ---
    attn2 = _attend(x1, k2_ref, v2_ref, wq2_ref[...], bq2_ref[0], wo2_ref[...], bo2_ref[0],
                    n_heads=n_heads, causal=False, q_offset=0)
    x2 = _layer_norm(x1 + attn2, g2_ref[0], be2_ref[0])

    # --- position-wise feed-forward + residual + LayerNorm3 ---
    h = jnp.maximum(jnp.dot(x2.astype(jnp.bfloat16), wf1_ref[...],
                            preferred_element_type=jnp.float32) + bf1_ref[0], 0.0)
    ff = jnp.dot(h.astype(jnp.bfloat16), wf2_ref[...],
                 preferred_element_type=jnp.float32) + bf2_ref[0]
    x3 = _layer_norm(x2 + ff, g3_ref[0], be3_ref[0])

    out_ref[0] = x3.astype(out_ref.dtype)


# --------------------- feature probe for single-buffered weights ---------------------
@functools.lru_cache(maxsize=None)
def _single_buffer_weights_supported():
    """True iff pl.Buffered(1) on a top-level BlockSpec compiles & runs on this jax/TPU.

    The probe is a tiny standalone kernel, so this `except` cannot hide errors from the
    real decoder kernel (addresses the silent-fallback concern).
    """
    if not hasattr(pl, "Buffered"):
        return False

    def probe_kernel(x_ref, o_ref):
        o_ref[...] = x_ref[...]

    try:
        probe = pl.pallas_call(
            probe_kernel,
            out_shape=jax.ShapeDtypeStruct((8, 128), jnp.float32),
            grid=(1,),
            in_specs=[pl.BlockSpec((8, 128), lambda i: (0, 0),
                                   pipeline_mode=pl.Buffered(1))],
            out_specs=pl.BlockSpec((8, 128), lambda i: (0, 0)),
        )
        jax.block_until_ready(probe(jnp.zeros((8, 128), jnp.float32)))
        return True
    except Exception:   # narrow in scope: only this probe
        return False


# --------------------------------- the wrapper ---------------------------------
def decoder_layer(enc, x, prep, n_heads, tq=None):
    """Fused decoder layer. `prep` must come from prepare_params() (bf16 / fused weights)."""
    B, S, D = x.shape
    S_enc = enc.shape[1]
    H = n_heads
    dh = D // H
    F = prep["wf1"].shape[1]
    assert D % H == 0 and D % 128 == 0
    if tq is None:
        tq = min(S, 256)                 # big query tiles: fill the 128/256-row MXU
    assert S % tq == 0 and tq % 8 == 0
    nq = S // tq

    plist = [prep[k] for k in PREP_ORDER]

    # enc / the K/V-source view of x are only ever bf16 MXU operands -> DMA them as bf16;
    # only the (1, TQ, D) residual/query tile of x stays f32.
    enc_bf = enc.astype(jnp.bfloat16)
    xkv_bf = x.astype(jnp.bfloat16)

    kernel = functools.partial(_decoder_layer_kernel, n_heads=n_heads, tq=tq)

    # advisory cost estimate so XLA can schedule surrounding ops around the long fused call
    macs = (6 * S * D * D + 2 * S_enc * D * D
            + 2 * S * S * D + 2 * S * S_enc * D + 2 * S * D * F)
    cost = pl.CostEstimate(
        flops=int(2 * B * macs),
        transcendentals=int(B * H * (S * S + S * S_enc)),
        bytes_accessed=int(enc_bf.size * 2 + xkv_bf.size * 2 + x.size * 4 + B * S * D * 4
                           + sum(int(p.size) * p.dtype.itemsize for p in plist)),
    )

    single_buffer = _single_buffer_weights_supported()

    def wspec(shape):
        zeros = (0,) * len(shape)
        idx = lambda b, q, _z=zeros: _z          # constant block index: weights stay resident
        if single_buffer:
            # constant index map => double buffering would be pure VMEM waste (matters on v7x)
            return pl.BlockSpec(shape, idx, pipeline_mode=pl.Buffered(1))
        return pl.BlockSpec(shape, idx)

    in_specs = [
        pl.BlockSpec((1, S_enc, D), lambda b, q: (b, 0, 0)),   # encoder output (bf16, full)
        pl.BlockSpec((1, S, D), lambda b, q: (b, 0, 0)),       # decoder K/V source (bf16, full)
        pl.BlockSpec((1, tq, D), lambda b, q: (b, q, 0)),      # decoder query/residual (f32 tile)
    ]
    in_specs += [wspec(p.shape) for p in plist]

    call = pl.pallas_call(
        kernel,
        out_shape=jax.ShapeDtypeStruct((B, S, D), x.dtype),
        grid=(B, nq),
        in_specs=in_specs,
        out_specs=pl.BlockSpec((1, tq, D), lambda b, q: (b, q, 0)),
        scratch_shapes=[
            pltpu.VMEM((H, S, dh), jnp.bfloat16),       # cached self-attn K (heads-first)
            pltpu.VMEM((H, S, dh), jnp.bfloat16),       # cached self-attn V
            pltpu.VMEM((H, S_enc, dh), jnp.bfloat16),   # cached enc-dec K
            pltpu.VMEM((H, S_enc, dh), jnp.bfloat16),   # cached enc-dec V
        ],
        compiler_params=pltpu.CompilerParams(
            # batch axis parallel (megacore); q axis sequential so the per-batch K/V scratch
            # init at q==0 is well defined per core.
            dimension_semantics=("parallel", "arbitrary"),
            vmem_limit_bytes=48 * 1024 * 1024,   # <= ~48 MiB: safe on v7x (64 MiB physical)
        ),
        cost_estimate=cost,
    )
    return call(enc_bf, xkv_bf, x, *plist)


# ------------------- pure-JAX reference (mirrors bf16 MXU casts) -------------------
def _ref_forward(enc, x, params, n_heads):
    bf16 = jnp.bfloat16

    def mm(a, w):
        return jnp.dot(a.astype(bf16), w.astype(bf16), preferred_element_type=jnp.float32)

    def ln(t, g, b):
        mu = jnp.mean(t, axis=-1, keepdims=True)
        var = jnp.mean((t - mu) ** 2, axis=-1, keepdims=True)
        return (t - mu) / jnp.sqrt(var + LN_EPS) * g + b

    def mha(q_in, kv, wq, bq, wk, bk, wv, bv, wo, bo, causal):
        Sq, D = q_in.shape
        Sk = kv.shape[0]
        H, dh = n_heads, D // n_heads
        scale = 1.0 / float(dh) ** 0.5
        q = (mm(q_in, wq) + bq) * scale
        k = mm(kv, wk) + bk
        v = mm(kv, wv) + bv
        qh = jnp.transpose(q.reshape(Sq, H, dh), (1, 0, 2))
        kh = jnp.transpose(k.reshape(Sk, H, dh), (1, 0, 2))
        vh = jnp.transpose(v.reshape(Sk, H, dh), (1, 0, 2))
        s = jnp.einsum("hqd,hkd->hqk", qh.astype(bf16), kh.astype(bf16),
                       preferred_element_type=jnp.float32)
        if causal:
            keep = jnp.tril(jnp.ones((Sq, Sk), jnp.int32)) > 0
            s = jnp.where(keep[None], s, MASK_NEG)
        p = jax.nn.softmax(s, axis=-1)
        o = jnp.einsum("hqk,hkd->hqd", p.astype(bf16), vh.astype(bf16),
                       preferred_element_type=jnp.float32)
        o = jnp.transpose(o, (1, 0, 2)).reshape(Sq, D)
        return mm(o, wo) + bo

    def one(enc_b, x_b):
        a = mha(x_b, x_b, params["wq1"], params["bq1"][0], params["wk1"], params["bk1"][0],
                params["wv1"], params["bv1"][0], params["wo1"], params["bo1"][0], True)
        x1 = ln(x_b + a, params["g1"][0], params["be1"][0])
        a2 = mha(x1, enc_b, params["wq2"], params["bq2"][0], params["wk2"], params["bk2"][0],
                 params["wv2"], params["bv2"][0], params["wo2"], params["bo2"][0], False)
        x2 = ln(x1 + a2, params["g2"][0], params["be2"][0])
        h = jnp.maximum(mm(x2, params["wf1"]) + params["bf1"][0], 0.0)
        ff = mm(h, params["wf2"]) + params["bf2"][0]
        return ln(x2 + ff, params["g3"][0], params["be3"][0])

    return jax.vmap(one)(enc, x)


def _init_params(key, d_model, ffn_hidden):
    ks = jax.random.split(key, 10)
    s = 0.05
    p = {}
    p["wq1"] = s * jax.random.normal(ks[0], (d_model, d_model), jnp.float32)
    p["wk1"] = s * jax.random.normal(ks[1], (d_model, d_model), jnp.float32)
    p["wv1"] = s * jax.random.normal(ks[2], (d_model, d_model), jnp.float32)
    p["wo1"] = s * jax.random.normal(ks[3], (d_model, d_model), jnp.float32)
    p["wq2"] = s * jax.random.normal(ks[4], (d_model, d_model), jnp.float32)
    p["wk2"] = s * jax.random.normal(ks[5], (d_model, d_model), jnp.float32)
    p["wv2"] = s * jax.random.normal(ks[6], (d_model, d_model), jnp.float32)
    p["wo2"] = s * jax.random.normal(ks[7], (d_model, d_model), jnp.float32)
    p["wf1"] = s * jax.random.normal(ks[8], (d_model, ffn_hidden), jnp.float32)
    p["wf2"] = s * jax.random.normal(ks[9], (ffn_hidden, d_model), jnp.float32)
    for n in ("bq1", "bk1", "bv1", "bo1", "be1", "bq2", "bk2", "bv2", "bo2", "be2",
              "bf2", "be3"):
        p[n] = jnp.zeros((1, d_model), jnp.float32)
    p["bf1"] = jnp.zeros((1, ffn_hidden), jnp.float32)
    p["g1"] = jnp.ones((1, d_model), jnp.float32)
    p["g2"] = jnp.ones((1, d_model), jnp.float32)
    p["g3"] = jnp.ones((1, d_model), jnp.float32)
    return p


if __name__ == "__main__":
    B, S_DEC, S_ENC = 2, 32, 32
    D_MODEL, FFN_HIDDEN, N_HEADS = 256, 1024, 2   # dh = 128 -> MXU-aligned head dim
    TQ = 16   # 2 query tiles/batch: exercises the cached-K/V multi-tile + causal-offset path
              # (for production S use TQ = 128 on v5e / 256 on v6e & v7x)

    key = jax.random.PRNGKey(0)
    k_enc, k_x, k_p = jax.random.split(key, 3)
    enc = jax.random.normal(k_enc, (B, S_ENC, D_MODEL), jnp.float32)
    x = jax.random.normal(k_x, (B, S_DEC, D_MODEL), jnp.float32)
    params = _init_params(k_p, D_MODEL, FFN_HIDDEN)
    prep = prepare_params(params, N_HEADS)        # one-time bf16 cast / fusion of weights

    out = decoder_layer(enc, x, prep, N_HEADS, tq=TQ)
    out = jax.block_until_ready(out)

    ref = jax.block_until_ready(_ref_forward(enc, x, params, N_HEADS))
    assert out.shape == (B, S_DEC, D_MODEL)
    max_err = float(jnp.max(jnp.abs(out - ref)))
    assert jnp.allclose(out, ref, atol=2e-2, rtol=2e-2), f"mismatch vs reference, max_err={max_err}"
    print("KERNEL_OK")
</pallas_src>

<mosaic_0001>
module attributes {stable_mosaic.version = 11 : i64} {
  func.func @probe_kernel(%arg0: i32, %arg1: memref<8x128xf32, #tpu.memory_space<vmem>>, %arg2: memref<8x128xf32, #tpu.memory_space<vmem>>) attributes {dimension_semantics = [#tpu.dimension_semantics<arbitrary>], iteration_bounds = array<i64: 1>, scalar_prefetch = 0 : i64, scratch_operands = 0 : i64, tpu.core_type = #tpu.core_type<tc>, window_params = [{pipeline_mode = #tpu.pipeline_mode<synchronous>, transform_indices = @transform_0, window_bounds = array<i64: 8, 128>}, {pipeline_mode = #tpu.pipeline_mode<synchronous>, transform_indices = @transform_1, window_bounds = array<i64: 8, 128>}]} {
    %c0 = arith.constant 0 : index
    %c0_0 = arith.constant 0 : index
    %0 = vector.load %arg1[%c0, %c0_0] : memref<8x128xf32, #tpu.memory_space<vmem>>, vector<8x128xf32>
    %c0_1 = arith.constant 0 : index
    %c0_2 = arith.constant 0 : index
    %1 = vector.load %arg2[%c0_1, %c0_2] : memref<8x128xf32, #tpu.memory_space<vmem>>, vector<8x128xf32>
    tpu.vector_store %arg2[%c0_1, %c0_2], %0 {strides = array<i32>} : memref<8x128xf32, #tpu.memory_space<vmem>>, vector<8x128xf32>,
    return
  }
  func.func @transform_0(%arg0: i32) -> (i32, i32) {
    %c0_i32 = arith.constant 0 : i32
    %c0_i32_0 = arith.constant 0 : i32
    %c0_i32_1 = arith.constant 0 : i32
    return %c0_i32, %c0_i32_0 : i32, i32
  }
  func.func @transform_1(%arg0: i32) -> (i32, i32) {
    %c0_i32 = arith.constant 0 : i32
    %c0_i32_0 = arith.constant 0 : i32
    %c0_i32_1 = arith.constant 0 : i32
    return %c0_i32, %c0_i32_0 : i32, i32
  }
}

module attributes {stable_mosaic.version = 11 : i64} {
  func.func @_decoder_layer_kernel(%arg0: i32, %arg1: i32, %arg2: memref<1x32x256xbf16, #tpu.memory_space<vmem>>, %arg3: memref<1x32x256xbf16, #tpu.memory_space<vmem>>, %arg4: memref<1x16x256xf32, #tpu.memory_space<vmem>>, %arg5: memref<256x256xbf16, #tpu.memory_space<vmem>>, %arg6: memref<1x256xf32, #tpu.memory_space<vmem>>, %arg7: memref<256x512xbf16, #tpu.memory_space<vmem>>, %arg8: memref<1x512xf32, #tpu.memory_space<vmem>>, %arg9: memref<2x128x256xbf16, #tpu.memory_space<vmem>>, %arg10: memref<1x256xf32, #tpu.memory_space<vmem>>, %arg11: memref<1x256xf32, #tpu.memory_space<vmem>>, %arg12: memref<1x256xf32, #tpu.memory_space<vmem>>, %arg13: memref<256x256xbf16, #tpu.memory_space<vmem>>, %arg14: memref<1x256xf32, #tpu.memory_space<vmem>>, %arg15: memref<256x512xbf16, #tpu.memory_space<vmem>>, %arg16: memref<1x512xf32, #tpu.memory_space<vmem>>, %arg17: memref<2x128x256xbf16, #tpu.memory_space<vmem>>, %arg18: memref<1x256xf32, #tpu.memory_space<vmem>>, %arg19: memref<1x256xf32, #tpu.memory_space<vmem>>, %arg20: memref<1x256xf32, #tpu.memory_space<vmem>>, %arg21: memref<256x1024xbf16, #tpu.memory_space<vmem>>, %arg22: memref<1x1024xf32, #tpu.memory_space<vmem>>, %arg23: memref<1024x256xbf16, #tpu.memory_space<vmem>>, %arg24: memref<1x256xf32, #tpu.memory_space<vmem>>, %arg25: memref<1x256xf32, #tpu.memory_space<vmem>>, %arg26: memref<1x256xf32, #tpu.memory_space<vmem>>, %arg27: memref<1x16x256xf32, #tpu.memory_space<vmem>>, %arg28: memref<2x32x128xbf16, #tpu.memory_space<vmem>>, %arg29: memref<2x32x128xbf16, #tpu.memory_space<vmem>>, %arg30: memref<2x32x128xbf16, #tpu.memory_space<vmem>>, %arg31: memref<2x32x128xbf16, #tpu.memory_space<vmem>>) attributes {dimension_semantics = [#tpu.dimension_semantics<parallel>, #tpu.dimension_semantics<arbitrary>], iteration_bounds = array<i64: 2, 2>, scalar_prefetch = 0 : i64, scratch_operands = 4 : i64, tpu.core_type = #tpu.core_type<tc>, window_params = [{transform_indices = @transform_0, window_bounds = array<i64: 1, 32, 256>}, {transform_indices = @transform_1, window_bounds = array<i64: 1, 32, 256>}, {transform_indices = @transform_2, window_bounds = array<i64: 1, 16, 256>}, {pipeline_mode = #tpu.pipeline_mode<synchronous>, transform_indices = @transform_3, window_bounds = array<i64: 256, 256>}, {pipeline_mode = #tpu.pipeline_mode<synchronous>, transform_indices = @transform_4, window_bounds = array<i64: 1, 256>}, {pipeline_mode = #tpu.pipeline_mode<synchronous>, transform_indices = @transform_5, window_bounds = array<i64: 256, 512>}, {pipeline_mode = #tpu.pipeline_mode<synchronous>, transform_indices = @transform_6, window_bounds = array<i64: 1, 512>}, {pipeline_mode = #tpu.pipeline_mode<synchronous>, transform_indices = @transform_7, window_bounds = array<i64: 2, 128, 256>}, {pipeline_mode = #tpu.pipeline_mode<synchronous>, transform_indices = @transform_8, window_bounds = array<i64: 1, 256>}, {pipeline_mode = #tpu.pipeline_mode<synchronous>, transform_indices = @transform_9, window_bounds = array<i64: 1, 256>}, {pipeline_mode = #tpu.pipeline_mode<synchronous>, transform_indices = @transform_10, window_bounds = array<i64: 1, 256>}, {pipeline_mode = #tpu.pipeline_mode<synchronous>, transform_indices = @transform_11, window_bounds = array<i64: 256, 256>}, {pipeline_mode = #tpu.pipeline_mode<synchronous>, transform_indices = @transform_12, window_bounds = array<i64: 1, 256>}, {pipeline_mode = #tpu.pipeline_mode<synchronous>, transform_indices = @transform_13, window_bounds = array<i64: 256, 512>}, {pipeline_mode = #tpu.pipeline_mode<synchronous>, transform_indices = @transform_14, window_bounds = array<i64: 1, 512>}, {pipeline_mode = #tpu.pipeline_mode<synchronous>, transform_indices = @transform_15, window_bounds = array<i64: 2, 128, 256>}, {pipeline_mode = #tpu.pipeline_mode<synchronous>, transform_indices = @transform_16, window_bounds = array<i64: 1, 256>}, {pipeline_mode = #tpu.pipeline_mode<synchronous>, transform_indices = @transform_17, window_bounds = array<i64: 1, 256>}, {pipeline_mode = #tpu.pipeline_mode<synchronous>, transform_indices = @transform_18, window_bounds = array<i64: 1, 256>}, {pipeline_mode = #tpu.pipeline_mode<synchronous>, transform_indices = @transform_19, window_bounds = array<i64: 256, 1024>}, {pipeline_mode = #tpu.pipeline_mode<synchronous>, transform_indices = @transform_20, window_bounds = array<i64: 1, 1024>}, {pipeline_mode = #tpu.pipeline_mode<synchronous>, transform_indices = @transform_21, window_bounds = array<i64: 1024, 256>}, {pipeline_mode = #tpu.pipeline_mode<synchronous>, transform_indices = @transform_22, window_bounds = array<i64: 1, 256>}, {pipeline_mode = #tpu.pipeline_mode<synchronous>, transform_indices = @transform_23, window_bounds = array<i64: 1, 256>}, {pipeline_mode = #tpu.pipeline_mode<synchronous>, transform_indices = @transform_24, window_bounds = array<i64: 1, 256>}, {transform_indices = @transform_25, window_bounds = array<i64: 1, 16, 256>}]} {
    %c16_i32 = arith.constant 16 : i32
    %0 = arith.muli %arg1, %c16_i32 : i32
    %1 = tpu.assume_multiple %0, 16 : i32
    %c0_i32 = arith.constant 0 : i32
    %2 = arith.cmpi eq, %arg1, %c0_i32 : i32
    %3 = arith.extui %2 : i1 to i32
    %c0_i32_0 = arith.constant 0 : i32
    %4 = arith.cmpi ne, %3, %c0_i32_0 : i32
    scf.if %4 {
      %c0_90 = arith.constant 0 : index
      %c0_91 = arith.constant 0 : index
      %c0_92 = arith.constant 0 : index
      %193 = vector.load %arg3[%c0_90, %c0_91, %c0_92] : memref<1x32x256xbf16, #tpu.memory_space<vmem>>, vector<1x32x256xbf16>
      %194 = vector.shape_cast %193 : vector<1x32x256xbf16> to vector<32x256xbf16>
      %c0_93 = arith.constant 0 : index
      %c0_94 = arith.constant 0 : index
      %195 = vector.load %arg7[%c0_93, %c0_94] : memref<256x512xbf16, #tpu.memory_space<vmem>>, vector<256x512xbf16>
      %c0_95 = arith.constant 0 : index
      %c0_96 = arith.constant 0 : index
      %196 = vector.load %arg8[%c0_95, %c0_96] : memref<1x512xf32, #tpu.memory_space<vmem>>, vector<1x512xf32>
      %197 = vector.shape_cast %196 : vector<1x512xf32> to vector<512xf32>
      %cst_97 = arith.constant dense<0.000000e+00> : vector<32x512xf32>
      %198 = tpu.matmul %194, %195, %cst_97 {dimension_numbers = #tpu.dot_dimension_numbers<[1], [0], [0], [1], [0, 0, 1, 1], [], []>} : vector<32x256xbf16>, vector<256x512xbf16>, vector<32x512xf32> -> vector<32x512xf32>
      %199 = vector.shape_cast %197 : vector<512xf32> to vector<1x512xf32>
      %200 = vector.broadcast %199 : vector<1x512xf32> to vector<32x512xf32>
      %201 = arith.addf %198, %200 : vector<32x512xf32>
      %202 = vector.extract_strided_slice %201 {offsets = [0, 0], sizes = [32, 256], strides = [1, 1]} : vector<32x512xf32> to vector<32x256xf32>
      %203 = vector.shape_cast %202 : vector<32x256xf32> to vector<32x2x128xf32>
      %204 = vector.extract_strided_slice %201 {offsets = [0, 256], sizes = [32, 256], strides = [1, 1]} : vector<32x512xf32> to vector<32x256xf32>
      %205 = vector.shape_cast %204 : vector<32x256xf32> to vector<32x2x128xf32>
      %206 = tpu.transpose %203, [1, 0, 2] : vector<32x2x128xf32> -> vector<2x32x128xf32>
      %207 = arith.truncf %206 : vector<2x32x128xf32> to vector<2x32x128xbf16>
      %c0_98 = arith.constant 0 : index
      %c0_99 = arith.constant 0 : index
      %c0_100 = arith.constant 0 : index
      %208 = vector.load %arg28[%c0_98, %c0_99, %c0_100] : memref<2x32x128xbf16, #tpu.memory_space<vmem>>, vector<2x32x128xbf16>
      tpu.vector_store %arg28[%c0_98, %c0_99, %c0_100], %207 {strides = array<i32>} : memref<2x32x128xbf16, #tpu.memory_space<vmem>>, vector<2x32x128xbf16>,
      %209 = tpu.transpose %205, [1, 0, 2] : vector<32x2x128xf32> -> vector<2x32x128xf32>
      %210 = arith.truncf %209 : vector<2x32x128xf32> to vector<2x32x128xbf16>
      %c0_101 = arith.constant 0 : index
      %c0_102 = arith.constant 0 : index
      %c0_103 = arith.constant 0 : index
      %211 = vector.load %arg29[%c0_101, %c0_102, %c0_103] : memref<2x32x128xbf16, #tpu.memory_space<vmem>>, vector<2x32x128xbf16>
      tpu.vector_store %arg29[%c0_101, %c0_102, %c0_103], %210 {strides = array<i32>} : memref<2x32x128xbf16, #tpu.memory_space<vmem>>, vector<2x32x128xbf16>,
      %c0_104 = arith.constant 0 : index
      %c0_105 = arith.constant 0 : index
      %c0_106 = arith.constant 0 : index
      %212 = vector.load %arg2[%c0_104, %c0_105, %c0_106] : memref<1x32x256xbf16, #tpu.memory_space<vmem>>, vector<1x32x256xbf16>
      %213 = vector.shape_cast %212 : vector<1x32x256xbf16> to vector<32x256xbf16>
      %c0_107 = arith.constant 0 : index
      %c0_108 = arith.constant 0 : index
      %214 = vector.load %arg15[%c0_107, %c0_108] : memref<256x512xbf16, #tpu.memory_space<vmem>>, vector<256x512xbf16>
      %c0_109 = arith.constant 0 : index
      %c0_110 = arith.constant 0 : index
      %215 = vector.load %arg16[%c0_109, %c0_110] : memref<1x512xf32, #tpu.memory_space<vmem>>, vector<1x512xf32>
      %216 = vector.shape_cast %215 : vector<1x512xf32> to vector<512xf32>
      %cst_111 = arith.constant dense<0.000000e+00> : vector<32x512xf32>
      %217 = tpu.matmul %213, %214, %cst_111 {dimension_numbers = #tpu.dot_dimension_numbers<[1], [0], [0], [1], [0, 0, 1, 1], [], []>} : vector<32x256xbf16>, vector<256x512xbf16>, vector<32x512xf32> -> vector<32x512xf32>
      %218 = vector.shape_cast %216 : vector<512xf32> to vector<1x512xf32>
      %219 = vector.broadcast %218 : vector<1x512xf32> to vector<32x512xf32>
      %220 = arith.addf %217, %219 : vector<32x512xf32>
      %221 = vector.extract_strided_slice %220 {offsets = [0, 0], sizes = [32, 256], strides = [1, 1]} : vector<32x512xf32> to vector<32x256xf32>
      %222 = vector.shape_cast %221 : vector<32x256xf32> to vector<32x2x128xf32>
      %223 = vector.extract_strided_slice %220 {offsets = [0, 256], sizes = [32, 256], strides = [1, 1]} : vector<32x512xf32> to vector<32x256xf32>
      %224 = vector.shape_cast %223 : vector<32x256xf32> to vector<32x2x128xf32>
      %225 = tpu.transpose %222, [1, 0, 2] : vector<32x2x128xf32> -> vector<2x32x128xf32>
      %226 = arith.truncf %225 : vector<2x32x128xf32> to vector<2x32x128xbf16>
      %c0_112 = arith.constant 0 : index
      %c0_113 = arith.constant 0 : index
      %c0_114 = arith.constant 0 : index
      %227 = vector.load %arg30[%c0_112, %c0_113, %c0_114] : memref<2x32x128xbf16, #tpu.memory_space<vmem>>, vector<2x32x128xbf16>
      tpu.vector_store %arg30[%c0_112, %c0_113, %c0_114], %226 {strides = array<i32>} : memref<2x32x128xbf16, #tpu.memory_space<vmem>>, vector<2x32x128xbf16>,
      %228 = tpu.transpose %224, [1, 0, 2] : vector<32x2x128xf32> -> vector<2x32x128xf32>
      %229 = arith.truncf %228 : vector<2x32x128xf32> to vector<2x32x128xbf16>
      %c0_115 = arith.constant 0 : index
      %c0_116 = arith.constant 0 : index
      %c0_117 = arith.constant 0 : index
      %230 = vector.load %arg31[%c0_115, %c0_116, %c0_117] : memref<2x32x128xbf16, #tpu.memory_space<vmem>>, vector<2x32x128xbf16>
      tpu.vector_store %arg31[%c0_115, %c0_116, %c0_117], %229 {strides = array<i32>} : memref<2x32x128xbf16, #tpu.memory_space<vmem>>, vector<2x32x128xbf16>,
    } else {
    }
    %c0 = arith.constant 0 : index
    %c0_1 = arith.constant 0 : index
    %c0_2 = arith.constant 0 : index
    %5 = vector.load %arg4[%c0, %c0_1, %c0_2] : memref<1x16x256xf32, #tpu.memory_space<vmem>>, vector<1x16x256xf32>
    %6 = vector.shape_cast %5 : vector<1x16x256xf32> to vector<16x256xf32>
    %c0_3 = arith.constant 0 : index
    %c0_4 = arith.constant 0 : index
    %7 = vector.load %arg5[%c0_3, %c0_4] : memref<256x256xbf16, #tpu.memory_space<vmem>>, vector<256x256xbf16>
    %c0_5 = arith.constant 0 : index
    %c0_6 = arith.constant 0 : index
    %8 = vector.load %arg6[%c0_5, %c0_6] : memref<1x256xf32, #tpu.memory_space<vmem>>, vector<1x256xf32>
    %9 = vector.shape_cast %8 : vector<1x256xf32> to vector<256xf32>
    %c0_7 = arith.constant 0 : index
    %c0_8 = arith.constant 0 : index
    %c0_9 = arith.constant 0 : index
    %10 = vector.load %arg9[%c0_7, %c0_8, %c0_9] : memref<2x128x256xbf16, #tpu.memory_space<vmem>>, vector<2x128x256xbf16>
    %c0_10 = arith.constant 0 : index
    %c0_11 = arith.constant 0 : index
    %11 = vector.load %arg10[%c0_10, %c0_11] : memref<1x256xf32, #tpu.memory_space<vmem>>, vector<1x256xf32>
    %12 = vector.shape_cast %11 : vector<1x256xf32> to vector<256xf32>
    %13 = arith.truncf %6 : vector<16x256xf32> to vector<16x256xbf16>
    %cst = arith.constant dense<0.000000e+00> : vector<16x256xf32>
    %14 = tpu.matmul %13, %7, %cst {dimension_numbers = #tpu.dot_dimension_numbers<[1], [0], [0], [1], [0, 0, 1, 1], [], []>} : vector<16x256xbf16>, vector<256x256xbf16>, vector<16x256xf32> -> vector<16x256xf32>
    %15 = vector.shape_cast %9 : vector<256xf32> to vector<1x256xf32>
    %16 = vector.broadcast %15 : vector<1x256xf32> to vector<16x256xf32>
    %17 = arith.addf %14, %16 : vector<16x256xf32>
    %cst_12 = arith.constant 0.0883883461 : f32
    %18 = vector.broadcast %cst_12 : f32 to vector<16x256xf32>
    %19 = arith.mulf %17, %18 : vector<16x256xf32>
    %20 = vector.shape_cast %19 : vector<16x256xf32> to vector<16x2x128xf32>
    %21 = tpu.transpose %20, [1, 0, 2] : vector<16x2x128xf32> -> vector<2x16x128xf32>
    %22 = arith.truncf %21 : vector<2x16x128xf32> to vector<2x16x128xbf16>
    %c0_13 = arith.constant 0 : index
    %c0_14 = arith.constant 0 : index
    %c0_15 = arith.constant 0 : index
    %23 = vector.load %arg28[%c0_13, %c0_14, %c0_15] : memref<2x32x128xbf16, #tpu.memory_space<vmem>>, vector<2x32x128xbf16>
    "tpu.trace_start"() <{level = 10 : i32, message = "hqd,hkd->hqk"}> : () -> ()
    %cst_16 = arith.constant dense<0.000000e+00> : vector<2x16x32xf32>
    %24 = tpu.matmul %22, %23, %cst_16 {dimension_numbers = #tpu.dot_dimension_numbers<[2], [2], [1], [1], [0, 0, 0, 1, 1, 1], [0], [0]>} : vector<2x16x128xbf16>, vector<2x32x128xbf16>, vector<2x16x32xf32> -> vector<2x16x32xf32>
    "tpu.trace_stop"() : () -> ()
    %25 = tpu.iota {dimensions = array<i32: 0>} : vector<16x32xi32>
    %26 = vector.broadcast %1 : i32 to vector<16x32xi32>
    %27 = arith.addi %25, %26 : vector<16x32xi32>
    %28 = tpu.iota {dimensions = array<i32: 1>} : vector<16x32xi32>
    %29 = arith.cmpi sge, %27, %28 : vector<16x32xi32>
    %30 = vector.shape_cast %29 : vector<16x32xi1> to vector<1x16x32xi1>
    %cst_17 = arith.constant -1.000000e+09 : f32
    %31 = vector.shape_cast %30 : vector<1x16x32xi1> to vector<1x16x32xi1>
    %32 = vector.broadcast %31 : vector<1x16x32xi1> to vector<2x16x32xi1>
    %33 = vector.broadcast %cst_17 : f32 to vector<2x16x32xf32>
    %34 = arith.select %32, %24, %33 : vector<2x16x32xi1>, vector<2x16x32xf32>
    %cst_18 = arith.constant dense<0xFF800000> : vector<2x16xf32>
    %35 = vector.multi_reduction <maximumf>, %34, %cst_18 [2] : vector<2x16x32xf32> to vector<2x16xf32>
    %36 = vector.shape_cast %35 : vector<2x16xf32> to vector<2x16x1xf32>
    %37 = vector.broadcast %36 : vector<2x16x1xf32> to vector<2x16x32xf32>
    %38 = arith.subf %34, %37 : vector<2x16x32xf32>
    %39 = math.exp %38 : vector<2x16x32xf32>
    %cst_19 = arith.constant dense<0.000000e+00> : vector<2x16xf32>
    %40 = vector.multi_reduction <add>, %39, %cst_19 [2] : vector<2x16x32xf32> to vector<2x16xf32>
    %41 = vector.shape_cast %40 : vector<2x16xf32> to vector<2x16x1xf32>
    %42 = arith.truncf %39 : vector<2x16x32xf32> to vector<2x16x32xbf16>
    %c0_20 = arith.constant 0 : index
    %c0_21 = arith.constant 0 : index
    %c0_22 = arith.constant 0 : index
    %43 = vector.load %arg29[%c0_20, %c0_21, %c0_22] : memref<2x32x128xbf16, #tpu.memory_space<vmem>>, vector<2x32x128xbf16>
    "tpu.trace_start"() <{level = 10 : i32, message = "hqk,hkd->hqd"}> : () -> ()
    %cst_23 = arith.constant dense<0.000000e+00> : vector<2x16x128xf32>
    %44 = tpu.matmul %42, %43, %cst_23 {dimension_numbers = #tpu.dot_dimension_numbers<[2], [1], [1], [2], [0, 0, 0, 1, 1, 2], [0], [0]>} : vector<2x16x32xbf16>, vector<2x32x128xbf16>, vector<2x16x128xf32> -> vector<2x16x128xf32>
    "tpu.trace_stop"() : () -> ()
    %45 = tpu.reciprocal %41 {approx = true} : vector<2x16x1xf32> -> vector<2x16x1xf32>
    %46 = vector.broadcast %45 : vector<2x16x1xf32> to vector<2x16x128xf32>
    %47 = arith.mulf %44, %46 : vector<2x16x128xf32>
    %48 = arith.truncf %47 : vector<2x16x128xf32> to vector<2x16x128xbf16>
    "tpu.trace_start"() <{level = 10 : i32, message = "hqd,hde->hqe"}> : () -> ()
    %cst_24 = arith.constant dense<0.000000e+00> : vector<2x16x256xf32>
    %49 = tpu.matmul %48, %10, %cst_24 {dimension_numbers = #tpu.dot_dimension_numbers<[2], [1], [1], [2], [0, 0, 0, 1, 1, 2], [0], [0]>} : vector<2x16x128xbf16>, vector<2x128x256xbf16>, vector<2x16x256xf32> -> vector<2x16x256xf32>
    "tpu.trace_stop"() : () -> ()
    %cst_25 = arith.constant dense<0.000000e+00> : vector<16x256xf32>
    %50 = vector.multi_reduction <add>, %49, %cst_25 [0] : vector<2x16x256xf32> to vector<16x256xf32>
    %51 = vector.shape_cast %12 : vector<256xf32> to vector<1x256xf32>
    %52 = vector.broadcast %51 : vector<1x256xf32> to vector<16x256xf32>
    %53 = arith.addf %50, %52 : vector<16x256xf32>
    %54 = arith.addf %6, %53 : vector<16x256xf32>
    %c0_26 = arith.constant 0 : index
    %c0_27 = arith.constant 0 : index
    %55 = vector.load %arg11[%c0_26, %c0_27] : memref<1x256xf32, #tpu.memory_space<vmem>>, vector<1x256xf32>
    %56 = vector.shape_cast %55 : vector<1x256xf32> to vector<256xf32>
    %c0_28 = arith.constant 0 : index
    %c0_29 = arith.constant 0 : index
    %57 = vector.load %arg12[%c0_28, %c0_29] : memref<1x256xf32, #tpu.memory_space<vmem>>, vector<1x256xf32>
    %58 = vector.shape_cast %57 : vector<1x256xf32> to vector<256xf32>
    %cst_30 = arith.constant dense<0.000000e+00> : vector<16xf32>
    %59 = vector.multi_reduction <add>, %54, %cst_30 [1] : vector<16x256xf32> to vector<16xf32>
    %60 = vector.shape_cast %59 : vector<16xf32> to vector<16x1xf32>
    %cst_31 = arith.constant 2.560000e+02 : f32
    %61 = vector.broadcast %cst_31 : f32 to vector<16x1xf32>
    %62 = arith.divf %60, %61 : vector<16x1xf32>
    %63 = vector.broadcast %62 : vector<16x1xf32> to vector<16x256xf32>
    %64 = arith.subf %54, %63 : vector<16x256xf32>
    %65 = arith.mulf %64, %64 : vector<16x256xf32>
    %cst_32 = arith.constant dense<0.000000e+00> : vector<16xf32>
    %66 = vector.multi_reduction <add>, %65, %cst_32 [1] : vector<16x256xf32> to vector<16xf32>
    %67 = vector.shape_cast %66 : vector<16xf32> to vector<16x1xf32>
    %cst_33 = arith.constant 2.560000e+02 : f32
    %68 = vector.broadcast %cst_33 : f32 to vector<16x1xf32>
    %69 = arith.divf %67, %68 : vector<16x1xf32>
    %cst_34 = arith.constant 9.99999996E-13 : f32
    %70 = vector.broadcast %cst_34 : f32 to vector<16x1xf32>
    %71 = arith.addf %69, %70 : vector<16x1xf32>
    %72 = math.rsqrt %71 : vector<16x1xf32>
    %73 = vector.broadcast %72 : vector<16x1xf32> to vector<16x256xf32>
    %74 = arith.mulf %64, %73 : vector<16x256xf32>
    %75 = vector.shape_cast %56 : vector<256xf32> to vector<1x256xf32>
    %76 = vector.broadcast %75 : vector<1x256xf32> to vector<16x256xf32>
    %77 = arith.mulf %74, %76 : vector<16x256xf32>
    %78 = vector.shape_cast %58 : vector<256xf32> to vector<1x256xf32>
    %79 = vector.broadcast %78 : vector<1x256xf32> to vector<16x256xf32>
    %80 = arith.addf %77, %79 : vector<16x256xf32>
    %c0_35 = arith.constant 0 : index
    %c0_36 = arith.constant 0 : index
    %81 = vector.load %arg13[%c0_35, %c0_36] : memref<256x256xbf16, #tpu.memory_space<vmem>>, vector<256x256xbf16>
    %c0_37 = arith.constant 0 : index
    %c0_38 = arith.constant 0 : index
    %82 = vector.load %arg14[%c0_37, %c0_38] : memref<1x256xf32, #tpu.memory_space<vmem>>, vector<1x256xf32>
    %83 = vector.shape_cast %82 : vector<1x256xf32> to vector<256xf32>
    %c0_39 = arith.constant 0 : index
    %c0_40 = arith.constant 0 : index
    %c0_41 = arith.constant 0 : index
    %84 = vector.load %arg17[%c0_39, %c0_40, %c0_41] : memref<2x128x256xbf16, #tpu.memory_space<vmem>>, vector<2x128x256xbf16>
    %c0_42 = arith.constant 0 : index
    %c0_43 = arith.constant 0 : index
    %85 = vector.load %arg18[%c0_42, %c0_43] : memref<1x256xf32, #tpu.memory_space<vmem>>, vector<1x256xf32>
    %86 = vector.shape_cast %85 : vector<1x256xf32> to vector<256xf32>
    %87 = arith.truncf %80 : vector<16x256xf32> to vector<16x256xbf16>
    %cst_44 = arith.constant dense<0.000000e+00> : vector<16x256xf32>
    %88 = tpu.matmul %87, %81, %cst_44 {dimension_numbers = #tpu.dot_dimension_numbers<[1], [0], [0], [1], [0, 0, 1, 1], [], []>} : vector<16x256xbf16>, vector<256x256xbf16>, vector<16x256xf32> -> vector<16x256xf32>
    %89 = vector.shape_cast %83 : vector<256xf32> to vector<1x256xf32>
    %90 = vector.broadcast %89 : vector<1x256xf32> to vector<16x256xf32>
    %91 = arith.addf %88, %90 : vector<16x256xf32>
    %cst_45 = arith.constant 0.0883883461 : f32
    %92 = vector.broadcast %cst_45 : f32 to vector<16x256xf32>
    %93 = arith.mulf %91, %92 : vector<16x256xf32>
    %94 = vector.shape_cast %93 : vector<16x256xf32> to vector<16x2x128xf32>
    %95 = tpu.transpose %94, [1, 0, 2] : vector<16x2x128xf32> -> vector<2x16x128xf32>
    %96 = arith.truncf %95 : vector<2x16x128xf32> to vector<2x16x128xbf16>
    %c0_46 = arith.constant 0 : index
    %c0_47 = arith.constant 0 : index
    %c0_48 = arith.constant 0 : index
    %97 = vector.load %arg30[%c0_46, %c0_47, %c0_48] : memref<2x32x128xbf16, #tpu.memory_space<vmem>>, vector<2x32x128xbf16>
    "tpu.trace_start"() <{level = 10 : i32, message = "hqd,hkd->hqk"}> : () -> ()
    %cst_49 = arith.constant dense<0.000000e+00> : vector<2x16x32xf32>
    %98 = tpu.matmul %96, %97, %cst_49 {dimension_numbers = #tpu.dot_dimension_numbers<[2], [2], [1], [1], [0, 0, 0, 1, 1, 1], [0], [0]>} : vector<2x16x128xbf16>, vector<2x32x128xbf16>, vector<2x16x32xf32> -> vector<2x16x32xf32>
    "tpu.trace_stop"() : () -> ()
    %cst_50 = arith.constant dense<0xFF800000> : vector<2x16xf32>
    %99 = vector.multi_reduction <maximumf>, %98, %cst_50 [2] : vector<2x16x32xf32> to vector<2x16xf32>
    %100 = vector.shape_cast %99 : vector<2x16xf32> to vector<2x16x1xf32>
    %101 = vector.broadcast %100 : vector<2x16x1xf32> to vector<2x16x32xf32>
    %102 = arith.subf %98, %101 : vector<2x16x32xf32>
    %103 = math.exp %102 : vector<2x16x32xf32>
    %cst_51 = arith.constant dense<0.000000e+00> : vector<2x16xf32>
    %104 = vector.multi_reduction <add>, %103, %cst_51 [2] : vector<2x16x32xf32> to vector<2x16xf32>
    %105 = vector.shape_cast %104 : vector<2x16xf32> to vector<2x16x1xf32>
    %106 = arith.truncf %103 : vector<2x16x32xf32> to vector<2x16x32xbf16>
    %c0_52 = arith.constant 0 : index
    %c0_53 = arith.constant 0 : index
    %c0_54 = arith.constant 0 : index
    %107 = vector.load %arg31[%c0_52, %c0_53, %c0_54] : memref<2x32x128xbf16, #tpu.memory_space<vmem>>, vector<2x32x128xbf16>
    "tpu.trace_start"() <{level = 10 : i32, message = "hqk,hkd->hqd"}> : () -> ()
    %cst_55 = arith.constant dense<0.000000e+00> : vector<2x16x128xf32>
    %108 = tpu.matmul %106, %107, %cst_55 {dimension_numbers = #tpu.dot_dimension_numbers<[2], [1], [1], [2], [0, 0, 0, 1, 1, 2], [0], [0]>} : vector<2x16x32xbf16>, vector<2x32x128xbf16>, vector<2x16x128xf32> -> vector<2x16x128xf32>
    "tpu.trace_stop"() : () -> ()
    %109 = tpu.reciprocal %105 {approx = true} : vector<2x16x1xf32> -> vector<2x16x1xf32>
    %110 = vector.broadcast %109 : vector<2x16x1xf32> to vector<2x16x128xf32>
    %111 = arith.mulf %108, %110 : vector<2x16x128xf32>
    %112 = arith.truncf %111 : vector<2x16x128xf32> to vector<2x16x128xbf16>
    "tpu.trace_start"() <{level = 10 : i32, message = "hqd,hde->hqe"}> : () -> ()
    %cst_56 = arith.constant dense<0.000000e+00> : vector<2x16x256xf32>
    %113 = tpu.matmul %112, %84, %cst_56 {dimension_numbers = #tpu.dot_dimension_numbers<[2], [1], [1], [2], [0, 0, 0, 1, 1, 2], [0], [0]>} : vector<2x16x128xbf16>, vector<2x128x256xbf16>, vector<2x16x256xf32> -> vector<2x16x256xf32>
    "tpu.trace_stop"() : () -> ()
    %cst_57 = arith.constant dense<0.000000e+00> : vector<16x256xf32>
    %114 = vector.multi_reduction <add>, %113, %cst_57 [0] : vector<2x16x256xf32> to vector<16x256xf32>
    %115 = vector.shape_cast %86 : vector<256xf32> to vector<1x256xf32>
    %116 = vector.broadcast %115 : vector<1x256xf32> to vector<16x256xf32>
    %117 = arith.addf %114, %116 : vector<16x256xf32>
    %118 = arith.addf %80, %117 : vector<16x256xf32>
    %c0_58 = arith.constant 0 : index
    %c0_59 = arith.constant 0 : index
    %119 = vector.load %arg19[%c0_58, %c0_59] : memref<1x256xf32, #tpu.memory_space<vmem>>, vector<1x256xf32>
    %120 = vector.shape_cast %119 : vector<1x256xf32> to vector<256xf32>
    %c0_60 = arith.constant 0 : index
    %c0_61 = arith.constant 0 : index
    %121 = vector.load %arg20[%c0_60, %c0_61] : memref<1x256xf32, #tpu.memory_space<vmem>>, vector<1x256xf32>
    %122 = vector.shape_cast %121 : vector<1x256xf32> to vector<256xf32>
    %cst_62 = arith.constant dense<0.000000e+00> : vector<16xf32>
    %123 = vector.multi_reduction <add>, %118, %cst_62 [1] : vector<16x256xf32> to vector<16xf32>
    %124 = vector.shape_cast %123 : vector<16xf32> to vector<16x1xf32>
    %cst_63 = arith.constant 2.560000e+02 : f32
    %125 = vector.broadcast %cst_63 : f32 to vector<16x1xf32>
    %126 = arith.divf %124, %125 : vector<16x1xf32>
    %127 = vector.broadcast %126 : vector<16x1xf32> to vector<16x256xf32>
    %128 = arith.subf %118, %127 : vector<16x256xf32>
    %129 = arith.mulf %128, %128 : vector<16x256xf32>
    %cst_64 = arith.constant dense<0.000000e+00> : vector<16xf32>
    %130 = vector.multi_reduction <add>, %129, %cst_64 [1] : vector<16x256xf32> to vector<16xf32>
    %131 = vector.shape_cast %130 : vector<16xf32> to vector<16x1xf32>
    %cst_65 = arith.constant 2.560000e+02 : f32
    %132 = vector.broadcast %cst_65 : f32 to vector<16x1xf32>
    %133 = arith.divf %131, %132 : vector<16x1xf32>
    %cst_66 = arith.constant 9.99999996E-13 : f32
    %134 = vector.broadcast %cst_66 : f32 to vector<16x1xf32>
    %135 = arith.addf %133, %134 : vector<16x1xf32>
    %136 = math.rsqrt %135 : vector<16x1xf32>
    %137 = vector.broadcast %136 : vector<16x1xf32> to vector<16x256xf32>
    %138 = arith.mulf %128, %137 : vector<16x256xf32>
    %139 = vector.shape_cast %120 : vector<256xf32> to vector<1x256xf32>
    %140 = vector.broadcast %139 : vector<1x256xf32> to vector<16x256xf32>
    %141 = arith.mulf %138, %140 : vector<16x256xf32>
    %142 = vector.shape_cast %122 : vector<256xf32> to vector<1x256xf32>
    %143 = vector.broadcast %142 : vector<1x256xf32> to vector<16x256xf32>
    %144 = arith.addf %141, %143 : vector<16x256xf32>
    %145 = arith.truncf %144 : vector<16x256xf32> to vector<16x256xbf16>
    %c0_67 = arith.constant 0 : index
    %c0_68 = arith.constant 0 : index
    %146 = vector.load %arg21[%c0_67, %c0_68] : memref<256x1024xbf16, #tpu.memory_space<vmem>>, vector<256x1024xbf16>
    %cst_69 = arith.constant dense<0.000000e+00> : vector<16x1024xf32>
    %147 = tpu.matmul %145, %146, %cst_69 {dimension_numbers = #tpu.dot_dimension_numbers<[1], [0], [0], [1], [0, 0, 1, 1], [], []>} : vector<16x256xbf16>, vector<256x1024xbf16>, vector<16x1024xf32> -> vector<16x1024xf32>
    %c0_70 = arith.constant 0 : index
    %c0_71 = arith.constant 0 : index
    %148 = vector.load %arg22[%c0_70, %c0_71] : memref<1x1024xf32, #tpu.memory_space<vmem>>, vector<1x1024xf32>
    %149 = vector.shape_cast %148 : vector<1x1024xf32> to vector<1024xf32>
    %150 = vector.shape_cast %149 : vector<1024xf32> to vector<1x1024xf32>
    %151 = vector.broadcast %150 : vector<1x1024xf32> to vector<16x1024xf32>
    %152 = arith.addf %147, %151 : vector<16x1024xf32>
    %cst_72 = arith.constant 0.000000e+00 : f32
    %153 = vector.broadcast %cst_72 : f32 to vector<16x1024xf32>
    %154 = arith.maximumf %152, %153 : vector<16x1024xf32>
    %155 = arith.truncf %154 : vector<16x1024xf32> to vector<16x1024xbf16>
    %c0_73 = arith.constant 0 : index
    %c0_74 = arith.constant 0 : index
    %156 = vector.load %arg23[%c0_73, %c0_74] : memref<1024x256xbf16, #tpu.memory_space<vmem>>, vector<1024x256xbf16>
    %cst_75 = arith.constant dense<0.000000e+00> : vector<16x256xf32>
    %157 = tpu.matmul %155, %156, %cst_75 {dimension_numbers = #tpu.dot_dimension_numbers<[1], [0], [0], [1], [0, 0, 1, 1], [], []>} : vector<16x1024xbf16>, vector<1024x256xbf16>, vector<16x256xf32> -> vector<16x256xf32>
    %c0_76 = arith.constant 0 : index
    %c0_77 = arith.constant 0 : index
    %158 = vector.load %arg24[%c0_76, %c0_77] : memref<1x256xf32, #tpu.memory_space<vmem>>, vector<1x256xf32>
    %159 = vector.shape_cast %158 : vector<1x256xf32> to vector<256xf32>
    %160 = vector.shape_cast %159 : vector<256xf32> to vector<1x256xf32>
    %161 = vector.broadcast %160 : vector<1x256xf32> to vector<16x256xf32>
    %162 = arith.addf %157, %161 : vector<16x256xf32>
    %163 = arith.addf %144, %162 : vector<16x256xf32>
    %c0_78 = arith.constant 0 : index
    %c0_79 = arith.constant 0 : index
    %164 = vector.load %arg25[%c0_78, %c0_79] : memref<1x256xf32, #tpu.memory_space<vmem>>, vector<1x256xf32>
    %165 = vector.shape_cast %164 : vector<1x256xf32> to vector<256xf32>
    %c0_80 = arith.constant 0 : index
    %c0_81 = arith.constant 0 : index
    %166 = vector.load %arg26[%c0_80, %c0_81] : memref<1x256xf32, #tpu.memory_space<vmem>>, vector<1x256xf32>
    %167 = vector.shape_cast %166 : vector<1x256xf32> to vector<256xf32>
    %cst_82 = arith.constant dense<0.000000e+00> : vector<16xf32>
    %168 = vector.multi_reduction <add>, %163, %cst_82 [1] : vector<16x256xf32> to vector<16xf32>
    %169 = vector.shape_cast %168 : vector<16xf32> to vector<16x1xf32>
    %cst_83 = arith.constant 2.560000e+02 : f32
    %170 = vector.broadcast %cst_83 : f32 to vector<16x1xf32>
    %171 = arith.divf %169, %170 : vector<16x1xf32>
    %172 = vector.broadcast %171 : vector<16x1xf32> to vector<16x256xf32>
    %173 = arith.subf %163, %172 : vector<16x256xf32>
    %174 = arith.mulf %173, %173 : vector<16x256xf32>
    %cst_84 = arith.constant dense<0.000000e+00> : vector<16xf32>
    %175 = vector.multi_reduction <add>, %174, %cst_84 [1] : vector<16x256xf32> to vector<16xf32>
    %176 = vector.shape_cast %175 : vector<16xf32> to vector<16x1xf32>
    %cst_85 = arith.constant 2.560000e+02 : f32
    %177 = vector.broadcast %cst_85 : f32 to vector<16x1xf32>
    %178 = arith.divf %176, %177 : vector<16x1xf32>
    %cst_86 = arith.constant 9.99999996E-13 : f32
    %179 = vector.broadcast %cst_86 : f32 to vector<16x1xf32>
    %180 = arith.addf %178, %179 : vector<16x1xf32>
    %181 = math.rsqrt %180 : vector<16x1xf32>
    %182 = vector.broadcast %181 : vector<16x1xf32> to vector<16x256xf32>
    %183 = arith.mulf %173, %182 : vector<16x256xf32>
    %184 = vector.shape_cast %165 : vector<256xf32> to vector<1x256xf32>
    %185 = vector.broadcast %184 : vector<1x256xf32> to vector<16x256xf32>
    %186 = arith.mulf %183, %185 : vector<16x256xf32>
    %187 = vector.shape_cast %167 : vector<256xf32> to vector<1x256xf32>
    %188 = vector.broadcast %187 : vector<1x256xf32> to vector<16x256xf32>
    %189 = arith.addf %186, %188 : vector<16x256xf32>
    %c0_87 = arith.constant 0 : index
    %c0_88 = arith.constant 0 : index
    %c0_89 = arith.constant 0 : index
    %190 = vector.load %arg27[%c0_87, %c0_88, %c0_89] : memref<1x16x256xf32, #tpu.memory_space<vmem>>, vector<1x16x256xf32>
    %191 = vector.shape_cast %190 : vector<1x16x256xf32> to vector<16x256xf32>
    %192 = vector.shape_cast %189 : vector<16x256xf32> to vector<1x16x256xf32>
    tpu.vector_store %arg27[%c0_87, %c0_88, %c0_89], %192 {strides = array<i32>} : memref<1x16x256xf32, #tpu.memory_space<vmem>>, vector<1x16x256xf32>,
    return
  }
  func.func @transform_0(%arg0: i32, %arg1: i32) -> (i32, i32, i32) {
    %c0_i32 = arith.constant 0 : i32
    %c0_i32_0 = arith.constant 0 : i32
    %c0_i32_1 = arith.constant 0 : i32
    return %arg0, %c0_i32, %c0_i32_0 : i32, i32, i32
  }
  func.func @transform_1(%arg0: i32, %arg1: i32) -> (i32, i32, i32) {
    %c0_i32 = arith.constant 0 : i32
    %c0_i32_0 = arith.constant 0 : i32
    %c0_i32_1 = arith.constant 0 : i32
    return %arg0, %c0_i32, %c0_i32_0 : i32, i32, i32
  }
  func.func @transform_2(%arg0: i32, %arg1: i32) -> (i32, i32, i32) {
    %c0_i32 = arith.constant 0 : i32
    %c0_i32_0 = arith.constant 0 : i32
    return %arg0, %arg1, %c0_i32 : i32, i32, i32
  }
  func.func @transform_3(%arg0: i32, %arg1: i32) -> (i32, i32) {
    %c0_i32 = arith.constant 0 : i32
    %c0_i32_0 = arith.constant 0 : i32
    %c0_i32_1 = arith.constant 0 : i32
    return %c0_i32, %c0_i32_0 : i32, i32
  }
  func.func @transform_4(%arg0: i32, %arg1: i32) -> (i32, i32) {
    %c0_i32 = arith.constant 0 : i32
    %c0_i32_0 = arith.constant 0 : i32
    %c0_i32_1 = arith.constant 0 : i32
    return %c0_i32, %c0_i32_0 : i32, i32
  }
  func.func @transform_5(%arg0: i32, %arg1: i32) -> (i32, i32) {
    %c0_i32 = arith.constant 0 : i32
    %c0_i32_0 = arith.constant 0 : i32
    %c0_i32_1 = arith.constant 0 : i32
    return %c0_i32, %c0_i32_0 : i32, i32
  }
  func.func @transform_6(%arg0: i32, %arg1: i32) -> (i32, i32) {
    %c0_i32 = arith.constant 0 : i32
    %c0_i32_0 = arith.constant 0 : i32
    %c0_i32_1 = arith.constant 0 : i32
    return %c0_i32, %c0_i32_0 : i32, i32
  }
  func.func @transform_7(%arg0: i32, %arg1: i32) -> (i32, i32, i32) {
    %c0_i32 = arith.constant 0 : i32
    %c0_i32_0 = arith.constant 0 : i32
    %c0_i32_1 = arith.constant 0 : i32
    %c0_i32_2 = arith.constant 0 : i32
    return %c0_i32, %c0_i32_0, %c0_i32_1 : i32, i32, i32
  }
  func.func @transform_8(%arg0: i32, %arg1: i32) -> (i32, i32) {
    %c0_i32 = arith.constant 0 : i32
    %c0_i32_0 = arith.constant 0 : i32
    %c0_i32_1 = arith.constant 0 : i32
    return %c0_i32, %c0_i32_0 : i32, i32
  }
  func.func @transform_9(%arg0: i32, %arg1: i32) -> (i32, i32) {
    %c0_i32 = arith.constant 0 : i32
    %c0_i32_0 = arith.constant 0 : i32
    %c0_i32_1 = arith.constant 0 : i32
    return %c0_i32, %c0_i32_0 : i32, i32
  }
  func.func @transform_10(%arg0: i32, %arg1: i32) -> (i32, i32) {
    %c0_i32 = arith.constant 0 : i32
    %c0_i32_0 = arith.constant 0 : i32
    %c0_i32_1 = arith.constant 0 : i32
    return %c0_i32, %c0_i32_0 : i32, i32
  }
  func.func @transform_11(%arg0: i32, %arg1: i32) -> (i32, i32) {
    %c0_i32 = arith.constant 0 : i32
    %c0_i32_0 = arith.constant 0 : i32
    %c0_i32_1 = arith.constant 0 : i32
    return %c0_i32, %c0_i32_0 : i32, i32
  }
  func.func @transform_12(%arg0: i32, %arg1: i32) -> (i32, i32) {
    %c0_i32 = arith.constant 0 : i32
    %c0_i32_0 = arith.constant 0 : i32
    %c0_i32_1 = arith.constant 0 : i32
    return %c0_i32, %c0_i32_0 : i32, i32
  }
  func.func @transform_13(%arg0: i32, %arg1: i32) -> (i32, i32) {
    %c0_i32 = arith.constant 0 : i32
    %c0_i32_0 = arith.constant 0 : i32
    %c0_i32_1 = arith.constant 0 : i32
    return %c0_i32, %c0_i32_0 : i32, i32
  }
  func.func @transform_14(%arg0: i32, %arg1: i32) -> (i32, i32) {
    %c0_i32 = arith.constant 0 : i32
    %c0_i32_0 = arith.constant 0 : i32
    %c0_i32_1 = arith.constant 0 : i32
    return %c0_i32, %c0_i32_0 : i32, i32
  }
  func.func @transform_15(%arg0: i32, %arg1: i32) -> (i32, i32, i32) {
    %c0_i32 = arith.constant 0 : i32
    %c0_i32_0 = arith.constant 0 : i32
    %c0_i32_1 = arith.constant 0 : i32
    %c0_i32_2 = arith.constant 0 : i32
    return %c0_i32, %c0_i32_0, %c0_i32_1 : i32, i32, i32
  }
  func.func @transform_16(%arg0: i32, %arg1: i32) -> (i32, i32) {
    %c0_i32 = arith.constant 0 : i32
    %c0_i32_0 = arith.constant 0 : i32
    %c0_i32_1 = arith.constant 0 : i32
    return %c0_i32, %c0_i32_0 : i32, i32
  }
  func.func @transform_17(%arg0: i32, %arg1: i32) -> (i32, i32) {
    %c0_i32 = arith.constant 0 : i32
    %c0_i32_0 = arith.constant 0 : i32
    %c0_i32_1 = arith.constant 0 : i32
    return %c0_i32, %c0_i32_0 : i32, i32
  }
  func.func @transform_18(%arg0: i32, %arg1: i32) -> (i32, i32) {
    %c0_i32 = arith.constant 0 : i32
    %c0_i32_0 = arith.constant 0 : i32
    %c0_i32_1 = arith.constant 0 : i32
    return %c0_i32, %c0_i32_0 : i32, i32
  }
  func.func @transform_19(%arg0: i32, %arg1: i32) -> (i32, i32) {
    %c0_i32 = arith.constant 0 : i32
    %c0_i32_0 = arith.constant 0 : i32
    %c0_i32_1 = arith.constant 0 : i32
    return %c0_i32, %c0_i32_0 : i32, i32
  }
  func.func @transform_20(%arg0: i32, %arg1: i32) -> (i32, i32) {
    %c0_i32 = arith.constant 0 : i32
    %c0_i32_0 = arith.constant 0 : i32
    %c0_i32_1 = arith.constant 0 : i32
    return %c0_i32, %c0_i32_0 : i32, i32
  }
  func.func @transform_21(%arg0: i32, %arg1: i32) -> (i32, i32) {
    %c0_i32 = arith.constant 0 : i32
    %c0_i32_0 = arith.constant 0 : i32
    %c0_i32_1 = arith.constant 0 : i32
    return %c0_i32, %c0_i32_0 : i32, i32
  }
  func.func @transform_22(%arg0: i32, %arg1: i32) -> (i32, i32) {
    %c0_i32 = arith.constant 0 : i32
    %c0_i32_0 = arith.constant 0 : i32
    %c0_i32_1 = arith.constant 0 : i32
    return %c0_i32, %c0_i32_0 : i32, i32
  }
  func.func @transform_23(%arg0: i32, %arg1: i32) -> (i32, i32) {
    %c0_i32 = arith.constant 0 : i32
    %c0_i32_0 = arith.constant 0 : i32
    %c0_i32_1 = arith.constant 0 : i32
    return %c0_i32, %c0_i32_0 : i32, i32
  }
  func.func @transform_24(%arg0: i32, %arg1: i32) -> (i32, i32) {
    %c0_i32 = arith.constant 0 : i32
    %c0_i32_0 = arith.constant 0 : i32
    %c0_i32_1 = arith.constant 0 : i32
    return %c0_i32, %c0_i32_0 : i32, i32
  }
  func.func @transform_25(%arg0: i32, %arg1: i32) -> (i32, i32, i32) {
    %c0_i32 = arith.constant 0 : i32
    %c0_i32_0 = arith.constant 0 : i32
    return %arg0, %arg1, %c0_i32 : i32, i32, i32
  }
}

</mosaic_0001>

<llo_original>
// kernel: tpu_custom_call.1
$region0: #{tpu_custom_call.1}
  #allocation0 [shape = 'u32[]', space=smem, size = 0x4, offset = 0x4, fixed_abs, tag = 'smem constant byte address 0x4 - core index']
  #allocation1 [shape = 'u32[144,128]{1,0:T(1,128)}', space=vmem, size = 0x12000, scoped, tag = 'internal scratch']
  %s0 = inlined_call_operand.hbm [shape: f32[8,128], index: 0, kind: input, shape index: {}]
  %s1 = inlined_call_operand.hbm [shape: f32[8,128], index: 1, kind: output, shape index: {}]
  %s2 = sld [smem:[#allocation0]]
  $region18: #{tpu_custom_call.1} parent=0
    _
  %s4 = ssub.s32 1, %s2
  %s5 = scalar_select 0, %s4, %s2
  $region1: #{tpu_custom_call.1} parent=0
    #allocation2 [shape = 'u8[4096]{0}', space=vmem, size = 0x1000, scoped, tag = 'input window, operand 0, single buffered']
    #allocation3 [shape = 's32[1]{0}', space=sflag, size = 0x4, scoped, tag = 'scoped memory for tpu_custom_call.1']
    #allocation4 [shape = 's32[1]{0}', space=sflag, size = 0x4, scoped, tag = 'scoped memory for tpu_custom_call.1']
    #allocation5 [shape = 'u8[4096]{0}', space=vmem, size = 0x1000, scoped, tag = 'output window, operand 0, single buffered']
    %6 = vsyncpa [#allocation3], 0
    %7 = vsyncpa [#allocation4], 0
    // Predicated region
    $region2: #{tpu_custom_call.1} parent=1 // pred_check
      _
    $region3: #{tpu_custom_call.1} parent=1 // pred_check_branch
      %9 = sbr.rel (0) target = $region5
    $region4: #{tpu_custom_call.1} parent=1 // pred_region
      %s11 = ssub.s32 128, 128
      %12 = vsyncadd [#allocation3], %s11
      %s14 = sshll.u32 [#allocation2], 4
      %s15 = int_to_ptr.vmem [resolvable:$true] %s14
      %17 = dma.hbm_to_vmem [thread:$0]  %s0, 128, %s15, [#allocation3]
    $region5: #{tpu_custom_call.1} parent=1 // pred_fallthru
      _
    // Predicated region
    $region6: #{tpu_custom_call.1} parent=1 // pred_check
      _
    $region7: #{tpu_custom_call.1} parent=1 // pred_check_branch
      %19 = sbr.rel (0) target = $region9
    $region8: #{tpu_custom_call.1} parent=1 // pred_region
      %20 = dma.done [#allocation3], 128
    $region9: #{tpu_custom_call.1} parent=1 // pred_fallthru
      _
    %v21 = vld [vmem:[#allocation2] sm:$0xff]
    %22 = vst [vmem:[#allocation5] sm:$0xff] %v21
    // Predicated region
    $region10: #{tpu_custom_call.1} parent=1 // pred_check
      _
    $region11: #{tpu_custom_call.1} parent=1 // pred_check_branch
      %24 = sbr.rel (0) target = $region13
    $region12: #{tpu_custom_call.1} parent=1 // pred_region
      %s26 = ssub.s32 128, 128
      %27 = vsyncadd [#allocation4], %s26
      %s29 = sshll.u32 [#allocation5], 4
      %s30 = int_to_ptr.vmem [resolvable:$true] %s29
      %32 = dma.vmem_to_hbm [thread:$0]  %s30, 128, %s1, [#allocation4]
    $region13: #{tpu_custom_call.1} parent=1 // pred_fallthru
      _
    // Predicated region
    $region14: #{tpu_custom_call.1} parent=1 // pred_check
      _
    $region15: #{tpu_custom_call.1} parent=1 // pred_check_branch
      %34 = sbr.rel (0) target = $region17
    $region16: #{tpu_custom_call.1} parent=1 // pred_region
      %35 = dma.done [#allocation4], 128
    $region17: #{tpu_custom_call.1} parent=1 // pred_fallthru
      _
    %36 = vsyncpa [#allocation3], 1
    %37 = vsyncpa [#allocation4], 1

// kernel: tpu_custom_call.1
$region0: #{tpu_custom_call.1}
  #allocation0 [shape = 'u32[]', space=smem, size = 0x4, offset = 0x4, fixed_abs, tag = 'smem constant byte address 0x4 - core index']
  #allocation1 [shape = 'u32[144,128]{1,0:T(1,128)}', space=vmem, size = 0x12000, scoped, tag = 'internal scratch']
  #allocation2 [shape = 'bf16[2,32,128]{2,1,0:T(8,128)(2,1)}', space=vmem, size = 0x4000, scoped, tag = 'scratch operand']
  #allocation3 [shape = 'bf16[2,32,128]{2,1,0:T(8,128)(2,1)}', space=vmem, size = 0x4000, scoped, tag = 'scratch operand']
  #allocation4 [shape = 'bf16[2,32,128]{2,1,0:T(8,128)(2,1)}', space=vmem, size = 0x4000, scoped, tag = 'scratch operand']
  #allocation5 [shape = 'bf16[2,32,128]{2,1,0:T(8,128)(2,1)}', space=vmem, size = 0x4000, scoped, tag = 'scratch operand']
  %s0 = inlined_call_operand.hbm [shape: bf16[2,32,256], index: 0, kind: input, shape index: {}]
  %s1 = inlined_call_operand.hbm [shape: bf16[2,32,256], index: 1, kind: input, shape index: {}]
  %s2 = inlined_call_operand.hbm [shape: f32[2,32,256], index: 2, kind: input, shape index: {}]
  %s3 = inlined_call_operand.hbm [shape: bf16[256,256], index: 3, kind: input, shape index: {}]
  %s4 = inlined_call_operand.hbm [shape: f32[1,256], index: 4, kind: input, shape index: {}]
  %s5 = inlined_call_operand.hbm [shape: bf16[256,512], index: 5, kind: input, shape index: {}]
  %s6 = inlined_call_operand.vmem [shape: f32[1,512], index: 6, kind: input, shape index: {}]
  %s7 = inlined_call_operand.hbm [shape: bf16[2,128,256], index: 7, kind: input, shape index: {}]
  %s8 = inlined_call_operand.hbm [shape: f32[1,256], index: 8, kind: input, shape index: {}]
  %s9 = inlined_call_operand.hbm [shape: f32[1,256], index: 9, kind: input, shape index: {}]
  %s10 = inlined_call_operand.vmem [shape: f32[1,256], index: 10, kind: input, shape index: {}]
  %s11 = inlined_call_operand.hbm [shape: bf16[256,256], index: 11, kind: input, shape index: {}]
  %s12 = inlined_call_operand.vmem [shape: f32[1,256], index: 12, kind: input, shape index: {}]
  %s13 = inlined_call_operand.hbm [shape: bf16[256,512], index: 13, kind: input, shape index: {}]
  %s14 = inlined_call_operand.vmem [shape: f32[1,512], index: 14, kind: input, shape index: {}]
  %s15 = inlined_call_operand.hbm [shape: bf16[2,128,256], index: 15, kind: input, shape index: {}]
  %s16 = inlined_call_operand.vmem [shape: f32[1,256], index: 16, kind: input, shape index: {}]
  %s17 = inlined_call_operand.vmem [shape: f32[1,256], index: 17, kind: input, shape index: {}]
  %s18 = inlined_call_operand.vmem [shape: f32[1,256], index: 18, kind: input, shape index: {}]
  %s19 = inlined_call_operand.hbm [shape: bf16[256,1024], index: 19, kind: input, shape index: {}]
  %s20 = inlined_call_operand.vmem [shape: f32[1,1024], index: 20, kind: input, shape index: {}]
  %s21 = inlined_call_operand.hbm [shape: bf16[1024,256], index: 21, kind: input, shape index: {}]
  %s22 = inlined_call_operand.vmem [shape: f32[1,256], index: 22, kind: input, shape index: {}]
  %s23 = inlined_call_operand.vmem [shape: f32[1,256], index: 23, kind: input, shape index: {}]
  %s24 = inlined_call_operand.vmem [shape: f32[1,256], index: 24, kind: input, shape index: {}]
  %s25 = inlined_call_operand.hbm [shape: f32[2,32,256], index: 25, kind: output, shape index: {}]
  %s26 = sld [smem:[#allocation0]]
  $region193: #{tpu_custom_call.1} parent=0
    _
  %s28 = ssub.s32 1, %s26
  %s29 = scalar_select 0, %s28, %s26
  $region1: #{tpu_custom_call.1} parent=0
    #allocation6 [shape = 'u8[32768]{0}', space=vmem, size = 0x8000, scoped, tag = 'input window, operand 0']
    #allocation7 [shape = 's32[2]{0}', space=sflag, size = 0x8, scoped, tag = 'scoped memory for tpu_custom_call.1']
    #allocation8 [shape = 's32[2]{0}', space=sflag, size = 0x8, scoped, tag = 'scoped memory for tpu_custom_call.1']
    #allocation9 [shape = 'u8[32768]{0}', space=vmem, size = 0x8000, scoped, tag = 'input window, operand 1']
    #allocation10 [shape = 's32[2]{0}', space=sflag, size = 0x8, scoped, tag = 'scoped memory for tpu_custom_call.1']
    #allocation11 [shape = 'u8[32768]{0}', space=vmem, size = 0x8000, scoped, tag = 'input window, operand 2']
    #allocation12 [shape = 'u8[131072]{0}', space=vmem, size = 0x20000, scoped, tag = 'input window, operand 3, single buffered']
    #allocation13 [shape = 's32[1]{0}', space=sflag, size = 0x4, scoped, tag = 'scoped memory for tpu_custom_call.1']
    #allocation14 [shape = 'u8[1024]{0}', space=vmem, size = 0x400, scoped, tag = 'input window, operand 4, single buffered']
    #allocation15 [shape = 'u8[262144]{0}', space=vmem, size = 0x40000, scoped, tag = 'input window, operand 5, single buffered']
    #allocation16 [shape = 's32[1]{0}', space=sflag, size = 0x4, scoped, tag = 'scoped memory for tpu_custom_call.1']
    #allocation17 [shape = 'u8[131072]{0}', space=vmem, size = 0x20000, scoped, tag = 'input window, operand 7, single buffered']
    #allocation18 [shape = 'u8[1024]{0}', space=vmem, size = 0x400, scoped, tag = 'input window, operand 8, single buffered']
    #allocation19 [shape = 's32[1]{0}', space=sflag, size = 0x4, scoped, tag = 'scoped memory for tpu_custom_call.1']
    #allocation20 [shape = 'u8[1024]{0}', space=vmem, size = 0x400, scoped, tag = 'input window, operand 9, single buffered']
    #allocation21 [shape = 'u8[131072]{0}', space=vmem, size = 0x20000, scoped, tag = 'input window, operand 11, single buffered']
    #allocation22 [shape = 's32[1]{0}', space=sflag, size = 0x4, scoped, tag = 'scoped memory for tpu_custom_call.1']
    #allocation23 [shape = 'u8[262144]{0}', space=vmem, size = 0x40000, scoped, tag = 'input window, operand 13, single buffered']
    #allocation24 [shape = 'u8[131072]{0}', space=vmem, size = 0x20000, scoped, tag = 'input window, operand 15, single buffered']
    #allocation25 [shape = 's32[1]{0}', space=sflag, size = 0x4, scoped, tag = 'scoped memory for tpu_custom_call.1']
    #allocation26 [shape = 'u8[524288]{0}', space=vmem, size = 0x80000, scoped, tag = 'input window, operand 19, single buffered']
    #allocation27 [shape = 'u8[524288]{0}', space=vmem, size = 0x80000, scoped, tag = 'input window, operand 21, single buffered']
    #allocation28 [shape = 's32[1]{0}', space=sflag, size = 0x4, scoped, tag = 'scoped memory for tpu_custom_call.1']
    #allocation29 [shape = 'u8[32768]{0}', space=vmem, size = 0x8000, scoped, tag = 'output window, operand 0']
    %30 = vsyncpa [#allocation7], 0
    %s31 = scalar_lea.sflag [#allocation7], 1
    %32 = vsyncpa %s31, 0
    %33 = vsyncpa [#allocation10], 0
    %s34 = scalar_lea.sflag [#allocation10], 1
    %35 = vsyncpa %s34, 0
    %36 = vsyncpa [#allocation13], 0
    %37 = vsyncpa [#allocation16], 0
    %38 = vsyncpa [#allocation19], 0
    %39 = vsyncpa [#allocation22], 0
    %40 = vsyncpa [#allocation25], 0
    %41 = vsyncpa [#allocation28], 0
    %42 = vsyncpa [#allocation8], 0
    %s43 = scalar_lea.sflag [#allocation8], 1
    %44 = vsyncpa %s43, 0
    loop: start=0, step=1, limit=6
    $region2: #{tpu_custom_call.1} parent=1 // loop_pre_header
      _
    $region3: #{tpu_custom_call.1} parent=1 // loop_header
      %s46 = sphi 0, %s50
      %p47 = scmp.ge.s32.totalorder %s46, 6
      %s53 = sphi 0, %s65
      %s54 = sphi 0, %s61
      %s55 = sphi 0, %s53
      %s56 = sphi 0, %s54
      %s57 = sphi 0, %s55
      %s58 = sphi 0, %s56
      %s68 = sphi 0, %s70
      %s71 = sphi 0, %s68
      %s72 = sphi 0, %s71
      %s88 = sphi 0, %s72
      %s94 = sphi 0, %s96
      %s97 = sphi 0, %s94
      %s98 = sphi 0, %s97
      %s114 = sphi 0, %s98
      %s122 = sphi 0, %s124
      %s125 = sphi 0, %s122
      %s126 = sphi 0, %s125
      %s142 = sphi 0, %s126
      %s146 = sphi 0, %s146
      %s148 = sphi 0, %s146
      %s149 = sphi 0, %s148
      %s163 = sphi 0, %s149
      %s167 = sphi 0, %s167
      %s169 = sphi 0, %s167
      %s170 = sphi 0, %s169
      %s184 = sphi 0, %s170
      %s188 = sphi 0, %s188
      %s190 = sphi 0, %s188
      %s191 = sphi 0, %s190
      %s205 = sphi 0, %s191
      %s209 = sphi 0, %s209
      %s211 = sphi 0, %s209
      %s212 = sphi 0, %s211
      %s226 = sphi 0, %s212
      %s230 = sphi 0, %s230
      %s232 = sphi 0, %s230
      %s233 = sphi 0, %s232
      %s247 = sphi 0, %s233
      %s251 = sphi 0, %s251
      %s253 = sphi 0, %s251
      %s254 = sphi 0, %s253
      %s268 = sphi 0, %s254
      %s272 = sphi 0, %s272
      %s274 = sphi 0, %s272
      %s275 = sphi 0, %s274
      %s289 = sphi 0, %s275
      %s293 = sphi 0, %s293
      %s295 = sphi 0, %s293
      %s296 = sphi 0, %s295
      %s310 = sphi 0, %s296
      %s314 = sphi 0, %s314
      %s316 = sphi 0, %s314
      %s317 = sphi 0, %s316
      %s331 = sphi 0, %s317
      %s335 = sphi 0, %s335
      %s337 = sphi 0, %s335
      %s338 = sphi 0, %s337
      %s352 = sphi 0, %s338
      %s356 = sphi 0, %s356
      %s358 = sphi 0, %s356
      %s359 = sphi 0, %s358
      %s373 = sphi 0, %s359
      %s377 = sphi 0, %s377
      %s379 = sphi 0, %s377
      %s380 = sphi 0, %s379
      %s394 = sphi 0, %s380
      %s398 = sphi 0, %s398
      %s400 = sphi 0, %s398
      %s401 = sphi 0, %s400
      %s415 = sphi 0, %s401
      %s419 = sphi 0, %s419
      %s421 = sphi 0, %s419
      %s422 = sphi 0, %s421
      %s436 = sphi 0, %s422
      %s440 = sphi 0, %s440
      %s442 = sphi 0, %s440
      %s443 = sphi 0, %s442
      %s457 = sphi 0, %s443
      %s461 = sphi 0, %s461
      %s463 = sphi 0, %s461
      %s464 = sphi 0, %s463
      %s478 = sphi 0, %s464
      %s482 = sphi 0, %s482
      %s484 = sphi 0, %s482
      %s485 = sphi 0, %s484
      %s499 = sphi 0, %s485
      %s503 = sphi 0, %s503
      %s505 = sphi 0, %s503
      %s506 = sphi 0, %s505
      %s520 = sphi 0, %s506
      %s524 = sphi 0, %s524
      %s526 = sphi 0, %s524
      %s527 = sphi 0, %s526
      %s541 = sphi 0, %s527
      %s545 = sphi 0, %s545
      %s547 = sphi 0, %s545
      %s548 = sphi 0, %s547
      %s562 = sphi 0, %s548
      %s566 = sphi 0, %s566
      %s568 = sphi 0, %s566
      %s569 = sphi 0, %s568
      %s583 = sphi 0, %s569
      %s587 = sphi 0, %s587
      %s589 = sphi 0, %s587
      %s590 = sphi 0, %s589
      %s604 = sphi 0, %s590
      %s612 = sphi 0, %s614
      %s615 = sphi 0, %s612
      %s616 = sphi 0, %s615
      %s632 = sphi 0, %s616
    $region4: #{tpu_custom_call.1} parent=1 // loop_header_branch
      %49 = sbr.rel (%p47) target = $region8
    $region5: #{tpu_custom_call.1} parent=1 // loop_body
      %s51 = ssub.s32 %s46, 1
      %s52 = ssub.s32 %s46, 2
      %s59 = sadd.s32 1, %s54
      %p60 = scmp.ge.s32.totalorder %s59, 2
      %s61 = scalar_select %p60, 0, %s59
      %s62 = sadd.s32 1, %s53
      %s63 = scalar_select %p60, %s62, %s53
      %p64 = scmp.ge.s32.totalorder %s63, 2
      %s65 = scalar_select %p64, 0, %s63
      %s66 = ssub.s32 %s53, %s65
      %p67 = scmp.eq.s32.totalorder %s66, 0
      %s69 = sadd.s32 %s68, 1
      %s70 = scalar_select %p67, %s68, %s69
      %p73 = pneg %p67
      %p74 = scmp.eq.s32.totalorder %s46, 3
      %p75 = por %p73, %p74
      %p76 = scmp.ne.s32.totalorder %s68, %s71
      %p77 = scmp.eq.s32.totalorder %s46, 0
      %p78 = por %p76, %p77
      %p79 = scmp.ne.s32.totalorder %s68, %s71
      %p80 = scmp.eq.s32.totalorder %s51, 3
      %p81 = por %p79, %p80
      %p82 = scmp.ne.s32.totalorder %s71, %s72
      %p83 = scmp.eq.s32.totalorder %s51, 0
      %p84 = por %p82, %p83
      %p85 = scmp.ne.s32.totalorder %s71, %s72
      %p86 = scmp.eq.s32.totalorder %s52, 3
      %p87 = por %p85, %p86
      %p89 = scmp.ne.s32.totalorder %s72, %s88
      %p90 = scmp.eq.s32.totalorder %s52, 0
      %p91 = por %p89, %p90
      %s92 = ssub.s32 %s53, %s65
      %p93 = scmp.eq.s32.totalorder %s92, 0
      %s95 = sadd.s32 %s94, 1
      %s96 = scalar_select %p93, %s94, %s95
      %p99 = pneg %p93
      %p100 = scmp.eq.s32.totalorder %s46, 3
      %p101 = por %p99, %p100
      %p102 = scmp.ne.s32.totalorder %s94, %s97
      %p103 = scmp.eq.s32.totalorder %s46, 0
      %p104 = por %p102, %p103
      %p105 = scmp.ne.s32.totalorder %s94, %s97
      %p106 = scmp.eq.s32.totalorder %s51, 3
      %p107 = por %p105, %p106
      %p108 = scmp.ne.s32.totalorder %s97, %s98
      %p109 = scmp.eq.s32.totalorder %s51, 0
      %p110 = por %p108, %p109
      %p111 = scmp.ne.s32.totalorder %s97, %s98
      %p112 = scmp.eq.s32.totalorder %s52, 3
      %p113 = por %p111, %p112
      %p115 = scmp.ne.s32.totalorder %s98, %s114
      %p116 = scmp.eq.s32.totalorder %s52, 0
      %p117 = por %p115, %p116
      %s118 = ssub.s32 %s53, %s65
      %s119 = ssub.s32 %s54, %s61
      %s120 = sor.u32 %s118, %s119
      %p121 = scmp.eq.s32.totalorder %s120, 0
      %s123 = sadd.s32 %s122, 1
      %s124 = scalar_select %p121, %s122, %s123
      %p127 = pneg %p121
      %p128 = scmp.eq.s32.totalorder %s46, 3
      %p129 = por %p127, %p128
      %p130 = scmp.ne.s32.totalorder %s122, %s125
      %p131 = scmp.eq.s32.totalorder %s46, 0
      %p132 = por %p130, %p131
      %p133 = scmp.ne.s32.totalorder %s122, %s125
      %p134 = scmp.eq.s32.totalorder %s51, 3
      %p135 = por %p133, %p134
      %p136 = scmp.ne.s32.totalorder %s125, %s126
      %p137 = scmp.eq.s32.totalorder %s51, 0
      %p138 = por %p136, %p137
      %p139 = scmp.ne.s32.totalorder %s125, %s126
      %p140 = scmp.eq.s32.totalorder %s52, 3
      %p141 = por %p139, %p140
      %p143 = scmp.ne.s32.totalorder %s126, %s142
      %p144 = scmp.eq.s32.totalorder %s52, 0
      %p145 = por %p143, %p144
      %s147 = sadd.s32 %s146, 1
      %p150 = scmp.eq.s32.totalorder %s46, 3
      %p151 = scmp.ne.s32.totalorder %s146, %s148
      %p152 = scmp.eq.s32.totalorder %s46, 0
      %p153 = por %p151, %p152
      %p154 = scmp.ne.s32.totalorder %s146, %s148
      %p155 = scmp.eq.s32.totalorder %s51, 3
      %p156 = por %p154, %p155
      %p157 = scmp.ne.s32.totalorder %s148, %s149
      %p158 = scmp.eq.s32.totalorder %s51, 0
      %p159 = por %p157, %p158
      %p160 = scmp.ne.s32.totalorder %s148, %s149
      %p161 = scmp.eq.s32.totalorder %s52, 3
      %p162 = por %p160, %p161
      %p164 = scmp.ne.s32.totalorder %s149, %s163
      %p165 = scmp.eq.s32.totalorder %s52, 0
      %p166 = por %p164, %p165
      %s168 = sadd.s32 %s167, 1
      %p171 = scmp.eq.s32.totalorder %s46, 3
      %p172 = scmp.ne.s32.totalorder %s167, %s169
      %p173 = scmp.eq.s32.totalorder %s46, 0
      %p174 = por %p172, %p173
      %p175 = scmp.ne.s32.totalorder %s167, %s169
      %p176 = scmp.eq.s32.totalorder %s51, 3
      %p177 = por %p175, %p176
      %p178 = scmp.ne.s32.totalorder %s169, %s170
      %p179 = scmp.eq.s32.totalorder %s51, 0
      %p180 = por %p178, %p179
      %p181 = scmp.ne.s32.totalorder %s169, %s170
      %p182 = scmp.eq.s32.totalorder %s52, 3
      %p183 = por %p181, %p182
      %p185 = scmp.ne.s32.totalorder %s170, %s184
      %p186 = scmp.eq.s32.totalorder %s52, 0
      %p187 = por %p185, %p186
      %s189 = sadd.s32 %s188, 1
      %p192 = scmp.eq.s32.totalorder %s46, 3
      %p193 = scmp.ne.s32.totalorder %s188, %s190
      %p194 = scmp.eq.s32.totalorder %s46, 0
      %p195 = por %p193, %p194
      %p196 = scmp.ne.s32.totalorder %s188, %s190
      %p197 = scmp.eq.s32.totalorder %s51, 3
      %p198 = por %p196, %p197
      %p199 = scmp.ne.s32.totalorder %s190, %s191
      %p200 = scmp.eq.s32.totalorder %s51, 0
      %p201 = por %p199, %p200
      %p202 = scmp.ne.s32.totalorder %s190, %s191
      %p203 = scmp.eq.s32.totalorder %s52, 3
      %p204 = por %p202, %p203
      %p206 = scmp.ne.s32.totalorder %s191, %s205
      %p207 = scmp.eq.s32.totalorder %s52, 0
      %p208 = por %p206, %p207
      %s210 = sadd.s32 %s209, 1
      %p213 = scmp.eq.s32.totalorder %s46, 3
      %p214 = scmp.ne.s32.totalorder %s209, %s211
      %p215 = scmp.eq.s32.totalorder %s46, 0
      %p216 = por %p214, %p215
      %p217 = scmp.ne.s32.totalorder %s209, %s211
      %p218 = scmp.eq.s32.totalorder %s51, 3
      %p219 = por %p217, %p218
      %p220 = scmp.ne.s32.totalorder %s211, %s212
      %p221 = scmp.eq.s32.totalorder %s51, 0
      %p222 = por %p220, %p221
      %p223 = scmp.ne.s32.totalorder %s211, %s212
      %p224 = scmp.eq.s32.totalorder %s52, 3
      %p225 = por %p223, %p224
      %p227 = scmp.ne.s32.totalorder %s212, %s226
      %p228 = scmp.eq.s32.totalorder %s52, 0
      %p229 = por %p227, %p228
      %s231 = sadd.s32 %s230, 1
      %p234 = scmp.eq.s32.totalorder %s46, 3
      %p235 = scmp.ne.s32.totalorder %s230, %s232
      %p236 = scmp.eq.s32.totalorder %s46, 0
      %p237 = por %p235, %p236
      %p238 = scmp.ne.s32.totalorder %s230, %s232
      %p239 = scmp.eq.s32.totalorder %s51, 3
      %p240 = por %p238, %p239
      %p241 = scmp.ne.s32.totalorder %s232, %s233
      %p242 = scmp.eq.s32.totalorder %s51, 0
      %p243 = por %p241, %p242
      %p244 = scmp.ne.s32.totalorder %s232, %s233
      %p245 = scmp.eq.s32.totalorder %s52, 3
      %p246 = por %p244, %p245
      %p248 = scmp.ne.s32.totalorder %s233, %s247
      %p249 = scmp.eq.s32.totalorder %s52, 0
      %p250 = por %p248, %p249
      %s252 = sadd.s32 %s251, 1
      %p255 = scmp.eq.s32.totalorder %s46, 3
      %p256 = scmp.ne.s32.totalorder %s251, %s253
      %p257 = scmp.eq.s32.totalorder %s46, 0
      %p258 = por %p256, %p257
      %p259 = scmp.ne.s32.totalorder %s251, %s253
      %p260 = scmp.eq.s32.totalorder %s51, 3
      %p261 = por %p259, %p260
      %p262 = scmp.ne.s32.totalorder %s253, %s254
      %p263 = scmp.eq.s32.totalorder %s51, 0
      %p264 = por %p262, %p263
      %p265 = scmp.ne.s32.totalorder %s253, %s254
      %p266 = scmp.eq.s32.totalorder %s52, 3
      %p267 = por %p265, %p266
      %p269 = scmp.ne.s32.totalorder %s254, %s268
      %p270 = scmp.eq.s32.totalorder %s52, 0
      %p271 = por %p269, %p270
      %s273 = sadd.s32 %s272, 1
      %p276 = scmp.eq.s32.totalorder %s46, 3
      %p277 = scmp.ne.s32.totalorder %s272, %s274
      %p278 = scmp.eq.s32.totalorder %s46, 0
      %p279 = por %p277, %p278
      %p280 = scmp.ne.s32.totalorder %s272, %s274
      %p281 = scmp.eq.s32.totalorder %s51, 3
      %p282 = por %p280, %p281
      %p283 = scmp.ne.s32.totalorder %s274, %s275
      %p284 = scmp.eq.s32.totalorder %s51, 0
      %p285 = por %p283, %p284
      %p286 = scmp.ne.s32.totalorder %s274, %s275
      %p287 = scmp.eq.s32.totalorder %s52, 3
      %p288 = por %p286, %p287
      %p290 = scmp.ne.s32.totalorder %s275, %s289
      %p291 = scmp.eq.s32.totalorder %s52, 0
      %p292 = por %p290, %p291
      %s294 = sadd.s32 %s293, 1
      %p297 = scmp.eq.s32.totalorder %s46, 3
      %p298 = scmp.ne.s32.totalorder %s293, %s295
      %p299 = scmp.eq.s32.totalorder %s46, 0
      %p300 = por %p298, %p299
      %p301 = scmp.ne.s32.totalorder %s293, %s295
      %p302 = scmp.eq.s32.totalorder %s51, 3
      %p303 = por %p301, %p302
      %p304 = scmp.ne.s32.totalorder %s295, %s296
      %p305 = scmp.eq.s32.totalorder %s51, 0
      %p306 = por %p304, %p305
      %p307 = scmp.ne.s32.totalorder %s295, %s296
      %p308 = scmp.eq.s32.totalorder %s52, 3
      %p309 = por %p307, %p308
      %p311 = scmp.ne.s32.totalorder %s296, %s310
      %p312 = scmp.eq.s32.totalorder %s52, 0
      %p313 = por %p311, %p312
      %s315 = sadd.s32 %s314, 1
      %p318 = scmp.eq.s32.totalorder %s46, 3
      %p319 = scmp.ne.s32.totalorder %s314, %s316
      %p320 = scmp.eq.s32.totalorder %s46, 0
      %p321 = por %p319, %p320
      %p322 = scmp.ne.s32.totalorder %s314, %s316
      %p323 = scmp.eq.s32.totalorder %s51, 3
      %p324 = por %p322, %p323
      %p325 = scmp.ne.s32.totalorder %s316, %s317
      %p326 = scmp.eq.s32.totalorder %s51, 0
      %p327 = por %p325, %p326
      %p328 = scmp.ne.s32.totalorder %s316, %s317
      %p329 = scmp.eq.s32.totalorder %s52, 3
      %p330 = por %p328, %p329
      %p332 = scmp.ne.s32.totalorder %s317, %s331
      %p333 = scmp.eq.s32.totalorder %s52, 0
      %p334 = por %p332, %p333
      %s336 = sadd.s32 %s335, 1
      %p339 = scmp.eq.s32.totalorder %s46, 3
      %p340 = scmp.ne.s32.totalorder %s335, %s337
      %p341 = scmp.eq.s32.totalorder %s46, 0
      %p342 = por %p340, %p341
      %p343 = scmp.ne.s32.totalorder %s335, %s337
      %p344 = scmp.eq.s32.totalorder %s51, 3
      %p345 = por %p343, %p344
      %p346 = scmp.ne.s32.totalorder %s337, %s338
      %p347 = scmp.eq.s32.totalorder %s51, 0
      %p348 = por %p346, %p347
      %p349 = scmp.ne.s32.totalorder %s337, %s338
      %p350 = scmp.eq.s32.totalorder %s52, 3
      %p351 = por %p349, %p350
      %p353 = scmp.ne.s32.totalorder %s338, %s352
      %p354 = scmp.eq.s32.totalorder %s52, 0
      %p355 = por %p353, %p354
      %s357 = sadd.s32 %s356, 1
      %p360 = scmp.eq.s32.totalorder %s46, 3
      %p361 = scmp.ne.s32.totalorder %s356, %s358
      %p362 = scmp.eq.s32.totalorder %s46, 0
      %p363 = por %p361, %p362
      %p364 = scmp.ne.s32.totalorder %s356, %s358
      %p365 = scmp.eq.s32.totalorder %s51, 3
      %p366 = por %p364, %p365
      %p367 = scmp.ne.s32.totalorder %s358, %s359
      %p368 = scmp.eq.s32.totalorder %s51, 0
      %p369 = por %p367, %p368
      %p370 = scmp.ne.s32.totalorder %s358, %s359
      %p371 = scmp.eq.s32.totalorder %s52, 3
      %p372 = por %p370, %p371
      %p374 = scmp.ne.s32.totalorder %s359, %s373
      %p375 = scmp.eq.s32.totalorder %s52, 0
      %p376 = por %p374, %p375
      %s378 = sadd.s32 %s377, 1
      %p381 = scmp.eq.s32.totalorder %s46, 3
      %p382 = scmp.ne.s32.totalorder %s377, %s379
      %p383 = scmp.eq.s32.totalorder %s46, 0
      %p384 = por %p382, %p383
      %p385 = scmp.ne.s32.totalorder %s377, %s379
      %p386 = scmp.eq.s32.totalorder %s51, 3
      %p387 = por %p385, %p386
      %p388 = scmp.ne.s32.totalorder %s379, %s380
      %p389 = scmp.eq.s32.totalorder %s51, 0
      %p390 = por %p388, %p389
      %p391 = scmp.ne.s32.totalorder %s379, %s380
      %p392 = scmp.eq.s32.totalorder %s52, 3
      %p393 = por %p391, %p392
      %p395 = scmp.ne.s32.totalorder %s380, %s394
      %p396 = scmp.eq.s32.totalorder %s52, 0
      %p397 = por %p395, %p396
      %s399 = sadd.s32 %s398, 1
      %p402 = scmp.eq.s32.totalorder %s46, 3
      %p403 = scmp.ne.s32.totalorder %s398, %s400
      %p404 = scmp.eq.s32.totalorder %s46, 0
      %p405 = por %p403, %p404
      %p406 = scmp.ne.s32.totalorder %s398, %s400
      %p407 = scmp.eq.s32.totalorder %s51, 3
      %p408 = por %p406, %p407
      %p409 = scmp.ne.s32.totalorder %s400, %s401
      %p410 = scmp.eq.s32.totalorder %s51, 0
      %p411 = por %p409, %p410
      %p412 = scmp.ne.s32.totalorder %s400, %s401
      %p413 = scmp.eq.s32.totalorder %s52, 3
      %p414 = por %p412, %p413
      %p416 = scmp.ne.s32.totalorder %s401, %s415
      %p417 = scmp.eq.s32.totalorder %s52, 0
      %p418 = por %p416, %p417
      %s420 = sadd.s32 %s419, 1
      %p423 = scmp.eq.s32.totalorder %s46, 3
      %p424 = scmp.ne.s32.totalorder %s419, %s421
      %p425 = scmp.eq.s32.totalorder %s46, 0
      %p426 = por %p424, %p425
      %p427 = scmp.ne.s32.totalorder %s419, %s421
      %p428 = scmp.eq.s32.totalorder %s51, 3
      %p429 = por %p427, %p428
      %p430 = scmp.ne.s32.totalorder %s421, %s422
      %p431 = scmp.eq.s32.totalorder %s51, 0
      %p432 = por %p430, %p431
      %p433 = scmp.ne.s32.totalorder %s421, %s422
      %p434 = scmp.eq.s32.totalorder %s52, 3
      %p435 = por %p433, %p434
      %p437 = scmp.ne.s32.totalorder %s422, %s436
      %p438 = scmp.eq.s32.totalorder %s52, 0
      %p439 = por %p437, %p438
      %s441 = sadd.s32 %s440, 1
      %p444 = scmp.eq.s32.totalorder %s46, 3
      %p445 = scmp.ne.s32.totalorder %s440, %s442
      %p446 = scmp.eq.s32.totalorder %s46, 0
      %p447 = por %p445, %p446
      %p448 = scmp.ne.s32.totalorder %s440, %s442
      %p449 = scmp.eq.s32.totalorder %s51, 3
      %p450 = por %p448, %p449
      %p451 = scmp.ne.s32.totalorder %s442, %s443
      %p452 = scmp.eq.s32.totalorder %s51, 0
      %p453 = por %p451, %p452
      %p454 = scmp.ne.s32.totalorder %s442, %s443
      %p455 = scmp.eq.s32.totalorder %s52, 3
      %p456 = por %p454, %p455
      %p458 = scmp.ne.s32.totalorder %s443, %s457
      %p459 = scmp.eq.s32.totalorder %s52, 0
      %p460 = por %p458, %p459
      %s462 = sadd.s32 %s461, 1
      %p465 = scmp.eq.s32.totalorder %s46, 3
      %p466 = scmp.ne.s32.totalorder %s461, %s463
      %p467 = scmp.eq.s32.totalorder %s46, 0
      %p468 = por %p466, %p467
      %p469 = scmp.ne.s32.totalorder %s461, %s463
      %p470 = scmp.eq.s32.totalorder %s51, 3
      %p471 = por %p469, %p470
      %p472 = scmp.ne.s32.totalorder %s463, %s464
      %p473 = scmp.eq.s32.totalorder %s51, 0
      %p474 = por %p472, %p473
      %p475 = scmp.ne.s32.totalorder %s463, %s464
      %p476 = scmp.eq.s32.totalorder %s52, 3
      %p477 = por %p475, %p476
      %p479 = scmp.ne.s32.totalorder %s464, %s478
      %p480 = scmp.eq.s32.totalorder %s52, 0
      %p481 = por %p479, %p480
      %s483 = sadd.s32 %s482, 1
      %p486 = scmp.eq.s32.totalorder %s46, 3
      %p487 = scmp.ne.s32.totalorder %s482, %s484
      %p488 = scmp.eq.s32.totalorder %s46, 0
      %p489 = por %p487, %p488
      %p490 = scmp.ne.s32.totalorder %s482, %s484
      %p491 = scmp.eq.s32.totalorder %s51, 3
      %p492 = por %p490, %p491
      %p493 = scmp.ne.s32.totalorder %s484, %s485
      %p494 = scmp.eq.s32.totalorder %s51, 0
      %p495 = por %p493, %p494
      %p496 = scmp.ne.s32.totalorder %s484, %s485
      %p497 = scmp.eq.s32.totalorder %s52, 3
      %p498 = por %p496, %p497
      %p500 = scmp.ne.s32.totalorder %s485, %s499
      %p501 = scmp.eq.s32.totalorder %s52, 0
      %p502 = por %p500, %p501
      %s504 = sadd.s32 %s503, 1
      %p507 = scmp.eq.s32.totalorder %s46, 3
      %p508 = scmp.ne.s32.totalorder %s503, %s505
      %p509 = scmp.eq.s32.totalorder %s46, 0
      %p510 = por %p508, %p509
      %p511 = scmp.ne.s32.totalorder %s503, %s505
      %p512 = scmp.eq.s32.totalorder %s51, 3
      %p513 = por %p511, %p512
      %p514 = scmp.ne.s32.totalorder %s505, %s506
      %p515 = scmp.eq.s32.totalorder %s51, 0
      %p516 = por %p514, %p515
      %p517 = scmp.ne.s32.totalorder %s505, %s506
      %p518 = scmp.eq.s32.totalorder %s52, 3
      %p519 = por %p517, %p518
      %p521 = scmp.ne.s32.totalorder %s506, %s520
      %p522 = scmp.eq.s32.totalorder %s52, 0
      %p523 = por %p521, %p522
      %s525 = sadd.s32 %s524, 1
      %p528 = scmp.eq.s32.totalorder %s46, 3
      %p529 = scmp.ne.s32.totalorder %s524, %s526
      %p530 = scmp.eq.s32.totalorder %s46, 0
      %p531 = por %p529, %p530
      %p532 = scmp.ne.s32.totalorder %s524, %s526
      %p533 = scmp.eq.s32.totalorder %s51, 3
      %p534 = por %p532, %p533
      %p535 = scmp.ne.s32.totalorder %s526, %s527
      %p536 = scmp.eq.s32.totalorder %s51, 0
      %p537 = por %p535, %p536
      %p538 = scmp.ne.s32.totalorder %s526, %s527
      %p539 = scmp.eq.s32.totalorder %s52, 3
      %p540 = por %p538, %p539
      %p542 = scmp.ne.s32.totalorder %s527, %s541
      %p543 = scmp.eq.s32.totalorder %s52, 0
      %p544 = por %p542, %p543
      %s546 = sadd.s32 %s545, 1
      %p549 = scmp.eq.s32.totalorder %s46, 3
      %p550 = scmp.ne.s32.totalorder %s545, %s547
      %p551 = scmp.eq.s32.totalorder %s46, 0
      %p552 = por %p550, %p551
      %p553 = scmp.ne.s32.totalorder %s545, %s547
      %p554 = scmp.eq.s32.totalorder %s51, 3
      %p555 = por %p553, %p554
      %p556 = scmp.ne.s32.totalorder %s547, %s548
      %p557 = scmp.eq.s32.totalorder %s51, 0
      %p558 = por %p556, %p557
      %p559 = scmp.ne.s32.totalorder %s547, %s548
      %p560 = scmp.eq.s32.totalorder %s52, 3
      %p561 = por %p559, %p560
      %p563 = scmp.ne.s32.totalorder %s548, %s562
      %p564 = scmp.eq.s32.totalorder %s52, 0
      %p565 = por %p563, %p564
      %s567 = sadd.s32 %s566, 1
      %p570 = scmp.eq.s32.totalorder %s46, 3
      %p571 = scmp.ne.s32.totalorder %s566, %s568
      %p572 = scmp.eq.s32.totalorder %s46, 0
      %p573 = por %p571, %p572
      %p574 = scmp.ne.s32.totalorder %s566, %s568
      %p575 = scmp.eq.s32.totalorder %s51, 3
      %p576 = por %p574, %p575
      %p577 = scmp.ne.s32.totalorder %s568, %s569
      %p578 = scmp.eq.s32.totalorder %s51, 0
      %p579 = por %p577, %p578
      %p580 = scmp.ne.s32.totalorder %s568, %s569
      %p581 = scmp.eq.s32.totalorder %s52, 3
      %p582 = por %p580, %p581
      %p584 = scmp.ne.s32.totalorder %s569, %s583
      %p585 = scmp.eq.s32.totalorder %s52, 0
      %p586 = por %p584, %p585
      %s588 = sadd.s32 %s587, 1
      %p591 = scmp.eq.s32.totalorder %s46, 3
      %p592 = scmp.ne.s32.totalorder %s587, %s589
      %p593 = scmp.eq.s32.totalorder %s46, 0
      %p594 = por %p592, %p593
      %p595 = scmp.ne.s32.totalorder %s587, %s589
      %p596 = scmp.eq.s32.totalorder %s51, 3
      %p597 = por %p595, %p596
      %p598 = scmp.ne.s32.totalorder %s589, %s590
      %p599 = scmp.eq.s32.totalorder %s51, 0
      %p600 = por %p598, %p599
      %p601 = scmp.ne.s32.totalorder %s589, %s590
      %p602 = scmp.eq.s32.totalorder %s52, 3
      %p603 = por %p601, %p602
      %p605 = scmp.ne.s32.totalorder %s590, %s604
      %p606 = scmp.eq.s32.totalorder %s52, 0
      %p607 = por %p605, %p606
      %s608 = ssub.s32 %s53, %s65
      %s609 = ssub.s32 %s54, %s61
      %s610 = sor.u32 %s608, %s609
      %p611 = scmp.eq.s32.totalorder %s610, 0
      %s613 = sadd.s32 %s612, 1
      %s614 = scalar_select %p611, %s612, %s613
      %p617 = pneg %p611
      %p618 = scmp.eq.s32.totalorder %s46, 3
      %p619 = por %p617, %p618
      %p620 = scmp.ne.s32.totalorder %s612, %s615
      %p621 = scmp.eq.s32.totalorder %s46, 0
      %p622 = por %p620, %p621
      %p623 = scmp.ne.s32.totalorder %s612, %s615
      %p624 = scmp.eq.s32.totalorder %s51, 3
      %p625 = por %p623, %p624
      %p626 = scmp.ne.s32.totalorder %s615, %s616
      %p627 = scmp.eq.s32.totalorder %s51, 0
      %p628 = por %p626, %p627
      %p629 = scmp.ne.s32.totalorder %s615, %s616
      %p630 = scmp.eq.s32.totalorder %s52, 3
      %p631 = por %p629, %p630
      %p633 = scmp.ne.s32.totalorder %s616, %s632
      %p634 = scmp.eq.s32.totalorder %s52, 0
      %p635 = por %p633, %p634
      %p636 = scmp.le.s32.totalorder 1, %s46
      %p637 = scmp.lt.s32.totalorder %s46, 5
      %p638 = pnand %p636, %p637
      %p639 = pneg %p638
      // Predicated region
      $region9: #{tpu_custom_call.1} parent=5 // pred_check
        _
      $region10: #{tpu_custom_call.1} parent=5 // pred_check_branch
        %641 = sbr.rel (%p638) target = $region12
      $region11: #{tpu_custom_call.1} parent=5 // pred_region
        %s642 = ssub.s32 %s46, 1
        // Predicated region
        $region13: #{tpu_custom_call.1} parent=11 // pred_check
          %p643 = pneg %p159
        $region14: #{tpu_custom_call.1} parent=11 // pred_check_branch
          %645 = sbr.rel (%p643) target = $region16
        $region15: #{tpu_custom_call.1} parent=11 // pred_region
          %s647 = ssub.s32 4096, 4096
          %648 = vsyncadd [#allocation13], %s647
          %s649 = sshll.u32 [#allocation12], 4
          %s650 = int_to_ptr.vmem [resolvable:$true] %s649
          %655 = dma.hbm_to_vmem [thread:$0]  %s3, 4096, %s650, [#allocation13], 128, 128, 8
        $region16: #{tpu_custom_call.1} parent=11 // pred_fallthru
          _
        // Predicated region
        $region17: #{tpu_custom_call.1} parent=11 // pred_check
          %p656 = pneg %p180
        $region18: #{tpu_custom_call.1} parent=11 // pred_check_branch
          %658 = sbr.rel (%p656) target = $region20
        $region19: #{tpu_custom_call.1} parent=11 // pred_region
          %s660 = ssub.s32 32, 32
          %661 = vsyncadd [#allocation13], %s660
          %s663 = sshll.u32 [#allocation14], 4
          %s664 = int_to_ptr.vmem [resolvable:$true] %s663
          %666 = dma.hbm_to_vmem [thread:$0]  %s4, 32, %s664, [#allocation13]
        $region20: #{tpu_custom_call.1} parent=11 // pred_fallthru
          _
        // Predicated region
        $region21: #{tpu_custom_call.1} parent=11 // pred_check
          %p667 = pneg %p201
        $region22: #{tpu_custom_call.1} parent=11 // pred_check_branch
          %669 = sbr.rel (%p667) target = $region24
        $region23: #{tpu_custom_call.1} parent=11 // pred_region
          %s671 = ssub.s32 8192, 8192
          %672 = vsyncadd [#allocation16], %s671
          %s673 = sshll.u32 [#allocation15], 4
          %s674 = int_to_ptr.vmem [resolvable:$true] %s673
          %679 = dma.hbm_to_vmem [thread:$0]  %s5, 8192, %s674, [#allocation16], 256, 256, 16
        $region24: #{tpu_custom_call.1} parent=11 // pred_fallthru
          _
        // Predicated region
        $region25: #{tpu_custom_call.1} parent=11 // pred_check
          %p680 = pneg %p222
        $region26: #{tpu_custom_call.1} parent=11 // pred_check_branch
          %682 = sbr.rel (%p680) target = $region28
        $region27: #{tpu_custom_call.1} parent=11 // pred_region
          _
        $region28: #{tpu_custom_call.1} parent=11 // pred_fallthru
          _
        // Predicated region
        $region29: #{tpu_custom_call.1} parent=11 // pred_check
          %p683 = pneg %p243
        $region30: #{tpu_custom_call.1} parent=11 // pred_check_branch
          %685 = sbr.rel (%p683) target = $region32
        $region31: #{tpu_custom_call.1} parent=11 // pred_region
          %s687 = ssub.s32 4096, 4096
          %688 = vsyncadd [#allocation16], %s687
          %s689 = sshll.u32 [#allocation17], 4
          %s690 = int_to_ptr.vmem [resolvable:$true] %s689
          %695 = dma.hbm_to_vmem [thread:$0]  %s7, 4096, %s690, [#allocation16], 128, 128, 8
        $region32: #{tpu_custom_call.1} parent=11 // pred_fallthru
          _
        // Predicated region
        $region33: #{tpu_custom_call.1} parent=11 // pred_check
          %p696 = pneg %p264
        $region34: #{tpu_custom_call.1} parent=11 // pred_check_branch
          %698 = sbr.rel (%p696) target = $region36
        $region35: #{tpu_custom_call.1} parent=11 // pred_region
          %s700 = ssub.s32 32, 32
          %701 = vsyncadd [#allocation19], %s700
          %s703 = sshll.u32 [#allocation18], 4
          %s704 = int_to_ptr.vmem [resolvable:$true] %s703
          %706 = dma.hbm_to_vmem [thread:$0]  %s8, 32, %s704, [#allocation19]
        $region36: #{tpu_custom_call.1} parent=11 // pred_fallthru
          _
        // Predicated region
        $region37: #{tpu_custom_call.1} parent=11 // pred_check
          %p707 = pneg %p285
        $region38: #{tpu_custom_call.1} parent=11 // pred_check_branch
          %709 = sbr.rel (%p707) target = $region40
        $region39: #{tpu_custom_call.1} parent=11 // pred_region
          %s711 = ssub.s32 32, 32
          %712 = vsyncadd [#allocation19], %s711
          %s714 = sshll.u32 [#allocation20], 4
          %s715 = int_to_ptr.vmem [resolvable:$true] %s714
          %717 = dma.hbm_to_vmem [thread:$0]  %s9, 32, %s715, [#allocation19]
        $region40: #{tpu_custom_call.1} parent=11 // pred_fallthru
          _
        // Predicated region
        $region41: #{tpu_custom_call.1} parent=11 // pred_check
          %p718 = pneg %p306
        $region42: #{tpu_custom_call.1} parent=11 // pred_check_branch
          %720 = sbr.rel (%p718) target = $region44
        $region43: #{tpu_custom_call.1} parent=11 // pred_region
          _
        $region44: #{tpu_custom_call.1} parent=11 // pred_fallthru
          _
        // Predicated region
        $region45: #{tpu_custom_call.1} parent=11 // pred_check
          %p721 = pneg %p327
        $region46: #{tpu_custom_call.1} parent=11 // pred_check_branch
          %723 = sbr.rel (%p721) target = $region48
        $region47: #{tpu_custom_call.1} parent=11 // pred_region
          %s725 = ssub.s32 4096, 4096
          %726 = vsyncadd [#allocation22], %s725
          %s727 = sshll.u32 [#allocation21], 4
          %s728 = int_to_ptr.vmem [resolvable:$true] %s727
          %733 = dma.hbm_to_vmem [thread:$0]  %s11, 4096, %s728, [#allocation22], 128, 128, 8
        $region48: #{tpu_custom_call.1} parent=11 // pred_fallthru
          _
        // Predicated region
        $region49: #{tpu_custom_call.1} parent=11 // pred_check
          %p734 = pneg %p348
        $region50: #{tpu_custom_call.1} parent=11 // pred_check_branch
          %736 = sbr.rel (%p734) target = $region52
        $region51: #{tpu_custom_call.1} parent=11 // pred_region
          _
        $region52: #{tpu_custom_call.1} parent=11 // pred_fallthru
          _
        // Predicated region
        $region53: #{tpu_custom_call.1} parent=11 // pred_check
          %p737 = pneg %p369
        $region54: #{tpu_custom_call.1} parent=11 // pred_check_branch
          %739 = sbr.rel (%p737) target = $region56
        $region55: #{tpu_custom_call.1} parent=11 // pred_region
          %s741 = ssub.s32 8192, 8192
          %742 = vsyncadd [#allocation22], %s741
          %s743 = sshll.u32 [#allocation23], 4
          %s744 = int_to_ptr.vmem [resolvable:$true] %s743
          %749 = dma.hbm_to_vmem [thread:$0]  %s13, 8192, %s744, [#allocation22], 256, 256, 16
        $region56: #{tpu_custom_call.1} parent=11 // pred_fallthru
          _
        // Predicated region
        $region57: #{tpu_custom_call.1} parent=11 // pred_check
          %p750 = pneg %p390
        $region58: #{tpu_custom_call.1} parent=11 // pred_check_branch
          %752 = sbr.rel (%p750) target = $region60
        $region59: #{tpu_custom_call.1} parent=11 // pred_region
          _
        $region60: #{tpu_custom_call.1} parent=11 // pred_fallthru
          _
        // Predicated region
        $region61: #{tpu_custom_call.1} parent=11 // pred_check
          %p753 = pneg %p411
        $region62: #{tpu_custom_call.1} parent=11 // pred_check_branch
          %755 = sbr.rel (%p753) target = $region64
        $region63: #{tpu_custom_call.1} parent=11 // pred_region
          %s757 = ssub.s32 4096, 4096
          %758 = vsyncadd [#allocation25], %s757
          %s759 = sshll.u32 [#allocation24], 4
          %s760 = int_to_ptr.vmem [resolvable:$true] %s759
          %765 = dma.hbm_to_vmem [thread:$0]  %s15, 4096, %s760, [#allocation25], 128, 128, 8
        $region64: #{tpu_custom_call.1} parent=11 // pred_fallthru
          _
        // Predicated region
        $region65: #{tpu_custom_call.1} parent=11 // pred_check
          %p766 = pneg %p432
        $region66: #{tpu_custom_call.1} parent=11 // pred_check_branch
          %768 = sbr.rel (%p766) target = $region68
        $region67: #{tpu_custom_call.1} parent=11 // pred_region
          _
        $region68: #{tpu_custom_call.1} parent=11 // pred_fallthru
          _
        // Predicated region
        $region69: #{tpu_custom_call.1} parent=11 // pred_check
          %p769 = pneg %p453
        $region70: #{tpu_custom_call.1} parent=11 // pred_check_branch
          %771 = sbr.rel (%p769) target = $region72
        $region71: #{tpu_custom_call.1} parent=11 // pred_region
          _
        $region72: #{tpu_custom_call.1} parent=11 // pred_fallthru
          _
        // Predicated region
        $region73: #{tpu_custom_call.1} parent=11 // pred_check
          %p772 = pneg %p474
        $region74: #{tpu_custom_call.1} parent=11 // pred_check_branch
          %774 = sbr.rel (%p772) target = $region76
        $region75: #{tpu_custom_call.1} parent=11 // pred_region
          _
        $region76: #{tpu_custom_call.1} parent=11 // pred_fallthru
          _
        // Predicated region
        $region77: #{tpu_custom_call.1} parent=11 // pred_check
          %p775 = pneg %p495
        $region78: #{tpu_custom_call.1} parent=11 // pred_check_branch
          %777 = sbr.rel (%p775) target = $region80
        $region79: #{tpu_custom_call.1} parent=11 // pred_region
          %s779 = ssub.s32 16384, 16384
          %780 = vsyncadd [#allocation25], %s779
          %s781 = sshll.u32 [#allocation26], 4
          %s782 = int_to_ptr.vmem [resolvable:$true] %s781
          %787 = dma.hbm_to_vmem [thread:$0]  %s19, 16384, %s782, [#allocation25], 512, 512, 32
        $region80: #{tpu_custom_call.1} parent=11 // pred_fallthru
          _
        // Predicated region
        $region81: #{tpu_custom_call.1} parent=11 // pred_check
          %p788 = pneg %p516
        $region82: #{tpu_custom_call.1} parent=11 // pred_check_branch
          %790 = sbr.rel (%p788) target = $region84
        $region83: #{tpu_custom_call.1} parent=11 // pred_region
          _
        $region84: #{tpu_custom_call.1} parent=11 // pred_fallthru
          _
        // Predicated region
        $region85: #{tpu_custom_call.1} parent=11 // pred_check
          %p791 = pneg %p537
        $region86: #{tpu_custom_call.1} parent=11 // pred_check_branch
          %793 = sbr.rel (%p791) target = $region88
        $region87: #{tpu_custom_call.1} parent=11 // pred_region
          %s795 = ssub.s32 16384, 16384
          %796 = vsyncadd [#allocation28], %s795
          %s797 = sshll.u32 [#allocation27], 4
          %s798 = int_to_ptr.vmem [resolvable:$true] %s797
          %803 = dma.hbm_to_vmem [thread:$0]  %s21, 16384, %s798, [#allocation28], 128, 128, 8
        $region88: #{tpu_custom_call.1} parent=11 // pred_fallthru
          _
        // Predicated region
        $region89: #{tpu_custom_call.1} parent=11 // pred_check
          %p804 = pneg %p558
        $region90: #{tpu_custom_call.1} parent=11 // pred_check_branch
          %806 = sbr.rel (%p804) target = $region92
        $region91: #{tpu_custom_call.1} parent=11 // pred_region
          _
        $region92: #{tpu_custom_call.1} parent=11 // pred_fallthru
          _
        // Predicated region
        $region93: #{tpu_custom_call.1} parent=11 // pred_check
          %p807 = pneg %p579
        $region94: #{tpu_custom_call.1} parent=11 // pred_check_branch
          %809 = sbr.rel (%p807) target = $region96
        $region95: #{tpu_custom_call.1} parent=11 // pred_region
          _
        $region96: #{tpu_custom_call.1} parent=11 // pred_fallthru
          _
        // Predicated region
        $region97: #{tpu_custom_call.1} parent=11 // pred_check
          %p810 = pneg %p600
        $region98: #{tpu_custom_call.1} parent=11 // pred_check_branch
          %812 = sbr.rel (%p810) target = $region100
        $region99: #{tpu_custom_call.1} parent=11 // pred_region
          _
        $region100: #{tpu_custom_call.1} parent=11 // pred_fallthru
          _
      $region12: #{tpu_custom_call.1} parent=5 // pred_fallthru
        _
      %p813 = scmp.lt.s32.totalorder %s46, 4
      // Predicated region
      $region101: #{tpu_custom_call.1} parent=5 // pred_check
        %p814 = pneg %p813
      $region102: #{tpu_custom_call.1} parent=5 // pred_check_branch
        %816 = sbr.rel (%p814) target = $region104
      $region103: #{tpu_custom_call.1} parent=5 // pred_region
        // Predicated region
        $region105: #{tpu_custom_call.1} parent=103 // pred_check
          %p817 = pneg %p78
        $region106: #{tpu_custom_call.1} parent=103 // pred_check_branch
          %819 = sbr.rel (%p817) target = $region108
        $region107: #{tpu_custom_call.1} parent=103 // pred_region
          %s820 = sand.u32 %s68, 1
          %s821 = scalar_lea.sflag [#allocation7], %s820
          %s822 = sand.u32 %s68, 1
          %s823 = smul.addr %s822, 32
          %s824 = scalar_lea.vmem [#allocation6], %s823
          %s826 = ssub.s32 512, 512
          %827 = vsyncadd %s821, %s826
          %s828 = smul.addr %s53, 8
          %s829 = smul.addr %s828, 64
          %s830 = scalar_lea.hbm %s0, %s829
          %s831 = sshll.u32 %s824, 4
          %s832 = int_to_ptr.vmem [resolvable:$true] %s831
          %837 = dma.hbm_to_vmem [thread:$0]  %s830, 512, %s832, %s821, 128, 128, 8
        $region108: #{tpu_custom_call.1} parent=103 // pred_fallthru
          _
        // Predicated region
        $region109: #{tpu_custom_call.1} parent=103 // pred_check
          %p838 = pneg %p104
        $region110: #{tpu_custom_call.1} parent=103 // pred_check_branch
          %840 = sbr.rel (%p838) target = $region112
        $region111: #{tpu_custom_call.1} parent=103 // pred_region
          %s841 = sand.u32 %s46, 1
          %s842 = scalar_lea.sflag [#allocation10], %s841
          %s843 = sand.u32 %s94, 1
          %s844 = smul.addr %s843, 32
          %s845 = scalar_lea.vmem [#allocation9], %s844
          %s847 = ssub.s32 512, 512
          %848 = vsyncadd %s842, %s847
          %s849 = smul.addr %s53, 8
          %s850 = smul.addr %s849, 64
          %s851 = scalar_lea.hbm %s1, %s850
          %s852 = sshll.u32 %s845, 4
          %s853 = int_to_ptr.vmem [resolvable:$true] %s852
          %858 = dma.hbm_to_vmem [thread:$0]  %s851, 512, %s853, %s842, 128, 128, 8
        $region112: #{tpu_custom_call.1} parent=103 // pred_fallthru
          _
        // Predicated region
        $region113: #{tpu_custom_call.1} parent=103 // pred_check
          %p859 = pneg %p132
        $region114: #{tpu_custom_call.1} parent=103 // pred_check_branch
          %861 = sbr.rel (%p859) target = $region116
        $region115: #{tpu_custom_call.1} parent=103 // pred_region
          %s862 = sand.u32 %s46, 1
          %s863 = scalar_lea.sflag [#allocation10], %s862
          %s864 = sand.u32 %s122, 1
          %s865 = smul.addr %s864, 32
          %s866 = scalar_lea.vmem [#allocation11], %s865
          %s867 = smul.u32 2, %s54
          %s869 = ssub.s32 512, 512
          %870 = vsyncadd %s863, %s869
          %s871 = smul.addr %s867, 2
          %s872 = smul.addr %s53, 8
          %s873 = sadd.s32 %s871, %s872
          %s874 = smul.addr %s873, 128
          %s875 = scalar_lea.hbm %s2, %s874
          %s876 = sshll.u32 %s866, 4
          %s877 = int_to_ptr.vmem [resolvable:$true] %s876
          %882 = dma.hbm_to_vmem [thread:$0]  %s875, 512, %s877, %s863, 256, 256, 16
        $region116: #{tpu_custom_call.1} parent=103 // pred_fallthru
          _
      $region104: #{tpu_custom_call.1} parent=5 // pred_fallthru
        _
      %p883 = scmp.le.s32.totalorder 1, %s46
      %p884 = scmp.lt.s32.totalorder %s46, 5
      %p885 = pnand %p883, %p884
      %p886 = pneg %p885
      // Predicated region
      $region117: #{tpu_custom_call.1} parent=5 // pred_check
        _
      $region118: #{tpu_custom_call.1} parent=5 // pred_check_branch
        %888 = sbr.rel (%p885) target = $region120
      $region119: #{tpu_custom_call.1} parent=5 // pred_region
        %s889 = ssub.s32 %s46, 1
        %s890 = sand.u32 %s71, 1
        %s891 = scalar_lea.sflag [#allocation7], %s890
        %s892 = sand.u32 %s71, 1
        %s893 = smul.addr %s892, 32
        %s894 = scalar_lea.vmem [#allocation6], %s893
        // Predicated region
        $region121: #{tpu_custom_call.1} parent=119 // pred_check
          %p895 = pneg %p84
        $region122: #{tpu_custom_call.1} parent=119 // pred_check_branch
          %897 = sbr.rel (%p895) target = $region124
        $region123: #{tpu_custom_call.1} parent=119 // pred_region
          %898 = dma.done %s891, 512
        $region124: #{tpu_custom_call.1} parent=119 // pred_fallthru
          _
        %s899 = sand.u32 %s51, 1
        %s900 = scalar_lea.sflag [#allocation10], %s899
        %s901 = sand.u32 %s97, 1
        %s902 = smul.addr %s901, 32
        %s903 = scalar_lea.vmem [#allocation9], %s902
        // Predicated region
        $region125: #{tpu_custom_call.1} parent=119 // pred_check
          %p904 = pneg %p110
        $region126: #{tpu_custom_call.1} parent=119 // pred_check_branch
          %906 = sbr.rel (%p904) target = $region128
        $region127: #{tpu_custom_call.1} parent=119 // pred_region
          %907 = dma.done %s900, 512
        $region128: #{tpu_custom_call.1} parent=119 // pred_fallthru
          _
        %s908 = sand.u32 %s51, 1
        %s909 = scalar_lea.sflag [#allocation10], %s908
        %s910 = sand.u32 %s125, 1
        %s911 = smul.addr %s910, 32
        %s912 = scalar_lea.vmem [#allocation11], %s911
        // Predicated region
        $region129: #{tpu_custom_call.1} parent=119 // pred_check
          %p913 = pneg %p138
        $region130: #{tpu_custom_call.1} parent=119 // pred_check_branch
          %915 = sbr.rel (%p913) target = $region132
        $region131: #{tpu_custom_call.1} parent=119 // pred_region
          %916 = dma.done %s909, 512
        $region132: #{tpu_custom_call.1} parent=119 // pred_fallthru
          _
        // Predicated region
        $region133: #{tpu_custom_call.1} parent=119 // pred_check
          %p917 = pneg %p159
        $region134: #{tpu_custom_call.1} parent=119 // pred_check_branch
          %919 = sbr.rel (%p917) target = $region136
        $region135: #{tpu_custom_call.1} parent=119 // pred_region
          %920 = dma.done [#allocation13], 4096
        $region136: #{tpu_custom_call.1} parent=119 // pred_fallthru
          _
        // Predicated region
        $region137: #{tpu_custom_call.1} parent=119 // pred_check
          %p921 = pneg %p180
        $region138: #{tpu_custom_call.1} parent=119 // pred_check_branch
          %923 = sbr.rel (%p921) target = $region140
        $region139: #{tpu_custom_call.1} parent=119 // pred_region
          %924 = dma.done [#allocation13], 32
        $region140: #{tpu_custom_call.1} parent=119 // pred_fallthru
          _
        // Predicated region
        $region141: #{tpu_custom_call.1} parent=119 // pred_check
          %p925 = pneg %p201
        $region142: #{tpu_custom_call.1} parent=119 // pred_check_branch
          %927 = sbr.rel (%p925) target = $region144
        $region143: #{tpu_custom_call.1} parent=119 // pred_region
          %928 = dma.done [#allocation16], 8192
        $region144: #{tpu_custom_call.1} parent=119 // pred_fallthru
          _
        // Predicated region
        $region145: #{tpu_custom_call.1} parent=119 // pred_check
          %p929 = pneg %p243
        $region146: #{tpu_custom_call.1} parent=119 // pred_check_branch
          %931 = sbr.rel (%p929) target = $region148
        $region147: #{tpu_custom_call.1} parent=119 // pred_region
          %932 = dma.done [#allocation16], 4096
        $region148: #{tpu_custom_call.1} parent=119 // pred_fallthru
          _
        // Predicated region
        $region149: #{tpu_custom_call.1} parent=119 // pred_check
          %p933 = pneg %p264
        $region150: #{tpu_custom_call.1} parent=119 // pred_check_branch
          %935 = sbr.rel (%p933) target = $region152
        $region151: #{tpu_custom_call.1} parent=119 // pred_region
          %936 = dma.done [#allocation19], 32
        $region152: #{tpu_custom_call.1} parent=119 // pred_fallthru
          _
        // Predicated region
        $region153: #{tpu_custom_call.1} parent=119 // pred_check
          %p937 = pneg %p285
        $region154: #{tpu_custom_call.1} parent=119 // pred_check_branch
          %939 = sbr.rel (%p937) target = $region156
        $region155: #{tpu_custom_call.1} parent=119 // pred_region
          %940 = dma.done [#allocation19], 32
        $region156: #{tpu_custom_call.1} parent=119 // pred_fallthru
          _
        // Predicated region
        $region157: #{tpu_custom_call.1} parent=119 // pred_check
          %p941 = pneg %p327
        $region158: #{tpu_custom_call.1} parent=119 // pred_check_branch
          %943 = sbr.rel (%p941) target = $region160
        $region159: #{tpu_custom_call.1} parent=119 // pred_region
          %944 = dma.done [#allocation22], 4096
        $region160: #{tpu_custom_call.1} parent=119 // pred_fallthru
          _
        // Predicated region
        $region161: #{tpu_custom_call.1} parent=119 // pred_check
          %p945 = pneg %p369
        $region162: #{tpu_custom_call.1} parent=119 // pred_check_branch
          %947 = sbr.rel (%p945) target = $region164
        $region163: #{tpu_custom_call.1} parent=119 // pred_region
          %948 = dma.done [#allocation22], 8192
        $region164: #{tpu_custom_call.1} parent=119 // pred_fallthru
          _
        // Predicated region
        $region165: #{tpu_custom_call.1} parent=119 // pred_check
          %p949 = pneg %p411
        $region166: #{tpu_custom_call.1} parent=119 // pred_check_branch
          %951 = sbr.rel (%p949) target = $region168
        $region167: #{tpu_custom_call.1} parent=119 // pred_region
          %952 = dma.done [#allocation25], 4096
        $region168: #{tpu_custom_call.1} parent=119 // pred_fallthru
          _
        // Predicated region
        $region169: #{tpu_custom_call.1} parent=119 // pred_check
          %p953 = pneg %p495
        $region170: #{tpu_custom_call.1} parent=119 // pred_check_branch
          %955 = sbr.rel (%p953) target = $region172
        $region171: #{tpu_custom_call.1} parent=119 // pred_region
          %956 = dma.done [#allocation25], 16384
        $region172: #{tpu_custom_call.1} parent=119 // pred_fallthru
          _
        // Predicated region
        $region173: #{tpu_custom_call.1} parent=119 // pred_check
          %p957 = pneg %p537
        $region174: #{tpu_custom_call.1} parent=119 // pred_check_branch
          %959 = sbr.rel (%p957) target = $region176
        $region175: #{tpu_custom_call.1} parent=119 // pred_region
          %960 = dma.done [#allocation28], 16384
        $region176: #{tpu_custom_call.1} parent=119 // pred_fallthru
          _
        %s961 = sand.u32 %s71, 1
        %s962 = scalar_lea.sflag [#allocation7], %s961
        %s963 = sand.u32 %s71, 1
        %s964 = smul.addr %s963, 32
        %s965 = scalar_lea.vmem [#allocation6], %s964
        %p966 = pneg %p84
        %p967 = pneg %p81
        %s968 = sand.u32 %s51, 1
        %s969 = scalar_lea.sflag [#allocation10], %s968
        %s970 = sand.u32 %s97, 1
        %s971 = smul.addr %s970, 32
        %s972 = scalar_lea.vmem [#allocation9], %s971
        %p973 = pneg %p110
        %p974 = pneg %p107
        %s975 = sand.u32 %s51, 1
        %s976 = scalar_lea.sflag [#allocation10], %s975
        %s977 = sand.u32 %s125, 1
        %s978 = smul.addr %s977, 32
        %s979 = scalar_lea.vmem [#allocation11], %s978
        %p980 = pneg %p138
        %p981 = pneg %p135
        %p982 = pneg %p159
        %p983 = pneg %p156
        %p984 = pneg %p180
        %p985 = pneg %p177
        %p986 = pneg %p201
        %p987 = pneg %p198
        %p988 = pneg %p222
        %p989 = pneg %p219
        %p990 = pneg %p243
        %p991 = pneg %p240
        %p992 = pneg %p264
        %p993 = pneg %p261
        %p994 = pneg %p285
        %p995 = pneg %p282
        %p996 = pneg %p306
        %p997 = pneg %p303
        %p998 = pneg %p327
        %p999 = pneg %p324
        %p1000 = pneg %p348
        %p1001 = pneg %p345
        %p1002 = pneg %p369
        %p1003 = pneg %p366
        %p1004 = pneg %p390
        %p1005 = pneg %p387
        %p1006 = pneg %p411
        %p1007 = pneg %p408
        %p1008 = pneg %p432
        %p1009 = pneg %p429
        %p1010 = pneg %p453
        %p1011 = pneg %p450
        %p1012 = pneg %p474
        %p1013 = pneg %p471
        %p1014 = pneg %p495
        %p1015 = pneg %p492
        %p1016 = pneg %p516
        %p1017 = pneg %p513
        %p1018 = pneg %p537
        %p1019 = pneg %p534
        %p1020 = pneg %p558
        %p1021 = pneg %p555
        %p1022 = pneg %p579
        %p1023 = pneg %p576
        %p1024 = pneg %p600
        %p1025 = pneg %p597
        %p1026 = pneg %p628
        %p1027 = pneg %p625
        %s1028 = sand.u32 %s615, 1
        %s1029 = scalar_lea.sflag [#allocation8], %s1028
        %s1030 = sand.u32 %s615, 1
        %s1031 = smul.addr %s1030, 32
        %s1032 = scalar_lea.vmem [#allocation29], %s1031
        %s1033 = smul.u32 2, %s56
        %s1034 = smul.u32 2, %s56
        %s1036 = smul.u32 %s56, 16
        %p1037 = scmp.eq.s32.totalorder %s56, 0
        // Predicated region
        $region177: #{tpu_custom_call.1} parent=119 // pred_check
          %p1038 = pneg %p1037
        $region178: #{tpu_custom_call.1} parent=119 // pred_check_branch
          %1040 = sbr.rel (%p1038) target = $region180
        $region179: #{tpu_custom_call.1} parent=119 // pred_region
          %v1041 = vld [vmem:[%s903] sm:$0xff]
          %v1042 = vld [vmem:[%s903 + $0x8] sm:$0xff]
          %v1043 = vld [vmem:[%s903 + $0x10] sm:$0xff]
          %v1044 = vld [vmem:[%s903 + $0x18] sm:$0xff]
          %v1045 = vld [vmem:[#allocation15] sm:$0xff]
          %v1046 = vld [vmem:[#allocation15 + $0x8] sm:$0xff]
          %v1047 = vld [vmem:[#allocation15 + $0x10] sm:$0xff]
          %v1048 = vld [vmem:[#allocation15 + $0x18] sm:$0xff]
          %v1049 = vld [vmem:[#allocation15 + $0x20] sm:$0xff]
          %v1050 = vld [vmem:[#allocation15 + $0x28] sm:$0xff]
          %v1051 = vld [vmem:[#allocation15 + $0x30] sm:$0xff]
          %v1052 = vld [vmem:[#allocation15 + $0x38] sm:$0xff]
          %v1053 = vld [vmem:[#allocation15 + $0x40] sm:$0xff]
          %v1054 = vld [vmem:[#allocation15 + $0x48] sm:$0xff]
          %v1055 = vld [vmem:[#allocation15 + $0x50] sm:$0xff]
          %v1056 = vld [vmem:[#allocation15 + $0x58] sm:$0xff]
          %v1057 = vld [vmem:[#allocation15 + $0x60] sm:$0xff]
          %v1058 = vld [vmem:[#allocation15 + $0x68] sm:$0xff]
          %v1059 = vld [vmem:[#allocation15 + $0x70] sm:$0xff]
          %v1060 = vld [vmem:[#allocation15 + $0x78] sm:$0xff]
          %v1061 = vld [vmem:[#allocation15 + $0x80] sm:$0xff]
          %v1062 = vld [vmem:[#allocation15 + $0x88] sm:$0xff]
          %v1063 = vld [vmem:[#allocation15 + $0x90] sm:$0xff]
          %v1064 = vld [vmem:[#allocation15 + $0x98] sm:$0xff]
          %v1065 = vld [vmem:[#allocation15 + $0xa0] sm:$0xff]
          %v1066 = vld [vmem:[#allocation15 + $0xa8] sm:$0xff]
          %v1067 = vld [vmem:[#allocation15 + $0xb0] sm:$0xff]
          %v1068 = vld [vmem:[#allocation15 + $0xb8] sm:$0xff]
          %v1069 = vld [vmem:[#allocation15 + $0xc0] sm:$0xff]
          %v1070 = vld [vmem:[#allocation15 + $0xc8] sm:$0xff]
          %v1071 = vld [vmem:[#allocation15 + $0xd0] sm:$0xff]
          %v1072 = vld [vmem:[#allocation15 + $0xd8] sm:$0xff]
          %v1073 = vld [vmem:[#allocation15 + $0xe0] sm:$0xff]
          %v1074 = vld [vmem:[#allocation15 + $0xe8] sm:$0xff]
          %v1075 = vld [vmem:[#allocation15 + $0xf0] sm:$0xff]
          %v1076 = vld [vmem:[#allocation15 + $0xf8] sm:$0xff]
          %v1077 = vld [vmem:[#allocation15 + $0x100] sm:$0xff]
          %v1078 = vld [vmem:[#allocation15 + $0x108] sm:$0xff]
          %v1079 = vld [vmem:[#allocation15 + $0x110] sm:$0xff]
          %v1080 = vld [vmem:[#allocation15 + $0x118] sm:$0xff]
          %v1081 = vld [vmem:[#allocation15 + $0x120] sm:$0xff]
          %v1082 = vld [vmem:[#allocation15 + $0x128] sm:$0xff]
          %v1083 = vld [vmem:[#allocation15 + $0x130] sm:$0xff]
          %v1084 = vld [vmem:[#allocation15 + $0x138] sm:$0xff]
          %v1085 = vld [vmem:[#allocation15 + $0x140] sm:$0xff]
          %v1086 = vld [vmem:[#allocation15 + $0x148] sm:$0xff]
          %v1087 = vld [vmem:[#allocation15 + $0x150] sm:$0xff]
          %v1088 = vld [vmem:[#allocation15 + $0x158] sm:$0xff]
          %v1089 = vld [vmem:[#allocation15 + $0x160] sm:$0xff]
          %v1090 = vld [vmem:[#allocation15 + $0x168] sm:$0xff]
          %v1091 = vld [vmem:[#allocation15 + $0x170] sm:$0xff]
          %v1092 = vld [vmem:[#allocation15 + $0x178] sm:$0xff]
          %v1093 = vld [vmem:[#allocation15 + $0x180] sm:$0xff]
          %v1094 = vld [vmem:[#allocation15 + $0x188] sm:$0xff]
          %v1095 = vld [vmem:[#allocation15 + $0x190] sm:$0xff]
          %v1096 = vld [vmem:[#allocation15 + $0x198] sm:$0xff]
          %v1097 = vld [vmem:[#allocation15 + $0x1a0] sm:$0xff]
          %v1098 = vld [vmem:[#allocation15 + $0x1a8] sm:$0xff]
          %v1099 = vld [vmem:[#allocation15 + $0x1b0] sm:$0xff]
          %v1100 = vld [vmem:[#allocation15 + $0x1b8] sm:$0xff]
          %v1101 = vld [vmem:[#allocation15 + $0x1c0] sm:$0xff]
          %v1102 = vld [vmem:[#allocation15 + $0x1c8] sm:$0xff]
          %v1103 = vld [vmem:[#allocation15 + $0x1d0] sm:$0xff]
          %v1104 = vld [vmem:[#allocation15 + $0x1d8] sm:$0xff]
          %v1105 = vld [vmem:[#allocation15 + $0x1e0] sm:$0xff]
          %v1106 = vld [vmem:[#allocation15 + $0x1e8] sm:$0xff]
          %v1107 = vld [vmem:[#allocation15 + $0x1f0] sm:$0xff]
          %v1108 = vld [vmem:[#allocation15 + $0x1f8] sm:$0xff]
          %v1109 = vld [vmem:[%s6] sm:$0xf]
          %v1111 = vlaneseq
          %v1112 = vshrl.u32 %v1111, 7
          %v1113 = vsub.s32 0, %v1112
          %v1114 = vrot.slane %v1109, %v1113
          %v1115 = vlaneseq
          %v1116 = vshrl.u32 %v1115, 7
          %v1117 = vsub.s32 1, %v1116
          %v1118 = vrot.slane %v1109, %v1117
          %v1119 = vlaneseq
          %v1120 = vshrl.u32 %v1119, 7
          %v1121 = vsub.s32 2, %v1120
          %v1122 = vrot.slane %v1109, %v1121
          %v1123 = vlaneseq
          %v1124 = vshrl.u32 %v1123, 7
          %v1125 = vsub.s32 3, %v1124
          %v1126 = vrot.slane %v1109, %v1125
          %v1135 = vunpack.c.l.b16 %v1041
          %v1136 = vunpack.c.h.b16 %v1041
          %v1137 = vunpack.c.l.b16 %v1042
          %v1138 = vunpack.c.h.b16 %v1042
          %v1139 = vunpack.c.l.b16 %v1043
          %v1140 = vunpack.c.h.b16 %v1043
          %v1141 = vunpack.c.l.b16 %v1044
          %v1142 = vunpack.c.h.b16 %v1044
          %v1143 = vpack.c.b16 %v1137, %v1135
          %v1144 = vpack.c.b16 %v1138, %v1136
          %v1145 = vpack.c.b16 %v1141, %v1139
          %v1146 = vpack.c.b16 %v1142, %v1140
          %v1215 = vunpack.c.l.b16 %v1045
          %v1216 = vunpack.c.h.b16 %v1045
          %v1217 = vunpack.c.l.b16 %v1046
          %v1218 = vunpack.c.h.b16 %v1046
          %v1219 = vunpack.c.l.b16 %v1047
          %v1220 = vunpack.c.h.b16 %v1047
          %v1221 = vunpack.c.l.b16 %v1048
          %v1222 = vunpack.c.h.b16 %v1048
          %v1223 = vunpack.c.l.b16 %v1049
          %v1224 = vunpack.c.h.b16 %v1049
          %v1225 = vunpack.c.l.b16 %v1050
          %v1226 = vunpack.c.h.b16 %v1050
          %v1227 = vunpack.c.l.b16 %v1051
          %v1228 = vunpack.c.h.b16 %v1051
          %v1229 = vunpack.c.l.b16 %v1052
          %v1230 = vunpack.c.h.b16 %v1052
          %v1231 = vunpack.c.l.b16 %v1053
          %v1232 = vunpack.c.h.b16 %v1053
          %v1233 = vunpack.c.l.b16 %v1054
          %v1234 = vunpack.c.h.b16 %v1054
          %v1235 = vunpack.c.l.b16 %v1055
          %v1236 = vunpack.c.h.b16 %v1055
          %v1237 = vunpack.c.l.b16 %v1056
          %v1238 = vunpack.c.h.b16 %v1056
          %v1239 = vunpack.c.l.b16 %v1057
          %v1240 = vunpack.c.h.b16 %v1057
          %v1241 = vunpack.c.l.b16 %v1058
          %v1242 = vunpack.c.h.b16 %v1058
          %v1243 = vunpack.c.l.b16 %v1059
          %v1244 = vunpack.c.h.b16 %v1059
          %v1245 = vunpack.c.l.b16 %v1060
          %v1246 = vunpack.c.h.b16 %v1060
          %v1247 = vunpack.c.l.b16 %v1061
          %v1248 = vunpack.c.h.b16 %v1061
          %v1249 = vunpack.c.l.b16 %v1062
          %v1250 = vunpack.c.h.b16 %v1062
          %v1251 = vunpack.c.l.b16 %v1063
          %v1252 = vunpack.c.h.b16 %v1063
          %v1253 = vunpack.c.l.b16 %v1064
          %v1254 = vunpack.c.h.b16 %v1064
          %v1255 = vunpack.c.l.b16 %v1065
          %v1256 = vunpack.c.h.b16 %v1065
          %v1257 = vunpack.c.l.b16 %v1066
          %v1258 = vunpack.c.h.b16 %v1066
          %v1259 = vunpack.c.l.b16 %v1067
          %v1260 = vunpack.c.h.b16 %v1067
          %v1261 = vunpack.c.l.b16 %v1068
          %v1262 = vunpack.c.h.b16 %v1068
          %v1263 = vunpack.c.l.b16 %v1069
          %v1264 = vunpack.c.h.b16 %v1069
          %v1265 = vunpack.c.l.b16 %v1070
          %v1266 = vunpack.c.h.b16 %v1070
          %v1267 = vunpack.c.l.b16 %v1071
          %v1268 = vunpack.c.h.b16 %v1071
          %v1269 = vunpack.c.l.b16 %v1072
          %v1270 = vunpack.c.h.b16 %v1072
          %v1271 = vunpack.c.l.b16 %v1073
          %v1272 = vunpack.c.h.b16 %v1073
          %v1273 = vunpack.c.l.b16 %v1074
          %v1274 = vunpack.c.h.b16 %v1074
          %v1275 = vunpack.c.l.b16 %v1075
          %v1276 = vunpack.c.h.b16 %v1075
          %v1277 = vunpack.c.l.b16 %v1076
          %v1278 = vunpack.c.h.b16 %v1076
          %v1279 = vunpack.c.l.b16 %v1077
          %v1280 = vunpack.c.h.b16 %v1077
          %v1281 = vunpack.c.l.b16 %v1078
          %v1282 = vunpack.c.h.b16 %v1078
          %v1283 = vunpack.c.l.b16 %v1079
          %v1284 = vunpack.c.h.b16 %v1079
          %v1285 = vunpack.c.l.b16 %v1080
          %v1286 = vunpack.c.h.b16 %v1080
          %v1287 = vunpack.c.l.b16 %v1081
          %v1288 = vunpack.c.h.b16 %v1081
          %v1289 = vunpack.c.l.b16 %v1082
          %v1290 = vunpack.c.h.b16 %v1082
          %v1291 = vunpack.c.l.b16 %v1083
          %v1292 = vunpack.c.h.b16 %v1083
          %v1293 = vunpack.c.l.b16 %v1084
          %v1294 = vunpack.c.h.b16 %v1084
          %v1295 = vunpack.c.l.b16 %v1085
          %v1296 = vunpack.c.h.b16 %v1085
          %v1297 = vunpack.c.l.b16 %v1086
          %v1298 = vunpack.c.h.b16 %v1086
          %v1299 = vunpack.c.l.b16 %v1087
          %v1300 = vunpack.c.h.b16 %v1087
          %v1301 = vunpack.c.l.b16 %v1088
          %v1302 = vunpack.c.h.b16 %v1088
          %v1303 = vunpack.c.l.b16 %v1089
          %v1304 = vunpack.c.h.b16 %v1089
          %v1305 = vunpack.c.l.b16 %v1090
          %v1306 = vunpack.c.h.b16 %v1090
          %v1307 = vunpack.c.l.b16 %v1091
          %v1308 = vunpack.c.h.b16 %v1091
          %v1309 = vunpack.c.l.b16 %v1092
          %v1310 = vunpack.c.h.b16 %v1092
          %v1311 = vunpack.c.l.b16 %v1093
          %v1312 = vunpack.c.h.b16 %v1093
          %v1313 = vunpack.c.l.b16 %v1094
          %v1314 = vunpack.c.h.b16 %v1094
          %v1315 = vunpack.c.l.b16 %v1095
          %v1316 = vunpack.c.h.b16 %v1095
          %v1317 = vunpack.c.l.b16 %v1096
          %v1318 = vunpack.c.h.b16 %v1096
          %v1319 = vunpack.c.l.b16 %v1097
          %v1320 = vunpack.c.h.b16 %v1097
          %v1321 = vunpack.c.l.b16 %v1098
          %v1322 = vunpack.c.h.b16 %v1098
          %v1323 = vunpack.c.l.b16 %v1099
          %v1324 = vunpack.c.h.b16 %v1099
          %v1325 = vunpack.c.l.b16 %v1100
          %v1326 = vunpack.c.h.b16 %v1100
          %v1327 = vunpack.c.l.b16 %v1101
          %v1328 = vunpack.c.h.b16 %v1101
          %v1329 = vunpack.c.l.b16 %v1102
          %v1330 = vunpack.c.h.b16 %v1102
          %v1331 = vunpack.c.l.b16 %v1103
          %v1332 = vunpack.c.h.b16 %v1103
          %v1333 = vunpack.c.l.b16 %v1104
          %v1334 = vunpack.c.h.b16 %v1104
          %v1335 = vunpack.c.l.b16 %v1105
          %v1336 = vunpack.c.h.b16 %v1105
          %v1337 = vunpack.c.l.b16 %v1106
          %v1338 = vunpack.c.h.b16 %v1106
          %v1339 = vunpack.c.l.b16 %v1107
          %v1340 = vunpack.c.h.b16 %v1107
          %v1341 = vunpack.c.l.b16 %v1108
          %v1342 = vunpack.c.h.b16 %v1108
          %v1343 = vpack.c.b16 %v1219, %v1215
          %v1344 = vpack.c.b16 %v1220, %v1216
          %v1345 = vpack.c.b16 %v1221, %v1217
          %v1346 = vpack.c.b16 %v1222, %v1218
          %v1347 = vpack.c.b16 %v1227, %v1223
          %v1348 = vpack.c.b16 %v1228, %v1224
          %v1349 = vpack.c.b16 %v1229, %v1225
          %v1350 = vpack.c.b16 %v1230, %v1226
          %v1351 = vpack.c.b16 %v1235, %v1231
          %v1352 = vpack.c.b16 %v1236, %v1232
          %v1353 = vpack.c.b16 %v1237, %v1233
          %v1354 = vpack.c.b16 %v1238, %v1234
          %v1355 = vpack.c.b16 %v1243, %v1239
          %v1356 = vpack.c.b16 %v1244, %v1240
          %v1357 = vpack.c.b16 %v1245, %v1241
          %v1358 = vpack.c.b16 %v1246, %v1242
          %v1359 = vpack.c.b16 %v1251, %v1247
          %v1360 = vpack.c.b16 %v1252, %v1248
          %v1361 = vpack.c.b16 %v1253, %v1249
          %v1362 = vpack.c.b16 %v1254, %v1250
          %v1363 = vpack.c.b16 %v1259, %v1255
          %v1364 = vpack.c.b16 %v1260, %v1256
          %v1365 = vpack.c.b16 %v1261, %v1257
          %v1366 = vpack.c.b16 %v1262, %v1258
          %v1367 = vpack.c.b16 %v1267, %v1263
          %v1368 = vpack.c.b16 %v1268, %v1264
          %v1369 = vpack.c.b16 %v1269, %v1265
          %v1370 = vpack.c.b16 %v1270, %v1266
          %v1371 = vpack.c.b16 %v1275, %v1271
          %v1372 = vpack.c.b16 %v1276, %v1272
          %v1373 = vpack.c.b16 %v1277, %v1273
          %v1374 = vpack.c.b16 %v1278, %v1274
          %v1375 = vpack.c.b16 %v1283, %v1279
          %v1376 = vpack.c.b16 %v1284, %v1280
          %v1377 = vpack.c.b16 %v1285, %v1281
          %v1378 = vpack.c.b16 %v1286, %v1282
          %v1379 = vpack.c.b16 %v1291, %v1287
          %v1380 = vpack.c.b16 %v1292, %v1288
          %v1381 = vpack.c.b16 %v1293, %v1289
          %v1382 = vpack.c.b16 %v1294, %v1290
          %v1383 = vpack.c.b16 %v1299, %v1295
          %v1384 = vpack.c.b16 %v1300, %v1296
          %v1385 = vpack.c.b16 %v1301, %v1297
          %v1386 = vpack.c.b16 %v1302, %v1298
          %v1387 = vpack.c.b16 %v1307, %v1303
          %v1388 = vpack.c.b16 %v1308, %v1304
          %v1389 = vpack.c.b16 %v1309, %v1305
          %v1390 = vpack.c.b16 %v1310, %v1306
          %v1391 = vpack.c.b16 %v1315, %v1311
          %v1392 = vpack.c.b16 %v1316, %v1312
          %v1393 = vpack.c.b16 %v1317, %v1313
          %v1394 = vpack.c.b16 %v1318, %v1314
          %v1395 = vpack.c.b16 %v1323, %v1319
          %v1396 = vpack.c.b16 %v1324, %v1320
          %v1397 = vpack.c.b16 %v1325, %v1321
          %v1398 = vpack.c.b16 %v1326, %v1322
          %v1399 = vpack.c.b16 %v1331, %v1327
          %v1400 = vpack.c.b16 %v1332, %v1328
          %v1401 = vpack.c.b16 %v1333, %v1329
          %v1402 = vpack.c.b16 %v1334, %v1330
          %v1403 = vpack.c.b16 %v1339, %v1335
          %v1404 = vpack.c.b16 %v1340, %v1336
          %v1405 = vpack.c.b16 %v1341, %v1337
          %v1406 = vpack.c.b16 %v1342, %v1338
          %1471 = vmatprep.subr.bf16.mxu0 %v1372
          %1472 = vmatpush1.bf16.msra.mxu0 %v1371
          %1473 = vmatprep.subr.bf16.mxu0 %v1368
          %1474 = vmatpush1.bf16.msra.mxu0 %v1367
          %1475 = vmatprep.subr.bf16.mxu0 %v1364
          %1476 = vmatpush1.bf16.msra.mxu0 %v1363
          %1477 = vmatprep.subr.bf16.mxu0 %v1360
          %1478 = vmatpush1.bf16.msra.mxu0 %v1359
          %1479 = vmatprep.subr.bf16.mxu0 %v1356
          %1480 = vmatpush1.bf16.msra.mxu0 %v1355
          %1481 = vmatprep.subr.bf16.mxu0 %v1352
          %1482 = vmatpush1.bf16.msra.mxu0 %v1351
          %1483 = vmatprep.subr.bf16.mxu0 %v1348
          %1484 = vmatpush1.bf16.msra.mxu0 %v1347
          %1485 = vmatprep.subr.bf16.mxu0 %v1344
          %1486 = vmatpush1.bf16.msra.mxu0 %v1343
          %1487 = vmatprep.subr.bf16.mxu0 %v1404
          %1488 = vmatpush2.bf16.msra.mxu0 %v1403
          %1489 = vmatprep.subr.bf16.mxu0 %v1400
          %1490 = vmatpush2.bf16.msra.mxu0 %v1399
          %1491 = vmatprep.subr.bf16.mxu0 %v1396
          %1492 = vmatpush2.bf16.msra.mxu0 %v1395
          %1493 = vmatprep.subr.bf16.mxu0 %v1392
          %1494 = vmatpush2.bf16.msra.mxu0 %v1391
          %1495 = vmatprep.subr.bf16.mxu0 %v1388
          %1496 = vmatpush2.bf16.msra.mxu0 %v1387
          %1497 = vmatprep.subr.bf16.mxu0 %v1384
          %1498 = vmatpush2.bf16.msra.mxu0 %v1383
          %1499 = vmatprep.subr.bf16.mxu0 %v1380
          %1500 = vmatpush2.bf16.msra.mxu0 %v1379
          %1501 = vmatprep.subr.bf16.mxu0 %v1376
          %1502 = vmatpush2.bf16.msra.mxu0 %v1375
          %1503 = vmatprep.mubr.bf16.mxu0 %v1144
          %1504 = vmatmul.mubr.bf16.gmra.mxu0 %v1143
          %v1505 = vpop.f32.mrf.mxu0
          %v1506 = vadd.f32 %v1114, %v1505
          %v1507 = vpop.f32.mrf.mxu0
          %v1508 = vadd.f32 %v1118, %v1507
          %v1509 = vpop.f32.mrf.mxu0
          %v1510 = vadd.f32 %v1114, %v1509
          %v1511 = vpop.f32.mrf.mxu0
          %v1512 = vadd.f32 %v1118, %v1511
          %1513 = vmatprep.mubr.bf16.mxu0 %v1146
          %1514 = vmatmul.mubr.bf16.gmra.mxu0 %v1145
          %v1515 = vpop.f32.mrf.mxu0
          %v1516 = vadd.f32 %v1114, %v1515
          %v1517 = vpop.f32.mrf.mxu0
          %v1518 = vadd.f32 %v1118, %v1517
          %v1519 = vpop.f32.mrf.mxu0
          %v1520 = vadd.f32 %v1114, %v1519
          %v1521 = vpop.f32.mrf.mxu0
          %v1522 = vadd.f32 %v1118, %v1521
          %1523 = vdwg.mxu0
          %1524 = vmatprep.subr.bf16.mxu0 %v1374
          %1525 = vmatpush1.bf16.msra.mxu0 %v1373
          %1526 = vmatprep.subr.bf16.mxu0 %v1370
          %1527 = vmatpush1.bf16.msra.mxu0 %v1369
          %1528 = vmatprep.subr.bf16.mxu0 %v1366
          %1529 = vmatpush1.bf16.msra.mxu0 %v1365
          %1530 = vmatprep.subr.bf16.mxu0 %v1362
          %1531 = vmatpush1.bf16.msra.mxu0 %v1361
          %1532 = vmatprep.subr.bf16.mxu0 %v1358
          %1533 = vmatpush1.bf16.msra.mxu0 %v1357
          %1534 = vmatprep.subr.bf16.mxu0 %v1354
          %1535 = vmatpush1.bf16.msra.mxu0 %v1353
          %1536 = vmatprep.subr.bf16.mxu0 %v1350
          %1537 = vmatpush1.bf16.msra.mxu0 %v1349
          %1538 = vmatprep.subr.bf16.mxu0 %v1346
          %1539 = vmatpush1.bf16.msra.mxu0 %v1345
          %1540 = vmatprep.subr.bf16.mxu0 %v1406
          %1541 = vmatpush2.bf16.msra.mxu0 %v1405
          %1542 = vmatprep.subr.bf16.mxu0 %v1402
          %1543 = vmatpush2.bf16.msra.mxu0 %v1401
          %1544 = vmatprep.subr.bf16.mxu0 %v1398
          %1545 = vmatpush2.bf16.msra.mxu0 %v1397
          %1546 = vmatprep.subr.bf16.mxu0 %v1394
          %1547 = vmatpush2.bf16.msra.mxu0 %v1393
          %1548 = vmatprep.subr.bf16.mxu0 %v1390
          %1549 = vmatpush2.bf16.msra.mxu0 %v1389
          %1550 = vmatprep.subr.bf16.mxu0 %v1386
          %1551 = vmatpush2.bf16.msra.mxu0 %v1385
          %1552 = vmatprep.subr.bf16.mxu0 %v1382
          %1553 = vmatpush2.bf16.msra.mxu0 %v1381
          %1554 = vmatprep.subr.bf16.mxu0 %v1378
          %1555 = vmatpush2.bf16.msra.mxu0 %v1377
          %1556 = vmatprep.mubr.bf16.mxu0 %v1144
          %1557 = vmatmul.mubr.bf16.gmra.mxu0 %v1143
          %v1558 = vpop.f32.mrf.mxu0
          %v1559 = vadd.f32 %v1122, %v1558
          %v1560 = vpop.f32.mrf.mxu0
          %v1561 = vadd.f32 %v1126, %v1560
          %v1562 = vpop.f32.mrf.mxu0
          %v1563 = vadd.f32 %v1122, %v1562
          %v1564 = vpop.f32.mrf.mxu0
          %v1565 = vadd.f32 %v1126, %v1564
          %1566 = vmatprep.mubr.bf16.mxu0 %v1146
          %1567 = vmatmul.mubr.bf16.gmra.mxu0 %v1145
          %v1568 = vpop.f32.mrf.mxu0
          %v1569 = vadd.f32 %v1122, %v1568
          %v1570 = vpop.f32.mrf.mxu0
          %v1571 = vadd.f32 %v1126, %v1570
          %v1572 = vpop.f32.mrf.mxu0
          %v1573 = vadd.f32 %v1122, %v1572
          %v1574 = vpop.f32.mrf.mxu0
          %v1575 = vadd.f32 %v1126, %v1574
          %1576 = vdwg.mxu0
          %v1577 = vcombine.high %v1506, 0.0
          %v1579 = vunpack.c.l.s4 1983009808
          %v1580 = vunpack.c.0.s8 %v1579
          %v1581 = vlaneseq
          %v1582 = vshrl.u32 %v1581, 7
          %v1583 = vsub.s32 %v1580, %v1582
          %v1584 = vrot.slane %v1506, %v1583
          %v1586 = vunpack.c.l.s4 1983009808
          %v1587 = vunpack.c.0.s8 %v1586
          %v1588 = vlaneseq
          %v1589 = vshrl.u32 %v1588, 7
          %v1590 = vsub.s32 %v1587, %v1589
          %v1591 = vrot.slane %v1577, %v1590
          %v1592 = vcombine.high %v1508, 0.0
          %v1594 = vunpack.c.l.s4 1983009808
          %v1595 = vunpack.c.0.s8 %v1594
          %v1596 = vlaneseq
          %v1597 = vshrl.u32 %v1596, 7
          %v1598 = vsub.s32 %v1595, %v1597
          %v1599 = vrot.slane %v1508, %v1598
          %v1601 = vunpack.c.l.s4 1983009808
          %v1602 = vunpack.c.0.s8 %v1601
          %v1603 = vlaneseq
          %v1604 = vshrl.u32 %v1603, 7
          %v1605 = vsub.s32 %v1602, %v1604
          %v1606 = vrot.slane %v1592, %v1605
          %v1607 = vcombine.low %v1584, %v1599
          %v1608 = vcombine.high %v1584, %v1599
          %v1610 = vunpack.c.l.s4 1934713408
          %v1611 = vunpack.c.0.s8 %v1610
          %v1612 = vlaneseq
          %v1613 = vshrl.u32 %v1612, 7
          %v1614 = vsub.s32 %v1611, %v1613
          %v1615 = vrot.slane %v1607, %v1614
          %v1617 = vunpack.c.l.s4 1934713408
          %v1618 = vunpack.c.0.s8 %v1617
          %v1619 = vlaneseq
          %v1620 = vshrl.u32 %v1619, 7
          %v1621 = vsub.s32 %v1618, %v1620
          %v1622 = vrot.slane %v1608, %v1621
          %v1623 = vcombine.low %v1591, %v1606
          %v1624 = vcombine.high %v1591, %v1606
          %v1626 = vunpack.c.l.s4 1934713408
          %v1627 = vunpack.c.0.s8 %v1626
          %v1628 = vlaneseq
          %v1629 = vshrl.u32 %v1628, 7
          %v1630 = vsub.s32 %v1627, %v1629
          %v1631 = vrot.slane %v1623, %v1630
          %v1633 = vunpack.c.l.s4 1934713408
          %v1634 = vunpack.c.0.s8 %v1633
          %v1635 = vlaneseq
          %v1636 = vshrl.u32 %v1635, 7
          %v1637 = vsub.s32 %v1634, %v1636
          %v1638 = vrot.slane %v1624, %v1637
          %v1639 = vcombine.high %v1615, 0.0
          %v1640 = vcombine.high %v1622, 0.0
          %v1641 = vcombine.high %v1631, 0.0
          %v1642 = vcombine.high %v1638, 0.0
          %v1643 = vcombine.high %v1510, 0.0
          %v1645 = vunpack.c.l.s4 1983009808
          %v1646 = vunpack.c.0.s8 %v1645
          %v1647 = vlaneseq
          %v1648 = vshrl.u32 %v1647, 7
          %v1649 = vsub.s32 %v1646, %v1648
          %v1650 = vrot.slane %v1510, %v1649
          %v1652 = vunpack.c.l.s4 1983009808
          %v1653 = vunpack.c.0.s8 %v1652
          %v1654 = vlaneseq
          %v1655 = vshrl.u32 %v1654, 7
          %v1656 = vsub.s32 %v1653, %v1655
          %v1657 = vrot.slane %v1643, %v1656
          %v1658 = vcombine.high %v1512, 0.0
          %v1660 = vunpack.c.l.s4 1983009808
          %v1661 = vunpack.c.0.s8 %v1660
          %v1662 = vlaneseq
          %v1663 = vshrl.u32 %v1662, 7
          %v1664 = vsub.s32 %v1661, %v1663
          %v1665 = vrot.slane %v1512, %v1664
          %v1667 = vunpack.c.l.s4 1983009808
          %v1668 = vunpack.c.0.s8 %v1667
          %v1669 = vlaneseq
          %v1670 = vshrl.u32 %v1669, 7
          %v1671 = vsub.s32 %v1668, %v1670
          %v1672 = vrot.slane %v1658, %v1671
          %v1673 = vcombine.low %v1650, %v1665
          %v1674 = vcombine.high %v1650, %v1665
          %v1676 = vunpack.c.l.s4 1934713408
          %v1677 = vunpack.c.0.s8 %v1676
          %v1678 = vlaneseq
          %v1679 = vshrl.u32 %v1678, 7
          %v1680 = vsub.s32 %v1677, %v1679
          %v1681 = vrot.slane %v1673, %v1680
          %v1683 = vunpack.c.l.s4 1934713408
          %v1684 = vunpack.c.0.s8 %v1683
          %v1685 = vlaneseq
          %v1686 = vshrl.u32 %v1685, 7
          %v1687 = vsub.s32 %v1684, %v1686
          %v1688 = vrot.slane %v1674, %v1687
          %v1689 = vcombine.low %v1657, %v1672
          %v1690 = vcombine.high %v1657, %v1672
          %v1692 = vunpack.c.l.s4 1934713408
          %v1693 = vunpack.c.0.s8 %v1692
          %v1694 = vlaneseq
          %v1695 = vshrl.u32 %v1694, 7
          %v1696 = vsub.s32 %v1693, %v1695
          %v1697 = vrot.slane %v1689, %v1696
          %v1699 = vunpack.c.l.s4 1934713408
          %v1700 = vunpack.c.0.s8 %v1699
          %v1701 = vlaneseq
          %v1702 = vshrl.u32 %v1701, 7
          %v1703 = vsub.s32 %v1700, %v1702
          %v1704 = vrot.slane %v1690, %v1703
          %v1705 = vcombine.high %v1681, 0.0
          %v1706 = vcombine.high %v1688, 0.0
          %v1707 = vcombine.high %v1697, 0.0
          %v1708 = vcombine.high %v1704, 0.0
          %v1709 = vcombine.high %v1516, 0.0
          %v1711 = vunpack.c.l.s4 1983009808
          %v1712 = vunpack.c.0.s8 %v1711
          %v1713 = vlaneseq
          %v1714 = vshrl.u32 %v1713, 7
          %v1715 = vsub.s32 %v1712, %v1714
          %v1716 = vrot.slane %v1516, %v1715
          %v1718 = vunpack.c.l.s4 1983009808
          %v1719 = vunpack.c.0.s8 %v1718
          %v1720 = vlaneseq
          %v1721 = vshrl.u32 %v1720, 7
          %v1722 = vsub.s32 %v1719, %v1721
          %v1723 = vrot.slane %v1709, %v1722
          %v1724 = vcombine.high %v1518, 0.0
          %v1726 = vunpack.c.l.s4 1983009808
          %v1727 = vunpack.c.0.s8 %v1726
          %v1728 = vlaneseq
          %v1729 = vshrl.u32 %v1728, 7
          %v1730 = vsub.s32 %v1727, %v1729
          %v1731 = vrot.slane %v1518, %v1730
          %v1733 = vunpack.c.l.s4 1983009808
          %v1734 = vunpack.c.0.s8 %v1733
          %v1735 = vlaneseq
          %v1736 = vshrl.u32 %v1735, 7
          %v1737 = vsub.s32 %v1734, %v1736
          %v1738 = vrot.slane %v1724, %v1737
          %v1739 = vcombine.low %v1716, %v1731
          %v1740 = vcombine.high %v1716, %v1731
          %v1742 = vunpack.c.l.s4 1934713408
          %v1743 = vunpack.c.0.s8 %v1742
          %v1744 = vlaneseq
          %v1745 = vshrl.u32 %v1744, 7
          %v1746 = vsub.s32 %v1743, %v1745
          %v1747 = vrot.slane %v1739, %v1746
          %v1749 = vunpack.c.l.s4 1934713408
          %v1750 = vunpack.c.0.s8 %v1749
          %v1751 = vlaneseq
          %v1752 = vshrl.u32 %v1751, 7
          %v1753 = vsub.s32 %v1750, %v1752
          %v1754 = vrot.slane %v1740, %v1753
          %v1755 = vcombine.low %v1723, %v1738
          %v1756 = vcombine.high %v1723, %v1738
          %v1758 = vunpack.c.l.s4 1934713408
          %v1759 = vunpack.c.0.s8 %v1758
          %v1760 = vlaneseq
          %v1761 = vshrl.u32 %v1760, 7
          %v1762 = vsub.s32 %v1759, %v1761
          %v1763 = vrot.slane %v1755, %v1762
          %v1765 = vunpack.c.l.s4 1934713408
          %v1766 = vunpack.c.0.s8 %v1765
          %v1767 = vlaneseq
          %v1768 = vshrl.u32 %v1767, 7
          %v1769 = vsub.s32 %v1766, %v1768
          %v1770 = vrot.slane %v1756, %v1769
          %v1771 = vcombine.high %v1747, 0.0
          %v1772 = vcombine.high %v1754, 0.0
          %v1773 = vcombine.high %v1763, 0.0
          %v1774 = vcombine.high %v1770, 0.0
          %v1775 = vcombine.high %v1520, 0.0
          %v1777 = vunpack.c.l.s4 1983009808
          %v1778 = vunpack.c.0.s8 %v1777
          %v1779 = vlaneseq
          %v1780 = vshrl.u32 %v1779, 7
          %v1781 = vsub.s32 %v1778, %v1780
          %v1782 = vrot.slane %v1520, %v1781
          %v1784 = vunpack.c.l.s4 1983009808
          %v1785 = vunpack.c.0.s8 %v1784
          %v1786 = vlaneseq
          %v1787 = vshrl.u32 %v1786, 7
          %v1788 = vsub.s32 %v1785, %v1787
          %v1789 = vrot.slane %v1775, %v1788
          %v1790 = vcombine.high %v1522, 0.0
          %v1792 = vunpack.c.l.s4 1983009808
          %v1793 = vunpack.c.0.s8 %v1792
          %v1794 = vlaneseq
          %v1795 = vshrl.u32 %v1794, 7
          %v1796 = vsub.s32 %v1793, %v1795
          %v1797 = vrot.slane %v1522, %v1796
          %v1799 = vunpack.c.l.s4 1983009808
          %v1800 = vunpack.c.0.s8 %v1799
          %v1801 = vlaneseq
          %v1802 = vshrl.u32 %v1801, 7
          %v1803 = vsub.s32 %v1800, %v1802
          %v1804 = vrot.slane %v1790, %v1803
          %v1805 = vcombine.low %v1782, %v1797
          %v1806 = vcombine.high %v1782, %v1797
          %v1808 = vunpack.c.l.s4 1934713408
          %v1809 = vunpack.c.0.s8 %v1808
          %v1810 = vlaneseq
          %v1811 = vshrl.u32 %v1810, 7
          %v1812 = vsub.s32 %v1809, %v1811
          %v1813 = vrot.slane %v1805, %v1812
          %v1815 = vunpack.c.l.s4 1934713408
          %v1816 = vunpack.c.0.s8 %v1815
          %v1817 = vlaneseq
          %v1818 = vshrl.u32 %v1817, 7
          %v1819 = vsub.s32 %v1816, %v1818
          %v1820 = vrot.slane %v1806, %v1819
          %v1821 = vcombine.low %v1789, %v1804
          %v1822 = vcombine.high %v1789, %v1804
          %v1824 = vunpack.c.l.s4 1934713408
          %v1825 = vunpack.c.0.s8 %v1824
          %v1826 = vlaneseq
          %v1827 = vshrl.u32 %v1826, 7
          %v1828 = vsub.s32 %v1825, %v1827
          %v1829 = vrot.slane %v1821, %v1828
          %v1831 = vunpack.c.l.s4 1934713408
          %v1832 = vunpack.c.0.s8 %v1831
          %v1833 = vlaneseq
          %v1834 = vshrl.u32 %v1833, 7
          %v1835 = vsub.s32 %v1832, %v1834
          %v1836 = vrot.slane %v1822, %v1835
          %v1837 = vcombine.high %v1813, 0.0
          %v1838 = vcombine.high %v1820, 0.0
          %v1839 = vcombine.high %v1829, 0.0
          %v1840 = vcombine.high %v1836, 0.0
          %v1841 = vcombine.high %v1559, 0.0
          %v1843 = vunpack.c.l.s4 1983009808
          %v1844 = vunpack.c.0.s8 %v1843
          %v1845 = vlaneseq
          %v1846 = vshrl.u32 %v1845, 7
          %v1847 = vsub.s32 %v1844, %v1846
          %v1848 = vrot.slane %v1559, %v1847
          %v1850 = vunpack.c.l.s4 1983009808
          %v1851 = vunpack.c.0.s8 %v1850
          %v1852 = vlaneseq
          %v1853 = vshrl.u32 %v1852, 7
          %v1854 = vsub.s32 %v1851, %v1853
          %v1855 = vrot.slane %v1841, %v1854
          %v1856 = vcombine.high %v1561, 0.0
          %v1858 = vunpack.c.l.s4 1983009808
          %v1859 = vunpack.c.0.s8 %v1858
          %v1860 = vlaneseq
          %v1861 = vshrl.u32 %v1860, 7
          %v1862 = vsub.s32 %v1859, %v1861
          %v1863 = vrot.slane %v1561, %v1862
          %v1865 = vunpack.c.l.s4 1983009808
          %v1866 = vunpack.c.0.s8 %v1865
          %v1867 = vlaneseq
          %v1868 = vshrl.u32 %v1867, 7
          %v1869 = vsub.s32 %v1866, %v1868
          %v1870 = vrot.slane %v1856, %v1869
          %v1871 = vcombine.low %v1848, %v1863
          %v1872 = vcombine.high %v1848, %v1863
          %v1874 = vunpack.c.l.s4 1934713408
          %v1875 = vunpack.c.0.s8 %v1874
          %v1876 = vlaneseq
          %v1877 = vshrl.u32 %v1876, 7
          %v1878 = vsub.s32 %v1875, %v1877
          %v1879 = vrot.slane %v1871, %v1878
          %v1881 = vunpack.c.l.s4 1934713408
          %v1882 = vunpack.c.0.s8 %v1881
          %v1883 = vlaneseq
          %v1884 = vshrl.u32 %v1883, 7
          %v1885 = vsub.s32 %v1882, %v1884
          %v1886 = vrot.slane %v1872, %v1885
          %v1887 = vcombine.low %v1855, %v1870
          %v1888 = vcombine.high %v1855, %v1870
          %v1890 = vunpack.c.l.s4 1934713408
          %v1891 = vunpack.c.0.s8 %v1890
          %v1892 = vlaneseq
          %v1893 = vshrl.u32 %v1892, 7
          %v1894 = vsub.s32 %v1891, %v1893
          %v1895 = vrot.slane %v1887, %v1894
          %v1897 = vunpack.c.l.s4 1934713408
          %v1898 = vunpack.c.0.s8 %v1897
          %v1899 = vlaneseq
          %v1900 = vshrl.u32 %v1899, 7
          %v1901 = vsub.s32 %v1898, %v1900
          %v1902 = vrot.slane %v1888, %v1901
          %v1903 = vcombine.high %v1879, 0.0
          %v1904 = vcombine.high %v1886, 0.0
          %v1905 = vcombine.high %v1895, 0.0
          %v1906 = vcombine.high %v1902, 0.0
          %v1907 = vcombine.high %v1563, 0.0
          %v1909 = vunpack.c.l.s4 1983009808
          %v1910 = vunpack.c.0.s8 %v1909
          %v1911 = vlaneseq
          %v1912 = vshrl.u32 %v1911, 7
          %v1913 = vsub.s32 %v1910, %v1912
          %v1914 = vrot.slane %v1563, %v1913
          %v1916 = vunpack.c.l.s4 1983009808
          %v1917 = vunpack.c.0.s8 %v1916
          %v1918 = vlaneseq
          %v1919 = vshrl.u32 %v1918, 7
          %v1920 = vsub.s32 %v1917, %v1919
          %v1921 = vrot.slane %v1907, %v1920
          %v1922 = vcombine.high %v1565, 0.0
          %v1924 = vunpack.c.l.s4 1983009808
          %v1925 = vunpack.c.0.s8 %v1924
          %v1926 = vlaneseq
          %v1927 = vshrl.u32 %v1926, 7
          %v1928 = vsub.s32 %v1925, %v1927
          %v1929 = vrot.slane %v1565, %v1928
          %v1931 = vunpack.c.l.s4 1983009808
          %v1932 = vunpack.c.0.s8 %v1931
          %v1933 = vlaneseq
          %v1934 = vshrl.u32 %v1933, 7
          %v1935 = vsub.s32 %v1932, %v1934
          %v1936 = vrot.slane %v1922, %v1935
          %v1937 = vcombine.low %v1914, %v1929
          %v1938 = vcombine.high %v1914, %v1929
          %v1940 = vunpack.c.l.s4 1934713408
          %v1941 = vunpack.c.0.s8 %v1940
          %v1942 = vlaneseq
          %v1943 = vshrl.u32 %v1942, 7
          %v1944 = vsub.s32 %v1941, %v1943
          %v1945 = vrot.slane %v1937, %v1944
          %v1947 = vunpack.c.l.s4 1934713408
          %v1948 = vunpack.c.0.s8 %v1947
          %v1949 = vlaneseq
          %v1950 = vshrl.u32 %v1949, 7
          %v1951 = vsub.s32 %v1948, %v1950
          %v1952 = vrot.slane %v1938, %v1951
          %v1953 = vcombine.low %v1921, %v1936
          %v1954 = vcombine.high %v1921, %v1936
          %v1956 = vunpack.c.l.s4 1934713408
          %v1957 = vunpack.c.0.s8 %v1956
          %v1958 = vlaneseq
          %v1959 = vshrl.u32 %v1958, 7
          %v1960 = vsub.s32 %v1957, %v1959
          %v1961 = vrot.slane %v1953, %v1960
          %v1963 = vunpack.c.l.s4 1934713408
          %v1964 = vunpack.c.0.s8 %v1963
          %v1965 = vlaneseq
          %v1966 = vshrl.u32 %v1965, 7
          %v1967 = vsub.s32 %v1964, %v1966
          %v1968 = vrot.slane %v1954, %v1967
          %v1969 = vcombine.high %v1945, 0.0
          %v1970 = vcombine.high %v1952, 0.0
          %v1971 = vcombine.high %v1961, 0.0
          %v1972 = vcombine.high %v1968, 0.0
          %v1973 = vcombine.high %v1569, 0.0
          %v1975 = vunpack.c.l.s4 1983009808
          %v1976 = vunpack.c.0.s8 %v1975
          %v1977 = vlaneseq
          %v1978 = vshrl.u32 %v1977, 7
          %v1979 = vsub.s32 %v1976, %v1978
          %v1980 = vrot.slane %v1569, %v1979
          %v1982 = vunpack.c.l.s4 1983009808
          %v1983 = vunpack.c.0.s8 %v1982
          %v1984 = vlaneseq
          %v1985 = vshrl.u32 %v1984, 7
          %v1986 = vsub.s32 %v1983, %v1985
          %v1987 = vrot.slane %v1973, %v1986
          %v1988 = vcombine.high %v1571, 0.0
          %v1990 = vunpack.c.l.s4 1983009808
          %v1991 = vunpack.c.0.s8 %v1990
          %v1992 = vlaneseq
          %v1993 = vshrl.u32 %v1992, 7
          %v1994 = vsub.s32 %v1991, %v1993
          %v1995 = vrot.slane %v1571, %v1994
          %v1997 = vunpack.c.l.s4 1983009808
          %v1998 = vunpack.c.0.s8 %v1997
          %v1999 = vlaneseq
          %v2000 = vshrl.u32 %v1999, 7
          %v2001 = vsub.s32 %v1998, %v2000
          %v2002 = vrot.slane %v1988, %v2001
          %v2003 = vcombine.low %v1980, %v1995
          %v2004 = vcombine.high %v1980, %v1995
          %v2006 = vunpack.c.l.s4 1934713408
          %v2007 = vunpack.c.0.s8 %v2006
          %v2008 = vlaneseq
          %v2009 = vshrl.u32 %v2008, 7
          %v2010 = vsub.s32 %v2007, %v2009
          %v2011 = vrot.slane %v2003, %v2010
          %v2013 = vunpack.c.l.s4 1934713408
          %v2014 = vunpack.c.0.s8 %v2013
          %v2015 = vlaneseq
          %v2016 = vshrl.u32 %v2015, 7
          %v2017 = vsub.s32 %v2014, %v2016
          %v2018 = vrot.slane %v2004, %v2017
          %v2019 = vcombine.low %v1987, %v2002
          %v2020 = vcombine.high %v1987, %v2002
          %v2022 = vunpack.c.l.s4 1934713408
          %v2023 = vunpack.c.0.s8 %v2022
          %v2024 = vlaneseq
          %v2025 = vshrl.u32 %v2024, 7
          %v2026 = vsub.s32 %v2023, %v2025
          %v2027 = vrot.slane %v2019, %v2026
          %v2029 = vunpack.c.l.s4 1934713408
          %v2030 = vunpack.c.0.s8 %v2029
          %v2031 = vlaneseq
          %v2032 = vshrl.u32 %v2031, 7
          %v2033 = vsub.s32 %v2030, %v2032
          %v2034 = vrot.slane %v2020, %v2033
          %v2035 = vcombine.high %v2011, 0.0
          %v2036 = vcombine.high %v2018, 0.0
          %v2037 = vcombine.high %v2027, 0.0
          %v2038 = vcombine.high %v2034, 0.0
          %v2039 = vcombine.high %v1573, 0.0
          %v2041 = vunpack.c.l.s4 1983009808
          %v2042 = vunpack.c.0.s8 %v2041
          %v2043 = vlaneseq
          %v2044 = vshrl.u32 %v2043, 7
          %v2045 = vsub.s32 %v2042, %v2044
          %v2046 = vrot.slane %v1573, %v2045
          %v2048 = vunpack.c.l.s4 1983009808
          %v2049 = vunpack.c.0.s8 %v2048
          %v2050 = vlaneseq
          %v2051 = vshrl.u32 %v2050, 7
          %v2052 = vsub.s32 %v2049, %v2051
          %v2053 = vrot.slane %v2039, %v2052
          %v2054 = vcombine.high %v1575, 0.0
          %v2056 = vunpack.c.l.s4 1983009808
          %v2057 = vunpack.c.0.s8 %v2056
          %v2058 = vlaneseq
          %v2059 = vshrl.u32 %v2058, 7
          %v2060 = vsub.s32 %v2057, %v2059
          %v2061 = vrot.slane %v1575, %v2060
          %v2063 = vunpack.c.l.s4 1983009808
          %v2064 = vunpack.c.0.s8 %v2063
          %v2065 = vlaneseq
          %v2066 = vshrl.u32 %v2065, 7
          %v2067 = vsub.s32 %v2064, %v2066
          %v2068 = vrot.slane %v2054, %v2067
          %v2069 = vcombine.low %v2046, %v2061
          %v2070 = vcombine.high %v2046, %v2061
          %v2072 = vunpack.c.l.s4 1934713408
          %v2073 = vunpack.c.0.s8 %v2072
          %v2074 = vlaneseq
          %v2075 = vshrl.u32 %v2074, 7
          %v2076 = vsub.s32 %v2073, %v2075
          %v2077 = vrot.slane %v2069, %v2076
          %v2079 = vunpack.c.l.s4 1934713408
          %v2080 = vunpack.c.0.s8 %v2079
          %v2081 = vlaneseq
          %v2082 = vshrl.u32 %v2081, 7
          %v2083 = vsub.s32 %v2080, %v2082
          %v2084 = vrot.slane %v2070, %v2083
          %v2085 = vcombine.low %v2053, %v2068
          %v2086 = vcombine.high %v2053, %v2068
          %v2088 = vunpack.c.l.s4 1934713408
          %v2089 = vunpack.c.0.s8 %v2088
          %v2090 = vlaneseq
          %v2091 = vshrl.u32 %v2090, 7
          %v2092 = vsub.s32 %v2089, %v2091
          %v2093 = vrot.slane %v2085, %v2092
          %v2095 = vunpack.c.l.s4 1934713408
          %v2096 = vunpack.c.0.s8 %v2095
          %v2097 = vlaneseq
          %v2098 = vshrl.u32 %v2097, 7
          %v2099 = vsub.s32 %v2096, %v2098
          %v2100 = vrot.slane %v2086, %v2099
          %v2101 = vcombine.high %v2077, 0.0
          %v2102 = vcombine.high %v2084, 0.0
          %v2103 = vcombine.high %v2093, 0.0
          %v2104 = vcombine.high %v2100, 0.0
          %v2105 = vcombine.low %v1615, %v1622
          %v2107 = vunpack.c.l.s4 1983009808
          %v2108 = vunpack.c.0.s8 %v2107
          %v2109 = vlaneseq
          %v2110 = vshrl.u32 %v2109, 7
          %v2111 = vsub.s32 %v2108, %v2110
          %v2112 = vrot.slane %v2105, %v2111
          %v2113 = vcombine.low %v1639, %v1640
          %v2115 = vunpack.c.l.s4 1983009808
          %v2116 = vunpack.c.0.s8 %v2115
          %v2117 = vlaneseq
          %v2118 = vshrl.u32 %v2117, 7
          %v2119 = vsub.s32 %v2116, %v2118
          %v2120 = vrot.slane %v2113, %v2119
          %v2121 = vcombine.low %v1631, %v1638
          %v2123 = vunpack.c.l.s4 1983009808
          %v2124 = vunpack.c.0.s8 %v2123
          %v2125 = vlaneseq
          %v2126 = vshrl.u32 %v2125, 7
          %v2127 = vsub.s32 %v2124, %v2126
          %v2128 = vrot.slane %v2121, %v2127
          %v2129 = vcombine.low %v1641, %v1642
          %v2131 = vunpack.c.l.s4 1983009808
          %v2132 = vunpack.c.0.s8 %v2131
          %v2133 = vlaneseq
          %v2134 = vshrl.u32 %v2133, 7
          %v2135 = vsub.s32 %v2132, %v2134
          %v2136 = vrot.slane %v2129, %v2135
          %v2137 = vcombine.low %v2112, %v2120
          %v2139 = vunpack.c.l.s4 1934713408
          %v2140 = vunpack.c.0.s8 %v2139
          %v2141 = vlaneseq
          %v2142 = vshrl.u32 %v2141, 7
          %v2143 = vsub.s32 %v2140, %v2142
          %v2144 = vrot.slane %v2137, %v2143
          %v2145 = vcombine.low %v2128, %v2136
          %v2147 = vunpack.c.l.s4 1934713408
          %v2148 = vunpack.c.0.s8 %v2147
          %v2149 = vlaneseq
          %v2150 = vshrl.u32 %v2149, 7
          %v2151 = vsub.s32 %v2148, %v2150
          %v2152 = vrot.slane %v2145, %v2151
          %v2153 = vcombine.low %v2144, %v2152
          %v2154 = vcombine.high %v2144, %v2152
          %v2155 = vcombine.low %v1681, %v1688
          %v2157 = vunpack.c.l.s4 1983009808
          %v2158 = vunpack.c.0.s8 %v2157
          %v2159 = vlaneseq
          %v2160 = vshrl.u32 %v2159, 7
          %v2161 = vsub.s32 %v2158, %v2160
          %v2162 = vrot.slane %v2155, %v2161
          %v2163 = vcombine.low %v1705, %v1706
          %v2165 = vunpack.c.l.s4 1983009808
          %v2166 = vunpack.c.0.s8 %v2165
          %v2167 = vlaneseq
          %v2168 = vshrl.u32 %v2167, 7
          %v2169 = vsub.s32 %v2166, %v2168
          %v2170 = vrot.slane %v2163, %v2169
          %v2171 = vcombine.low %v1697, %v1704
          %v2173 = vunpack.c.l.s4 1983009808
          %v2174 = vunpack.c.0.s8 %v2173
          %v2175 = vlaneseq
          %v2176 = vshrl.u32 %v2175, 7
          %v2177 = vsub.s32 %v2174, %v2176
          %v2178 = vrot.slane %v2171, %v2177
          %v2179 = vcombine.low %v1707, %v1708
          %v2181 = vunpack.c.l.s4 1983009808
          %v2182 = vunpack.c.0.s8 %v2181
          %v2183 = vlaneseq
          %v2184 = vshrl.u32 %v2183, 7
          %v2185 = vsub.s32 %v2182, %v2184
          %v2186 = vrot.slane %v2179, %v2185
          %v2187 = vcombine.low %v2162, %v2170
          %v2189 = vunpack.c.l.s4 1934713408
          %v2190 = vunpack.c.0.s8 %v2189
          %v2191 = vlaneseq
          %v2192 = vshrl.u32 %v2191, 7
          %v2193 = vsub.s32 %v2190, %v2192
          %v2194 = vrot.slane %v2187, %v2193
          %v2195 = vcombine.low %v2178, %v2186
          %v2197 = vunpack.c.l.s4 1934713408
          %v2198 = vunpack.c.0.s8 %v2197
          %v2199 = vlaneseq
          %v2200 = vshrl.u32 %v2199, 7
          %v2201 = vsub.s32 %v2198, %v2200
          %v2202 = vrot.slane %v2195, %v2201
          %v2203 = vcombine.low %v2194, %v2202
          %v2204 = vcombine.high %v2194, %v2202
          %v2205 = vcombine.low %v1747, %v1754
          %v2207 = vunpack.c.l.s4 1983009808
          %v2208 = vunpack.c.0.s8 %v2207
          %v2209 = vlaneseq
          %v2210 = vshrl.u32 %v2209, 7
          %v2211 = vsub.s32 %v2208, %v2210
          %v2212 = vrot.slane %v2205, %v2211
          %v2213 = vcombine.low %v1771, %v1772
          %v2215 = vunpack.c.l.s4 1983009808
          %v2216 = vunpack.c.0.s8 %v2215
          %v2217 = vlaneseq
          %v2218 = vshrl.u32 %v2217, 7
          %v2219 = vsub.s32 %v2216, %v2218
          %v2220 = vrot.slane %v2213, %v2219
          %v2221 = vcombine.low %v1763, %v1770
          %v2223 = vunpack.c.l.s4 1983009808
          %v2224 = vunpack.c.0.s8 %v2223
          %v2225 = vlaneseq
          %v2226 = vshrl.u32 %v2225, 7
          %v2227 = vsub.s32 %v2224, %v2226
          %v2228 = vrot.slane %v2221, %v2227
          %v2229 = vcombine.low %v1773, %v1774
          %v2231 = vunpack.c.l.s4 1983009808
          %v2232 = vunpack.c.0.s8 %v2231
          %v2233 = vlaneseq
          %v2234 = vshrl.u32 %v2233, 7
          %v2235 = vsub.s32 %v2232, %v2234
          %v2236 = vrot.slane %v2229, %v2235
          %v2237 = vcombine.low %v2212, %v2220
          %v2239 = vunpack.c.l.s4 1934713408
          %v2240 = vunpack.c.0.s8 %v2239
          %v2241 = vlaneseq
          %v2242 = vshrl.u32 %v2241, 7
          %v2243 = vsub.s32 %v2240, %v2242
          %v2244 = vrot.slane %v2237, %v2243
          %v2245 = vcombine.low %v2228, %v2236
          %v2247 = vunpack.c.l.s4 1934713408
          %v2248 = vunpack.c.0.s8 %v2247
          %v2249 = vlaneseq
          %v2250 = vshrl.u32 %v2249, 7
          %v2251 = vsub.s32 %v2248, %v2250
          %v2252 = vrot.slane %v2245, %v2251
          %v2253 = vcombine.low %v2244, %v2252
          %v2254 = vcombine.high %v2244, %v2252
          %v2255 = vcombine.low %v1813, %v1820
          %v2257 = vunpack.c.l.s4 1983009808
          %v2258 = vunpack.c.0.s8 %v2257
          %v2259 = vlaneseq
          %v2260 = vshrl.u32 %v2259, 7
          %v2261 = vsub.s32 %v2258, %v2260
          %v2262 = vrot.slane %v2255, %v2261
          %v2263 = vcombine.low %v1837, %v1838
          %v2265 = vunpack.c.l.s4 1983009808
          %v2266 = vunpack.c.0.s8 %v2265
          %v2267 = vlaneseq
          %v2268 = vshrl.u32 %v2267, 7
          %v2269 = vsub.s32 %v2266, %v2268
          %v2270 = vrot.slane %v2263, %v2269
          %v2271 = vcombine.low %v1829, %v1836
          %v2273 = vunpack.c.l.s4 1983009808
          %v2274 = vunpack.c.0.s8 %v2273
          %v2275 = vlaneseq
          %v2276 = vshrl.u32 %v2275, 7
          %v2277 = vsub.s32 %v2274, %v2276
          %v2278 = vrot.slane %v2271, %v2277
          %v2279 = vcombine.low %v1839, %v1840
          %v2281 = vunpack.c.l.s4 1983009808
          %v2282 = vunpack.c.0.s8 %v2281
          %v2283 = vlaneseq
          %v2284 = vshrl.u32 %v2283, 7
          %v2285 = vsub.s32 %v2282, %v2284
          %v2286 = vrot.slane %v2279, %v2285
          %v2287 = vcombine.low %v2262, %v2270
          %v2289 = vunpack.c.l.s4 1934713408
          %v2290 = vunpack.c.0.s8 %v2289
          %v2291 = vlaneseq
          %v2292 = vshrl.u32 %v2291, 7
          %v2293 = vsub.s32 %v2290, %v2292
          %v2294 = vrot.slane %v2287, %v2293
          %v2295 = vcombine.low %v2278, %v2286
          %v2297 = vunpack.c.l.s4 1934713408
          %v2298 = vunpack.c.0.s8 %v2297
          %v2299 = vlaneseq
          %v2300 = vshrl.u32 %v2299, 7
          %v2301 = vsub.s32 %v2298, %v2300
          %v2302 = vrot.slane %v2295, %v2301
          %v2303 = vcombine.low %v2294, %v2302
          %v2304 = vcombine.high %v2294, %v2302
          %v2305 = vpack.c.bf16 %v2203, %v2153
          %v2306 = vpack.c.bf16 %v2303, %v2253
          %v2307 = vpack.c.bf16 %v2204, %v2154
          %v2308 = vpack.c.bf16 %v2304, %v2254
          %v2313 = vunpack.c.l.b16 %v2305
          %v2314 = vunpack.c.h.b16 %v2305
          %v2315 = vunpack.c.l.b16 %v2306
          %v2316 = vunpack.c.h.b16 %v2306
          %v2317 = vunpack.c.l.b16 %v2307
          %v2318 = vunpack.c.h.b16 %v2307
          %v2319 = vunpack.c.l.b16 %v2308
          %v2320 = vunpack.c.h.b16 %v2308
          %v2321 = vpack.c.b16 %v2313, %v2313
          %v2322 = vpack.c.b16 %v2314, %v2314
          %v2323 = vpack.c.b16 %v2315, %v2315
          %v2324 = vpack.c.b16 %v2316, %v2316
          %v2325 = vpack.c.b16 %v2317, %v2317
          %v2326 = vpack.c.b16 %v2318, %v2318
          %v2327 = vpack.c.b16 %v2319, %v2319
          %v2328 = vpack.c.b16 %v2320, %v2320
          %2337 = vst [vmem:[#allocation2] sm:$0xf] %v2321
          %2338 = vst [vmem:[#allocation2 + $0x4] sm:$0xf] %v2322
          %2339 = vst [vmem:[#allocation2 + $0x8] sm:$0xf] %v2323
          %2340 = vst [vmem:[#allocation2 + $0xc] sm:$0xf] %v2324
          %2341 = vst [vmem:[#allocation2 + $0x10] sm:$0xf] %v2325
          %2342 = vst [vmem:[#allocation2 + $0x14] sm:$0xf] %v2326
          %2343 = vst [vmem:[#allocation2 + $0x18] sm:$0xf] %v2327
          %2344 = vst [vmem:[#allocation2 + $0x1c] sm:$0xf] %v2328
          %v2345 = vcombine.low %v1879, %v1886
          %v2347 = vunpack.c.l.s4 1983009808
          %v2348 = vunpack.c.0.s8 %v2347
          %v2349 = vlaneseq
          %v2350 = vshrl.u32 %v2349, 7
          %v2351 = vsub.s32 %v2348, %v2350
          %v2352 = vrot.slane %v2345, %v2351
          %v2353 = vcombine.low %v1903, %v1904
          %v2355 = vunpack.c.l.s4 1983009808
          %v2356 = vunpack.c.0.s8 %v2355
          %v2357 = vlaneseq
          %v2358 = vshrl.u32 %v2357, 7
          %v2359 = vsub.s32 %v2356, %v2358
          %v2360 = vrot.slane %v2353, %v2359
          %v2361 = vcombine.low %v1895, %v1902
          %v2363 = vunpack.c.l.s4 1983009808
          %v2364 = vunpack.c.0.s8 %v2363
          %v2365 = vlaneseq
          %v2366 = vshrl.u32 %v2365, 7
          %v2367 = vsub.s32 %v2364, %v2366
          %v2368 = vrot.slane %v2361, %v2367
          %v2369 = vcombine.low %v1905, %v1906
          %v2371 = vunpack.c.l.s4 1983009808
          %v2372 = vunpack.c.0.s8 %v2371
          %v2373 = vlaneseq
          %v2374 = vshrl.u32 %v2373, 7
          %v2375 = vsub.s32 %v2372, %v2374
          %v2376 = vrot.slane %v2369, %v2375
          %v2377 = vcombine.low %v2352, %v2360
          %v2379 = vunpack.c.l.s4 1934713408
          %v2380 = vunpack.c.0.s8 %v2379
          %v2381 = vlaneseq
          %v2382 = vshrl.u32 %v2381, 7
          %v2383 = vsub.s32 %v2380, %v2382
          %v2384 = vrot.slane %v2377, %v2383
          %v2385 = vcombine.low %v2368, %v2376
          %v2387 = vunpack.c.l.s4 1934713408
          %v2388 = vunpack.c.0.s8 %v2387
          %v2389 = vlaneseq
          %v2390 = vshrl.u32 %v2389, 7
          %v2391 = vsub.s32 %v2388, %v2390
          %v2392 = vrot.slane %v2385, %v2391
          %v2393 = vcombine.low %v2384, %v2392
          %v2394 = vcombine.high %v2384, %v2392
          %v2395 = vcombine.low %v1945, %v1952
          %v2397 = vunpack.c.l.s4 1983009808
          %v2398 = vunpack.c.0.s8 %v2397
          %v2399 = vlaneseq
          %v2400 = vshrl.u32 %v2399, 7
          %v2401 = vsub.s32 %v2398, %v2400
          %v2402 = vrot.slane %v2395, %v2401
          %v2403 = vcombine.low %v1969, %v1970
          %v2405 = vunpack.c.l.s4 1983009808
          %v2406 = vunpack.c.0.s8 %v2405
          %v2407 = vlaneseq
          %v2408 = vshrl.u32 %v2407, 7
          %v2409 = vsub.s32 %v2406, %v2408
          %v2410 = vrot.slane %v2403, %v2409
          %v2411 = vcombine.low %v1961, %v1968
          %v2413 = vunpack.c.l.s4 1983009808
          %v2414 = vunpack.c.0.s8 %v2413
          %v2415 = vlaneseq
          %v2416 = vshrl.u32 %v2415, 7
          %v2417 = vsub.s32 %v2414, %v2416
          %v2418 = vrot.slane %v2411, %v2417
          %v2419 = vcombine.low %v1971, %v1972
          %v2421 = vunpack.c.l.s4 1983009808
          %v2422 = vunpack.c.0.s8 %v2421
          %v2423 = vlaneseq
          %v2424 = vshrl.u32 %v2423, 7
          %v2425 = vsub.s32 %v2422, %v2424
          %v2426 = vrot.slane %v2419, %v2425
          %v2427 = vcombine.low %v2402, %v2410
          %v2429 = vunpack.c.l.s4 1934713408
          %v2430 = vunpack.c.0.s8 %v2429
          %v2431 = vlaneseq
          %v2432 = vshrl.u32 %v2431, 7
          %v2433 = vsub.s32 %v2430, %v2432
          %v2434 = vrot.slane %v2427, %v2433
          %v2435 = vcombine.low %v2418, %v2426
          %v2437 = vunpack.c.l.s4 1934713408
          %v2438 = vunpack.c.0.s8 %v2437
          %v2439 = vlaneseq
          %v2440 = vshrl.u32 %v2439, 7
          %v2441 = vsub.s32 %v2438, %v2440
          %v2442 = vrot.slane %v2435, %v2441
          %v2443 = vcombine.low %v2434, %v2442
          %v2444 = vcombine.high %v2434, %v2442
          %v2445 = vcombine.low %v2011, %v2018
          %v2447 = vunpack.c.l.s4 1983009808
          %v2448 = vunpack.c.0.s8 %v2447
          %v2449 = vlaneseq
          %v2450 = vshrl.u32 %v2449, 7
          %v2451 = vsub.s32 %v2448, %v2450
          %v2452 = vrot.slane %v2445, %v2451
          %v2453 = vcombine.low %v2035, %v2036
          %v2455 = vunpack.c.l.s4 1983009808
          %v2456 = vunpack.c.0.s8 %v2455
          %v2457 = vlaneseq
          %v2458 = vshrl.u32 %v2457, 7
          %v2459 = vsub.s32 %v2456, %v2458
          %v2460 = vrot.slane %v2453, %v2459
          %v2461 = vcombine.low %v2027, %v2034
          %v2463 = vunpack.c.l.s4 1983009808
          %v2464 = vunpack.c.0.s8 %v2463
          %v2465 = vlaneseq
          %v2466 = vshrl.u32 %v2465, 7
          %v2467 = vsub.s32 %v2464, %v2466
          %v2468 = vrot.slane %v2461, %v2467
          %v2469 = vcombine.low %v2037, %v2038
          %v2471 = vunpack.c.l.s4 1983009808
          %v2472 = vunpack.c.0.s8 %v2471
          %v2473 = vlaneseq
          %v2474 = vshrl.u32 %v2473, 7
          %v2475 = vsub.s32 %v2472, %v2474
          %v2476 = vrot.slane %v2469, %v2475
          %v2477 = vcombine.low %v2452, %v2460
          %v2479 = vunpack.c.l.s4 1934713408
          %v2480 = vunpack.c.0.s8 %v2479
          %v2481 = vlaneseq
          %v2482 = vshrl.u32 %v2481, 7
          %v2483 = vsub.s32 %v2480, %v2482
          %v2484 = vrot.slane %v2477, %v2483
          %v2485 = vcombine.low %v2468, %v2476
          %v2487 = vunpack.c.l.s4 1934713408
          %v2488 = vunpack.c.0.s8 %v2487
          %v2489 = vlaneseq
          %v2490 = vshrl.u32 %v2489, 7
          %v2491 = vsub.s32 %v2488, %v2490
          %v2492 = vrot.slane %v2485, %v2491
          %v2493 = vcombine.low %v2484, %v2492
          %v2494 = vcombine.high %v2484, %v2492
          %v2495 = vcombine.low %v2077, %v2084
          %v2497 = vunpack.c.l.s4 1983009808
          %v2498 = vunpack.c.0.s8 %v2497
          %v2499 = vlaneseq
          %v2500 = vshrl.u32 %v2499, 7
          %v2501 = vsub.s32 %v2498, %v2500
          %v2502 = vrot.slane %v2495, %v2501
          %v2503 = vcombine.low %v2101, %v2102
          %v2505 = vunpack.c.l.s4 1983009808
          %v2506 = vunpack.c.0.s8 %v2505
          %v2507 = vlaneseq
          %v2508 = vshrl.u32 %v2507, 7
          %v2509 = vsub.s32 %v2506, %v2508
          %v2510 = vrot.slane %v2503, %v2509
          %v2511 = vcombine.low %v2093, %v2100
          %v2513 = vunpack.c.l.s4 1983009808
          %v2514 = vunpack.c.0.s8 %v2513
          %v2515 = vlaneseq
          %v2516 = vshrl.u32 %v2515, 7
          %v2517 = vsub.s32 %v2514, %v2516
          %v2518 = vrot.slane %v2511, %v2517
          %v2519 = vcombine.low %v2103, %v2104
          %v2521 = vunpack.c.l.s4 1983009808
          %v2522 = vunpack.c.0.s8 %v2521
          %v2523 = vlaneseq
          %v2524 = vshrl.u32 %v2523, 7
          %v2525 = vsub.s32 %v2522, %v2524
          %v2526 = vrot.slane %v2519, %v2525
          %v2527 = vcombine.low %v2502, %v2510
          %v2529 = vunpack.c.l.s4 1934713408
          %v2530 = vunpack.c.0.s8 %v2529
          %v2531 = vlaneseq
          %v2532 = vshrl.u32 %v2531, 7
          %v2533 = vsub.s32 %v2530, %v2532
          %v2534 = vrot.slane %v2527, %v2533
          %v2535 = vcombine.low %v2518, %v2526
          %v2537 = vunpack.c.l.s4 1934713408
          %v2538 = vunpack.c.0.s8 %v2537
          %v2539 = vlaneseq
          %v2540 = vshrl.u32 %v2539, 7
          %v2541 = vsub.s32 %v2538, %v2540
          %v2542 = vrot.slane %v2535, %v2541
          %v2543 = vcombine.low %v2534, %v2542
          %v2544 = vcombine.high %v2534, %v2542
          %v2545 = vpack.c.bf16 %v2443, %v2393
          %v2546 = vpack.c.bf16 %v2543, %v2493
          %v2547 = vpack.c.bf16 %v2444, %v2394
          %v2548 = vpack.c.bf16 %v2544, %v2494
          %v2553 = vunpack.c.l.b16 %v2545
          %v2554 = vunpack.c.h.b16 %v2545
          %v2555 = vunpack.c.l.b16 %v2546
          %v2556 = vunpack.c.h.b16 %v2546
          %v2557 = vunpack.c.l.b16 %v2547
          %v2558 = vunpack.c.h.b16 %v2547
          %v2559 = vunpack.c.l.b16 %v2548
          %v2560 = vunpack.c.h.b16 %v2548
          %v2561 = vpack.c.b16 %v2553, %v2553
          %v2562 = vpack.c.b16 %v2554, %v2554
          %v2563 = vpack.c.b16 %v2555, %v2555
          %v2564 = vpack.c.b16 %v2556, %v2556
          %v2565 = vpack.c.b16 %v2557, %v2557
          %v2566 = vpack.c.b16 %v2558, %v2558
          %v2567 = vpack.c.b16 %v2559, %v2559
          %v2568 = vpack.c.b16 %v2560, %v2560
          %2577 = vst [vmem:[#allocation3] sm:$0xf] %v2561
          %2578 = vst [vmem:[#allocation3 + $0x4] sm:$0xf] %v2562
          %2579 = vst [vmem:[#allocation3 + $0x8] sm:$0xf] %v2563
          %2580 = vst [vmem:[#allocation3 + $0xc] sm:$0xf] %v2564
          %2581 = vst [vmem:[#allocation3 + $0x10] sm:$0xf] %v2565
          %2582 = vst [vmem:[#allocation3 + $0x14] sm:$0xf] %v2566
          %2583 = vst [vmem:[#allocation3 + $0x18] sm:$0xf] %v2567
          %2584 = vst [vmem:[#allocation3 + $0x1c] sm:$0xf] %v2568
          %v2585 = vld [vmem:[%s894] sm:$0xff]
          %v2586 = vld [vmem:[%s894 + $0x8] sm:$0xff]
          %v2587 = vld [vmem:[%s894 + $0x10] sm:$0xff]
          %v2588 = vld [vmem:[%s894 + $0x18] sm:$0xff]
          %v2589 = vld [vmem:[#allocation23] sm:$0xff]
          %v2590 = vld [vmem:[#allocation23 + $0x8] sm:$0xff]
          %v2591 = vld [vmem:[#allocation23 + $0x10] sm:$0xff]
          %v2592 = vld [vmem:[#allocation23 + $0x18] sm:$0xff]
          %v2593 = vld [vmem:[#allocation23 + $0x20] sm:$0xff]
          %v2594 = vld [vmem:[#allocation23 + $0x28] sm:$0xff]
          %v2595 = vld [vmem:[#allocation23 + $0x30] sm:$0xff]
          %v2596 = vld [vmem:[#allocation23 + $0x38] sm:$0xff]
          %v2597 = vld [vmem:[#allocation23 + $0x40] sm:$0xff]
          %v2598 = vld [vmem:[#allocation23 + $0x48] sm:$0xff]
          %v2599 = vld [vmem:[#allocation23 + $0x50] sm:$0xff]
          %v2600 = vld [vmem:[#allocation23 + $0x58] sm:$0xff]
          %v2601 = vld [vmem:[#allocation23 + $0x60] sm:$0xff]
          %v2602 = vld [vmem:[#allocation23 + $0x68] sm:$0xff]
          %v2603 = vld [vmem:[#allocation23 + $0x70] sm:$0xff]
          %v2604 = vld [vmem:[#allocation23 + $0x78] sm:$0xff]
          %v2605 = vld [vmem:[#allocation23 + $0x80] sm:$0xff]
          %v2606 = vld [vmem:[#allocation23 + $0x88] sm:$0xff]
          %v2607 = vld [vmem:[#allocation23 + $0x90] sm:$0xff]
          %v2608 = vld [vmem:[#allocation23 + $0x98] sm:$0xff]
          %v2609 = vld [vmem:[#allocation23 + $0xa0] sm:$0xff]
          %v2610 = vld [vmem:[#allocation23 + $0xa8] sm:$0xff]
          %v2611 = vld [vmem:[#allocation23 + $0xb0] sm:$0xff]
          %v2612 = vld [vmem:[#allocation23 + $0xb8] sm:$0xff]
          %v2613 = vld [vmem:[#allocation23 + $0xc0] sm:$0xff]
          %v2614 = vld [vmem:[#allocation23 + $0xc8] sm:$0xff]
          %v2615 = vld [vmem:[#allocation23 + $0xd0] sm:$0xff]
          %v2616 = vld [vmem:[#allocation23 + $0xd8] sm:$0xff]
          %v2617 = vld [vmem:[#allocation23 + $0xe0] sm:$0xff]
          %v2618 = vld [vmem:[#allocation23 + $0xe8] sm:$0xff]
          %v2619 = vld [vmem:[#allocation23 + $0xf0] sm:$0xff]
          %v2620 = vld [vmem:[#allocation23 + $0xf8] sm:$0xff]
          %v2621 = vld [vmem:[#allocation23 + $0x100] sm:$0xff]
          %v2622 = vld [vmem:[#allocation23 + $0x108] sm:$0xff]
          %v2623 = vld [vmem:[#allocation23 + $0x110] sm:$0xff]
          %v2624 = vld [vmem:[#allocation23 + $0x118] sm:$0xff]
          %v2625 = vld [vmem:[#allocation23 + $0x120] sm:$0xff]
          %v2626 = vld [vmem:[#allocation23 + $0x128] sm:$0xff]
          %v2627 = vld [vmem:[#allocation23 + $0x130] sm:$0xff]
          %v2628 = vld [vmem:[#allocation23 + $0x138] sm:$0xff]
          %v2629 = vld [vmem:[#allocation23 + $0x140] sm:$0xff]
          %v2630 = vld [vmem:[#allocation23 + $0x148] sm:$0xff]
          %v2631 = vld [vmem:[#allocation23 + $0x150] sm:$0xff]
          %v2632 = vld [vmem:[#allocation23 + $0x158] sm:$0xff]
          %v2633 = vld [vmem:[#allocation23 + $0x160] sm:$0xff]
          %v2634 = vld [vmem:[#allocation23 + $0x168] sm:$0xff]
          %v2635 = vld [vmem:[#allocation23 + $0x170] sm:$0xff]
          %v2636 = vld [vmem:[#allocation23 + $0x178] sm:$0xff]
          %v2637 = vld [vmem:[#allocation23 + $0x180] sm:$0xff]
          %v2638 = vld [vmem:[#allocation23 + $0x188] sm:$0xff]
          %v2639 = vld [vmem:[#allocation23 + $0x190] sm:$0xff]
          %v2640 = vld [vmem:[#allocation23 + $0x198] sm:$0xff]
          %v2641 = vld [vmem:[#allocation23 + $0x1a0] sm:$0xff]
          %v2642 = vld [vmem:[#allocation23 + $0x1a8] sm:$0xff]
          %v2643 = vld [vmem:[#allocation23 + $0x1b0] sm:$0xff]
          %v2644 = vld [vmem:[#allocation23 + $0x1b8] sm:$0xff]
          %v2645 = vld [vmem:[#allocation23 + $0x1c0] sm:$0xff]
          %v2646 = vld [vmem:[#allocation23 + $0x1c8] sm:$0xff]
          %v2647 = vld [vmem:[#allocation23 + $0x1d0] sm:$0xff]
          %v2648 = vld [vmem:[#allocation23 + $0x1d8] sm:$0xff]
          %v2649 = vld [vmem:[#allocation23 + $0x1e0] sm:$0xff]
          %v2650 = vld [vmem:[#allocation23 + $0x1e8] sm:$0xff]
          %v2651 = vld [vmem:[#allocation23 + $0x1f0] sm:$0xff]
          %v2652 = vld [vmem:[#allocation23 + $0x1f8] sm:$0xff]
          %v2653 = vld [vmem:[%s14] sm:$0xf]
          %v2655 = vlaneseq
          %v2656 = vshrl.u32 %v2655, 7
          %v2657 = vsub.s32 0, %v2656
          %v2658 = vrot.slane %v2653, %v2657
          %v2659 = vlaneseq
          %v2660 = vshrl.u32 %v2659, 7
          %v2661 = vsub.s32 1, %v2660
          %v2662 = vrot.slane %v2653, %v2661
          %v2663 = vlaneseq
          %v2664 = vshrl.u32 %v2663, 7
          %v2665 = vsub.s32 2, %v2664
          %v2666 = vrot.slane %v2653, %v2665
          %v2667 = vlaneseq
          %v2668 = vshrl.u32 %v2667, 7
          %v2669 = vsub.s32 3, %v2668
          %v2670 = vrot.slane %v2653, %v2669
          %v2679 = vunpack.c.l.b16 %v2585
          %v2680 = vunpack.c.h.b16 %v2585
          %v2681 = vunpack.c.l.b16 %v2586
          %v2682 = vunpack.c.h.b16 %v2586
          %v2683 = vunpack.c.l.b16 %v2587
          %v2684 = vunpack.c.h.b16 %v2587
          %v2685 = vunpack.c.l.b16 %v2588
          %v2686 = vunpack.c.h.b16 %v2588
          %v2687 = vpack.c.b16 %v2681, %v2679
          %v2688 = vpack.c.b16 %v2682, %v2680
          %v2689 = vpack.c.b16 %v2685, %v2683
          %v2690 = vpack.c.b16 %v2686, %v2684
          %v2759 = vunpack.c.l.b16 %v2589
          %v2760 = vunpack.c.h.b16 %v2589
          %v2761 = vunpack.c.l.b16 %v2590
          %v2762 = vunpack.c.h.b16 %v2590
          %v2763 = vunpack.c.l.b16 %v2591
          %v2764 = vunpack.c.h.b16 %v2591
          %v2765 = vunpack.c.l.b16 %v2592
          %v2766 = vunpack.c.h.b16 %v2592
          %v2767 = vunpack.c.l.b16 %v2593
          %v2768 = vunpack.c.h.b16 %v2593
          %v2769 = vunpack.c.l.b16 %v2594
          %v2770 = vunpack.c.h.b16 %v2594
          %v2771 = vunpack.c.l.b16 %v2595
          %v2772 = vunpack.c.h.b16 %v2595
          %v2773 = vunpack.c.l.b16 %v2596
          %v2774 = vunpack.c.h.b16 %v2596
          %v2775 = vunpack.c.l.b16 %v2597
          %v2776 = vunpack.c.h.b16 %v2597
          %v2777 = vunpack.c.l.b16 %v2598
          %v2778 = vunpack.c.h.b16 %v2598
          %v2779 = vunpack.c.l.b16 %v2599
          %v2780 = vunpack.c.h.b16 %v2599
          %v2781 = vunpack.c.l.b16 %v2600
          %v2782 = vunpack.c.h.b16 %v2600
          %v2783 = vunpack.c.l.b16 %v2601
          %v2784 = vunpack.c.h.b16 %v2601
          %v2785 = vunpack.c.l.b16 %v2602
          %v2786 = vunpack.c.h.b16 %v2602
          %v2787 = vunpack.c.l.b16 %v2603
          %v2788 = vunpack.c.h.b16 %v2603
          %v2789 = vunpack.c.l.b16 %v2604
          %v2790 = vunpack.c.h.b16 %v2604
          %v2791 = vunpack.c.l.b16 %v2605
          %v2792 = vunpack.c.h.b16 %v2605
          %v2793 = vunpack.c.l.b16 %v2606
          %v2794 = vunpack.c.h.b16 %v2606
          %v2795 = vunpack.c.l.b16 %v2607
          %v2796 = vunpack.c.h.b16 %v2607
          %v2797 = vunpack.c.l.b16 %v2608
          %v2798 = vunpack.c.h.b16 %v2608
          %v2799 = vunpack.c.l.b16 %v2609
          %v2800 = vunpack.c.h.b16 %v2609
          %v2801 = vunpack.c.l.b16 %v2610
          %v2802 = vunpack.c.h.b16 %v2610
          %v2803 = vunpack.c.l.b16 %v2611
          %v2804 = vunpack.c.h.b16 %v2611
          %v2805 = vunpack.c.l.b16 %v2612
          %v2806 = vunpack.c.h.b16 %v2612
          %v2807 = vunpack.c.l.b16 %v2613
          %v2808 = vunpack.c.h.b16 %v2613
          %v2809 = vunpack.c.l.b16 %v2614
          %v2810 = vunpack.c.h.b16 %v2614
          %v2811 = vunpack.c.l.b16 %v2615
          %v2812 = vunpack.c.h.b16 %v2615
          %v2813 = vunpack.c.l.b16 %v2616
          %v2814 = vunpack.c.h.b16 %v2616
          %v2815 = vunpack.c.l.b16 %v2617
          %v2816 = vunpack.c.h.b16 %v2617
          %v2817 = vunpack.c.l.b16 %v2618
          %v2818 = vunpack.c.h.b16 %v2618
          %v2819 = vunpack.c.l.b16 %v2619
          %v2820 = vunpack.c.h.b16 %v2619
          %v2821 = vunpack.c.l.b16 %v2620
          %v2822 = vunpack.c.h.b16 %v2620
          %v2823 = vunpack.c.l.b16 %v2621
          %v2824 = vunpack.c.h.b16 %v2621
          %v2825 = vunpack.c.l.b16 %v2622
          %v2826 = vunpack.c.h.b16 %v2622
          %v2827 = vunpack.c.l.b16 %v2623
          %v2828 = vunpack.c.h.b16 %v2623
          %v2829 = vunpack.c.l.b16 %v2624
          %v2830 = vunpack.c.h.b16 %v2624
          %v2831 = vunpack.c.l.b16 %v2625
          %v2832 = vunpack.c.h.b16 %v2625
          %v2833 = vunpack.c.l.b16 %v2626
          %v2834 = vunpack.c.h.b16 %v2626
          %v2835 = vunpack.c.l.b16 %v2627
          %v2836 = vunpack.c.h.b16 %v2627
          %v2837 = vunpack.c.l.b16 %v2628
          %v2838 = vunpack.c.h.b16 %v2628
          %v2839 = vunpack.c.l.b16 %v2629
          %v2840 = vunpack.c.h.b16 %v2629
          %v2841 = vunpack.c.l.b16 %v2630
          %v2842 = vunpack.c.h.b16 %v2630
          %v2843 = vunpack.c.l.b16 %v2631
          %v2844 = vunpack.c.h.b16 %v2631
          %v2845 = vunpack.c.l.b16 %v2632
          %v2846 = vunpack.c.h.b16 %v2632
          %v2847 = vunpack.c.l.b16 %v2633
          %v2848 = vunpack.c.h.b16 %v2633
          %v2849 = vunpack.c.l.b16 %v2634
          %v2850 = vunpack.c.h.b16 %v2634
          %v2851 = vunpack.c.l.b16 %v2635
          %v2852 = vunpack.c.h.b16 %v2635
          %v2853 = vunpack.c.l.b16 %v2636
          %v2854 = vunpack.c.h.b16 %v2636
          %v2855 = vunpack.c.l.b16 %v2637
          %v2856 = vunpack.c.h.b16 %v2637
          %v2857 = vunpack.c.l.b16 %v2638
          %v2858 = vunpack.c.h.b16 %v2638
          %v2859 = vunpack.c.l.b16 %v2639
          %v2860 = vunpack.c.h.b16 %v2639
          %v2861 = vunpack.c.l.b16 %v2640
          %v2862 = vunpack.c.h.b16 %v2640
          %v2863 = vunpack.c.l.b16 %v2641
          %v2864 = vunpack.c.h.b16 %v2641
          %v2865 = vunpack.c.l.b16 %v2642
          %v2866 = vunpack.c.h.b16 %v2642
          %v2867 = vunpack.c.l.b16 %v2643
          %v2868 = vunpack.c.h.b16 %v2643
          %v2869 = vunpack.c.l.b16 %v2644
          %v2870 = vunpack.c.h.b16 %v2644
          %v2871 = vunpack.c.l.b16 %v2645
          %v2872 = vunpack.c.h.b16 %v2645
          %v2873 = vunpack.c.l.b16 %v2646
          %v2874 = vunpack.c.h.b16 %v2646
          %v2875 = vunpack.c.l.b16 %v2647
          %v2876 = vunpack.c.h.b16 %v2647
          %v2877 = vunpack.c.l.b16 %v2648
          %v2878 = vunpack.c.h.b16 %v2648
          %v2879 = vunpack.c.l.b16 %v2649
          %v2880 = vunpack.c.h.b16 %v2649
          %v2881 = vunpack.c.l.b16 %v2650
          %v2882 = vunpack.c.h.b16 %v2650
          %v2883 = vunpack.c.l.b16 %v2651
          %v2884 = vunpack.c.h.b16 %v2651
          %v2885 = vunpack.c.l.b16 %v2652
          %v2886 = vunpack.c.h.b16 %v2652
          %v2887 = vpack.c.b16 %v2763, %v2759
          %v2888 = vpack.c.b16 %v2764, %v2760
          %v2889 = vpack.c.b16 %v2765, %v2761
          %v2890 = vpack.c.b16 %v2766, %v2762
          %v2891 = vpack.c.b16 %v2771, %v2767
          %v2892 = vpack.c.b16 %v2772, %v2768
          %v2893 = vpack.c.b16 %v2773, %v2769
          %v2894 = vpack.c.b16 %v2774, %v2770
          %v2895 = vpack.c.b16 %v2779, %v2775
          %v2896 = vpack.c.b16 %v2780, %v2776
          %v2897 = vpack.c.b16 %v2781, %v2777
          %v2898 = vpack.c.b16 %v2782, %v2778
          %v2899 = vpack.c.b16 %v2787, %v2783
          %v2900 = vpack.c.b16 %v2788, %v2784
          %v2901 = vpack.c.b16 %v2789, %v2785
          %v2902 = vpack.c.b16 %v2790, %v2786
          %v2903 = vpack.c.b16 %v2795, %v2791
          %v2904 = vpack.c.b16 %v2796, %v2792
          %v2905 = vpack.c.b16 %v2797, %v2793
          %v2906 = vpack.c.b16 %v2798, %v2794
          %v2907 = vpack.c.b16 %v2803, %v2799
          %v2908 = vpack.c.b16 %v2804, %v2800
          %v2909 = vpack.c.b16 %v2805, %v2801
          %v2910 = vpack.c.b16 %v2806, %v2802
          %v2911 = vpack.c.b16 %v2811, %v2807
          %v2912 = vpack.c.b16 %v2812, %v2808
          %v2913 = vpack.c.b16 %v2813, %v2809
          %v2914 = vpack.c.b16 %v2814, %v2810
          %v2915 = vpack.c.b16 %v2819, %v2815
          %v2916 = vpack.c.b16 %v2820, %v2816
          %v2917 = vpack.c.b16 %v2821, %v2817
          %v2918 = vpack.c.b16 %v2822, %v2818
          %v2919 = vpack.c.b16 %v2827, %v2823
          %v2920 = vpack.c.b16 %v2828, %v2824
          %v2921 = vpack.c.b16 %v2829, %v2825
          %v2922 = vpack.c.b16 %v2830, %v2826
          %v2923 = vpack.c.b16 %v2835, %v2831
          %v2924 = vpack.c.b16 %v2836, %v2832
          %v2925 = vpack.c.b16 %v2837, %v2833
          %v2926 = vpack.c.b16 %v2838, %v2834
          %v2927 = vpack.c.b16 %v2843, %v2839
          %v2928 = vpack.c.b16 %v2844, %v2840
          %v2929 = vpack.c.b16 %v2845, %v2841
          %v2930 = vpack.c.b16 %v2846, %v2842
          %v2931 = vpack.c.b16 %v2851, %v2847
          %v2932 = vpack.c.b16 %v2852, %v2848
          %v2933 = vpack.c.b16 %v2853, %v2849
          %v2934 = vpack.c.b16 %v2854, %v2850
          %v2935 = vpack.c.b16 %v2859, %v2855
          %v2936 = vpack.c.b16 %v2860, %v2856
          %v2937 = vpack.c.b16 %v2861, %v2857
          %v2938 = vpack.c.b16 %v2862, %v2858
          %v2939 = vpack.c.b16 %v2867, %v2863
          %v2940 = vpack.c.b16 %v2868, %v2864
          %v2941 = vpack.c.b16 %v2869, %v2865
          %v2942 = vpack.c.b16 %v2870, %v2866
          %v2943 = vpack.c.b16 %v2875, %v2871
          %v2944 = vpack.c.b16 %v2876, %v2872
          %v2945 = vpack.c.b16 %v2877, %v2873
          %v2946 = vpack.c.b16 %v2878, %v2874
          %v2947 = vpack.c.b16 %v2883, %v2879
          %v2948 = vpack.c.b16 %v2884, %v2880
          %v2949 = vpack.c.b16 %v2885, %v2881
          %v2950 = vpack.c.b16 %v2886, %v2882
          %3015 = vmatprep.subr.bf16.mxu0 %v2916
          %3016 = vmatpush1.bf16.msra.mxu0 %v2915
          %3017 = vmatprep.subr.bf16.mxu0 %v2912
          %3018 = vmatpush1.bf16.msra.mxu0 %v2911
          %3019 = vmatprep.subr.bf16.mxu0 %v2908
          %3020 = vmatpush1.bf16.msra.mxu0 %v2907
          %3021 = vmatprep.subr.bf16.mxu0 %v2904
          %3022 = vmatpush1.bf16.msra.mxu0 %v2903
          %3023 = vmatprep.subr.bf16.mxu0 %v2900
          %3024 = vmatpush1.bf16.msra.mxu0 %v2899
          %3025 = vmatprep.subr.bf16.mxu0 %v2896
          %3026 = vmatpush1.bf16.msra.mxu0 %v2895
          %3027 = vmatprep.subr.bf16.mxu0 %v2892
          %3028 = vmatpush1.bf16.msra.mxu0 %v2891
          %3029 = vmatprep.subr.bf16.mxu0 %v2888
          %3030 = vmatpush1.bf16.msra.mxu0 %v2887
          %3031 = vmatprep.subr.bf16.mxu0 %v2948
          %3032 = vmatpush2.bf16.msra.mxu0 %v2947
          %3033 = vmatprep.subr.bf16.mxu0 %v2944
          %3034 = vmatpush2.bf16.msra.mxu0 %v2943
          %3035 = vmatprep.subr.bf16.mxu0 %v2940
          %3036 = vmatpush2.bf16.msra.mxu0 %v2939
          %3037 = vmatprep.subr.bf16.mxu0 %v2936
          %3038 = vmatpush2.bf16.msra.mxu0 %v2935
          %3039 = vmatprep.subr.bf16.mxu0 %v2932
          %3040 = vmatpush2.bf16.msra.mxu0 %v2931
          %3041 = vmatprep.subr.bf16.mxu0 %v2928
          %3042 = vmatpush2.bf16.msra.mxu0 %v2927
          %3043 = vmatprep.subr.bf16.mxu0 %v2924
          %3044 = vmatpush2.bf16.msra.mxu0 %v2923
          %3045 = vmatprep.subr.bf16.mxu0 %v2920
          %3046 = vmatpush2.bf16.msra.mxu0 %v2919
          %3047 = vmatprep.mubr.bf16.mxu0 %v2688
          %3048 = vmatmul.mubr.bf16.gmra.mxu0 %v2687
          %v3049 = vpop.f32.mrf.mxu0
          %v3050 = vadd.f32 %v2658, %v3049
          %v3051 = vpop.f32.mrf.mxu0
          %v3052 = vadd.f32 %v2662, %v3051
          %v3053 = vpop.f32.mrf.mxu0
          %v3054 = vadd.f32 %v2658, %v3053
          %v3055 = vpop.f32.mrf.mxu0
          %v3056 = vadd.f32 %v2662, %v3055
          %3057 = vmatprep.mubr.bf16.mxu0 %v2690
          %3058 = vmatmul.mubr.bf16.gmra.mxu0 %v2689
          %v3059 = vpop.f32.mrf.mxu0
          %v3060 = vadd.f32 %v2658, %v3059
          %v3061 = vpop.f32.mrf.mxu0
          %v3062 = vadd.f32 %v2662, %v3061
          %v3063 = vpop.f32.mrf.mxu0
          %v3064 = vadd.f32 %v2658, %v3063
          %v3065 = vpop.f32.mrf.mxu0
          %v3066 = vadd.f32 %v2662, %v3065
          %3067 = vdwg.mxu0
          %3068 = vmatprep.subr.bf16.mxu0 %v2918
          %3069 = vmatpush1.bf16.msra.mxu0 %v2917
          %3070 = vmatprep.subr.bf16.mxu0 %v2914
          %3071 = vmatpush1.bf16.msra.mxu0 %v2913
          %3072 = vmatprep.subr.bf16.mxu0 %v2910
          %3073 = vmatpush1.bf16.msra.mxu0 %v2909
          %3074 = vmatprep.subr.bf16.mxu0 %v2906
          %3075 = vmatpush1.bf16.msra.mxu0 %v2905
          %3076 = vmatprep.subr.bf16.mxu0 %v2902
          %3077 = vmatpush1.bf16.msra.mxu0 %v2901
          %3078 = vmatprep.subr.bf16.mxu0 %v2898
          %3079 = vmatpush1.bf16.msra.mxu0 %v2897
          %3080 = vmatprep.subr.bf16.mxu0 %v2894
          %3081 = vmatpush1.bf16.msra.mxu0 %v2893
          %3082 = vmatprep.subr.bf16.mxu0 %v2890
          %3083 = vmatpush1.bf16.msra.mxu0 %v2889
          %3084 = vmatprep.subr.bf16.mxu0 %v2950
          %3085 = vmatpush2.bf16.msra.mxu0 %v2949
          %3086 = vmatprep.subr.bf16.mxu0 %v2946
          %3087 = vmatpush2.bf16.msra.mxu0 %v2945
          %3088 = vmatprep.subr.bf16.mxu0 %v2942
          %3089 = vmatpush2.bf16.msra.mxu0 %v2941
          %3090 = vmatprep.subr.bf16.mxu0 %v2938
          %3091 = vmatpush2.bf16.msra.mxu0 %v2937
          %3092 = vmatprep.subr.bf16.mxu0 %v2934
          %3093 = vmatpush2.bf16.msra.mxu0 %v2933
          %3094 = vmatprep.subr.bf16.mxu0 %v2930
          %3095 = vmatpush2.bf16.msra.mxu0 %v2929
          %3096 = vmatprep.subr.bf16.mxu0 %v2926
          %3097 = vmatpush2.bf16.msra.mxu0 %v2925
          %3098 = vmatprep.subr.bf16.mxu0 %v2922
          %3099 = vmatpush2.bf16.msra.mxu0 %v2921
          %3100 = vmatprep.mubr.bf16.mxu0 %v2688
          %3101 = vmatmul.mubr.bf16.gmra.mxu0 %v2687
          %v3102 = vpop.f32.mrf.mxu0
          %v3103 = vadd.f32 %v2666, %v3102
          %v3104 = vpop.f32.mrf.mxu0
          %v3105 = vadd.f32 %v2670, %v3104
          %v3106 = vpop.f32.mrf.mxu0
          %v3107 = vadd.f32 %v2666, %v3106
          %v3108 = vpop.f32.mrf.mxu0
          %v3109 = vadd.f32 %v2670, %v3108
          %3110 = vmatprep.mubr.bf16.mxu0 %v2690
          %3111 = vmatmul.mubr.bf16.gmra.mxu0 %v2689
          %v3112 = vpop.f32.mrf.mxu0
          %v3113 = vadd.f32 %v2666, %v3112
          %v3114 = vpop.f32.mrf.mxu0
          %v3115 = vadd.f32 %v2670, %v3114
          %v3116 = vpop.f32.mrf.mxu0
          %v3117 = vadd.f32 %v2666, %v3116
          %v3118 = vpop.f32.mrf.mxu0
          %v3119 = vadd.f32 %v2670, %v3118
          %3120 = vdwg.mxu0
          %v3121 = vcombine.high %v3050, 0.0
          %v3123 = vunpack.c.l.s4 1983009808
          %v3124 = vunpack.c.0.s8 %v3123
          %v3125 = vlaneseq
          %v3126 = vshrl.u32 %v3125, 7
          %v3127 = vsub.s32 %v3124, %v3126
          %v3128 = vrot.slane %v3050, %v3127
          %v3130 = vunpack.c.l.s4 1983009808
          %v3131 = vunpack.c.0.s8 %v3130
          %v3132 = vlaneseq
          %v3133 = vshrl.u32 %v3132, 7
          %v3134 = vsub.s32 %v3131, %v3133
          %v3135 = vrot.slane %v3121, %v3134
          %v3136 = vcombine.high %v3052, 0.0
          %v3138 = vunpack.c.l.s4 1983009808
          %v3139 = vunpack.c.0.s8 %v3138
          %v3140 = vlaneseq
          %v3141 = vshrl.u32 %v3140, 7
          %v3142 = vsub.s32 %v3139, %v3141
          %v3143 = vrot.slane %v3052, %v3142
          %v3145 = vunpack.c.l.s4 1983009808
          %v3146 = vunpack.c.0.s8 %v3145
          %v3147 = vlaneseq
          %v3148 = vshrl.u32 %v3147, 7
          %v3149 = vsub.s32 %v3146, %v3148
          %v3150 = vrot.slane %v3136, %v3149
          %v3151 = vcombine.low %v3128, %v3143
          %v3152 = vcombine.high %v3128, %v3143
          %v3154 = vunpack.c.l.s4 1934713408
          %v3155 = vunpack.c.0.s8 %v3154
          %v3156 = vlaneseq
          %v3157 = vshrl.u32 %v3156, 7
          %v3158 = vsub.s32 %v3155, %v3157
          %v3159 = vrot.slane %v3151, %v3158
          %v3161 = vunpack.c.l.s4 1934713408
          %v3162 = vunpack.c.0.s8 %v3161
          %v3163 = vlaneseq
          %v3164 = vshrl.u32 %v3163, 7
          %v3165 = vsub.s32 %v3162, %v3164
          %v3166 = vrot.slane %v3152, %v3165
          %v3167 = vcombine.low %v3135, %v3150
          %v3168 = vcombine.high %v3135, %v3150
          %v3170 = vunpack.c.l.s4 1934713408
          %v3171 = vunpack.c.0.s8 %v3170
          %v3172 = vlaneseq
          %v3173 = vshrl.u32 %v3172, 7
          %v3174 = vsub.s32 %v3171, %v3173
          %v3175 = vrot.slane %v3167, %v3174
          %v3177 = vunpack.c.l.s4 1934713408
          %v3178 = vunpack.c.0.s8 %v3177
          %v3179 = vlaneseq
          %v3180 = vshrl.u32 %v3179, 7
          %v3181 = vsub.s32 %v3178, %v3180
          %v3182 = vrot.slane %v3168, %v3181
          %v3183 = vcombine.high %v3159, 0.0
          %v3184 = vcombine.high %v3166, 0.0
          %v3185 = vcombine.high %v3175, 0.0
          %v3186 = vcombine.high %v3182, 0.0
          %v3187 = vcombine.high %v3054, 0.0
          %v3189 = vunpack.c.l.s4 1983009808
          %v3190 = vunpack.c.0.s8 %v3189
          %v3191 = vlaneseq
          %v3192 = vshrl.u32 %v3191, 7
          %v3193 = vsub.s32 %v3190, %v3192
          %v3194 = vrot.slane %v3054, %v3193
          %v3196 = vunpack.c.l.s4 1983009808
          %v3197 = vunpack.c.0.s8 %v3196
          %v3198 = vlaneseq
          %v3199 = vshrl.u32 %v3198, 7
          %v3200 = vsub.s32 %v3197, %v3199
          %v3201 = vrot.slane %v3187, %v3200
          %v3202 = vcombine.high %v3056, 0.0
          %v3204 = vunpack.c.l.s4 1983009808
          %v3205 = vunpack.c.0.s8 %v3204
          %v3206 = vlaneseq
          %v3207 = vshrl.u32 %v3206, 7
          %v3208 = vsub.s32 %v3205, %v3207
          %v3209 = vrot.slane %v3056, %v3208
          %v3211 = vunpack.c.l.s4 1983009808
          %v3212 = vunpack.c.0.s8 %v3211
          %v3213 = vlaneseq
          %v3214 = vshrl.u32 %v3213, 7
          %v3215 = vsub.s32 %v3212, %v3214
          %v3216 = vrot.slane %v3202, %v3215
          %v3217 = vcombine.low %v3194, %v3209
          %v3218 = vcombine.high %v3194, %v3209
          %v3220 = vunpack.c.l.s4 1934713408
          %v3221 = vunpack.c.0.s8 %v3220
          %v3222 = vlaneseq
          %v3223 = vshrl.u32 %v3222, 7
          %v3224 = vsub.s32 %v3221, %v3223
          %v3225 = vrot.slane %v3217, %v3224
          %v3227 = vunpack.c.l.s4 1934713408
          %v3228 = vunpack.c.0.s8 %v3227
          %v3229 = vlaneseq
          %v3230 = vshrl.u32 %v3229, 7
          %v3231 = vsub.s32 %v3228, %v3230
          %v3232 = vrot.slane %v3218, %v3231
          %v3233 = vcombine.low %v3201, %v3216
          %v3234 = vcombine.high %v3201, %v3216
          %v3236 = vunpack.c.l.s4 1934713408
          %v3237 = vunpack.c.0.s8 %v3236
          %v3238 = vlaneseq
          %v3239 = vshrl.u32 %v3238, 7
          %v3240 = vsub.s32 %v3237, %v3239
          %v3241 = vrot.slane %v3233, %v3240
          %v3243 = vunpack.c.l.s4 1934713408
          %v3244 = vunpack.c.0.s8 %v3243
          %v3245 = vlaneseq
          %v3246 = vshrl.u32 %v3245, 7
          %v3247 = vsub.s32 %v3244, %v3246
          %v3248 = vrot.slane %v3234, %v3247
          %v3249 = vcombine.high %v3225, 0.0
          %v3250 = vcombine.high %v3232, 0.0
          %v3251 = vcombine.high %v3241, 0.0
          %v3252 = vcombine.high %v3248, 0.0
          %v3253 = vcombine.high %v3060, 0.0
          %v3255 = vunpack.c.l.s4 1983009808
          %v3256 = vunpack.c.0.s8 %v3255
          %v3257 = vlaneseq
          %v3258 = vshrl.u32 %v3257, 7
          %v3259 = vsub.s32 %v3256, %v3258
          %v3260 = vrot.slane %v3060, %v3259
          %v3262 = vunpack.c.l.s4 1983009808
          %v3263 = vunpack.c.0.s8 %v3262
          %v3264 = vlaneseq
          %v3265 = vshrl.u32 %v3264, 7
          %v3266 = vsub.s32 %v3263, %v3265
          %v3267 = vrot.slane %v3253, %v3266
          %v3268 = vcombine.high %v3062, 0.0
          %v3270 = vunpack.c.l.s4 1983009808
          %v3271 = vunpack.c.0.s8 %v3270
          %v3272 = vlaneseq
          %v3273 = vshrl.u32 %v3272, 7
          %v3274 = vsub.s32 %v3271, %v3273
          %v3275 = vrot.slane %v3062, %v3274
          %v3277 = vunpack.c.l.s4 1983009808
          %v3278 = vunpack.c.0.s8 %v3277
          %v3279 = vlaneseq
          %v3280 = vshrl.u32 %v3279, 7
          %v3281 = vsub.s32 %v3278, %v3280
          %v3282 = vrot.slane %v3268, %v3281
          %v3283 = vcombine.low %v3260, %v3275
          %v3284 = vcombine.high %v3260, %v3275
          %v3286 = vunpack.c.l.s4 1934713408
          %v3287 = vunpack.c.0.s8 %v3286
          %v3288 = vlaneseq
          %v3289 = vshrl.u32 %v3288, 7
          %v3290 = vsub.s32 %v3287, %v3289
          %v3291 = vrot.slane %v3283, %v3290
          %v3293 = vunpack.c.l.s4 1934713408
          %v3294 = vunpack.c.0.s8 %v3293
          %v3295 = vlaneseq
          %v3296 = vshrl.u32 %v3295, 7
          %v3297 = vsub.s32 %v3294, %v3296
          %v3298 = vrot.slane %v3284, %v3297
          %v3299 = vcombine.low %v3267, %v3282
          %v3300 = vcombine.high %v3267, %v3282
          %v3302 = vunpack.c.l.s4 1934713408
          %v3303 = vunpack.c.0.s8 %v3302
          %v3304 = vlaneseq
          %v3305 = vshrl.u32 %v3304, 7
          %v3306 = vsub.s32 %v3303, %v3305
          %v3307 = vrot.slane %v3299, %v3306
          %v3309 = vunpack.c.l.s4 1934713408
          %v3310 = vunpack.c.0.s8 %v3309
          %v3311 = vlaneseq
          %v3312 = vshrl.u32 %v3311, 7
          %v3313 = vsub.s32 %v3310, %v3312
          %v3314 = vrot.slane %v3300, %v3313
          %v3315 = vcombine.high %v3291, 0.0
          %v3316 = vcombine.high %v3298, 0.0
          %v3317 = vcombine.high %v3307, 0.0
          %v3318 = vcombine.high %v3314, 0.0
          %v3319 = vcombine.high %v3064, 0.0
          %v3321 = vunpack.c.l.s4 1983009808
          %v3322 = vunpack.c.0.s8 %v3321
          %v3323 = vlaneseq
          %v3324 = vshrl.u32 %v3323, 7
          %v3325 = vsub.s32 %v3322, %v3324
          %v3326 = vrot.slane %v3064, %v3325
          %v3328 = vunpack.c.l.s4 1983009808
          %v3329 = vunpack.c.0.s8 %v3328
          %v3330 = vlaneseq
          %v3331 = vshrl.u32 %v3330, 7
          %v3332 = vsub.s32 %v3329, %v3331
          %v3333 = vrot.slane %v3319, %v3332
          %v3334 = vcombine.high %v3066, 0.0
          %v3336 = vunpack.c.l.s4 1983009808
          %v3337 = vunpack.c.0.s8 %v3336
          %v3338 = vlaneseq
          %v3339 = vshrl.u32 %v3338, 7
          %v3340 = vsub.s32 %v3337, %v3339
          %v3341 = vrot.slane %v3066, %v3340
          %v3343 = vunpack.c.l.s4 1983009808
          %v3344 = vunpack.c.0.s8 %v3343
          %v3345 = vlaneseq
          %v3346 = vshrl.u32 %v3345, 7
          %v3347 = vsub.s32 %v3344, %v3346
          %v3348 = vrot.slane %v3334, %v3347
          %v3349 = vcombine.low %v3326, %v3341
          %v3350 = vcombine.high %v3326, %v3341
          %v3352 = vunpack.c.l.s4 1934713408
          %v3353 = vunpack.c.0.s8 %v3352
          %v3354 = vlaneseq
          %v3355 = vshrl.u32 %v3354, 7
          %v3356 = vsub.s32 %v3353, %v3355
          %v3357 = vrot.slane %v3349, %v3356
          %v3359 = vunpack.c.l.s4 1934713408
          %v3360 = vunpack.c.0.s8 %v3359
          %v3361 = vlaneseq
          %v3362 = vshrl.u32 %v3361, 7
          %v3363 = vsub.s32 %v3360, %v3362
          %v3364 = vrot.slane %v3350, %v3363
          %v3365 = vcombine.low %v3333, %v3348
          %v3366 = vcombine.high %v3333, %v3348
          %v3368 = vunpack.c.l.s4 1934713408
          %v3369 = vunpack.c.0.s8 %v3368
          %v3370 = vlaneseq
          %v3371 = vshrl.u32 %v3370, 7
          %v3372 = vsub.s32 %v3369, %v3371
          %v3373 = vrot.slane %v3365, %v3372
          %v3375 = vunpack.c.l.s4 1934713408
          %v3376 = vunpack.c.0.s8 %v3375
          %v3377 = vlaneseq
          %v3378 = vshrl.u32 %v3377, 7
          %v3379 = vsub.s32 %v3376, %v3378
          %v3380 = vrot.slane %v3366, %v3379
          %v3381 = vcombine.high %v3357, 0.0
          %v3382 = vcombine.high %v3364, 0.0
          %v3383 = vcombine.high %v3373, 0.0
          %v3384 = vcombine.high %v3380, 0.0
          %v3385 = vcombine.high %v3103, 0.0
          %v3387 = vunpack.c.l.s4 1983009808
          %v3388 = vunpack.c.0.s8 %v3387
          %v3389 = vlaneseq
          %v3390 = vshrl.u32 %v3389, 7
          %v3391 = vsub.s32 %v3388, %v3390
          %v3392 = vrot.slane %v3103, %v3391
          %v3394 = vunpack.c.l.s4 1983009808
          %v3395 = vunpack.c.0.s8 %v3394
          %v3396 = vlaneseq
          %v3397 = vshrl.u32 %v3396, 7
          %v3398 = vsub.s32 %v3395, %v3397
          %v3399 = vrot.slane %v3385, %v3398
          %v3400 = vcombine.high %v3105, 0.0
          %v3402 = vunpack.c.l.s4 1983009808
          %v3403 = vunpack.c.0.s8 %v3402
          %v3404 = vlaneseq
          %v3405 = vshrl.u32 %v3404, 7
          %v3406 = vsub.s32 %v3403, %v3405
          %v3407 = vrot.slane %v3105, %v3406
          %v3409 = vunpack.c.l.s4 1983009808
          %v3410 = vunpack.c.0.s8 %v3409
          %v3411 = vlaneseq
          %v3412 = vshrl.u32 %v3411, 7
          %v3413 = vsub.s32 %v3410, %v3412
          %v3414 = vrot.slane %v3400, %v3413
          %v3415 = vcombine.low %v3392, %v3407
          %v3416 = vcombine.high %v3392, %v3407
          %v3418 = vunpack.c.l.s4 1934713408
          %v3419 = vunpack.c.0.s8 %v3418
          %v3420 = vlaneseq
          %v3421 = vshrl.u32 %v3420, 7
          %v3422 = vsub.s32 %v3419, %v3421
          %v3423 = vrot.slane %v3415, %v3422
          %v3425 = vunpack.c.l.s4 1934713408
          %v3426 = vunpack.c.0.s8 %v3425
          %v3427 = vlaneseq
          %v3428 = vshrl.u32 %v3427, 7
          %v3429 = vsub.s32 %v3426, %v3428
          %v3430 = vrot.slane %v3416, %v3429
          %v3431 = vcombine.low %v3399, %v3414
          %v3432 = vcombine.high %v3399, %v3414
          %v3434 = vunpack.c.l.s4 1934713408
          %v3435 = vunpack.c.0.s8 %v3434
          %v3436 = vlaneseq
          %v3437 = vshrl.u32 %v3436, 7
          %v3438 = vsub.s32 %v3435, %v3437
          %v3439 = vrot.slane %v3431, %v3438
          %v3441 = vunpack.c.l.s4 1934713408
          %v3442 = vunpack.c.0.s8 %v3441
          %v3443 = vlaneseq
          %v3444 = vshrl.u32 %v3443, 7
          %v3445 = vsub.s32 %v3442, %v3444
          %v3446 = vrot.slane %v3432, %v3445
          %v3447 = vcombine.high %v3423, 0.0
          %v3448 = vcombine.high %v3430, 0.0
          %v3449 = vcombine.high %v3439, 0.0
          %v3450 = vcombine.high %v3446, 0.0
          %v3451 = vcombine.high %v3107, 0.0
          %v3453 = vunpack.c.l.s4 1983009808
          %v3454 = vunpack.c.0.s8 %v3453
          %v3455 = vlaneseq
          %v3456 = vshrl.u32 %v3455, 7
          %v3457 = vsub.s32 %v3454, %v3456
          %v3458 = vrot.slane %v3107, %v3457
          %v3460 = vunpack.c.l.s4 1983009808
          %v3461 = vunpack.c.0.s8 %v3460
          %v3462 = vlaneseq
          %v3463 = vshrl.u32 %v3462, 7
          %v3464 = vsub.s32 %v3461, %v3463
          %v3465 = vrot.slane %v3451, %v3464
          %v3466 = vcombine.high %v3109, 0.0
          %v3468 = vunpack.c.l.s4 1983009808
          %v3469 = vunpack.c.0.s8 %v3468
          %v3470 = vlaneseq
          %v3471 = vshrl.u32 %v3470, 7
          %v3472 = vsub.s32 %v3469, %v3471
          %v3473 = vrot.slane %v3109, %v3472
          %v3475 = vunpack.c.l.s4 1983009808
          %v3476 = vunpack.c.0.s8 %v3475
          %v3477 = vlaneseq
          %v3478 = vshrl.u32 %v3477, 7
          %v3479 = vsub.s32 %v3476, %v3478
          %v3480 = vrot.slane %v3466, %v3479
          %v3481 = vcombine.low %v3458, %v3473
          %v3482 = vcombine.high %v3458, %v3473
          %v3484 = vunpack.c.l.s4 1934713408
          %v3485 = vunpack.c.0.s8 %v3484
          %v3486 = vlaneseq
          %v3487 = vshrl.u32 %v3486, 7
          %v3488 = vsub.s32 %v3485, %v3487
          %v3489 = vrot.slane %v3481, %v3488
          %v3491 = vunpack.c.l.s4 1934713408
          %v3492 = vunpack.c.0.s8 %v3491
          %v3493 = vlaneseq
          %v3494 = vshrl.u32 %v3493, 7
          %v3495 = vsub.s32 %v3492, %v3494
          %v3496 = vrot.slane %v3482, %v3495
          %v3497 = vcombine.low %v3465, %v3480
          %v3498 = vcombine.high %v3465, %v3480
          %v3500 = vunpack.c.l.s4 1934713408
          %v3501 = vunpack.c.0.s8 %v3500
          %v3502 = vlaneseq
          %v3503 = vshrl.u32 %v3502, 7
          %v3504 = vsub.s32 %v3501, %v3503
          %v3505 = vrot.slane %v3497, %v3504
          %v3507 = vunpack.c.l.s4 1934713408
          %v3508 = vunpack.c.0.s8 %v3507
          %v3509 = vlaneseq
          %v3510 = vshrl.u32 %v3509, 7
          %v3511 = vsub.s32 %v3508, %v3510
          %v3512 = vrot.slane %v3498, %v3511
          %v3513 = vcombine.high %v3489, 0.0
          %v3514 = vcombine.high %v3496, 0.0
          %v3515 = vcombine.high %v3505, 0.0
          %v3516 = vcombine.high %v3512, 0.0
          %v3517 = vcombine.high %v3113, 0.0
          %v3519 = vunpack.c.l.s4 1983009808
          %v3520 = vunpack.c.0.s8 %v3519
          %v3521 = vlaneseq
          %v3522 = vshrl.u32 %v3521, 7
          %v3523 = vsub.s32 %v3520, %v3522
          %v3524 = vrot.slane %v3113, %v3523
          %v3526 = vunpack.c.l.s4 1983009808
          %v3527 = vunpack.c.0.s8 %v3526
          %v3528 = vlaneseq
          %v3529 = vshrl.u32 %v3528, 7
          %v3530 = vsub.s32 %v3527, %v3529
          %v3531 = vrot.slane %v3517, %v3530
          %v3532 = vcombine.high %v3115, 0.0
          %v3534 = vunpack.c.l.s4 1983009808
          %v3535 = vunpack.c.0.s8 %v3534
          %v3536 = vlaneseq
          %v3537 = vshrl.u32 %v3536, 7
          %v3538 = vsub.s32 %v3535, %v3537
          %v3539 = vrot.slane %v3115, %v3538
          %v3541 = vunpack.c.l.s4 1983009808
          %v3542 = vunpack.c.0.s8 %v3541
          %v3543 = vlaneseq
          %v3544 = vshrl.u32 %v3543, 7
          %v3545 = vsub.s32 %v3542, %v3544
          %v3546 = vrot.slane %v3532, %v3545
          %v3547 = vcombine.low %v3524, %v3539
          %v3548 = vcombine.high %v3524, %v3539
          %v3550 = vunpack.c.l.s4 1934713408
          %v3551 = vunpack.c.0.s8 %v3550
          %v3552 = vlaneseq
          %v3553 = vshrl.u32 %v3552, 7
          %v3554 = vsub.s32 %v3551, %v3553
          %v3555 = vrot.slane %v3547, %v3554
          %v3557 = vunpack.c.l.s4 1934713408
          %v3558 = vunpack.c.0.s8 %v3557
          %v3559 = vlaneseq
          %v3560 = vshrl.u32 %v3559, 7
          %v3561 = vsub.s32 %v3558, %v3560
          %v3562 = vrot.slane %v3548, %v3561
          %v3563 = vcombine.low %v3531, %v3546
          %v3564 = vcombine.high %v3531, %v3546
          %v3566 = vunpack.c.l.s4 1934713408
          %v3567 = vunpack.c.0.s8 %v3566
          %v3568 = vlaneseq
          %v3569 = vshrl.u32 %v3568, 7
          %v3570 = vsub.s32 %v3567, %v3569
          %v3571 = vrot.slane %v3563, %v3570
          %v3573 = vunpack.c.l.s4 1934713408
          %v3574 = vunpack.c.0.s8 %v3573
          %v3575 = vlaneseq
          %v3576 = vshrl.u32 %v3575, 7
          %v3577 = vsub.s32 %v3574, %v3576
          %v3578 = vrot.slane %v3564, %v3577
          %v3579 = vcombine.high %v3555, 0.0
          %v3580 = vcombine.high %v3562, 0.0
          %v3581 = vcombine.high %v3571, 0.0
          %v3582 = vcombine.high %v3578, 0.0
          %v3583 = vcombine.high %v3117, 0.0
          %v3585 = vunpack.c.l.s4 1983009808
          %v3586 = vunpack.c.0.s8 %v3585
          %v3587 = vlaneseq
          %v3588 = vshrl.u32 %v3587, 7
          %v3589 = vsub.s32 %v3586, %v3588
          %v3590 = vrot.slane %v3117, %v3589
          %v3592 = vunpack.c.l.s4 1983009808
          %v3593 = vunpack.c.0.s8 %v3592
          %v3594 = vlaneseq
          %v3595 = vshrl.u32 %v3594, 7
          %v3596 = vsub.s32 %v3593, %v3595
          %v3597 = vrot.slane %v3583, %v3596
          %v3598 = vcombine.high %v3119, 0.0
          %v3600 = vunpack.c.l.s4 1983009808
          %v3601 = vunpack.c.0.s8 %v3600
          %v3602 = vlaneseq
          %v3603 = vshrl.u32 %v3602, 7
          %v3604 = vsub.s32 %v3601, %v3603
          %v3605 = vrot.slane %v3119, %v3604
          %v3607 = vunpack.c.l.s4 1983009808
          %v3608 = vunpack.c.0.s8 %v3607
          %v3609 = vlaneseq
          %v3610 = vshrl.u32 %v3609, 7
          %v3611 = vsub.s32 %v3608, %v3610
          %v3612 = vrot.slane %v3598, %v3611
          %v3613 = vcombine.low %v3590, %v3605
          %v3614 = vcombine.high %v3590, %v3605
          %v3616 = vunpack.c.l.s4 1934713408
          %v3617 = vunpack.c.0.s8 %v3616
          %v3618 = vlaneseq
          %v3619 = vshrl.u32 %v3618, 7
          %v3620 = vsub.s32 %v3617, %v3619
          %v3621 = vrot.slane %v3613, %v3620
          %v3623 = vunpack.c.l.s4 1934713408
          %v3624 = vunpack.c.0.s8 %v3623
          %v3625 = vlaneseq
          %v3626 = vshrl.u32 %v3625, 7
          %v3627 = vsub.s32 %v3624, %v3626
          %v3628 = vrot.slane %v3614, %v3627
          %v3629 = vcombine.low %v3597, %v3612
          %v3630 = vcombine.high %v3597, %v3612
          %v3632 = vunpack.c.l.s4 1934713408
          %v3633 = vunpack.c.0.s8 %v3632
          %v3634 = vlaneseq
          %v3635 = vshrl.u32 %v3634, 7
          %v3636 = vsub.s32 %v3633, %v3635
          %v3637 = vrot.slane %v3629, %v3636
          %v3639 = vunpack.c.l.s4 1934713408
          %v3640 = vunpack.c.0.s8 %v3639
          %v3641 = vlaneseq
          %v3642 = vshrl.u32 %v3641, 7
          %v3643 = vsub.s32 %v3640, %v3642
          %v3644 = vrot.slane %v3630, %v3643
          %v3645 = vcombine.high %v3621, 0.0
          %v3646 = vcombine.high %v3628, 0.0
          %v3647 = vcombine.high %v3637, 0.0
          %v3648 = vcombine.high %v3644, 0.0
          %v3649 = vcombine.low %v3159, %v3166
          %v3651 = vunpack.c.l.s4 1983009808
          %v3652 = vunpack.c.0.s8 %v3651
          %v3653 = vlaneseq
          %v3654 = vshrl.u32 %v3653, 7
          %v3655 = vsub.s32 %v3652, %v3654
          %v3656 = vrot.slane %v3649, %v3655
          %v3657 = vcombine.low %v3183, %v3184
          %v3659 = vunpack.c.l.s4 1983009808
          %v3660 = vunpack.c.0.s8 %v3659
          %v3661 = vlaneseq
          %v3662 = vshrl.u32 %v3661, 7
          %v3663 = vsub.s32 %v3660, %v3662
          %v3664 = vrot.slane %v3657, %v3663
          %v3665 = vcombine.low %v3175, %v3182
          %v3667 = vunpack.c.l.s4 1983009808
          %v3668 = vunpack.c.0.s8 %v3667
          %v3669 = vlaneseq
          %v3670 = vshrl.u32 %v3669, 7
          %v3671 = vsub.s32 %v3668, %v3670
          %v3672 = vrot.slane %v3665, %v3671
          %v3673 = vcombine.low %v3185, %v3186
          %v3675 = vunpack.c.l.s4 1983009808
          %v3676 = vunpack.c.0.s8 %v3675
          %v3677 = vlaneseq
          %v3678 = vshrl.u32 %v3677, 7
          %v3679 = vsub.s32 %v3676, %v3678
          %v3680 = vrot.slane %v3673, %v3679
          %v3681 = vcombine.low %v3656, %v3664
          %v3683 = vunpack.c.l.s4 1934713408
          %v3684 = vunpack.c.0.s8 %v3683
          %v3685 = vlaneseq
          %v3686 = vshrl.u32 %v3685, 7
          %v3687 = vsub.s32 %v3684, %v3686
          %v3688 = vrot.slane %v3681, %v3687
          %v3689 = vcombine.low %v3672, %v3680
          %v3691 = vunpack.c.l.s4 1934713408
          %v3692 = vunpack.c.0.s8 %v3691
          %v3693 = vlaneseq
          %v3694 = vshrl.u32 %v3693, 7
          %v3695 = vsub.s32 %v3692, %v3694
          %v3696 = vrot.slane %v3689, %v3695
          %v3697 = vcombine.low %v3688, %v3696
          %v3698 = vcombine.high %v3688, %v3696
          %v3699 = vcombine.low %v3225, %v3232
          %v3701 = vunpack.c.l.s4 1983009808
          %v3702 = vunpack.c.0.s8 %v3701
          %v3703 = vlaneseq
          %v3704 = vshrl.u32 %v3703, 7
          %v3705 = vsub.s32 %v3702, %v3704
          %v3706 = vrot.slane %v3699, %v3705
          %v3707 = vcombine.low %v3249, %v3250
          %v3709 = vunpack.c.l.s4 1983009808
          %v3710 = vunpack.c.0.s8 %v3709
          %v3711 = vlaneseq
          %v3712 = vshrl.u32 %v3711, 7
          %v3713 = vsub.s32 %v3710, %v3712
          %v3714 = vrot.slane %v3707, %v3713
          %v3715 = vcombine.low %v3241, %v3248
          %v3717 = vunpack.c.l.s4 1983009808
          %v3718 = vunpack.c.0.s8 %v3717
          %v3719 = vlaneseq
          %v3720 = vshrl.u32 %v3719, 7
          %v3721 = vsub.s32 %v3718, %v3720
          %v3722 = vrot.slane %v3715, %v3721
          %v3723 = vcombine.low %v3251, %v3252
          %v3725 = vunpack.c.l.s4 1983009808
          %v3726 = vunpack.c.0.s8 %v3725
          %v3727 = vlaneseq
          %v3728 = vshrl.u32 %v3727, 7
          %v3729 = vsub.s32 %v3726, %v3728
          %v3730 = vrot.slane %v3723, %v3729
          %v3731 = vcombine.low %v3706, %v3714
          %v3733 = vunpack.c.l.s4 1934713408
          %v3734 = vunpack.c.0.s8 %v3733
          %v3735 = vlaneseq
          %v3736 = vshrl.u32 %v3735, 7
          %v3737 = vsub.s32 %v3734, %v3736
          %v3738 = vrot.slane %v3731, %v3737
          %v3739 = vcombine.low %v3722, %v3730
          %v3741 = vunpack.c.l.s4 1934713408
          %v3742 = vunpack.c.0.s8 %v3741
          %v3743 = vlaneseq
          %v3744 = vshrl.u32 %v3743, 7
          %v3745 = vsub.s32 %v3742, %v3744
          %v3746 = vrot.slane %v3739, %v3745
          %v3747 = vcombine.low %v3738, %v3746
          %v3748 = vcombine.high %v3738, %v3746
          %v3749 = vcombine.low %v3291, %v3298
          %v3751 = vunpack.c.l.s4 1983009808
          %v3752 = vunpack.c.0.s8 %v3751
          %v3753 = vlaneseq
          %v3754 = vshrl.u32 %v3753, 7
          %v3755 = vsub.s32 %v3752, %v3754
          %v3756 = vrot.slane %v3749, %v3755
          %v3757 = vcombine.low %v3315, %v3316
          %v3759 = vunpack.c.l.s4 1983009808
          %v3760 = vunpack.c.0.s8 %v3759
          %v3761 = vlaneseq
          %v3762 = vshrl.u32 %v3761, 7
          %v3763 = vsub.s32 %v3760, %v3762
          %v3764 = vrot.slane %v3757, %v3763
          %v3765 = vcombine.low %v3307, %v3314
          %v3767 = vunpack.c.l.s4 1983009808
          %v3768 = vunpack.c.0.s8 %v3767
          %v3769 = vlaneseq
          %v3770 = vshrl.u32 %v3769, 7
          %v3771 = vsub.s32 %v3768, %v3770
          %v3772 = vrot.slane %v3765, %v3771
          %v3773 = vcombine.low %v3317, %v3318
          %v3775 = vunpack.c.l.s4 1983009808
          %v3776 = vunpack.c.0.s8 %v3775
          %v3777 = vlaneseq
          %v3778 = vshrl.u32 %v3777, 7
          %v3779 = vsub.s32 %v3776, %v3778
          %v3780 = vrot.slane %v3773, %v3779
          %v3781 = vcombine.low %v3756, %v3764
          %v3783 = vunpack.c.l.s4 1934713408
          %v3784 = vunpack.c.0.s8 %v3783
          %v3785 = vlaneseq
          %v3786 = vshrl.u32 %v3785, 7
          %v3787 = vsub.s32 %v3784, %v3786
          %v3788 = vrot.slane %v3781, %v3787
          %v3789 = vcombine.low %v3772, %v3780
          %v3791 = vunpack.c.l.s4 1934713408
          %v3792 = vunpack.c.0.s8 %v3791
          %v3793 = vlaneseq
          %v3794 = vshrl.u32 %v3793, 7
          %v3795 = vsub.s32 %v3792, %v3794
          %v3796 = vrot.slane %v3789, %v3795
          %v3797 = vcombine.low %v3788, %v3796
          %v3798 = vcombine.high %v3788, %v3796
          %v3799 = vcombine.low %v3357, %v3364
          %v3801 = vunpack.c.l.s4 1983009808
          %v3802 = vunpack.c.0.s8 %v3801
          %v3803 = vlaneseq
          %v3804 = vshrl.u32 %v3803, 7
          %v3805 = vsub.s32 %v3802, %v3804
          %v3806 = vrot.slane %v3799, %v3805
          %v3807 = vcombine.low %v3381, %v3382
          %v3809 = vunpack.c.l.s4 1983009808
          %v3810 = vunpack.c.0.s8 %v3809
          %v3811 = vlaneseq
          %v3812 = vshrl.u32 %v3811, 7
          %v3813 = vsub.s32 %v3810, %v3812
          %v3814 = vrot.slane %v3807, %v3813
          %v3815 = vcombine.low %v3373, %v3380
          %v3817 = vunpack.c.l.s4 1983009808
          %v3818 = vunpack.c.0.s8 %v3817
          %v3819 = vlaneseq
          %v3820 = vshrl.u32 %v3819, 7
          %v3821 = vsub.s32 %v3818, %v3820
          %v3822 = vrot.slane %v3815, %v3821
          %v3823 = vcombine.low %v3383, %v3384
          %v3825 = vunpack.c.l.s4 1983009808
          %v3826 = vunpack.c.0.s8 %v3825
          %v3827 = vlaneseq
          %v3828 = vshrl.u32 %v3827, 7
          %v3829 = vsub.s32 %v3826, %v3828
          %v3830 = vrot.slane %v3823, %v3829
          %v3831 = vcombine.low %v3806, %v3814
          %v3833 = vunpack.c.l.s4 1934713408
          %v3834 = vunpack.c.0.s8 %v3833
          %v3835 = vlaneseq
          %v3836 = vshrl.u32 %v3835, 7
          %v3837 = vsub.s32 %v3834, %v3836
          %v3838 = vrot.slane %v3831, %v3837
          %v3839 = vcombine.low %v3822, %v3830
          %v3841 = vunpack.c.l.s4 1934713408
          %v3842 = vunpack.c.0.s8 %v3841
          %v3843 = vlaneseq
          %v3844 = vshrl.u32 %v3843, 7
          %v3845 = vsub.s32 %v3842, %v3844
          %v3846 = vrot.slane %v3839, %v3845
          %v3847 = vcombine.low %v3838, %v3846
          %v3848 = vcombine.high %v3838, %v3846
          %v3849 = vpack.c.bf16 %v3747, %v3697
          %v3850 = vpack.c.bf16 %v3847, %v3797
          %v3851 = vpack.c.bf16 %v3748, %v3698
          %v3852 = vpack.c.bf16 %v3848, %v3798
          %v3857 = vunpack.c.l.b16 %v3849
          %v3858 = vunpack.c.h.b16 %v3849
          %v3859 = vunpack.c.l.b16 %v3850
          %v3860 = vunpack.c.h.b16 %v3850
          %v3861 = vunpack.c.l.b16 %v3851
          %v3862 = vunpack.c.h.b16 %v3851
          %v3863 = vunpack.c.l.b16 %v3852
          %v3864 = vunpack.c.h.b16 %v3852
          %v3865 = vpack.c.b16 %v3857, %v3857
          %v3866 = vpack.c.b16 %v3858, %v3858
          %v3867 = vpack.c.b16 %v3859, %v3859
          %v3868 = vpack.c.b16 %v3860, %v3860
          %v3869 = vpack.c.b16 %v3861, %v3861
          %v3870 = vpack.c.b16 %v3862, %v3862
          %v3871 = vpack.c.b16 %v3863, %v3863
          %v3872 = vpack.c.b16 %v3864, %v3864
          %3881 = vst [vmem:[#allocation4] sm:$0xf] %v3865
          %3882 = vst [vmem:[#allocation4 + $0x4] sm:$0xf] %v3866
          %3883 = vst [vmem:[#allocation4 + $0x8] sm:$0xf] %v3867
          %3884 = vst [vmem:[#allocation4 + $0xc] sm:$0xf] %v3868
          %3885 = vst [vmem:[#allocation4 + $0x10] sm:$0xf] %v3869
          %3886 = vst [vmem:[#allocation4 + $0x14] sm:$0xf] %v3870
          %3887 = vst [vmem:[#allocation4 + $0x18] sm:$0xf] %v3871
          %3888 = vst [vmem:[#allocation4 + $0x1c] sm:$0xf] %v3872
          %v3889 = vcombine.low %v3423, %v3430
          %v3891 = vunpack.c.l.s4 1983009808
          %v3892 = vunpack.c.0.s8 %v3891
          %v3893 = vlaneseq
          %v3894 = vshrl.u32 %v3893, 7
          %v3895 = vsub.s32 %v3892, %v3894
          %v3896 = vrot.slane %v3889, %v3895
          %v3897 = vcombine.low %v3447, %v3448
          %v3899 = vunpack.c.l.s4 1983009808
          %v3900 = vunpack.c.0.s8 %v3899
          %v3901 = vlaneseq
          %v3902 = vshrl.u32 %v3901, 7
          %v3903 = vsub.s32 %v3900, %v3902
          %v3904 = vrot.slane %v3897, %v3903
          %v3905 = vcombine.low %v3439, %v3446
          %v3907 = vunpack.c.l.s4 1983009808
          %v3908 = vunpack.c.0.s8 %v3907
          %v3909 = vlaneseq
          %v3910 = vshrl.u32 %v3909, 7
          %v3911 = vsub.s32 %v3908, %v3910
          %v3912 = vrot.slane %v3905, %v3911
          %v3913 = vcombine.low %v3449, %v3450
          %v3915 = vunpack.c.l.s4 1983009808
          %v3916 = vunpack.c.0.s8 %v3915
          %v3917 = vlaneseq
          %v3918 = vshrl.u32 %v3917, 7
          %v3919 = vsub.s32 %v3916, %v3918
          %v3920 = vrot.slane %v3913, %v3919
          %v3921 = vcombine.low %v3896, %v3904
          %v3923 = vunpack.c.l.s4 1934713408
          %v3924 = vunpack.c.0.s8 %v3923
          %v3925 = vlaneseq
          %v3926 = vshrl.u32 %v3925, 7
          %v3927 = vsub.s32 %v3924, %v3926
          %v3928 = vrot.slane %v3921, %v3927
          %v3929 = vcombine.low %v3912, %v3920
          %v3931 = vunpack.c.l.s4 1934713408
          %v3932 = vunpack.c.0.s8 %v3931
          %v3933 = vlaneseq
          %v3934 = vshrl.u32 %v3933, 7
          %v3935 = vsub.s32 %v3932, %v3934
          %v3936 = vrot.slane %v3929, %v3935
          %v3937 = vcombine.low %v3928, %v3936
          %v3938 = vcombine.high %v3928, %v3936
          %v3939 = vcombine.low %v3489, %v3496
          %v3941 = vunpack.c.l.s4 1983009808
          %v3942 = vunpack.c.0.s8 %v3941
          %v3943 = vlaneseq
          %v3944 = vshrl.u32 %v3943, 7
          %v3945 = vsub.s32 %v3942, %v3944
          %v3946 = vrot.slane %v3939, %v3945
          %v3947 = vcombine.low %v3513, %v3514
          %v3949 = vunpack.c.l.s4 1983009808
          %v3950 = vunpack.c.0.s8 %v3949
          %v3951 = vlaneseq
          %v3952 = vshrl.u32 %v3951, 7
          %v3953 = vsub.s32 %v3950, %v3952
          %v3954 = vrot.slane %v3947, %v3953
          %v3955 = vcombine.low %v3505, %v3512
          %v3957 = vunpack.c.l.s4 1983009808
          %v3958 = vunpack.c.0.s8 %v3957
          %v3959 = vlaneseq
          %v3960 = vshrl.u32 %v3959, 7
          %v3961 = vsub.s32 %v3958, %v3960
          %v3962 = vrot.slane %v3955, %v3961
          %v3963 = vcombine.low %v3515, %v3516
          %v3965 = vunpack.c.l.s4 1983009808
          %v3966 = vunpack.c.0.s8 %v3965
          %v3967 = vlaneseq
          %v3968 = vshrl.u32 %v3967, 7
          %v3969 = vsub.s32 %v3966, %v3968
          %v3970 = vrot.slane %v3963, %v3969
          %v3971 = vcombine.low %v3946, %v3954
          %v3973 = vunpack.c.l.s4 1934713408
          %v3974 = vunpack.c.0.s8 %v3973
          %v3975 = vlaneseq
          %v3976 = vshrl.u32 %v3975, 7
          %v3977 = vsub.s32 %v3974, %v3976
          %v3978 = vrot.slane %v3971, %v3977
          %v3979 = vcombine.low %v3962, %v3970
          %v3981 = vunpack.c.l.s4 1934713408
          %v3982 = vunpack.c.0.s8 %v3981
          %v3983 = vlaneseq
          %v3984 = vshrl.u32 %v3983, 7
          %v3985 = vsub.s32 %v3982, %v3984
          %v3986 = vrot.slane %v3979, %v3985
          %v3987 = vcombine.low %v3978, %v3986
          %v3988 = vcombine.high %v3978, %v3986
          %v3989 = vcombine.low %v3555, %v3562
          %v3991 = vunpack.c.l.s4 1983009808
          %v3992 = vunpack.c.0.s8 %v3991
          %v3993 = vlaneseq
          %v3994 = vshrl.u32 %v3993, 7
          %v3995 = vsub.s32 %v3992, %v3994
          %v3996 = vrot.slane %v3989, %v3995
          %v3997 = vcombine.low %v3579, %v3580
          %v3999 = vunpack.c.l.s4 1983009808
          %v4000 = vunpack.c.0.s8 %v3999
          %v4001 = vlaneseq
          %v4002 = vshrl.u32 %v4001, 7
          %v4003 = vsub.s32 %v4000, %v4002
          %v4004 = vrot.slane %v3997, %v4003
          %v4005 = vcombine.low %v3571, %v3578
          %v4007 = vunpack.c.l.s4 1983009808
          %v4008 = vunpack.c.0.s8 %v4007
          %v4009 = vlaneseq
          %v4010 = vshrl.u32 %v4009, 7
          %v4011 = vsub.s32 %v4008, %v4010
          %v4012 = vrot.slane %v4005, %v4011
          %v4013 = vcombine.low %v3581, %v3582
          %v4015 = vunpack.c.l.s4 1983009808
          %v4016 = vunpack.c.0.s8 %v4015
          %v4017 = vlaneseq
          %v4018 = vshrl.u32 %v4017, 7
          %v4019 = vsub.s32 %v4016, %v4018
          %v4020 = vrot.slane %v4013, %v4019
          %v4021 = vcombine.low %v3996, %v4004
          %v4023 = vunpack.c.l.s4 1934713408
          %v4024 = vunpack.c.0.s8 %v4023
          %v4025 = vlaneseq
          %v4026 = vshrl.u32 %v4025, 7
          %v4027 = vsub.s32 %v4024, %v4026
          %v4028 = vrot.slane %v4021, %v4027
          %v4029 = vcombine.low %v4012, %v4020
          %v4031 = vunpack.c.l.s4 1934713408
          %v4032 = vunpack.c.0.s8 %v4031
          %v4033 = vlaneseq
          %v4034 = vshrl.u32 %v4033, 7
          %v4035 = vsub.s32 %v4032, %v4034
          %v4036 = vrot.slane %v4029, %v4035
          %v4037 = vcombine.low %v4028, %v4036
          %v4038 = vcombine.high %v4028, %v4036
          %v4039 = vcombine.low %v3621, %v3628
          %v4041 = vunpack.c.l.s4 1983009808
          %v4042 = vunpack.c.0.s8 %v4041
          %v4043 = vlaneseq
          %v4044 = vshrl.u32 %v4043, 7
          %v4045 = vsub.s32 %v4042, %v4044
          %v4046 = vrot.slane %v4039, %v4045
          %v4047 = vcombine.low %v3645, %v3646
          %v4049 = vunpack.c.l.s4 1983009808
          %v4050 = vunpack.c.0.s8 %v4049
          %v4051 = vlaneseq
          %v4052 = vshrl.u32 %v4051, 7
          %v4053 = vsub.s32 %v4050, %v4052
          %v4054 = vrot.slane %v4047, %v4053
          %v4055 = vcombine.low %v3637, %v3644
          %v4057 = vunpack.c.l.s4 1983009808
          %v4058 = vunpack.c.0.s8 %v4057
          %v4059 = vlaneseq
          %v4060 = vshrl.u32 %v4059, 7
          %v4061 = vsub.s32 %v4058, %v4060
          %v4062 = vrot.slane %v4055, %v4061
          %v4063 = vcombine.low %v3647, %v3648
          %v4065 = vunpack.c.l.s4 1983009808
          %v4066 = vunpack.c.0.s8 %v4065
          %v4067 = vlaneseq
          %v4068 = vshrl.u32 %v4067, 7
          %v4069 = vsub.s32 %v4066, %v4068
          %v4070 = vrot.slane %v4063, %v4069
          %v4071 = vcombine.low %v4046, %v4054
          %v4073 = vunpack.c.l.s4 1934713408
          %v4074 = vunpack.c.0.s8 %v4073
          %v4075 = vlaneseq
          %v4076 = vshrl.u32 %v4075, 7
          %v4077 = vsub.s32 %v4074, %v4076
          %v4078 = vrot.slane %v4071, %v4077
          %v4079 = vcombine.low %v4062, %v4070
          %v4081 = vunpack.c.l.s4 1934713408
          %v4082 = vunpack.c.0.s8 %v4081
          %v4083 = vlaneseq
          %v4084 = vshrl.u32 %v4083, 7
          %v4085 = vsub.s32 %v4082, %v4084
          %v4086 = vrot.slane %v4079, %v4085
          %v4087 = vcombine.low %v4078, %v4086
          %v4088 = vcombine.high %v4078, %v4086
          %v4089 = vpack.c.bf16 %v3987, %v3937
          %v4090 = vpack.c.bf16 %v4087, %v4037
          %v4091 = vpack.c.bf16 %v3988, %v3938
          %v4092 = vpack.c.bf16 %v4088, %v4038
          %v4097 = vunpack.c.l.b16 %v4089
          %v4098 = vunpack.c.h.b16 %v4089
          %v4099 = vunpack.c.l.b16 %v4090
          %v4100 = vunpack.c.h.b16 %v4090
          %v4101 = vunpack.c.l.b16 %v4091
          %v4102 = vunpack.c.h.b16 %v4091
          %v4103 = vunpack.c.l.b16 %v4092
          %v4104 = vunpack.c.h.b16 %v4092
          %v4105 = vpack.c.b16 %v4097, %v4097
          %v4106 = vpack.c.b16 %v4098, %v4098
          %v4107 = vpack.c.b16 %v4099, %v4099
          %v4108 = vpack.c.b16 %v4100, %v4100
          %v4109 = vpack.c.b16 %v4101, %v4101
          %v4110 = vpack.c.b16 %v4102, %v4102
          %v4111 = vpack.c.b16 %v4103, %v4103
          %v4112 = vpack.c.b16 %v4104, %v4104
          %4121 = vst [vmem:[#allocation5] sm:$0xf] %v4105
          %4122 = vst [vmem:[#allocation5 + $0x4] sm:$0xf] %v4106
          %4123 = vst [vmem:[#allocation5 + $0x8] sm:$0xf] %v4107
          %4124 = vst [vmem:[#allocation5 + $0xc] sm:$0xf] %v4108
          %4125 = vst [vmem:[#allocation5 + $0x10] sm:$0xf] %v4109
          %4126 = vst [vmem:[#allocation5 + $0x14] sm:$0xf] %v4110
          %4127 = vst [vmem:[#allocation5 + $0x18] sm:$0xf] %v4111
          %4128 = vst [vmem:[#allocation5 + $0x1c] sm:$0xf] %v4112
        $region180: #{tpu_custom_call.1} parent=119 // pred_fallthru
          _
        %v4129 = vld [vmem:[%s912] sm:$0xff]
        %v4130 = vld [vmem:[%s912 + $0x8] sm:$0xff]
        %v4131 = vld [vmem:[%s912 + $0x10] sm:$0xff]
        %v4132 = vld [vmem:[%s912 + $0x18] sm:$0xff]
        %v4133 = vld [vmem:[#allocation12] sm:$0xff]
        %v4134 = vld [vmem:[#allocation12 + $0x8] sm:$0xff]
        %v4135 = vld [vmem:[#allocation12 + $0x10] sm:$0xff]
        %v4136 = vld [vmem:[#allocation12 + $0x18] sm:$0xff]
        %v4137 = vld [vmem:[#allocation12 + $0x20] sm:$0xff]
        %v4138 = vld [vmem:[#allocation12 + $0x28] sm:$0xff]
        %v4139 = vld [vmem:[#allocation12 + $0x30] sm:$0xff]
        %v4140 = vld [vmem:[#allocation12 + $0x38] sm:$0xff]
        %v4141 = vld [vmem:[#allocation12 + $0x40] sm:$0xff]
        %v4142 = vld [vmem:[#allocation12 + $0x48] sm:$0xff]
        %v4143 = vld [vmem:[#allocation12 + $0x50] sm:$0xff]
        %v4144 = vld [vmem:[#allocation12 + $0x58] sm:$0xff]
        %v4145 = vld [vmem:[#allocation12 + $0x60] sm:$0xff]
        %v4146 = vld [vmem:[#allocation12 + $0x68] sm:$0xff]
        %v4147 = vld [vmem:[#allocation12 + $0x70] sm:$0xff]
        %v4148 = vld [vmem:[#allocation12 + $0x78] sm:$0xff]
        %v4149 = vld [vmem:[#allocation12 + $0x80] sm:$0xff]
        %v4150 = vld [vmem:[#allocation12 + $0x88] sm:$0xff]
        %v4151 = vld [vmem:[#allocation12 + $0x90] sm:$0xff]
        %v4152 = vld [vmem:[#allocation12 + $0x98] sm:$0xff]
        %v4153 = vld [vmem:[#allocation12 + $0xa0] sm:$0xff]
        %v4154 = vld [vmem:[#allocation12 + $0xa8] sm:$0xff]
        %v4155 = vld [vmem:[#allocation12 + $0xb0] sm:$0xff]
        %v4156 = vld [vmem:[#allocation12 + $0xb8] sm:$0xff]
        %v4157 = vld [vmem:[#allocation12 + $0xc0] sm:$0xff]
        %v4158 = vld [vmem:[#allocation12 + $0xc8] sm:$0xff]
        %v4159 = vld [vmem:[#allocation12 + $0xd0] sm:$0xff]
        %v4160 = vld [vmem:[#allocation12 + $0xd8] sm:$0xff]
        %v4161 = vld [vmem:[#allocation12 + $0xe0] sm:$0xff]
        %v4162 = vld [vmem:[#allocation12 + $0xe8] sm:$0xff]
        %v4163 = vld [vmem:[#allocation12 + $0xf0] sm:$0xff]
        %v4164 = vld [vmem:[#allocation12 + $0xf8] sm:$0xff]
        %v4165 = vld [vmem:[#allocation14] sm:$0x3]
        %v4166 = vld [vmem:[#allocation17] sm:$0xff]
        %v4167 = vld [vmem:[#allocation17 + $0x8] sm:$0xff]
        %v4168 = vld [vmem:[#allocation17 + $0x10] sm:$0xff]
        %v4169 = vld [vmem:[#allocation17 + $0x18] sm:$0xff]
        %v4170 = vld [vmem:[#allocation17 + $0x20] sm:$0xff]
        %v4171 = vld [vmem:[#allocation17 + $0x28] sm:$0xff]
        %v4172 = vld [vmem:[#allocation17 + $0x30] sm:$0xff]
        %v4173 = vld [vmem:[#allocation17 + $0x38] sm:$0xff]
        %v4174 = vld [vmem:[#allocation17 + $0x40] sm:$0xff]
        %v4175 = vld [vmem:[#allocation17 + $0x48] sm:$0xff]
        %v4176 = vld [vmem:[#allocation17 + $0x50] sm:$0xff]
        %v4177 = vld [vmem:[#allocation17 + $0x58] sm:$0xff]
        %v4178 = vld [vmem:[#allocation17 + $0x60] sm:$0xff]
        %v4179 = vld [vmem:[#allocation17 + $0x68] sm:$0xff]
        %v4180 = vld [vmem:[#allocation17 + $0x70] sm:$0xff]
        %v4181 = vld [vmem:[#allocation17 + $0x78] sm:$0xff]
        %v4182 = vld [vmem:[#allocation17 + $0x80] sm:$0xff]
        %v4183 = vld [vmem:[#allocation17 + $0x88] sm:$0xff]
        %v4184 = vld [vmem:[#allocation17 + $0x90] sm:$0xff]
        %v4185 = vld [vmem:[#allocation17 + $0x98] sm:$0xff]
        %v4186 = vld [vmem:[#allocation17 + $0xa0] sm:$0xff]
        %v4187 = vld [vmem:[#allocation17 + $0xa8] sm:$0xff]
        %v4188 = vld [vmem:[#allocation17 + $0xb0] sm:$0xff]
        %v4189 = vld [vmem:[#allocation17 + $0xb8] sm:$0xff]
        %v4190 = vld [vmem:[#allocation17 + $0xc0] sm:$0xff]
        %v4191 = vld [vmem:[#allocation17 + $0xc8] sm:$0xff]
        %v4192 = vld [vmem:[#allocation17 + $0xd0] sm:$0xff]
        %v4193 = vld [vmem:[#allocation17 + $0xd8] sm:$0xff]
        %v4194 = vld [vmem:[#allocation17 + $0xe0] sm:$0xff]
        %v4195 = vld [vmem:[#allocation17 + $0xe8] sm:$0xff]
        %v4196 = vld [vmem:[#allocation17 + $0xf0] sm:$0xff]
        %v4197 = vld [vmem:[#allocation17 + $0xf8] sm:$0xff]
        %v4198 = vld [vmem:[#allocation18] sm:$0x3]
        %v4199 = vpack.c.bf16 %v4131, %v4129
        %v4200 = vpack.c.bf16 %v4132, %v4130
        %v4202 = vlaneseq
        %v4203 = vshrl.u32 %v4202, 7
        %v4204 = vsub.s32 0, %v4203
        %v4205 = vrot.slane %v4165, %v4204
        %v4206 = vlaneseq
        %v4207 = vshrl.u32 %v4206, 7
        %v4208 = vsub.s32 1, %v4207
        %v4209 = vrot.slane %v4165, %v4208
        %v4244 = vunpack.c.l.b16 %v4133
        %v4245 = vunpack.c.h.b16 %v4133
        %v4246 = vunpack.c.l.b16 %v4134
        %v4247 = vunpack.c.h.b16 %v4134
        %v4248 = vunpack.c.l.b16 %v4135
        %v4249 = vunpack.c.h.b16 %v4135
        %v4250 = vunpack.c.l.b16 %v4136
        %v4251 = vunpack.c.h.b16 %v4136
        %v4252 = vunpack.c.l.b16 %v4137
        %v4253 = vunpack.c.h.b16 %v4137
        %v4254 = vunpack.c.l.b16 %v4138
        %v4255 = vunpack.c.h.b16 %v4138
        %v4256 = vunpack.c.l.b16 %v4139
        %v4257 = vunpack.c.h.b16 %v4139
        %v4258 = vunpack.c.l.b16 %v4140
        %v4259 = vunpack.c.h.b16 %v4140
        %v4260 = vunpack.c.l.b16 %v4141
        %v4261 = vunpack.c.h.b16 %v4141
        %v4262 = vunpack.c.l.b16 %v4142
        %v4263 = vunpack.c.h.b16 %v4142
        %v4264 = vunpack.c.l.b16 %v4143
        %v4265 = vunpack.c.h.b16 %v4143
        %v4266 = vunpack.c.l.b16 %v4144
        %v4267 = vunpack.c.h.b16 %v4144
        %v4268 = vunpack.c.l.b16 %v4145
        %v4269 = vunpack.c.h.b16 %v4145
        %v4270 = vunpack.c.l.b16 %v4146
        %v4271 = vunpack.c.h.b16 %v4146
        %v4272 = vunpack.c.l.b16 %v4147
        %v4273 = vunpack.c.h.b16 %v4147
        %v4274 = vunpack.c.l.b16 %v4148
        %v4275 = vunpack.c.h.b16 %v4148
        %v4276 = vunpack.c.l.b16 %v4149
        %v4277 = vunpack.c.h.b16 %v4149
        %v4278 = vunpack.c.l.b16 %v4150
        %v4279 = vunpack.c.h.b16 %v4150
        %v4280 = vunpack.c.l.b16 %v4151
        %v4281 = vunpack.c.h.b16 %v4151
        %v4282 = vunpack.c.l.b16 %v4152
        %v4283 = vunpack.c.h.b16 %v4152
        %v4284 = vunpack.c.l.b16 %v4153
        %v4285 = vunpack.c.h.b16 %v4153
        %v4286 = vunpack.c.l.b16 %v4154
        %v4287 = vunpack.c.h.b16 %v4154
        %v4288 = vunpack.c.l.b16 %v4155
        %v4289 = vunpack.c.h.b16 %v4155
        %v4290 = vunpack.c.l.b16 %v4156
        %v4291 = vunpack.c.h.b16 %v4156
        %v4292 = vunpack.c.l.b16 %v4157
        %v4293 = vunpack.c.h.b16 %v4157
        %v4294 = vunpack.c.l.b16 %v4158
        %v4295 = vunpack.c.h.b16 %v4158
        %v4296 = vunpack.c.l.b16 %v4159
        %v4297 = vunpack.c.h.b16 %v4159
        %v4298 = vunpack.c.l.b16 %v4160
        %v4299 = vunpack.c.h.b16 %v4160
        %v4300 = vunpack.c.l.b16 %v4161
        %v4301 = vunpack.c.h.b16 %v4161
        %v4302 = vunpack.c.l.b16 %v4162
        %v4303 = vunpack.c.h.b16 %v4162
        %v4304 = vunpack.c.l.b16 %v4163
        %v4305 = vunpack.c.h.b16 %v4163
        %v4306 = vunpack.c.l.b16 %v4164
        %v4307 = vunpack.c.h.b16 %v4164
        %v4308 = vpack.c.b16 %v4246, %v4244
        %v4309 = vpack.c.b16 %v4247, %v4245
        %v4310 = vpack.c.b16 %v4250, %v4248
        %v4311 = vpack.c.b16 %v4251, %v4249
        %v4312 = vpack.c.b16 %v4254, %v4252
        %v4313 = vpack.c.b16 %v4255, %v4253
        %v4314 = vpack.c.b16 %v4258, %v4256
        %v4315 = vpack.c.b16 %v4259, %v4257
        %v4316 = vpack.c.b16 %v4262, %v4260
        %v4317 = vpack.c.b16 %v4263, %v4261
        %v4318 = vpack.c.b16 %v4266, %v4264
        %v4319 = vpack.c.b16 %v4267, %v4265
        %v4320 = vpack.c.b16 %v4270, %v4268
        %v4321 = vpack.c.b16 %v4271, %v4269
        %v4322 = vpack.c.b16 %v4274, %v4272
        %v4323 = vpack.c.b16 %v4275, %v4273
        %v4324 = vpack.c.b16 %v4278, %v4276
        %v4325 = vpack.c.b16 %v4279, %v4277
        %v4326 = vpack.c.b16 %v4282, %v4280
        %v4327 = vpack.c.b16 %v4283, %v4281
        %v4328 = vpack.c.b16 %v4286, %v4284
        %v4329 = vpack.c.b16 %v4287, %v4285
        %v4330 = vpack.c.b16 %v4290, %v4288
        %v4331 = vpack.c.b16 %v4291, %v4289
        %v4332 = vpack.c.b16 %v4294, %v4292
        %v4333 = vpack.c.b16 %v4295, %v4293
        %v4334 = vpack.c.b16 %v4298, %v4296
        %v4335 = vpack.c.b16 %v4299, %v4297
        %v4336 = vpack.c.b16 %v4302, %v4300
        %v4337 = vpack.c.b16 %v4303, %v4301
        %v4338 = vpack.c.b16 %v4306, %v4304
        %v4339 = vpack.c.b16 %v4307, %v4305
        %4372 = vmatprep.subr.bf16.mxu0 %v4323
        %4373 = vmatpush1.bf16.msra.mxu0 %v4322
        %4374 = vmatprep.subr.bf16.mxu0 %v4321
        %4375 = vmatpush1.bf16.msra.mxu0 %v4320
        %4376 = vmatprep.subr.bf16.mxu0 %v4319
        %4377 = vmatpush1.bf16.msra.mxu0 %v4318
        %4378 = vmatprep.subr.bf16.mxu0 %v4317
        %4379 = vmatpush1.bf16.msra.mxu0 %v4316
        %4380 = vmatprep.subr.bf16.mxu0 %v4315
        %4381 = vmatpush1.bf16.msra.mxu0 %v4314
        %4382 = vmatprep.subr.bf16.mxu0 %v4313
        %4383 = vmatpush1.bf16.msra.mxu0 %v4312
        %4384 = vmatprep.subr.bf16.mxu0 %v4311
        %4385 = vmatpush1.bf16.msra.mxu0 %v4310
        %4386 = vmatprep.subr.bf16.mxu0 %v4309
        %4387 = vmatpush1.bf16.msra.mxu0 %v4308
        %4388 = vmatprep.subr.bf16.mxu0 %v4339
        %4389 = vmatpush2.bf16.msra.mxu0 %v4338
        %4390 = vmatprep.subr.bf16.mxu0 %v4337
        %4391 = vmatpush2.bf16.msra.mxu0 %v4336
        %4392 = vmatprep.subr.bf16.mxu0 %v4335
        %4393 = vmatpush2.bf16.msra.mxu0 %v4334
        %4394 = vmatprep.subr.bf16.mxu0 %v4333
        %4395 = vmatpush2.bf16.msra.mxu0 %v4332
        %4396 = vmatprep.subr.bf16.mxu0 %v4331
        %4397 = vmatpush2.bf16.msra.mxu0 %v4330
        %4398 = vmatprep.subr.bf16.mxu0 %v4329
        %4399 = vmatpush2.bf16.msra.mxu0 %v4328
        %4400 = vmatprep.subr.bf16.mxu0 %v4327
        %4401 = vmatpush2.bf16.msra.mxu0 %v4326
        %4402 = vmatprep.subr.bf16.mxu0 %v4325
        %4403 = vmatpush2.bf16.msra.mxu0 %v4324
        %4404 = vmatprep.mubr.bf16.mxu0 %v4200
        %4405 = vmatmul.mubr.bf16.gmra.mxu0 %v4199
        %v4406 = vpop.f32.mrf.mxu0
        %v4407 = vadd.f32 %v4205, %v4406
        %v4408 = vpop.f32.mrf.mxu0
        %v4409 = vadd.f32 %v4209, %v4408
        %v4410 = vpop.f32.mrf.mxu0
        %v4411 = vadd.f32 %v4205, %v4410
        %v4412 = vpop.f32.mrf.mxu0
        %v4413 = vadd.f32 %v4209, %v4412
        %4414 = vdwg.mxu0
        %v4415 = vmul.f32 %v4407, 0.088388346
        %v4416 = vmul.f32 %v4409, 0.088388346
        %v4417 = vmul.f32 %v4411, 0.088388346
        %v4418 = vmul.f32 %v4413, 0.088388346
        %v4419 = vcombine.high %v4415, 0.0
        %v4421 = vunpack.c.l.s4 1983009808
        %v4422 = vunpack.c.0.s8 %v4421
        %v4423 = vlaneseq
        %v4424 = vshrl.u32 %v4423, 7
        %v4425 = vsub.s32 %v4422, %v4424
        %v4426 = vrot.slane %v4415, %v4425
        %v4428 = vunpack.c.l.s4 1983009808
        %v4429 = vunpack.c.0.s8 %v4428
        %v4430 = vlaneseq
        %v4431 = vshrl.u32 %v4430, 7
        %v4432 = vsub.s32 %v4429, %v4431
        %v4433 = vrot.slane %v4419, %v4432
        %v4434 = vcombine.high %v4416, 0.0
        %v4436 = vunpack.c.l.s4 1983009808
        %v4437 = vunpack.c.0.s8 %v4436
        %v4438 = vlaneseq
        %v4439 = vshrl.u32 %v4438, 7
        %v4440 = vsub.s32 %v4437, %v4439
        %v4441 = vrot.slane %v4416, %v4440
        %v4443 = vunpack.c.l.s4 1983009808
        %v4444 = vunpack.c.0.s8 %v4443
        %v4445 = vlaneseq
        %v4446 = vshrl.u32 %v4445, 7
        %v4447 = vsub.s32 %v4444, %v4446
        %v4448 = vrot.slane %v4434, %v4447
        %v4449 = vcombine.low %v4426, %v4441
        %v4450 = vcombine.high %v4426, %v4441
        %v4452 = vunpack.c.l.s4 1934713408
        %v4453 = vunpack.c.0.s8 %v4452
        %v4454 = vlaneseq
        %v4455 = vshrl.u32 %v4454, 7
        %v4456 = vsub.s32 %v4453, %v4455
        %v4457 = vrot.slane %v4449, %v4456
        %v4459 = vunpack.c.l.s4 1934713408
        %v4460 = vunpack.c.0.s8 %v4459
        %v4461 = vlaneseq
        %v4462 = vshrl.u32 %v4461, 7
        %v4463 = vsub.s32 %v4460, %v4462
        %v4464 = vrot.slane %v4450, %v4463
        %v4465 = vcombine.low %v4433, %v4448
        %v4466 = vcombine.high %v4433, %v4448
        %v4468 = vunpack.c.l.s4 1934713408
        %v4469 = vunpack.c.0.s8 %v4468
        %v4470 = vlaneseq
        %v4471 = vshrl.u32 %v4470, 7
        %v4472 = vsub.s32 %v4469, %v4471
        %v4473 = vrot.slane %v4465, %v4472
        %v4475 = vunpack.c.l.s4 1934713408
        %v4476 = vunpack.c.0.s8 %v4475
        %v4477 = vlaneseq
        %v4478 = vshrl.u32 %v4477, 7
        %v4479 = vsub.s32 %v4476, %v4478
        %v4480 = vrot.slane %v4466, %v4479
        %v4481 = vcombine.high %v4457, 0.0
        %v4482 = vcombine.high %v4464, 0.0
        %v4483 = vcombine.high %v4473, 0.0
        %v4484 = vcombine.high %v4480, 0.0
        %v4485 = vcombine.high %v4417, 0.0
        %v4487 = vunpack.c.l.s4 1983009808
        %v4488 = vunpack.c.0.s8 %v4487
        %v4489 = vlaneseq
        %v4490 = vshrl.u32 %v4489, 7
        %v4491 = vsub.s32 %v4488, %v4490
        %v4492 = vrot.slane %v4417, %v4491
        %v4494 = vunpack.c.l.s4 1983009808
        %v4495 = vunpack.c.0.s8 %v4494
        %v4496 = vlaneseq
        %v4497 = vshrl.u32 %v4496, 7
        %v4498 = vsub.s32 %v4495, %v4497
        %v4499 = vrot.slane %v4485, %v4498
        %v4500 = vcombine.high %v4418, 0.0
        %v4502 = vunpack.c.l.s4 1983009808
        %v4503 = vunpack.c.0.s8 %v4502
        %v4504 = vlaneseq
        %v4505 = vshrl.u32 %v4504, 7
        %v4506 = vsub.s32 %v4503, %v4505
        %v4507 = vrot.slane %v4418, %v4506
        %v4509 = vunpack.c.l.s4 1983009808
        %v4510 = vunpack.c.0.s8 %v4509
        %v4511 = vlaneseq
        %v4512 = vshrl.u32 %v4511, 7
        %v4513 = vsub.s32 %v4510, %v4512
        %v4514 = vrot.slane %v4500, %v4513
        %v4515 = vcombine.low %v4492, %v4507
        %v4516 = vcombine.high %v4492, %v4507
        %v4518 = vunpack.c.l.s4 1934713408
        %v4519 = vunpack.c.0.s8 %v4518
        %v4520 = vlaneseq
        %v4521 = vshrl.u32 %v4520, 7
        %v4522 = vsub.s32 %v4519, %v4521
        %v4523 = vrot.slane %v4515, %v4522
        %v4525 = vunpack.c.l.s4 1934713408
        %v4526 = vunpack.c.0.s8 %v4525
        %v4527 = vlaneseq
        %v4528 = vshrl.u32 %v4527, 7
        %v4529 = vsub.s32 %v4526, %v4528
        %v4530 = vrot.slane %v4516, %v4529
        %v4531 = vcombine.low %v4499, %v4514
        %v4532 = vcombine.high %v4499, %v4514
        %v4534 = vunpack.c.l.s4 1934713408
        %v4535 = vunpack.c.0.s8 %v4534
        %v4536 = vlaneseq
        %v4537 = vshrl.u32 %v4536, 7
        %v4538 = vsub.s32 %v4535, %v4537
        %v4539 = vrot.slane %v4531, %v4538
        %v4541 = vunpack.c.l.s4 1934713408
        %v4542 = vunpack.c.0.s8 %v4541
        %v4543 = vlaneseq
        %v4544 = vshrl.u32 %v4543, 7
        %v4545 = vsub.s32 %v4542, %v4544
        %v4546 = vrot.slane %v4532, %v4545
        %v4547 = vcombine.high %v4523, 0.0
        %v4548 = vcombine.high %v4530, 0.0
        %v4549 = vcombine.high %v4539, 0.0
        %v4550 = vcombine.high %v4546, 0.0
        %v4551 = vcombine.low %v4457, %v4464
        %v4553 = vunpack.c.l.s4 1983009808
        %v4554 = vunpack.c.0.s8 %v4553
        %v4555 = vlaneseq
        %v4556 = vshrl.u32 %v4555, 7
        %v4557 = vsub.s32 %v4554, %v4556
        %v4558 = vrot.slane %v4551, %v4557
        %v4559 = vcombine.low %v4481, %v4482
        %v4561 = vunpack.c.l.s4 1983009808
        %v4562 = vunpack.c.0.s8 %v4561
        %v4563 = vlaneseq
        %v4564 = vshrl.u32 %v4563, 7
        %v4565 = vsub.s32 %v4562, %v4564
        %v4566 = vrot.slane %v4559, %v4565
        %v4567 = vcombine.low %v4473, %v4480
        %v4569 = vunpack.c.l.s4 1983009808
        %v4570 = vunpack.c.0.s8 %v4569
        %v4571 = vlaneseq
        %v4572 = vshrl.u32 %v4571, 7
        %v4573 = vsub.s32 %v4570, %v4572
        %v4574 = vrot.slane %v4567, %v4573
        %v4575 = vcombine.low %v4483, %v4484
        %v4577 = vunpack.c.l.s4 1983009808
        %v4578 = vunpack.c.0.s8 %v4577
        %v4579 = vlaneseq
        %v4580 = vshrl.u32 %v4579, 7
        %v4581 = vsub.s32 %v4578, %v4580
        %v4582 = vrot.slane %v4575, %v4581
        %v4583 = vcombine.low %v4558, %v4566
        %v4585 = vunpack.c.l.s4 1934713408
        %v4586 = vunpack.c.0.s8 %v4585
        %v4587 = vlaneseq
        %v4588 = vshrl.u32 %v4587, 7
        %v4589 = vsub.s32 %v4586, %v4588
        %v4590 = vrot.slane %v4583, %v4589
        %v4591 = vcombine.low %v4574, %v4582
        %v4593 = vunpack.c.l.s4 1934713408
        %v4594 = vunpack.c.0.s8 %v4593
        %v4595 = vlaneseq
        %v4596 = vshrl.u32 %v4595, 7
        %v4597 = vsub.s32 %v4594, %v4596
        %v4598 = vrot.slane %v4591, %v4597
        %v4599 = vcombine.low %v4590, %v4598
        %v4600 = vcombine.high %v4590, %v4598
        %v4601 = vcombine.low %v4523, %v4530
        %v4603 = vunpack.c.l.s4 1983009808
        %v4604 = vunpack.c.0.s8 %v4603
        %v4605 = vlaneseq
        %v4606 = vshrl.u32 %v4605, 7
        %v4607 = vsub.s32 %v4604, %v4606
        %v4608 = vrot.slane %v4601, %v4607
        %v4609 = vcombine.low %v4547, %v4548
        %v4611 = vunpack.c.l.s4 1983009808
        %v4612 = vunpack.c.0.s8 %v4611
        %v4613 = vlaneseq
        %v4614 = vshrl.u32 %v4613, 7
        %v4615 = vsub.s32 %v4612, %v4614
        %v4616 = vrot.slane %v4609, %v4615
        %v4617 = vcombine.low %v4539, %v4546
        %v4619 = vunpack.c.l.s4 1983009808
        %v4620 = vunpack.c.0.s8 %v4619
        %v4621 = vlaneseq
        %v4622 = vshrl.u32 %v4621, 7
        %v4623 = vsub.s32 %v4620, %v4622
        %v4624 = vrot.slane %v4617, %v4623
        %v4625 = vcombine.low %v4549, %v4550
        %v4627 = vunpack.c.l.s4 1983009808
        %v4628 = vunpack.c.0.s8 %v4627
        %v4629 = vlaneseq
        %v4630 = vshrl.u32 %v4629, 7
        %v4631 = vsub.s32 %v4628, %v4630
        %v4632 = vrot.slane %v4625, %v4631
        %v4633 = vcombine.low %v4608, %v4616
        %v4635 = vunpack.c.l.s4 1934713408
        %v4636 = vunpack.c.0.s8 %v4635
        %v4637 = vlaneseq
        %v4638 = vshrl.u32 %v4637, 7
        %v4639 = vsub.s32 %v4636, %v4638
        %v4640 = vrot.slane %v4633, %v4639
        %v4641 = vcombine.low %v4624, %v4632
        %v4643 = vunpack.c.l.s4 1934713408
        %v4644 = vunpack.c.0.s8 %v4643
        %v4645 = vlaneseq
        %v4646 = vshrl.u32 %v4645, 7
        %v4647 = vsub.s32 %v4644, %v4646
        %v4648 = vrot.slane %v4641, %v4647
        %v4649 = vcombine.low %v4640, %v4648
        %v4650 = vcombine.high %v4640, %v4648
        %v4651 = vpack.c.bf16 %v4649, %v4599
        %v4652 = vpack.c.bf16 %v4650, %v4600
        %v4653 = vld [vmem:[#allocation2] sm:$0xf]
        %v4654 = vld [vmem:[#allocation2 + $0x4] sm:$0xf]
        %v4655 = vld [vmem:[#allocation2 + $0x8] sm:$0xf]
        %v4656 = vld [vmem:[#allocation2 + $0xc] sm:$0xf]
        %v4657 = vld [vmem:[#allocation2 + $0x10] sm:$0xf]
        %v4658 = vld [vmem:[#allocation2 + $0x14] sm:$0xf]
        %v4659 = vld [vmem:[#allocation2 + $0x18] sm:$0xf]
        %v4660 = vld [vmem:[#allocation2 + $0x1c] sm:$0xf]
        %v4665 = vunpack.c.l.b16 %v4653
        %v4666 = vunpack.c.l.b16 %v4654
        %v4667 = vunpack.c.l.b16 %v4655
        %v4668 = vunpack.c.l.b16 %v4656
        %v4669 = vpack.c.b16 %v4666, %v4665
        %v4670 = vpack.c.b16 %v4668, %v4667
        %4673 = vmatprep.subr.bf16.mxu0 0
        %4674 = vmatpush1.bf16.xpose.msra.mxu0 0
        %4675 = vmatprep.subr.bf16.mxu0 0
        %4676 = vmatpush1.bf16.xpose.msra.mxu0 0
        %4677 = vmatprep.subr.bf16.mxu0 0
        %4678 = vmatpush1.bf16.xpose.msra.mxu0 0
        %4679 = vmatprep.subr.bf16.mxu0 0
        %4680 = vmatpush1.bf16.xpose.msra.mxu0 0
        %4681 = vmatprep.subr.bf16.mxu0 0
        %4682 = vmatpush1.bf16.xpose.msra.mxu0 0
        %4683 = vmatprep.subr.bf16.mxu0 0
        %4684 = vmatpush1.bf16.xpose.msra.mxu0 0
        %4685 = vmatprep.subr.bf16.mxu0 0
        %4686 = vmatpush1.bf16.xpose.msra.mxu0 %v4670
        %4687 = vmatprep.subr.bf16.mxu0 0
        %4688 = vmatpush1.bf16.xpose.msra.mxu0 %v4669
        %4689 = vmatprep.subr.bf16.mxu0 0
        %4690 = vmatpush2.bf16.xpose.msra.mxu0 0
        %4691 = vmatprep.subr.bf16.mxu0 0
        %4692 = vmatpush2.bf16.xpose.msra.mxu0 0
        %4693 = vmatprep.subr.bf16.mxu0 0
        %4694 = vmatpush2.bf16.xpose.msra.mxu0 0
        %4695 = vmatprep.subr.bf16.mxu0 0
        %4696 = vmatpush2.bf16.xpose.msra.mxu0 0
        %4697 = vmatprep.subr.bf16.mxu0 0
        %4698 = vmatpush2.bf16.xpose.msra.mxu0 0
        %4699 = vmatprep.subr.bf16.mxu0 0
        %4700 = vmatpush2.bf16.xpose.msra.mxu0 0
        %4701 = vmatprep.subr.bf16.mxu0 0
        %4702 = vmatpush2.bf16.xpose.msra.mxu0 0
        %4703 = vmatprep.subr.bf16.mxu0 0
        %4704 = vmatpush2.bf16.xpose.msra.mxu0 0
        %4705 = vmatprep.mubr.bf16.mxu0 0
        %4706 = vmatmul.mubr.bf16.gmra.mxu0 %v4651
        %v4707 = vpop.f32.mrf.mxu0
        %v4708 = vadd.f32 0.0, %v4707
        %v4709 = vpop.f32.mrf.mxu0
        %v4710 = vpop.f32.mrf.mxu0
        %v4711 = vadd.f32 0.0, %v4710
        %v4712 = vpop.f32.mrf.mxu0
        %4713 = vdwg.mxu0
        %v4718 = vunpack.c.l.b16 %v4657
        %v4719 = vunpack.c.l.b16 %v4658
        %v4720 = vunpack.c.l.b16 %v4659
        %v4721 = vunpack.c.l.b16 %v4660
        %v4722 = vpack.c.b16 %v4719, %v4718
        %v4723 = vpack.c.b16 %v4721, %v4720
        %4726 = vmatprep.subr.bf16.mxu0 0
        %4727 = vmatpush1.bf16.xpose.msra.mxu0 0
        %4728 = vmatprep.subr.bf16.mxu0 0
        %4729 = vmatpush1.bf16.xpose.msra.mxu0 0
        %4730 = vmatprep.subr.bf16.mxu0 0
        %4731 = vmatpush1.bf16.xpose.msra.mxu0 0
        %4732 = vmatprep.subr.bf16.mxu0 0
        %4733 = vmatpush1.bf16.xpose.msra.mxu0 0
        %4734 = vmatprep.subr.bf16.mxu0 0
        %4735 = vmatpush1.bf16.xpose.msra.mxu0 0
        %4736 = vmatprep.subr.bf16.mxu0 0
        %4737 = vmatpush1.bf16.xpose.msra.mxu0 0
        %4738 = vmatprep.subr.bf16.mxu0 0
        %4739 = vmatpush1.bf16.xpose.msra.mxu0 %v4723
        %4740 = vmatprep.subr.bf16.mxu0 0
        %4741 = vmatpush1.bf16.xpose.msra.mxu0 %v4722
        %4742 = vmatprep.subr.bf16.mxu0 0
        %4743 = vmatpush2.bf16.xpose.msra.mxu0 0
        %4744 = vmatprep.subr.bf16.mxu0 0
        %4745 = vmatpush2.bf16.xpose.msra.mxu0 0
        %4746 = vmatprep.subr.bf16.mxu0 0
        %4747 = vmatpush2.bf16.xpose.msra.mxu0 0
        %4748 = vmatprep.subr.bf16.mxu0 0
        %4749 = vmatpush2.bf16.xpose.msra.mxu0 0
        %4750 = vmatprep.subr.bf16.mxu0 0
        %4751 = vmatpush2.bf16.xpose.msra.mxu0 0
        %4752 = vmatprep.subr.bf16.mxu0 0
        %4753 = vmatpush2.bf16.xpose.msra.mxu0 0
        %4754 = vmatprep.subr.bf16.mxu0 0
        %4755 = vmatpush2.bf16.xpose.msra.mxu0 0
        %4756 = vmatprep.subr.bf16.mxu0 0
        %4757 = vmatpush2.bf16.xpose.msra.mxu0 0
        %4758 = vmatprep.mubr.bf16.mxu0 0
        %4759 = vmatmul.mubr.bf16.gmra.mxu0 %v4652
        %v4760 = vpop.f32.mrf.mxu0
        %v4761 = vadd.f32 0.0, %v4760
        %v4762 = vpop.f32.mrf.mxu0
        %v4763 = vpop.f32.mrf.mxu0
        %v4764 = vadd.f32 0.0, %v4763
        %v4765 = vpop.f32.mrf.mxu0
        %4766 = vdwg.mxu0
        %v4767 = vlaneseq
        %v4768 = vshrl.u32 %v4767, 7
        %v4769 = vadd.s32 %v4768, 8
        %v4770 = vstv %s1036
        %v4771 = vadd.s32 %v4768, %v4770
        %v4772 = vadd.s32 %v4769, %v4770
        %v4773 = vlaneseq
        %v4774 = vand.u32 %v4773, 127
        %vm4775 = vcmp.ge.s32.totalorder %v4771, %v4774
        %vm4776 = vcmp.ge.s32.totalorder %v4772, %v4774
        %v4777 = vsel %vm4775, 1, 0
        %v4778 = vsel %vm4776, 1, 0
        %vm4779 = vcmp.eq.s32.totalorder %v4777, 1
        %vm4780 = vcmp.eq.s32.totalorder %v4778, 1
        %v4781 = vsel %vm4779, %v4708, -1e+09
        %v4782 = vsel %vm4780, %v4711, -1e+09
        %v4783 = vsel %vm4779, %v4761, -1e+09
        %v4784 = vsel %vm4780, %v4764, -1e+09
        %vm4785 = vcmask 261120
        %v4786 = vsel %vm4785, %v4781, -inf
        %4787 = vmax.xlane.f32.xlu0 %v4786
        %v4788 = vpop.xlane.xlu0 %4787
        %v4789 = vsel %vm4785, %v4782, -inf
        %4790 = vmax.xlane.f32.xlu0 %v4789
        %v4791 = vpop.xlane.xlu0 %4790
        %v4792 = vsel %vm4785, %v4783, -inf
        %4793 = vmax.xlane.f32.xlu0 %v4792
        %v4794 = vpop.xlane.xlu0 %4793
        %v4795 = vsel %vm4785, %v4784, -inf
        %4796 = vmax.xlane.f32.xlu0 %v4795
        %v4797 = vpop.xlane.xlu0 %4796
        %v4798 = vsub.f32 %v4781, %v4788
        %v4799 = vsub.f32 %v4782, %v4791
        %v4800 = vsub.f32 %v4783, %v4794
        %v4801 = vsub.f32 %v4784, %v4797
        %v4802 = vmul.f32 %v4798, 1.442695
        %v4803 = vpow.pop %v4802
        %v4804 = vmul.f32 %v4799, 1.442695
        %v4805 = vpow.pop %v4804
        %v4806 = vmul.f32 %v4800, 1.442695
        %v4807 = vpow.pop %v4806
        %v4808 = vmul.f32 %v4801, 1.442695
        %v4809 = vpow.pop %v4808
        %v4810 = vsel %vm4785, %v4803, 0.0
        %4811 = vadd.xlane.f32.xlu0 %v4810
        %v4812 = vpop.xlane.xlu0 %4811
        %v4813 = vsel %vm4785, %v4805, 0.0
        %4814 = vadd.xlane.f32.xlu0 %v4813
        %v4815 = vpop.xlane.xlu0 %4814
        %v4816 = vsel %vm4785, %v4807, 0.0
        %4817 = vadd.xlane.f32.xlu0 %v4816
        %v4818 = vpop.xlane.xlu0 %4817
        %v4819 = vsel %vm4785, %v4809, 0.0
        %4820 = vadd.xlane.f32.xlu0 %v4819
        %v4821 = vpop.xlane.xlu0 %4820
        %v4822 = vpack.c.bf16 %v4805, %v4803
        %v4823 = vpack.c.bf16 %v4809, %v4807
        %v4824 = vld [vmem:[#allocation3] sm:$0xf]
        %v4825 = vld [vmem:[#allocation3 + $0x4] sm:$0xf]
        %v4826 = vld [vmem:[#allocation3 + $0x8] sm:$0xf]
        %v4827 = vld [vmem:[#allocation3 + $0xc] sm:$0xf]
        %v4828 = vld [vmem:[#allocation3 + $0x10] sm:$0xf]
        %v4829 = vld [vmem:[#allocation3 + $0x14] sm:$0xf]
        %v4830 = vld [vmem:[#allocation3 + $0x18] sm:$0xf]
        %v4831 = vld [vmem:[#allocation3 + $0x1c] sm:$0xf]
        %v4836 = vunpack.c.l.b16 %v4824
        %v4837 = vunpack.c.l.b16 %v4825
        %v4838 = vunpack.c.l.b16 %v4826
        %v4839 = vunpack.c.l.b16 %v4827
        %v4840 = vpack.c.b16 %v4837, %v4836
        %v4841 = vpack.c.b16 %v4839, %v4838
        %v4845 = vsel %vm4785, %v4822, 0
        %4847 = vmatprep.subr.bf16.mxu0 0
        %4848 = vmatpush1.bf16.msra.mxu0 0
        %4849 = vmatprep.subr.bf16.mxu0 0
        %4850 = vmatpush1.bf16.msra.mxu0 0
        %4851 = vmatprep.subr.bf16.mxu0 0
        %4852 = vmatpush1.bf16.msra.mxu0 0
        %4853 = vmatprep.subr.bf16.mxu0 0
        %4854 = vmatpush1.bf16.msra.mxu0 0
        %4855 = vmatprep.subr.bf16.mxu0 0
        %4856 = vmatpush1.bf16.msra.mxu0 0
        %4857 = vmatprep.subr.bf16.mxu0 0
        %4858 = vmatpush1.bf16.msra.mxu0 0
        %4859 = vmatprep.subr.bf16.mxu0 0
        %4860 = vmatpush1.bf16.msra.mxu0 %v4841
        %4861 = vmatprep.subr.bf16.mxu0 0
        %4862 = vmatpush1.bf16.msra.mxu0 %v4840
        %4863 = vmatprep.subr.bf16.mxu0 0
        %4864 = vmatpush2.bf16.msra.mxu0 0
        %4865 = vmatprep.subr.bf16.mxu0 0
        %4866 = vmatpush2.bf16.msra.mxu0 0
        %4867 = vmatprep.subr.bf16.mxu0 0
        %4868 = vmatpush2.bf16.msra.mxu0 0
        %4869 = vmatprep.subr.bf16.mxu0 0
        %4870 = vmatpush2.bf16.msra.mxu0 0
        %4871 = vmatprep.subr.bf16.mxu0 0
        %4872 = vmatpush2.bf16.msra.mxu0 0
        %4873 = vmatprep.subr.bf16.mxu0 0
        %4874 = vmatpush2.bf16.msra.mxu0 0
        %4875 = vmatprep.subr.bf16.mxu0 0
        %4876 = vmatpush2.bf16.msra.mxu0 0
        %4877 = vmatprep.subr.bf16.mxu0 0
        %4878 = vmatpush2.bf16.msra.mxu0 0
        %4879 = vmatprep.mubr.bf16.mxu0 0
        %4880 = vmatmul.mubr.bf16.gmra.mxu0 %v4845
        %v4881 = vpop.f32.mrf.mxu0
        %v4882 = vadd.f32 0.0, %v4881
        %v4883 = vpop.f32.mrf.mxu0
        %v4884 = vpop.f32.mrf.mxu0
        %v4885 = vadd.f32 0.0, %v4884
        %v4886 = vpop.f32.mrf.mxu0
        %4887 = vdwg.mxu0
        %v4892 = vunpack.c.l.b16 %v4828
        %v4893 = vunpack.c.l.b16 %v4829
        %v4894 = vunpack.c.l.b16 %v4830
        %v4895 = vunpack.c.l.b16 %v4831
        %v4896 = vpack.c.b16 %v4893, %v4892
        %v4897 = vpack.c.b16 %v4895, %v4894
        %v4901 = vsel %vm4785, %v4823, 0
        %4903 = vmatprep.subr.bf16.mxu0 0
        %4904 = vmatpush1.bf16.msra.mxu0 0
        %4905 = vmatprep.subr.bf16.mxu0 0
        %4906 = vmatpush1.bf16.msra.mxu0 0
        %4907 = vmatprep.subr.bf16.mxu0 0
        %4908 = vmatpush1.bf16.msra.mxu0 0
        %4909 = vmatprep.subr.bf16.mxu0 0
        %4910 = vmatpush1.bf16.msra.mxu0 0
        %4911 = vmatprep.subr.bf16.mxu0 0
        %4912 = vmatpush1.bf16.msra.mxu0 0
        %4913 = vmatprep.subr.bf16.mxu0 0
        %4914 = vmatpush1.bf16.msra.mxu0 0
        %4915 = vmatprep.subr.bf16.mxu0 0
        %4916 = vmatpush1.bf16.msra.mxu0 %v4897
        %4917 = vmatprep.subr.bf16.mxu0 0
        %4918 = vmatpush1.bf16.msra.mxu0 %v4896
        %4919 = vmatprep.subr.bf16.mxu0 0
        %4920 = vmatpush2.bf16.msra.mxu0 0
        %4921 = vmatprep.subr.bf16.mxu0 0
        %4922 = vmatpush2.bf16.msra.mxu0 0
        %4923 = vmatprep.subr.bf16.mxu0 0
        %4924 = vmatpush2.bf16.msra.mxu0 0
        %4925 = vmatprep.subr.bf16.mxu0 0
        %4926 = vmatpush2.bf16.msra.mxu0 0
        %4927 = vmatprep.subr.bf16.mxu0 0
        %4928 = vmatpush2.bf16.msra.mxu0 0
        %4929 = vmatprep.subr.bf16.mxu0 0
        %4930 = vmatpush2.bf16.msra.mxu0 0
        %4931 = vmatprep.subr.bf16.mxu0 0
        %4932 = vmatpush2.bf16.msra.mxu0 0
        %4933 = vmatprep.subr.bf16.mxu0 0
        %4934 = vmatpush2.bf16.msra.mxu0 0
        %4935 = vmatprep.mubr.bf16.mxu0 0
        %4936 = vmatmul.mubr.bf16.gmra.mxu0 %v4901
        %v4937 = vpop.f32.mrf.mxu0
        %v4938 = vadd.f32 0.0, %v4937
        %v4939 = vpop.f32.mrf.mxu0
        %v4940 = vpop.f32.mrf.mxu0
        %v4941 = vadd.f32 0.0, %v4940
        %v4942 = vpop.f32.mrf.mxu0
        %4943 = vdwg.mxu0
        %v4944 = vrcp.pop %v4812
        %v4945 = vrcp.pop %v4815
        %v4946 = vrcp.pop %v4818
        %v4947 = vrcp.pop %v4821
        %v4948 = vmul.f32 %v4882, %v4944
        %v4949 = vmul.f32 %v4885, %v4945
        %v4950 = vmul.f32 %v4938, %v4946
        %v4951 = vmul.f32 %v4941, %v4947
        %v4952 = vpack.c.bf16 %v4949, %v4948
        %v4953 = vpack.c.bf16 %v4951, %v4950
        %v4970 = vunpack.c.l.b16 %v4166
        %v4971 = vunpack.c.h.b16 %v4166
        %v4972 = vunpack.c.l.b16 %v4167
        %v4973 = vunpack.c.h.b16 %v4167
        %v4974 = vunpack.c.l.b16 %v4168
        %v4975 = vunpack.c.h.b16 %v4168
        %v4976 = vunpack.c.l.b16 %v4169
        %v4977 = vunpack.c.h.b16 %v4169
        %v4978 = vunpack.c.l.b16 %v4170
        %v4979 = vunpack.c.h.b16 %v4170
        %v4980 = vunpack.c.l.b16 %v4171
        %v4981 = vunpack.c.h.b16 %v4171
        %v4982 = vunpack.c.l.b16 %v4172
        %v4983 = vunpack.c.h.b16 %v4172
        %v4984 = vunpack.c.l.b16 %v4173
        %v4985 = vunpack.c.h.b16 %v4173
        %v4986 = vunpack.c.l.b16 %v4174
        %v4987 = vunpack.c.h.b16 %v4174
        %v4988 = vunpack.c.l.b16 %v4175
        %v4989 = vunpack.c.h.b16 %v4175
        %v4990 = vunpack.c.l.b16 %v4176
        %v4991 = vunpack.c.h.b16 %v4176
        %v4992 = vunpack.c.l.b16 %v4177
        %v4993 = vunpack.c.h.b16 %v4177
        %v4994 = vunpack.c.l.b16 %v4178
        %v4995 = vunpack.c.h.b16 %v4178
        %v4996 = vunpack.c.l.b16 %v4179
        %v4997 = vunpack.c.h.b16 %v4179
        %v4998 = vunpack.c.l.b16 %v4180
        %v4999 = vunpack.c.h.b16 %v4180
        %v5000 = vunpack.c.l.b16 %v4181
        %v5001 = vunpack.c.h.b16 %v4181
        %v5002 = vpack.c.b16 %v4972, %v4970
        %v5003 = vpack.c.b16 %v4973, %v4971
        %v5004 = vpack.c.b16 %v4976, %v4974
        %v5005 = vpack.c.b16 %v4977, %v4975
        %v5006 = vpack.c.b16 %v4980, %v4978
        %v5007 = vpack.c.b16 %v4981, %v4979
        %v5008 = vpack.c.b16 %v4984, %v4982
        %v5009 = vpack.c.b16 %v4985, %v4983
        %v5010 = vpack.c.b16 %v4988, %v4986
        %v5011 = vpack.c.b16 %v4989, %v4987
        %v5012 = vpack.c.b16 %v4992, %v4990
        %v5013 = vpack.c.b16 %v4993, %v4991
        %v5014 = vpack.c.b16 %v4996, %v4994
        %v5015 = vpack.c.b16 %v4997, %v4995
        %v5016 = vpack.c.b16 %v5000, %v4998
        %v5017 = vpack.c.b16 %v5001, %v4999
        %5034 = vmatprep.subr.bf16.mxu0 %v5017
        %5035 = vmatpush1.bf16.msra.mxu0 %v5016
        %5036 = vmatprep.subr.bf16.mxu0 %v5015
        %5037 = vmatpush1.bf16.msra.mxu0 %v5014
        %5038 = vmatprep.subr.bf16.mxu0 %v5013
        %5039 = vmatpush1.bf16.msra.mxu0 %v5012
        %5040 = vmatprep.subr.bf16.mxu0 %v5011
        %5041 = vmatpush1.bf16.msra.mxu0 %v5010
        %5042 = vmatprep.subr.bf16.mxu0 %v5009
        %5043 = vmatpush1.bf16.msra.mxu0 %v5008
        %5044 = vmatprep.subr.bf16.mxu0 %v5007
        %5045 = vmatpush1.bf16.msra.mxu0 %v5006
        %5046 = vmatprep.subr.bf16.mxu0 %v5005
        %5047 = vmatpush1.bf16.msra.mxu0 %v5004
        %5048 = vmatprep.subr.bf16.mxu0 %v5003
        %5049 = vmatpush1.bf16.msra.mxu0 %v5002
        %5050 = vmatprep.subr.bf16.mxu0 0
        %5051 = vmatpush2.bf16.msra.mxu0 0
        %5052 = vmatprep.subr.bf16.mxu0 0
        %5053 = vmatpush2.bf16.msra.mxu0 0
        %5054 = vmatprep.subr.bf16.mxu0 0
        %5055 = vmatpush2.bf16.msra.mxu0 0
        %5056 = vmatprep.subr.bf16.mxu0 0
        %5057 = vmatpush2.bf16.msra.mxu0 0
        %5058 = vmatprep.subr.bf16.mxu0 0
        %5059 = vmatpush2.bf16.msra.mxu0 0
        %5060 = vmatprep.subr.bf16.mxu0 0
        %5061 = vmatpush2.bf16.msra.mxu0 0
        %5062 = vmatprep.subr.bf16.mxu0 0
        %5063 = vmatpush2.bf16.msra.mxu0 0
        %5064 = vmatprep.subr.bf16.mxu0 0
        %5065 = vmatpush2.bf16.msra.mxu0 0
        %5066 = vmatprep.mubr.bf16.mxu0 0
        %5067 = vmatmul.mubr.bf16.gmra.mxu0 %v4952
        %v5068 = vpop.f32.mrf.mxu0
        %v5069 = vadd.f32 0.0, %v5068
        %v5070 = vpop.f32.mrf.mxu0
        %v5071 = vadd.f32 0.0, %v5070
        %v5072 = vpop.f32.mrf.mxu0
        %v5073 = vadd.f32 0.0, %v5072
        %v5074 = vpop.f32.mrf.mxu0
        %v5075 = vadd.f32 0.0, %v5074
        %5076 = vdwg.mxu0
        %v5093 = vunpack.c.l.b16 %v4182
        %v5094 = vunpack.c.h.b16 %v4182
        %v5095 = vunpack.c.l.b16 %v4183
        %v5096 = vunpack.c.h.b16 %v4183
        %v5097 = vunpack.c.l.b16 %v4184
        %v5098 = vunpack.c.h.b16 %v4184
        %v5099 = vunpack.c.l.b16 %v4185
        %v5100 = vunpack.c.h.b16 %v4185
        %v5101 = vunpack.c.l.b16 %v4186
        %v5102 = vunpack.c.h.b16 %v4186
        %v5103 = vunpack.c.l.b16 %v4187
        %v5104 = vunpack.c.h.b16 %v4187
        %v5105 = vunpack.c.l.b16 %v4188
        %v5106 = vunpack.c.h.b16 %v4188
        %v5107 = vunpack.c.l.b16 %v4189
        %v5108 = vunpack.c.h.b16 %v4189
        %v5109 = vunpack.c.l.b16 %v4190
        %v5110 = vunpack.c.h.b16 %v4190
        %v5111 = vunpack.c.l.b16 %v4191
        %v5112 = vunpack.c.h.b16 %v4191
        %v5113 = vunpack.c.l.b16 %v4192
        %v5114 = vunpack.c.h.b16 %v4192
        %v5115 = vunpack.c.l.b16 %v4193
        %v5116 = vunpack.c.h.b16 %v4193
        %v5117 = vunpack.c.l.b16 %v4194
        %v5118 = vunpack.c.h.b16 %v4194
        %v5119 = vunpack.c.l.b16 %v4195
        %v5120 = vunpack.c.h.b16 %v4195
        %v5121 = vunpack.c.l.b16 %v4196
        %v5122 = vunpack.c.h.b16 %v4196
        %v5123 = vunpack.c.l.b16 %v4197
        %v5124 = vunpack.c.h.b16 %v4197
        %v5125 = vpack.c.b16 %v5095, %v5093
        %v5126 = vpack.c.b16 %v5096, %v5094
        %v5127 = vpack.c.b16 %v5099, %v5097
        %v5128 = vpack.c.b16 %v5100, %v5098
        %v5129 = vpack.c.b16 %v5103, %v5101
        %v5130 = vpack.c.b16 %v5104, %v5102
        %v5131 = vpack.c.b16 %v5107, %v5105
        %v5132 = vpack.c.b16 %v5108, %v5106
        %v5133 = vpack.c.b16 %v5111, %v5109
        %v5134 = vpack.c.b16 %v5112, %v5110
        %v5135 = vpack.c.b16 %v5115, %v5113
        %v5136 = vpack.c.b16 %v5116, %v5114
        %v5137 = vpack.c.b16 %v5119, %v5117
        %v5138 = vpack.c.b16 %v5120, %v5118
        %v5139 = vpack.c.b16 %v5123, %v5121
        %v5140 = vpack.c.b16 %v5124, %v5122
        %5157 = vmatprep.subr.bf16.mxu0 %v5140
        %5158 = vmatpush1.bf16.msra.mxu0 %v5139
        %5159 = vmatprep.subr.bf16.mxu0 %v5138
        %5160 = vmatpush1.bf16.msra.mxu0 %v5137
        %5161 = vmatprep.subr.bf16.mxu0 %v5136
        %5162 = vmatpush1.bf16.msra.mxu0 %v5135
        %5163 = vmatprep.subr.bf16.mxu0 %v5134
        %5164 = vmatpush1.bf16.msra.mxu0 %v5133
        %5165 = vmatprep.subr.bf16.mxu0 %v5132
        %5166 = vmatpush1.bf16.msra.mxu0 %v5131
        %5167 = vmatprep.subr.bf16.mxu0 %v5130
        %5168 = vmatpush1.bf16.msra.mxu0 %v5129
        %5169 = vmatprep.subr.bf16.mxu0 %v5128
        %5170 = vmatpush1.bf16.msra.mxu0 %v5127
        %5171 = vmatprep.subr.bf16.mxu0 %v5126
        %5172 = vmatpush1.bf16.msra.mxu0 %v5125
        %5173 = vmatprep.subr.bf16.mxu0 0
        %5174 = vmatpush2.bf16.msra.mxu0 0
        %5175 = vmatprep.subr.bf16.mxu0 0
        %5176 = vmatpush2.bf16.msra.mxu0 0
        %5177 = vmatprep.subr.bf16.mxu0 0
        %5178 = vmatpush2.bf16.msra.mxu0 0
        %5179 = vmatprep.subr.bf16.mxu0 0
        %5180 = vmatpush2.bf16.msra.mxu0 0
        %5181 = vmatprep.subr.bf16.mxu0 0
        %5182 = vmatpush2.bf16.msra.mxu0 0
        %5183 = vmatprep.subr.bf16.mxu0 0
        %5184 = vmatpush2.bf16.msra.mxu0 0
        %5185 = vmatprep.subr.bf16.mxu0 0
        %5186 = vmatpush2.bf16.msra.mxu0 0
        %5187 = vmatprep.subr.bf16.mxu0 0
        %5188 = vmatpush2.bf16.msra.mxu0 0
        %5189 = vmatprep.mubr.bf16.mxu0 0
        %5190 = vmatmul.mubr.bf16.gmra.mxu0 %v4953
        %v5191 = vpop.f32.mrf.mxu0
        %v5192 = vadd.f32 0.0, %v5191
        %v5193 = vpop.f32.mrf.mxu0
        %v5194 = vadd.f32 0.0, %v5193
        %v5195 = vpop.f32.mrf.mxu0
        %v5196 = vadd.f32 0.0, %v5195
        %v5197 = vpop.f32.mrf.mxu0
        %v5198 = vadd.f32 0.0, %v5197
        %5199 = vdwg.mxu0
        %v5200 = vadd.f32 %v5069, %v5192
        %v5201 = vadd.f32 %v5071, %v5194
        %v5202 = vadd.f32 %v5073, %v5196
        %v5203 = vadd.f32 %v5075, %v5198
        %v5205 = vlaneseq
        %v5206 = vshrl.u32 %v5205, 7
        %v5207 = vsub.s32 0, %v5206
        %v5208 = vrot.slane %v4198, %v5207
        %v5209 = vlaneseq
        %v5210 = vshrl.u32 %v5209, 7
        %v5211 = vsub.s32 1, %v5210
        %v5212 = vrot.slane %v4198, %v5211
        %v5215 = vadd.f32 %v5200, %v5208
        %v5216 = vadd.f32 %v5201, %v5212
        %v5217 = vadd.f32 %v5202, %v5208
        %v5218 = vadd.f32 %v5203, %v5212
        %v5219 = vadd.f32 %v4129, %v5215
        %v5220 = vadd.f32 %v4130, %v5216
        %v5221 = vadd.f32 %v4131, %v5217
        %v5222 = vadd.f32 %v4132, %v5218
        %v5223 = vld [vmem:[#allocation20] sm:$0x3]
        %v5224 = vld [vmem:[%s10] sm:$0x3]
        %v5225 = vadd.f32 %v5219, %v5220
        %5226 = vadd.xlane.f32.xlu0 %v5225
        %v5227 = vpop.xlane.xlu0 %5226
        %v5228 = vadd.f32 %v5221, %v5222
        %5229 = vadd.xlane.f32.xlu0 %v5228
        %v5230 = vpop.xlane.xlu0 %5229
        %v5231 = vrcp.pop 256.0
        %v5232 = vmul.f32 %v5227, %v5231
        %v5233 = vmul.f32 %v5230, %v5231
        %v5234 = vsub.f32 %v5219, %v5232
        %v5235 = vsub.f32 %v5220, %v5232
        %v5236 = vsub.f32 %v5221, %v5233
        %v5237 = vsub.f32 %v5222, %v5233
        %v5238 = vmul.f32 %v5234, %v5234
        %v5239 = vmul.f32 %v5235, %v5235
        %v5240 = vmul.f32 %v5236, %v5236
        %v5241 = vmul.f32 %v5237, %v5237
        %v5242 = vadd.f32 %v5238, %v5239
        %5243 = vadd.xlane.f32.xlu0 %v5242
        %v5244 = vpop.xlane.xlu0 %5243
        %v5245 = vadd.f32 %v5240, %v5241
        %5246 = vadd.xlane.f32.xlu0 %v5245
        %v5247 = vpop.xlane.xlu0 %5246
        %v5248 = vmul.f32 %v5244, %v5231
        %v5249 = vmul.f32 %v5247, %v5231
        %v5250 = vadd.f32 %v5248, 1e-12
        %v5251 = vadd.f32 %v5249, 1e-12
        %v5252 = vrsqrt.pop %v5250
        %v5253 = vrsqrt.pop %v5251
        %v5254 = vmul.f32 %v5234, %v5252
        %v5255 = vmul.f32 %v5235, %v5252
        %v5256 = vmul.f32 %v5236, %v5253
        %v5257 = vmul.f32 %v5237, %v5253
        %v5259 = vlaneseq
        %v5260 = vshrl.u32 %v5259, 7
        %v5261 = vsub.s32 0, %v5260
        %v5262 = vrot.slane %v5223, %v5261
        %v5263 = vlaneseq
        %v5264 = vshrl.u32 %v5263, 7
        %v5265 = vsub.s32 1, %v5264
        %v5266 = vrot.slane %v5223, %v5265
        %v5269 = vmul.f32 %v5254, %v5262
        %v5270 = vmul.f32 %v5255, %v5266
        %v5271 = vmul.f32 %v5256, %v5262
        %v5272 = vmul.f32 %v5257, %v5266
        %v5274 = vlaneseq
        %v5275 = vshrl.u32 %v5274, 7
        %v5276 = vsub.s32 0, %v5275
        %v5277 = vrot.slane %v5224, %v5276
        %v5278 = vlaneseq
        %v5279 = vshrl.u32 %v5278, 7
        %v5280 = vsub.s32 1, %v5279
        %v5281 = vrot.slane %v5224, %v5280
        %v5284 = vadd.f32 %v5269, %v5277
        %v5285 = vadd.f32 %v5270, %v5281
        %v5286 = vadd.f32 %v5271, %v5277
        %v5287 = vadd.f32 %v5272, %v5281
        %v5288 = vld [vmem:[#allocation21] sm:$0xff]
        %v5289 = vld [vmem:[#allocation21 + $0x8] sm:$0xff]
        %v5290 = vld [vmem:[#allocation21 + $0x10] sm:$0xff]
        %v5291 = vld [vmem:[#allocation21 + $0x18] sm:$0xff]
        %v5292 = vld [vmem:[#allocation21 + $0x20] sm:$0xff]
        %v5293 = vld [vmem:[#allocation21 + $0x28] sm:$0xff]
        %v5294 = vld [vmem:[#allocation21 + $0x30] sm:$0xff]
        %v5295 = vld [vmem:[#allocation21 + $0x38] sm:$0xff]
        %v5296 = vld [vmem:[#allocation21 + $0x40] sm:$0xff]
        %v5297 = vld [vmem:[#allocation21 + $0x48] sm:$0xff]
        %v5298 = vld [vmem:[#allocation21 + $0x50] sm:$0xff]
        %v5299 = vld [vmem:[#allocation21 + $0x58] sm:$0xff]
        %v5300 = vld [vmem:[#allocation21 + $0x60] sm:$0xff]
        %v5301 = vld [vmem:[#allocation21 + $0x68] sm:$0xff]
        %v5302 = vld [vmem:[#allocation21 + $0x70] sm:$0xff]
        %v5303 = vld [vmem:[#allocation21 + $0x78] sm:$0xff]
        %v5304 = vld [vmem:[#allocation21 + $0x80] sm:$0xff]
        %v5305 = vld [vmem:[#allocation21 + $0x88] sm:$0xff]
        %v5306 = vld [vmem:[#allocation21 + $0x90] sm:$0xff]
        %v5307 = vld [vmem:[#allocation21 + $0x98] sm:$0xff]
        %v5308 = vld [vmem:[#allocation21 + $0xa0] sm:$0xff]
        %v5309 = vld [vmem:[#allocation21 + $0xa8] sm:$0xff]
        %v5310 = vld [vmem:[#allocation21 + $0xb0] sm:$0xff]
        %v5311 = vld [vmem:[#allocation21 + $0xb8] sm:$0xff]
        %v5312 = vld [vmem:[#allocation21 + $0xc0] sm:$0xff]
        %v5313 = vld [vmem:[#allocation21 + $0xc8] sm:$0xff]
        %v5314 = vld [vmem:[#allocation21 + $0xd0] sm:$0xff]
        %v5315 = vld [vmem:[#allocation21 + $0xd8] sm:$0xff]
        %v5316 = vld [vmem:[#allocation21 + $0xe0] sm:$0xff]
        %v5317 = vld [vmem:[#allocation21 + $0xe8] sm:$0xff]
        %v5318 = vld [vmem:[#allocation21 + $0xf0] sm:$0xff]
        %v5319 = vld [vmem:[#allocation21 + $0xf8] sm:$0xff]
        %v5320 = vld [vmem:[%s12] sm:$0x3]
        %v5321 = vld [vmem:[#allocation24] sm:$0xff]
        %v5322 = vld [vmem:[#allocation24 + $0x8] sm:$0xff]
        %v5323 = vld [vmem:[#allocation24 + $0x10] sm:$0xff]
        %v5324 = vld [vmem:[#allocation24 + $0x18] sm:$0xff]
        %v5325 = vld [vmem:[#allocation24 + $0x20] sm:$0xff]
        %v5326 = vld [vmem:[#allocation24 + $0x28] sm:$0xff]
        %v5327 = vld [vmem:[#allocation24 + $0x30] sm:$0xff]
        %v5328 = vld [vmem:[#allocation24 + $0x38] sm:$0xff]
        %v5329 = vld [vmem:[#allocation24 + $0x40] sm:$0xff]
        %v5330 = vld [vmem:[#allocation24 + $0x48] sm:$0xff]
        %v5331 = vld [vmem:[#allocation24 + $0x50] sm:$0xff]
        %v5332 = vld [vmem:[#allocation24 + $0x58] sm:$0xff]
        %v5333 = vld [vmem:[#allocation24 + $0x60] sm:$0xff]
        %v5334 = vld [vmem:[#allocation24 + $0x68] sm:$0xff]
        %v5335 = vld [vmem:[#allocation24 + $0x70] sm:$0xff]
        %v5336 = vld [vmem:[#allocation24 + $0x78] sm:$0xff]
        %v5337 = vld [vmem:[#allocation24 + $0x80] sm:$0xff]
        %v5338 = vld [vmem:[#allocation24 + $0x88] sm:$0xff]
        %v5339 = vld [vmem:[#allocation24 + $0x90] sm:$0xff]
        %v5340 = vld [vmem:[#allocation24 + $0x98] sm:$0xff]
        %v5341 = vld [vmem:[#allocation24 + $0xa0] sm:$0xff]
        %v5342 = vld [vmem:[#allocation24 + $0xa8] sm:$0xff]
        %v5343 = vld [vmem:[#allocation24 + $0xb0] sm:$0xff]
        %v5344 = vld [vmem:[#allocation24 + $0xb8] sm:$0xff]
        %v5345 = vld [vmem:[#allocation24 + $0xc0] sm:$0xff]
        %v5346 = vld [vmem:[#allocation24 + $0xc8] sm:$0xff]
        %v5347 = vld [vmem:[#allocation24 + $0xd0] sm:$0xff]
        %v5348 = vld [vmem:[#allocation24 + $0xd8] sm:$0xff]
        %v5349 = vld [vmem:[#allocation24 + $0xe0] sm:$0xff]
        %v5350 = vld [vmem:[#allocation24 + $0xe8] sm:$0xff]
        %v5351 = vld [vmem:[#allocation24 + $0xf0] sm:$0xff]
        %v5352 = vld [vmem:[#allocation24 + $0xf8] sm:$0xff]
        %v5353 = vld [vmem:[%s16] sm:$0x3]
        %v5354 = vpack.c.bf16 %v5286, %v5284
        %v5355 = vpack.c.bf16 %v5287, %v5285
        %v5357 = vlaneseq
        %v5358 = vshrl.u32 %v5357, 7
        %v5359 = vsub.s32 0, %v5358
        %v5360 = vrot.slane %v5320, %v5359
        %v5361 = vlaneseq
        %v5362 = vshrl.u32 %v5361, 7
        %v5363 = vsub.s32 1, %v5362
        %v5364 = vrot.slane %v5320, %v5363
        %v5399 = vunpack.c.l.b16 %v5288
        %v5400 = vunpack.c.h.b16 %v5288
        %v5401 = vunpack.c.l.b16 %v5289
        %v5402 = vunpack.c.h.b16 %v5289
        %v5403 = vunpack.c.l.b16 %v5290
        %v5404 = vunpack.c.h.b16 %v5290
        %v5405 = vunpack.c.l.b16 %v5291
        %v5406 = vunpack.c.h.b16 %v5291
        %v5407 = vunpack.c.l.b16 %v5292
        %v5408 = vunpack.c.h.b16 %v5292
        %v5409 = vunpack.c.l.b16 %v5293
        %v5410 = vunpack.c.h.b16 %v5293
        %v5411 = vunpack.c.l.b16 %v5294
        %v5412 = vunpack.c.h.b16 %v5294
        %v5413 = vunpack.c.l.b16 %v5295
        %v5414 = vunpack.c.h.b16 %v5295
        %v5415 = vunpack.c.l.b16 %v5296
        %v5416 = vunpack.c.h.b16 %v5296
        %v5417 = vunpack.c.l.b16 %v5297
        %v5418 = vunpack.c.h.b16 %v5297
        %v5419 = vunpack.c.l.b16 %v5298
        %v5420 = vunpack.c.h.b16 %v5298
        %v5421 = vunpack.c.l.b16 %v5299
        %v5422 = vunpack.c.h.b16 %v5299
        %v5423 = vunpack.c.l.b16 %v5300
        %v5424 = vunpack.c.h.b16 %v5300
        %v5425 = vunpack.c.l.b16 %v5301
        %v5426 = vunpack.c.h.b16 %v5301
        %v5427 = vunpack.c.l.b16 %v5302
        %v5428 = vunpack.c.h.b16 %v5302
        %v5429 = vunpack.c.l.b16 %v5303
        %v5430 = vunpack.c.h.b16 %v5303
        %v5431 = vunpack.c.l.b16 %v5304
        %v5432 = vunpack.c.h.b16 %v5304
        %v5433 = vunpack.c.l.b16 %v5305
        %v5434 = vunpack.c.h.b16 %v5305
        %v5435 = vunpack.c.l.b16 %v5306
        %v5436 = vunpack.c.h.b16 %v5306
        %v5437 = vunpack.c.l.b16 %v5307
        %v5438 = vunpack.c.h.b16 %v5307
        %v5439 = vunpack.c.l.b16 %v5308
        %v5440 = vunpack.c.h.b16 %v5308
        %v5441 = vunpack.c.l.b16 %v5309
        %v5442 = vunpack.c.h.b16 %v5309
        %v5443 = vunpack.c.l.b16 %v5310
        %v5444 = vunpack.c.h.b16 %v5310
        %v5445 = vunpack.c.l.b16 %v5311
        %v5446 = vunpack.c.h.b16 %v5311
        %v5447 = vunpack.c.l.b16 %v5312
        %v5448 = vunpack.c.h.b16 %v5312
        %v5449 = vunpack.c.l.b16 %v5313
        %v5450 = vunpack.c.h.b16 %v5313
        %v5451 = vunpack.c.l.b16 %v5314
        %v5452 = vunpack.c.h.b16 %v5314
        %v5453 = vunpack.c.l.b16 %v5315
        %v5454 = vunpack.c.h.b16 %v5315
        %v5455 = vunpack.c.l.b16 %v5316
        %v5456 = vunpack.c.h.b16 %v5316
        %v5457 = vunpack.c.l.b16 %v5317
        %v5458 = vunpack.c.h.b16 %v5317
        %v5459 = vunpack.c.l.b16 %v5318
        %v5460 = vunpack.c.h.b16 %v5318
        %v5461 = vunpack.c.l.b16 %v5319
        %v5462 = vunpack.c.h.b16 %v5319
        %v5463 = vpack.c.b16 %v5401, %v5399
        %v5464 = vpack.c.b16 %v5402, %v5400
        %v5465 = vpack.c.b16 %v5405, %v5403
        %v5466 = vpack.c.b16 %v5406, %v5404
        %v5467 = vpack.c.b16 %v5409, %v5407
        %v5468 = vpack.c.b16 %v5410, %v5408
        %v5469 = vpack.c.b16 %v5413, %v5411
        %v5470 = vpack.c.b16 %v5414, %v5412
        %v5471 = vpack.c.b16 %v5417, %v5415
        %v5472 = vpack.c.b16 %v5418, %v5416
        %v5473 = vpack.c.b16 %v5421, %v5419
        %v5474 = vpack.c.b16 %v5422, %v5420
        %v5475 = vpack.c.b16 %v5425, %v5423
        %v5476 = vpack.c.b16 %v5426, %v5424
        %v5477 = vpack.c.b16 %v5429, %v5427
        %v5478 = vpack.c.b16 %v5430, %v5428
        %v5479 = vpack.c.b16 %v5433, %v5431
        %v5480 = vpack.c.b16 %v5434, %v5432
        %v5481 = vpack.c.b16 %v5437, %v5435
        %v5482 = vpack.c.b16 %v5438, %v5436
        %v5483 = vpack.c.b16 %v5441, %v5439
        %v5484 = vpack.c.b16 %v5442, %v5440
        %v5485 = vpack.c.b16 %v5445, %v5443
        %v5486 = vpack.c.b16 %v5446, %v5444
        %v5487 = vpack.c.b16 %v5449, %v5447
        %v5488 = vpack.c.b16 %v5450, %v5448
        %v5489 = vpack.c.b16 %v5453, %v5451
        %v5490 = vpack.c.b16 %v5454, %v5452
        %v5491 = vpack.c.b16 %v5457, %v5455
        %v5492 = vpack.c.b16 %v5458, %v5456
        %v5493 = vpack.c.b16 %v5461, %v5459
        %v5494 = vpack.c.b16 %v5462, %v5460
        %5527 = vmatprep.subr.bf16.mxu0 %v5478
        %5528 = vmatpush1.bf16.msra.mxu0 %v5477
        %5529 = vmatprep.subr.bf16.mxu0 %v5476
        %5530 = vmatpush1.bf16.msra.mxu0 %v5475
        %5531 = vmatprep.subr.bf16.mxu0 %v5474
        %5532 = vmatpush1.bf16.msra.mxu0 %v5473
        %5533 = vmatprep.subr.bf16.mxu0 %v5472
        %5534 = vmatpush1.bf16.msra.mxu0 %v5471
        %5535 = vmatprep.subr.bf16.mxu0 %v5470
        %5536 = vmatpush1.bf16.msra.mxu0 %v5469
        %5537 = vmatprep.subr.bf16.mxu0 %v5468
        %5538 = vmatpush1.bf16.msra.mxu0 %v5467
        %5539 = vmatprep.subr.bf16.mxu0 %v5466
        %5540 = vmatpush1.bf16.msra.mxu0 %v5465
        %5541 = vmatprep.subr.bf16.mxu0 %v5464
        %5542 = vmatpush1.bf16.msra.mxu0 %v5463
        %5543 = vmatprep.subr.bf16.mxu0 %v5494
        %5544 = vmatpush2.bf16.msra.mxu0 %v5493
        %5545 = vmatprep.subr.bf16.mxu0 %v5492
        %5546 = vmatpush2.bf16.msra.mxu0 %v5491
        %5547 = vmatprep.subr.bf16.mxu0 %v5490
        %5548 = vmatpush2.bf16.msra.mxu0 %v5489
        %5549 = vmatprep.subr.bf16.mxu0 %v5488
        %5550 = vmatpush2.bf16.msra.mxu0 %v5487
        %5551 = vmatprep.subr.bf16.mxu0 %v5486
        %5552 = vmatpush2.bf16.msra.mxu0 %v5485
        %5553 = vmatprep.subr.bf16.mxu0 %v5484
        %5554 = vmatpush2.bf16.msra.mxu0 %v5483
        %5555 = vmatprep.subr.bf16.mxu0 %v5482
        %5556 = vmatpush2.bf16.msra.mxu0 %v5481
        %5557 = vmatprep.subr.bf16.mxu0 %v5480
        %5558 = vmatpush2.bf16.msra.mxu0 %v5479
        %5559 = vmatprep.mubr.bf16.mxu0 %v5355
        %5560 = vmatmul.mubr.bf16.gmra.mxu0 %v5354
        %v5561 = vpop.f32.mrf.mxu0
        %v5562 = vadd.f32 %v5360, %v5561
        %v5563 = vpop.f32.mrf.mxu0
        %v5564 = vadd.f32 %v5364, %v5563
        %v5565 = vpop.f32.mrf.mxu0
        %v5566 = vadd.f32 %v5360, %v5565
        %v5567 = vpop.f32.mrf.mxu0
        %v5568 = vadd.f32 %v5364, %v5567
        %5569 = vdwg.mxu0
        %v5570 = vmul.f32 %v5562, 0.088388346
        %v5571 = vmul.f32 %v5564, 0.088388346
        %v5572 = vmul.f32 %v5566, 0.088388346
        %v5573 = vmul.f32 %v5568, 0.088388346
        %v5574 = vcombine.high %v5570, 0.0
        %v5576 = vunpack.c.l.s4 1983009808
        %v5577 = vunpack.c.0.s8 %v5576
        %v5578 = vlaneseq
        %v5579 = vshrl.u32 %v5578, 7
        %v5580 = vsub.s32 %v5577, %v5579
        %v5581 = vrot.slane %v5570, %v5580
        %v5583 = vunpack.c.l.s4 1983009808
        %v5584 = vunpack.c.0.s8 %v5583
        %v5585 = vlaneseq
        %v5586 = vshrl.u32 %v5585, 7
        %v5587 = vsub.s32 %v5584, %v5586
        %v5588 = vrot.slane %v5574, %v5587
        %v5589 = vcombine.high %v5571, 0.0
        %v5591 = vunpack.c.l.s4 1983009808
        %v5592 = vunpack.c.0.s8 %v5591
        %v5593 = vlaneseq
        %v5594 = vshrl.u32 %v5593, 7
        %v5595 = vsub.s32 %v5592, %v5594
        %v5596 = vrot.slane %v5571, %v5595
        %v5598 = vunpack.c.l.s4 1983009808
        %v5599 = vunpack.c.0.s8 %v5598
        %v5600 = vlaneseq
        %v5601 = vshrl.u32 %v5600, 7
        %v5602 = vsub.s32 %v5599, %v5601
        %v5603 = vrot.slane %v5589, %v5602
        %v5604 = vcombine.low %v5581, %v5596
        %v5605 = vcombine.high %v5581, %v5596
        %v5607 = vunpack.c.l.s4 1934713408
        %v5608 = vunpack.c.0.s8 %v5607
        %v5609 = vlaneseq
        %v5610 = vshrl.u32 %v5609, 7
        %v5611 = vsub.s32 %v5608, %v5610
        %v5612 = vrot.slane %v5604, %v5611
        %v5614 = vunpack.c.l.s4 1934713408
        %v5615 = vunpack.c.0.s8 %v5614
        %v5616 = vlaneseq
        %v5617 = vshrl.u32 %v5616, 7
        %v5618 = vsub.s32 %v5615, %v5617
        %v5619 = vrot.slane %v5605, %v5618
        %v5620 = vcombine.low %v5588, %v5603
        %v5621 = vcombine.high %v5588, %v5603
        %v5623 = vunpack.c.l.s4 1934713408
        %v5624 = vunpack.c.0.s8 %v5623
        %v5625 = vlaneseq
        %v5626 = vshrl.u32 %v5625, 7
        %v5627 = vsub.s32 %v5624, %v5626
        %v5628 = vrot.slane %v5620, %v5627
        %v5630 = vunpack.c.l.s4 1934713408
        %v5631 = vunpack.c.0.s8 %v5630
        %v5632 = vlaneseq
        %v5633 = vshrl.u32 %v5632, 7
        %v5634 = vsub.s32 %v5631, %v5633
        %v5635 = vrot.slane %v5621, %v5634
        %v5636 = vcombine.high %v5612, 0.0
        %v5637 = vcombine.high %v5619, 0.0
        %v5638 = vcombine.high %v5628, 0.0
        %v5639 = vcombine.high %v5635, 0.0
        %v5640 = vcombine.high %v5572, 0.0
        %v5642 = vunpack.c.l.s4 1983009808
        %v5643 = vunpack.c.0.s8 %v5642
        %v5644 = vlaneseq
        %v5645 = vshrl.u32 %v5644, 7
        %v5646 = vsub.s32 %v5643, %v5645
        %v5647 = vrot.slane %v5572, %v5646
        %v5649 = vunpack.c.l.s4 1983009808
        %v5650 = vunpack.c.0.s8 %v5649
        %v5651 = vlaneseq
        %v5652 = vshrl.u32 %v5651, 7
        %v5653 = vsub.s32 %v5650, %v5652
        %v5654 = vrot.slane %v5640, %v5653
        %v5655 = vcombine.high %v5573, 0.0
        %v5657 = vunpack.c.l.s4 1983009808
        %v5658 = vunpack.c.0.s8 %v5657
        %v5659 = vlaneseq
        %v5660 = vshrl.u32 %v5659, 7
        %v5661 = vsub.s32 %v5658, %v5660
        %v5662 = vrot.slane %v5573, %v5661
        %v5664 = vunpack.c.l.s4 1983009808
        %v5665 = vunpack.c.0.s8 %v5664
        %v5666 = vlaneseq
        %v5667 = vshrl.u32 %v5666, 7
        %v5668 = vsub.s32 %v5665, %v5667
        %v5669 = vrot.slane %v5655, %v5668
        %v5670 = vcombine.low %v5647, %v5662
        %v5671 = vcombine.high %v5647, %v5662
        %v5673 = vunpack.c.l.s4 1934713408
        %v5674 = vunpack.c.0.s8 %v5673
        %v5675 = vlaneseq
        %v5676 = vshrl.u32 %v5675, 7
        %v5677 = vsub.s32 %v5674, %v5676
        %v5678 = vrot.slane %v5670, %v5677
        %v5680 = vunpack.c.l.s4 1934713408
        %v5681 = vunpack.c.0.s8 %v5680
        %v5682 = vlaneseq
        %v5683 = vshrl.u32 %v5682, 7
        %v5684 = vsub.s32 %v5681, %v5683
        %v5685 = vrot.slane %v5671, %v5684
        %v5686 = vcombine.low %v5654, %v5669
        %v5687 = vcombine.high %v5654, %v5669
        %v5689 = vunpack.c.l.s4 1934713408
        %v5690 = vunpack.c.0.s8 %v5689
        %v5691 = vlaneseq
        %v5692 = vshrl.u32 %v5691, 7
        %v5693 = vsub.s32 %v5690, %v5692
        %v5694 = vrot.slane %v5686, %v5693
        %v5696 = vunpack.c.l.s4 1934713408
        %v5697 = vunpack.c.0.s8 %v5696
        %v5698 = vlaneseq
        %v5699 = vshrl.u32 %v5698, 7
        %v5700 = vsub.s32 %v5697, %v5699
        %v5701 = vrot.slane %v5687, %v5700
        %v5702 = vcombine.high %v5678, 0.0
        %v5703 = vcombine.high %v5685, 0.0
        %v5704 = vcombine.high %v5694, 0.0
        %v5705 = vcombine.high %v5701, 0.0
        %v5706 = vcombine.low %v5612, %v5619
        %v5708 = vunpack.c.l.s4 1983009808
        %v5709 = vunpack.c.0.s8 %v5708
        %v5710 = vlaneseq
        %v5711 = vshrl.u32 %v5710, 7
        %v5712 = vsub.s32 %v5709, %v5711
        %v5713 = vrot.slane %v5706, %v5712
        %v5714 = vcombine.low %v5636, %v5637
        %v5716 = vunpack.c.l.s4 1983009808
        %v5717 = vunpack.c.0.s8 %v5716
        %v5718 = vlaneseq
        %v5719 = vshrl.u32 %v5718, 7
        %v5720 = vsub.s32 %v5717, %v5719
        %v5721 = vrot.slane %v5714, %v5720
        %v5722 = vcombine.low %v5628, %v5635
        %v5724 = vunpack.c.l.s4 1983009808
        %v5725 = vunpack.c.0.s8 %v5724
        %v5726 = vlaneseq
        %v5727 = vshrl.u32 %v5726, 7
        %v5728 = vsub.s32 %v5725, %v5727
        %v5729 = vrot.slane %v5722, %v5728
        %v5730 = vcombine.low %v5638, %v5639
        %v5732 = vunpack.c.l.s4 1983009808
        %v5733 = vunpack.c.0.s8 %v5732
        %v5734 = vlaneseq
        %v5735 = vshrl.u32 %v5734, 7
        %v5736 = vsub.s32 %v5733, %v5735
        %v5737 = vrot.slane %v5730, %v5736
        %v5738 = vcombine.low %v5713, %v5721
        %v5740 = vunpack.c.l.s4 1934713408
        %v5741 = vunpack.c.0.s8 %v5740
        %v5742 = vlaneseq
        %v5743 = vshrl.u32 %v5742, 7
        %v5744 = vsub.s32 %v5741, %v5743
        %v5745 = vrot.slane %v5738, %v5744
        %v5746 = vcombine.low %v5729, %v5737
        %v5748 = vunpack.c.l.s4 1934713408
        %v5749 = vunpack.c.0.s8 %v5748
        %v5750 = vlaneseq
        %v5751 = vshrl.u32 %v5750, 7
        %v5752 = vsub.s32 %v5749, %v5751
        %v5753 = vrot.slane %v5746, %v5752
        %v5754 = vcombine.low %v5745, %v5753
        %v5755 = vcombine.high %v5745, %v5753
        %v5756 = vcombine.low %v5678, %v5685
        %v5758 = vunpack.c.l.s4 1983009808
        %v5759 = vunpack.c.0.s8 %v5758
        %v5760 = vlaneseq
        %v5761 = vshrl.u32 %v5760, 7
        %v5762 = vsub.s32 %v5759, %v5761
        %v5763 = vrot.slane %v5756, %v5762
        %v5764 = vcombine.low %v5702, %v5703
        %v5766 = vunpack.c.l.s4 1983009808
        %v5767 = vunpack.c.0.s8 %v5766
        %v5768 = vlaneseq
        %v5769 = vshrl.u32 %v5768, 7
        %v5770 = vsub.s32 %v5767, %v5769
        %v5771 = vrot.slane %v5764, %v5770
        %v5772 = vcombine.low %v5694, %v5701
        %v5774 = vunpack.c.l.s4 1983009808
        %v5775 = vunpack.c.0.s8 %v5774
        %v5776 = vlaneseq
        %v5777 = vshrl.u32 %v5776, 7
        %v5778 = vsub.s32 %v5775, %v5777
        %v5779 = vrot.slane %v5772, %v5778
        %v5780 = vcombine.low %v5704, %v5705
        %v5782 = vunpack.c.l.s4 1983009808
        %v5783 = vunpack.c.0.s8 %v5782
        %v5784 = vlaneseq
        %v5785 = vshrl.u32 %v5784, 7
        %v5786 = vsub.s32 %v5783, %v5785
        %v5787 = vrot.slane %v5780, %v5786
        %v5788 = vcombine.low %v5763, %v5771
        %v5790 = vunpack.c.l.s4 1934713408
        %v5791 = vunpack.c.0.s8 %v5790
        %v5792 = vlaneseq
        %v5793 = vshrl.u32 %v5792, 7
        %v5794 = vsub.s32 %v5791, %v5793
        %v5795 = vrot.slane %v5788, %v5794
        %v5796 = vcombine.low %v5779, %v5787
        %v5798 = vunpack.c.l.s4 1934713408
        %v5799 = vunpack.c.0.s8 %v5798
        %v5800 = vlaneseq
        %v5801 = vshrl.u32 %v5800, 7
        %v5802 = vsub.s32 %v5799, %v5801
        %v5803 = vrot.slane %v5796, %v5802
        %v5804 = vcombine.low %v5795, %v5803
        %v5805 = vcombine.high %v5795, %v5803
        %v5806 = vpack.c.bf16 %v5804, %v5754
        %v5807 = vpack.c.bf16 %v5805, %v5755
        %v5808 = vld [vmem:[#allocation4] sm:$0xf]
        %v5809 = vld [vmem:[#allocation4 + $0x4] sm:$0xf]
        %v5810 = vld [vmem:[#allocation4 + $0x8] sm:$0xf]
        %v5811 = vld [vmem:[#allocation4 + $0xc] sm:$0xf]
        %v5812 = vld [vmem:[#allocation4 + $0x10] sm:$0xf]
        %v5813 = vld [vmem:[#allocation4 + $0x14] sm:$0xf]
        %v5814 = vld [vmem:[#allocation4 + $0x18] sm:$0xf]
        %v5815 = vld [vmem:[#allocation4 + $0x1c] sm:$0xf]
        %v5820 = vunpack.c.l.b16 %v5808
        %v5821 = vunpack.c.l.b16 %v5809
        %v5822 = vunpack.c.l.b16 %v5810
        %v5823 = vunpack.c.l.b16 %v5811
        %v5824 = vpack.c.b16 %v5821, %v5820
        %v5825 = vpack.c.b16 %v5823, %v5822
        %5828 = vmatprep.subr.bf16.mxu0 0
        %5829 = vmatpush1.bf16.xpose.msra.mxu0 0
        %5830 = vmatprep.subr.bf16.mxu0 0
        %5831 = vmatpush1.bf16.xpose.msra.mxu0 0
        %5832 = vmatprep.subr.bf16.mxu0 0
        %5833 = vmatpush1.bf16.xpose.msra.mxu0 0
        %5834 = vmatprep.subr.bf16.mxu0 0
        %5835 = vmatpush1.bf16.xpose.msra.mxu0 0
        %5836 = vmatprep.subr.bf16.mxu0 0
        %5837 = vmatpush1.bf16.xpose.msra.mxu0 0
        %5838 = vmatprep.subr.bf16.mxu0 0
        %5839 = vmatpush1.bf16.xpose.msra.mxu0 0
        %5840 = vmatprep.subr.bf16.mxu0 0
        %5841 = vmatpush1.bf16.xpose.msra.mxu0 %v5825
        %5842 = vmatprep.subr.bf16.mxu0 0
        %5843 = vmatpush1.bf16.xpose.msra.mxu0 %v5824
        %5844 = vmatprep.subr.bf16.mxu0 0
        %5845 = vmatpush2.bf16.xpose.msra.mxu0 0
        %5846 = vmatprep.subr.bf16.mxu0 0
        %5847 = vmatpush2.bf16.xpose.msra.mxu0 0
        %5848 = vmatprep.subr.bf16.mxu0 0
        %5849 = vmatpush2.bf16.xpose.msra.mxu0 0
        %5850 = vmatprep.subr.bf16.mxu0 0
        %5851 = vmatpush2.bf16.xpose.msra.mxu0 0
        %5852 = vmatprep.subr.bf16.mxu0 0
        %5853 = vmatpush2.bf16.xpose.msra.mxu0 0
        %5854 = vmatprep.subr.bf16.mxu0 0
        %5855 = vmatpush2.bf16.xpose.msra.mxu0 0
        %5856 = vmatprep.subr.bf16.mxu0 0
        %5857 = vmatpush2.bf16.xpose.msra.mxu0 0
        %5858 = vmatprep.subr.bf16.mxu0 0
        %5859 = vmatpush2.bf16.xpose.msra.mxu0 0
        %5860 = vmatprep.mubr.bf16.mxu0 0
        %5861 = vmatmul.mubr.bf16.gmra.mxu0 %v5806
        %v5862 = vpop.f32.mrf.mxu0
        %v5863 = vadd.f32 0.0, %v5862
        %v5864 = vpop.f32.mrf.mxu0
        %v5865 = vpop.f32.mrf.mxu0
        %v5866 = vadd.f32 0.0, %v5865
        %v5867 = vpop.f32.mrf.mxu0
        %5868 = vdwg.mxu0
        %v5873 = vunpack.c.l.b16 %v5812
        %v5874 = vunpack.c.l.b16 %v5813
        %v5875 = vunpack.c.l.b16 %v5814
        %v5876 = vunpack.c.l.b16 %v5815
        %v5877 = vpack.c.b16 %v5874, %v5873
        %v5878 = vpack.c.b16 %v5876, %v5875
        %5881 = vmatprep.subr.bf16.mxu0 0
        %5882 = vmatpush1.bf16.xpose.msra.mxu0 0
        %5883 = vmatprep.subr.bf16.mxu0 0
        %5884 = vmatpush1.bf16.xpose.msra.mxu0 0
        %5885 = vmatprep.subr.bf16.mxu0 0
        %5886 = vmatpush1.bf16.xpose.msra.mxu0 0
        %5887 = vmatprep.subr.bf16.mxu0 0
        %5888 = vmatpush1.bf16.xpose.msra.mxu0 0
        %5889 = vmatprep.subr.bf16.mxu0 0
        %5890 = vmatpush1.bf16.xpose.msra.mxu0 0
        %5891 = vmatprep.subr.bf16.mxu0 0
        %5892 = vmatpush1.bf16.xpose.msra.mxu0 0
        %5893 = vmatprep.subr.bf16.mxu0 0
        %5894 = vmatpush1.bf16.xpose.msra.mxu0 %v5878
        %5895 = vmatprep.subr.bf16.mxu0 0
        %5896 = vmatpush1.bf16.xpose.msra.mxu0 %v5877
        %5897 = vmatprep.subr.bf16.mxu0 0
        %5898 = vmatpush2.bf16.xpose.msra.mxu0 0
        %5899 = vmatprep.subr.bf16.mxu0 0
        %5900 = vmatpush2.bf16.xpose.msra.mxu0 0
        %5901 = vmatprep.subr.bf16.mxu0 0
        %5902 = vmatpush2.bf16.xpose.msra.mxu0 0
        %5903 = vmatprep.subr.bf16.mxu0 0
        %5904 = vmatpush2.bf16.xpose.msra.mxu0 0
        %5905 = vmatprep.subr.bf16.mxu0 0
        %5906 = vmatpush2.bf16.xpose.msra.mxu0 0
        %5907 = vmatprep.subr.bf16.mxu0 0
        %5908 = vmatpush2.bf16.xpose.msra.mxu0 0
        %5909 = vmatprep.subr.bf16.mxu0 0
        %5910 = vmatpush2.bf16.xpose.msra.mxu0 0
        %5911 = vmatprep.subr.bf16.mxu0 0
        %5912 = vmatpush2.bf16.xpose.msra.mxu0 0
        %5913 = vmatprep.mubr.bf16.mxu0 0
        %5914 = vmatmul.mubr.bf16.gmra.mxu0 %v5807
        %v5915 = vpop.f32.mrf.mxu0
        %v5916 = vadd.f32 0.0, %v5915
        %v5917 = vpop.f32.mrf.mxu0
        %v5918 = vpop.f32.mrf.mxu0
        %v5919 = vadd.f32 0.0, %v5918
        %v5920 = vpop.f32.mrf.mxu0
        %5921 = vdwg.mxu0
        %v5922 = vsel %vm4785, %v5863, -inf
        %5923 = vmax.xlane.f32.xlu0 %v5922
        %v5924 = vpop.xlane.xlu0 %5923
        %v5925 = vsel %vm4785, %v5866, -inf
        %5926 = vmax.xlane.f32.xlu0 %v5925
        %v5927 = vpop.xlane.xlu0 %5926
        %v5928 = vsel %vm4785, %v5916, -inf
        %5929 = vmax.xlane.f32.xlu0 %v5928
        %v5930 = vpop.xlane.xlu0 %5929
        %v5931 = vsel %vm4785, %v5919, -inf
        %5932 = vmax.xlane.f32.xlu0 %v5931
        %v5933 = vpop.xlane.xlu0 %5932
        %v5934 = vsub.f32 %v5863, %v5924
        %v5935 = vsub.f32 %v5866, %v5927
        %v5936 = vsub.f32 %v5916, %v5930
        %v5937 = vsub.f32 %v5919, %v5933
        %v5938 = vmul.f32 %v5934, 1.442695
        %v5939 = vpow.pop %v5938
        %v5940 = vmul.f32 %v5935, 1.442695
        %v5941 = vpow.pop %v5940
        %v5942 = vmul.f32 %v5936, 1.442695
        %v5943 = vpow.pop %v5942
        %v5944 = vmul.f32 %v5937, 1.442695
        %v5945 = vpow.pop %v5944
        %v5946 = vsel %vm4785, %v5939, 0.0
        %5947 = vadd.xlane.f32.xlu0 %v5946
        %v5948 = vpop.xlane.xlu0 %5947
        %v5949 = vsel %vm4785, %v5941, 0.0
        %5950 = vadd.xlane.f32.xlu0 %v5949
        %v5951 = vpop.xlane.xlu0 %5950
        %v5952 = vsel %vm4785, %v5943, 0.0
        %5953 = vadd.xlane.f32.xlu0 %v5952
        %v5954 = vpop.xlane.xlu0 %5953
        %v5955 = vsel %vm4785, %v5945, 0.0
        %5956 = vadd.xlane.f32.xlu0 %v5955
        %v5957 = vpop.xlane.xlu0 %5956
        %v5958 = vpack.c.bf16 %v5941, %v5939
        %v5959 = vpack.c.bf16 %v5945, %v5943
        %v5960 = vld [vmem:[#allocation5] sm:$0xf]
        %v5961 = vld [vmem:[#allocation5 + $0x4] sm:$0xf]
        %v5962 = vld [vmem:[#allocation5 + $0x8] sm:$0xf]
        %v5963 = vld [vmem:[#allocation5 + $0xc] sm:$0xf]
        %v5964 = vld [vmem:[#allocation5 + $0x10] sm:$0xf]
        %v5965 = vld [vmem:[#allocation5 + $0x14] sm:$0xf]
        %v5966 = vld [vmem:[#allocation5 + $0x18] sm:$0xf]
        %v5967 = vld [vmem:[#allocation5 + $0x1c] sm:$0xf]
        %v5972 = vunpack.c.l.b16 %v5960
        %v5973 = vunpack.c.l.b16 %v5961
        %v5974 = vunpack.c.l.b16 %v5962
        %v5975 = vunpack.c.l.b16 %v5963
        %v5976 = vpack.c.b16 %v5973, %v5972
        %v5977 = vpack.c.b16 %v5975, %v5974
        %v5981 = vsel %vm4785, %v5958, 0
        %5983 = vmatprep.subr.bf16.mxu0 0
        %5984 = vmatpush1.bf16.msra.mxu0 0
        %5985 = vmatprep.subr.bf16.mxu0 0
        %5986 = vmatpush1.bf16.msra.mxu0 0
        %5987 = vmatprep.subr.bf16.mxu0 0
        %5988 = vmatpush1.bf16.msra.mxu0 0
        %5989 = vmatprep.subr.bf16.mxu0 0
        %5990 = vmatpush1.bf16.msra.mxu0 0
        %5991 = vmatprep.subr.bf16.mxu0 0
        %5992 = vmatpush1.bf16.msra.mxu0 0
        %5993 = vmatprep.subr.bf16.mxu0 0
        %5994 = vmatpush1.bf16.msra.mxu0 0
        %5995 = vmatprep.subr.bf16.mxu0 0
        %5996 = vmatpush1.bf16.msra.mxu0 %v5977
        %5997 = vmatprep.subr.bf16.mxu0 0
        %5998 = vmatpush1.bf16.msra.mxu0 %v5976
        %5999 = vmatprep.subr.bf16.mxu0 0
        %6000 = vmatpush2.bf16.msra.mxu0 0
        %6001 = vmatprep.subr.bf16.mxu0 0
        %6002 = vmatpush2.bf16.msra.mxu0 0
        %6003 = vmatprep.subr.bf16.mxu0 0
        %6004 = vmatpush2.bf16.msra.mxu0 0
        %6005 = vmatprep.subr.bf16.mxu0 0
        %6006 = vmatpush2.bf16.msra.mxu0 0
        %6007 = vmatprep.subr.bf16.mxu0 0
        %6008 = vmatpush2.bf16.msra.mxu0 0
        %6009 = vmatprep.subr.bf16.mxu0 0
        %6010 = vmatpush2.bf16.msra.mxu0 0
        %6011 = vmatprep.subr.bf16.mxu0 0
        %6012 = vmatpush2.bf16.msra.mxu0 0
        %6013 = vmatprep.subr.bf16.mxu0 0
        %6014 = vmatpush2.bf16.msra.mxu0 0
        %6015 = vmatprep.mubr.bf16.mxu0 0
        %6016 = vmatmul.mubr.bf16.gmra.mxu0 %v5981
        %v6017 = vpop.f32.mrf.mxu0
        %v6018 = vadd.f32 0.0, %v6017
        %v6019 = vpop.f32.mrf.mxu0
        %v6020 = vpop.f32.mrf.mxu0
        %v6021 = vadd.f32 0.0, %v6020
        %v6022 = vpop.f32.mrf.mxu0
        %6023 = vdwg.mxu0
        %v6028 = vunpack.c.l.b16 %v5964
        %v6029 = vunpack.c.l.b16 %v5965
        %v6030 = vunpack.c.l.b16 %v5966
        %v6031 = vunpack.c.l.b16 %v5967
        %v6032 = vpack.c.b16 %v6029, %v6028
        %v6033 = vpack.c.b16 %v6031, %v6030
        %v6037 = vsel %vm4785, %v5959, 0
        %6039 = vmatprep.subr.bf16.mxu0 0
        %6040 = vmatpush1.bf16.msra.mxu0 0
        %6041 = vmatprep.subr.bf16.mxu0 0
        %6042 = vmatpush1.bf16.msra.mxu0 0
        %6043 = vmatprep.subr.bf16.mxu0 0
        %6044 = vmatpush1.bf16.msra.mxu0 0
        %6045 = vmatprep.subr.bf16.mxu0 0
        %6046 = vmatpush1.bf16.msra.mxu0 0
        %6047 = vmatprep.subr.bf16.mxu0 0
        %6048 = vmatpush1.bf16.msra.mxu0 0
        %6049 = vmatprep.subr.bf16.mxu0 0
        %6050 = vmatpush1.bf16.msra.mxu0 0
        %6051 = vmatprep.subr.bf16.mxu0 0
        %6052 = vmatpush1.bf16.msra.mxu0 %v6033
        %6053 = vmatprep.subr.bf16.mxu0 0
        %6054 = vmatpush1.bf16.msra.mxu0 %v6032
        %6055 = vmatprep.subr.bf16.mxu0 0
        %6056 = vmatpush2.bf16.msra.mxu0 0
        %6057 = vmatprep.subr.bf16.mxu0 0
        %6058 = vmatpush2.bf16.msra.mxu0 0
        %6059 = vmatprep.subr.bf16.mxu0 0
        %6060 = vmatpush2.bf16.msra.mxu0 0
        %6061 = vmatprep.subr.bf16.mxu0 0
        %6062 = vmatpush2.bf16.msra.mxu0 0
        %6063 = vmatprep.subr.bf16.mxu0 0
        %6064 = vmatpush2.bf16.msra.mxu0 0
        %6065 = vmatprep.subr.bf16.mxu0 0
        %6066 = vmatpush2.bf16.msra.mxu0 0
        %6067 = vmatprep.subr.bf16.mxu0 0
        %6068 = vmatpush2.bf16.msra.mxu0 0
        %6069 = vmatprep.subr.bf16.mxu0 0
        %6070 = vmatpush2.bf16.msra.mxu0 0
        %6071 = vmatprep.mubr.bf16.mxu0 0
        %6072 = vmatmul.mubr.bf16.gmra.mxu0 %v6037
        %v6073 = vpop.f32.mrf.mxu0
        %v6074 = vadd.f32 0.0, %v6073
        %v6075 = vpop.f32.mrf.mxu0
        %v6076 = vpop.f32.mrf.mxu0
        %v6077 = vadd.f32 0.0, %v6076
        %v6078 = vpop.f32.mrf.mxu0
        %6079 = vdwg.mxu0
        %v6080 = vrcp.pop %v5948
        %v6081 = vrcp.pop %v5951
        %v6082 = vrcp.pop %v5954
        %v6083 = vrcp.pop %v5957
        %v6084 = vmul.f32 %v6018, %v6080
        %v6085 = vmul.f32 %v6021, %v6081
        %v6086 = vmul.f32 %v6074, %v6082
        %v6087 = vmul.f32 %v6077, %v6083
        %v6088 = vpack.c.bf16 %v6085, %v6084
        %v6089 = vpack.c.bf16 %v6087, %v6086
        %v6106 = vunpack.c.l.b16 %v5321
        %v6107 = vunpack.c.h.b16 %v5321
        %v6108 = vunpack.c.l.b16 %v5322
        %v6109 = vunpack.c.h.b16 %v5322
        %v6110 = vunpack.c.l.b16 %v5323
        %v6111 = vunpack.c.h.b16 %v5323
        %v6112 = vunpack.c.l.b16 %v5324
        %v6113 = vunpack.c.h.b16 %v5324
        %v6114 = vunpack.c.l.b16 %v5325
        %v6115 = vunpack.c.h.b16 %v5325
        %v6116 = vunpack.c.l.b16 %v5326
        %v6117 = vunpack.c.h.b16 %v5326
        %v6118 = vunpack.c.l.b16 %v5327
        %v6119 = vunpack.c.h.b16 %v5327
        %v6120 = vunpack.c.l.b16 %v5328
        %v6121 = vunpack.c.h.b16 %v5328
        %v6122 = vunpack.c.l.b16 %v5329
        %v6123 = vunpack.c.h.b16 %v5329
        %v6124 = vunpack.c.l.b16 %v5330
        %v6125 = vunpack.c.h.b16 %v5330
        %v6126 = vunpack.c.l.b16 %v5331
        %v6127 = vunpack.c.h.b16 %v5331
        %v6128 = vunpack.c.l.b16 %v5332
        %v6129 = vunpack.c.h.b16 %v5332
        %v6130 = vunpack.c.l.b16 %v5333
        %v6131 = vunpack.c.h.b16 %v5333
        %v6132 = vunpack.c.l.b16 %v5334
        %v6133 = vunpack.c.h.b16 %v5334
        %v6134 = vunpack.c.l.b16 %v5335
        %v6135 = vunpack.c.h.b16 %v5335
        %v6136 = vunpack.c.l.b16 %v5336
        %v6137 = vunpack.c.h.b16 %v5336
        %v6138 = vpack.c.b16 %v6108, %v6106
        %v6139 = vpack.c.b16 %v6109, %v6107
        %v6140 = vpack.c.b16 %v6112, %v6110
        %v6141 = vpack.c.b16 %v6113, %v6111
        %v6142 = vpack.c.b16 %v6116, %v6114
        %v6143 = vpack.c.b16 %v6117, %v6115
        %v6144 = vpack.c.b16 %v6120, %v6118
        %v6145 = vpack.c.b16 %v6121, %v6119
        %v6146 = vpack.c.b16 %v6124, %v6122
        %v6147 = vpack.c.b16 %v6125, %v6123
        %v6148 = vpack.c.b16 %v6128, %v6126
        %v6149 = vpack.c.b16 %v6129, %v6127
        %v6150 = vpack.c.b16 %v6132, %v6130
        %v6151 = vpack.c.b16 %v6133, %v6131
        %v6152 = vpack.c.b16 %v6136, %v6134
        %v6153 = vpack.c.b16 %v6137, %v6135
        %6170 = vmatprep.subr.bf16.mxu0 %v6153
        %6171 = vmatpush1.bf16.msra.mxu0 %v6152
        %6172 = vmatprep.subr.bf16.mxu0 %v6151
        %6173 = vmatpush1.bf16.msra.mxu0 %v6150
        %6174 = vmatprep.subr.bf16.mxu0 %v6149
        %6175 = vmatpush1.bf16.msra.mxu0 %v6148
        %6176 = vmatprep.subr.bf16.mxu0 %v6147
        %6177 = vmatpush1.bf16.msra.mxu0 %v6146
        %6178 = vmatprep.subr.bf16.mxu0 %v6145
        %6179 = vmatpush1.bf16.msra.mxu0 %v6144
        %6180 = vmatprep.subr.bf16.mxu0 %v6143
        %6181 = vmatpush1.bf16.msra.mxu0 %v6142
        %6182 = vmatprep.subr.bf16.mxu0 %v6141
        %6183 = vmatpush1.bf16.msra.mxu0 %v6140
        %6184 = vmatprep.subr.bf16.mxu0 %v6139
        %6185 = vmatpush1.bf16.msra.mxu0 %v6138
        %6186 = vmatprep.subr.bf16.mxu0 0
        %6187 = vmatpush2.bf16.msra.mxu0 0
        %6188 = vmatprep.subr.bf16.mxu0 0
        %6189 = vmatpush2.bf16.msra.mxu0 0
        %6190 = vmatprep.subr.bf16.mxu0 0
        %6191 = vmatpush2.bf16.msra.mxu0 0
        %6192 = vmatprep.subr.bf16.mxu0 0
        %6193 = vmatpush2.bf16.msra.mxu0 0
        %6194 = vmatprep.subr.bf16.mxu0 0
        %6195 = vmatpush2.bf16.msra.mxu0 0
        %6196 = vmatprep.subr.bf16.mxu0 0
        %6197 = vmatpush2.bf16.msra.mxu0 0
        %6198 = vmatprep.subr.bf16.mxu0 0
        %6199 = vmatpush2.bf16.msra.mxu0 0
        %6200 = vmatprep.subr.bf16.mxu0 0
        %6201 = vmatpush2.bf16.msra.mxu0 0
        %6202 = vmatprep.mubr.bf16.mxu0 0
        %6203 = vmatmul.mubr.bf16.gmra.mxu0 %v6088
        %v6204 = vpop.f32.mrf.mxu0
        %v6205 = vadd.f32 0.0, %v6204
        %v6206 = vpop.f32.mrf.mxu0
        %v6207 = vadd.f32 0.0, %v6206
        %v6208 = vpop.f32.mrf.mxu0
        %v6209 = vadd.f32 0.0, %v6208
        %v6210 = vpop.f32.mrf.mxu0
        %v6211 = vadd.f32 0.0, %v6210
        %6212 = vdwg.mxu0
        %v6229 = vunpack.c.l.b16 %v5337
        %v6230 = vunpack.c.h.b16 %v5337
        %v6231 = vunpack.c.l.b16 %v5338
        %v6232 = vunpack.c.h.b16 %v5338
        %v6233 = vunpack.c.l.b16 %v5339
        %v6234 = vunpack.c.h.b16 %v5339
        %v6235 = vunpack.c.l.b16 %v5340
        %v6236 = vunpack.c.h.b16 %v5340
        %v6237 = vunpack.c.l.b16 %v5341
        %v6238 = vunpack.c.h.b16 %v5341
        %v6239 = vunpack.c.l.b16 %v5342
        %v6240 = vunpack.c.h.b16 %v5342
        %v6241 = vunpack.c.l.b16 %v5343
        %v6242 = vunpack.c.h.b16 %v5343
        %v6243 = vunpack.c.l.b16 %v5344
        %v6244 = vunpack.c.h.b16 %v5344
        %v6245 = vunpack.c.l.b16 %v5345
        %v6246 = vunpack.c.h.b16 %v5345
        %v6247 = vunpack.c.l.b16 %v5346
        %v6248 = vunpack.c.h.b16 %v5346
        %v6249 = vunpack.c.l.b16 %v5347
        %v6250 = vunpack.c.h.b16 %v5347
        %v6251 = vunpack.c.l.b16 %v5348
        %v6252 = vunpack.c.h.b16 %v5348
        %v6253 = vunpack.c.l.b16 %v5349
        %v6254 = vunpack.c.h.b16 %v5349
        %v6255 = vunpack.c.l.b16 %v5350
        %v6256 = vunpack.c.h.b16 %v5350
        %v6257 = vunpack.c.l.b16 %v5351
        %v6258 = vunpack.c.h.b16 %v5351
        %v6259 = vunpack.c.l.b16 %v5352
        %v6260 = vunpack.c.h.b16 %v5352
        %v6261 = vpack.c.b16 %v6231, %v6229
        %v6262 = vpack.c.b16 %v6232, %v6230
        %v6263 = vpack.c.b16 %v6235, %v6233
        %v6264 = vpack.c.b16 %v6236, %v6234
        %v6265 = vpack.c.b16 %v6239, %v6237
        %v6266 = vpack.c.b16 %v6240, %v6238
        %v6267 = vpack.c.b16 %v6243, %v6241
        %v6268 = vpack.c.b16 %v6244, %v6242
        %v6269 = vpack.c.b16 %v6247, %v6245
        %v6270 = vpack.c.b16 %v6248, %v6246
        %v6271 = vpack.c.b16 %v6251, %v6249
        %v6272 = vpack.c.b16 %v6252, %v6250
        %v6273 = vpack.c.b16 %v6255, %v6253
        %v6274 = vpack.c.b16 %v6256, %v6254
        %v6275 = vpack.c.b16 %v6259, %v6257
        %v6276 = vpack.c.b16 %v6260, %v6258
        %6293 = vmatprep.subr.bf16.mxu0 %v6276
        %6294 = vmatpush1.bf16.msra.mxu0 %v6275
        %6295 = vmatprep.subr.bf16.mxu0 %v6274
        %6296 = vmatpush1.bf16.msra.mxu0 %v6273
        %6297 = vmatprep.subr.bf16.mxu0 %v6272
        %6298 = vmatpush1.bf16.msra.mxu0 %v6271
        %6299 = vmatprep.subr.bf16.mxu0 %v6270
        %6300 = vmatpush1.bf16.msra.mxu0 %v6269
        %6301 = vmatprep.subr.bf16.mxu0 %v6268
        %6302 = vmatpush1.bf16.msra.mxu0 %v6267
        %6303 = vmatprep.subr.bf16.mxu0 %v6266
        %6304 = vmatpush1.bf16.msra.mxu0 %v6265
        %6305 = vmatprep.subr.bf16.mxu0 %v6264
        %6306 = vmatpush1.bf16.msra.mxu0 %v6263
        %6307 = vmatprep.subr.bf16.mxu0 %v6262
        %6308 = vmatpush1.bf16.msra.mxu0 %v6261
        %6309 = vmatprep.subr.bf16.mxu0 0
        %6310 = vmatpush2.bf16.msra.mxu0 0
        %6311 = vmatprep.subr.bf16.mxu0 0
        %6312 = vmatpush2.bf16.msra.mxu0 0
        %6313 = vmatprep.subr.bf16.mxu0 0
        %6314 = vmatpush2.bf16.msra.mxu0 0
        %6315 = vmatprep.subr.bf16.mxu0 0
        %6316 = vmatpush2.bf16.msra.mxu0 0
        %6317 = vmatprep.subr.bf16.mxu0 0
        %6318 = vmatpush2.bf16.msra.mxu0 0
        %6319 = vmatprep.subr.bf16.mxu0 0
        %6320 = vmatpush2.bf16.msra.mxu0 0
        %6321 = vmatprep.subr.bf16.mxu0 0
        %6322 = vmatpush2.bf16.msra.mxu0 0
        %6323 = vmatprep.subr.bf16.mxu0 0
        %6324 = vmatpush2.bf16.msra.mxu0 0
        %6325 = vmatprep.mubr.bf16.mxu0 0
        %6326 = vmatmul.mubr.bf16.gmra.mxu0 %v6089
        %v6327 = vpop.f32.mrf.mxu0
        %v6328 = vadd.f32 0.0, %v6327
        %v6329 = vpop.f32.mrf.mxu0
        %v6330 = vadd.f32 0.0, %v6329
        %v6331 = vpop.f32.mrf.mxu0
        %v6332 = vadd.f32 0.0, %v6331
        %v6333 = vpop.f32.mrf.mxu0
        %v6334 = vadd.f32 0.0, %v6333
        %6335 = vdwg.mxu0
        %v6336 = vadd.f32 %v6205, %v6328
        %v6337 = vadd.f32 %v6207, %v6330
        %v6338 = vadd.f32 %v6209, %v6332
        %v6339 = vadd.f32 %v6211, %v6334
        %v6341 = vlaneseq
        %v6342 = vshrl.u32 %v6341, 7
        %v6343 = vsub.s32 0, %v6342
        %v6344 = vrot.slane %v5353, %v6343
        %v6345 = vlaneseq
        %v6346 = vshrl.u32 %v6345, 7
        %v6347 = vsub.s32 1, %v6346
        %v6348 = vrot.slane %v5353, %v6347
        %v6351 = vadd.f32 %v6336, %v6344
        %v6352 = vadd.f32 %v6337, %v6348
        %v6353 = vadd.f32 %v6338, %v6344
        %v6354 = vadd.f32 %v6339, %v6348
        %v6355 = vadd.f32 %v5284, %v6351
        %v6356 = vadd.f32 %v5285, %v6352
        %v6357 = vadd.f32 %v5286, %v6353
        %v6358 = vadd.f32 %v5287, %v6354
        %v6359 = vld [vmem:[%s17] sm:$0x3]
        %v6360 = vld [vmem:[%s18] sm:$0x3]
        %v6361 = vadd.f32 %v6355, %v6356
        %6362 = vadd.xlane.f32.xlu0 %v6361
        %v6363 = vpop.xlane.xlu0 %6362
        %v6364 = vadd.f32 %v6357, %v6358
        %6365 = vadd.xlane.f32.xlu0 %v6364
        %v6366 = vpop.xlane.xlu0 %6365
        %v6367 = vmul.f32 %v6363, %v5231
        %v6368 = vmul.f32 %v6366, %v5231
        %v6369 = vsub.f32 %v6355, %v6367
        %v6370 = vsub.f32 %v6356, %v6367
        %v6371 = vsub.f32 %v6357, %v6368
        %v6372 = vsub.f32 %v6358, %v6368
        %v6373 = vmul.f32 %v6369, %v6369
        %v6374 = vmul.f32 %v6370, %v6370
        %v6375 = vmul.f32 %v6371, %v6371
        %v6376 = vmul.f32 %v6372, %v6372
        %v6377 = vadd.f32 %v6373, %v6374
        %6378 = vadd.xlane.f32.xlu0 %v6377
        %v6379 = vpop.xlane.xlu0 %6378
        %v6380 = vadd.f32 %v6375, %v6376
        %6381 = vadd.xlane.f32.xlu0 %v6380
        %v6382 = vpop.xlane.xlu0 %6381
        %v6383 = vmul.f32 %v6379, %v5231
        %v6384 = vmul.f32 %v6382, %v5231
        %v6385 = vadd.f32 %v6383, 1e-12
        %v6386 = vadd.f32 %v6384, 1e-12
        %v6387 = vrsqrt.pop %v6385
        %v6388 = vrsqrt.pop %v6386
        %v6389 = vmul.f32 %v6369, %v6387
        %v6390 = vmul.f32 %v6370, %v6387
        %v6391 = vmul.f32 %v6371, %v6388
        %v6392 = vmul.f32 %v6372, %v6388
        %v6394 = vlaneseq
        %v6395 = vshrl.u32 %v6394, 7
        %v6396 = vsub.s32 0, %v6395
        %v6397 = vrot.slane %v6359, %v6396
        %v6398 = vlaneseq
        %v6399 = vshrl.u32 %v6398, 7
        %v6400 = vsub.s32 1, %v6399
        %v6401 = vrot.slane %v6359, %v6400
        %v6404 = vmul.f32 %v6389, %v6397
        %v6405 = vmul.f32 %v6390, %v6401
        %v6406 = vmul.f32 %v6391, %v6397
        %v6407 = vmul.f32 %v6392, %v6401
        %v6409 = vlaneseq
        %v6410 = vshrl.u32 %v6409, 7
        %v6411 = vsub.s32 0, %v6410
        %v6412 = vrot.slane %v6360, %v6411
        %v6413 = vlaneseq
        %v6414 = vshrl.u32 %v6413, 7
        %v6415 = vsub.s32 1, %v6414
        %v6416 = vrot.slane %v6360, %v6415
        %v6419 = vadd.f32 %v6404, %v6412
        %v6420 = vadd.f32 %v6405, %v6416
        %v6421 = vadd.f32 %v6406, %v6412
        %v6422 = vadd.f32 %v6407, %v6416
        %v6423 = vpack.c.bf16 %v6421, %v6419
        %v6424 = vpack.c.bf16 %v6422, %v6420
        %v6425 = vld [vmem:[#allocation26] sm:$0xff]
        %v6426 = vld [vmem:[#allocation26 + $0x8] sm:$0xff]
        %v6427 = vld [vmem:[#allocation26 + $0x10] sm:$0xff]
        %v6428 = vld [vmem:[#allocation26 + $0x18] sm:$0xff]
        %v6429 = vld [vmem:[#allocation26 + $0x20] sm:$0xff]
        %v6430 = vld [vmem:[#allocation26 + $0x28] sm:$0xff]
        %v6431 = vld [vmem:[#allocation26 + $0x30] sm:$0xff]
        %v6432 = vld [vmem:[#allocation26 + $0x38] sm:$0xff]
        %v6433 = vld [vmem:[#allocation26 + $0x40] sm:$0xff]
        %v6434 = vld [vmem:[#allocation26 + $0x48] sm:$0xff]
        %v6435 = vld [vmem:[#allocation26 + $0x50] sm:$0xff]
        %v6436 = vld [vmem:[#allocation26 + $0x58] sm:$0xff]
        %v6437 = vld [vmem:[#allocation26 + $0x60] sm:$0xff]
        %v6438 = vld [vmem:[#allocation26 + $0x68] sm:$0xff]
        %v6439 = vld [vmem:[#allocation26 + $0x70] sm:$0xff]
        %v6440 = vld [vmem:[#allocation26 + $0x78] sm:$0xff]
        %v6441 = vld [vmem:[#allocation26 + $0x80] sm:$0xff]
        %v6442 = vld [vmem:[#allocation26 + $0x88] sm:$0xff]
        %v6443 = vld [vmem:[#allocation26 + $0x90] sm:$0xff]
        %v6444 = vld [vmem:[#allocation26 + $0x98] sm:$0xff]
        %v6445 = vld [vmem:[#allocation26 + $0xa0] sm:$0xff]
        %v6446 = vld [vmem:[#allocation26 + $0xa8] sm:$0xff]
        %v6447 = vld [vmem:[#allocation26 + $0xb0] sm:$0xff]
        %v6448 = vld [vmem:[#allocation26 + $0xb8] sm:$0xff]
        %v6449 = vld [vmem:[#allocation26 + $0xc0] sm:$0xff]
        %v6450 = vld [vmem:[#allocation26 + $0xc8] sm:$0xff]
        %v6451 = vld [vmem:[#allocation26 + $0xd0] sm:$0xff]
        %v6452 = vld [vmem:[#allocation26 + $0xd8] sm:$0xff]
        %v6453 = vld [vmem:[#allocation26 + $0xe0] sm:$0xff]
        %v6454 = vld [vmem:[#allocation26 + $0xe8] sm:$0xff]
        %v6455 = vld [vmem:[#allocation26 + $0xf0] sm:$0xff]
        %v6456 = vld [vmem:[#allocation26 + $0xf8] sm:$0xff]
        %v6457 = vld [vmem:[#allocation26 + $0x100] sm:$0xff]
        %v6458 = vld [vmem:[#allocation26 + $0x108] sm:$0xff]
        %v6459 = vld [vmem:[#allocation26 + $0x110] sm:$0xff]
        %v6460 = vld [vmem:[#allocation26 + $0x118] sm:$0xff]
        %v6461 = vld [vmem:[#allocation26 + $0x120] sm:$0xff]
        %v6462 = vld [vmem:[#allocation26 + $0x128] sm:$0xff]
        %v6463 = vld [vmem:[#allocation26 + $0x130] sm:$0xff]
        %v6464 = vld [vmem:[#allocation26 + $0x138] sm:$0xff]
        %v6465 = vld [vmem:[#allocation26 + $0x140] sm:$0xff]
        %v6466 = vld [vmem:[#allocation26 + $0x148] sm:$0xff]
        %v6467 = vld [vmem:[#allocation26 + $0x150] sm:$0xff]
        %v6468 = vld [vmem:[#allocation26 + $0x158] sm:$0xff]
        %v6469 = vld [vmem:[#allocation26 + $0x160] sm:$0xff]
        %v6470 = vld [vmem:[#allocation26 + $0x168] sm:$0xff]
        %v6471 = vld [vmem:[#allocation26 + $0x170] sm:$0xff]
        %v6472 = vld [vmem:[#allocation26 + $0x178] sm:$0xff]
        %v6473 = vld [vmem:[#allocation26 + $0x180] sm:$0xff]
        %v6474 = vld [vmem:[#allocation26 + $0x188] sm:$0xff]
        %v6475 = vld [vmem:[#allocation26 + $0x190] sm:$0xff]
        %v6476 = vld [vmem:[#allocation26 + $0x198] sm:$0xff]
        %v6477 = vld [vmem:[#allocation26 + $0x1a0] sm:$0xff]
        %v6478 = vld [vmem:[#allocation26 + $0x1a8] sm:$0xff]
        %v6479 = vld [vmem:[#allocation26 + $0x1b0] sm:$0xff]
        %v6480 = vld [vmem:[#allocation26 + $0x1b8] sm:$0xff]
        %v6481 = vld [vmem:[#allocation26 + $0x1c0] sm:$0xff]
        %v6482 = vld [vmem:[#allocation26 + $0x1c8] sm:$0xff]
        %v6483 = vld [vmem:[#allocation26 + $0x1d0] sm:$0xff]
        %v6484 = vld [vmem:[#allocation26 + $0x1d8] sm:$0xff]
        %v6485 = vld [vmem:[#allocation26 + $0x1e0] sm:$0xff]
        %v6486 = vld [vmem:[#allocation26 + $0x1e8] sm:$0xff]
        %v6487 = vld [vmem:[#allocation26 + $0x1f0] sm:$0xff]
        %v6488 = vld [vmem:[#allocation26 + $0x1f8] sm:$0xff]
        %v6489 = vld [vmem:[#allocation26 + $0x200] sm:$0xff]
        %v6490 = vld [vmem:[#allocation26 + $0x208] sm:$0xff]
        %v6491 = vld [vmem:[#allocation26 + $0x210] sm:$0xff]
        %v6492 = vld [vmem:[#allocation26 + $0x218] sm:$0xff]
        %v6493 = vld [vmem:[#allocation26 + $0x220] sm:$0xff]
        %v6494 = vld [vmem:[#allocation26 + $0x228] sm:$0xff]
        %v6495 = vld [vmem:[#allocation26 + $0x230] sm:$0xff]
        %v6496 = vld [vmem:[#allocation26 + $0x238] sm:$0xff]
        %v6497 = vld [vmem:[#allocation26 + $0x240] sm:$0xff]
        %v6498 = vld [vmem:[#allocation26 + $0x248] sm:$0xff]
        %v6499 = vld [vmem:[#allocation26 + $0x250] sm:$0xff]
        %v6500 = vld [vmem:[#allocation26 + $0x258] sm:$0xff]
        %v6501 = vld [vmem:[#allocation26 + $0x260] sm:$0xff]
        %v6502 = vld [vmem:[#allocation26 + $0x268] sm:$0xff]
        %v6503 = vld [vmem:[#allocation26 + $0x270] sm:$0xff]
        %v6504 = vld [vmem:[#allocation26 + $0x278] sm:$0xff]
        %v6505 = vld [vmem:[#allocation26 + $0x280] sm:$0xff]
        %v6506 = vld [vmem:[#allocation26 + $0x288] sm:$0xff]
        %v6507 = vld [vmem:[#allocation26 + $0x290] sm:$0xff]
        %v6508 = vld [vmem:[#allocation26 + $0x298] sm:$0xff]
        %v6509 = vld [vmem:[#allocation26 + $0x2a0] sm:$0xff]
        %v6510 = vld [vmem:[#allocation26 + $0x2a8] sm:$0xff]
        %v6511 = vld [vmem:[#allocation26 + $0x2b0] sm:$0xff]
        %v6512 = vld [vmem:[#allocation26 + $0x2b8] sm:$0xff]
        %v6513 = vld [vmem:[#allocation26 + $0x2c0] sm:$0xff]
        %v6514 = vld [vmem:[#allocation26 + $0x2c8] sm:$0xff]
        %v6515 = vld [vmem:[#allocation26 + $0x2d0] sm:$0xff]
        %v6516 = vld [vmem:[#allocation26 + $0x2d8] sm:$0xff]
        %v6517 = vld [vmem:[#allocation26 + $0x2e0] sm:$0xff]
        %v6518 = vld [vmem:[#allocation26 + $0x2e8] sm:$0xff]
        %v6519 = vld [vmem:[#allocation26 + $0x2f0] sm:$0xff]
        %v6520 = vld [vmem:[#allocation26 + $0x2f8] sm:$0xff]
        %v6521 = vld [vmem:[#allocation26 + $0x300] sm:$0xff]
        %v6522 = vld [vmem:[#allocation26 + $0x308] sm:$0xff]
        %v6523 = vld [vmem:[#allocation26 + $0x310] sm:$0xff]
        %v6524 = vld [vmem:[#allocation26 + $0x318] sm:$0xff]
        %v6525 = vld [vmem:[#allocation26 + $0x320] sm:$0xff]
        %v6526 = vld [vmem:[#allocation26 + $0x328] sm:$0xff]
        %v6527 = vld [vmem:[#allocation26 + $0x330] sm:$0xff]
        %v6528 = vld [vmem:[#allocation26 + $0x338] sm:$0xff]
        %v6529 = vld [vmem:[#allocation26 + $0x340] sm:$0xff]
        %v6530 = vld [vmem:[#allocation26 + $0x348] sm:$0xff]
        %v6531 = vld [vmem:[#allocation26 + $0x350] sm:$0xff]
        %v6532 = vld [vmem:[#allocation26 + $0x358] sm:$0xff]
        %v6533 = vld [vmem:[#allocation26 + $0x360] sm:$0xff]
        %v6534 = vld [vmem:[#allocation26 + $0x368] sm:$0xff]
        %v6535 = vld [vmem:[#allocation26 + $0x370] sm:$0xff]
        %v6536 = vld [vmem:[#allocation26 + $0x378] sm:$0xff]
        %v6537 = vld [vmem:[#allocation26 + $0x380] sm:$0xff]
        %v6538 = vld [vmem:[#allocation26 + $0x388] sm:$0xff]
        %v6539 = vld [vmem:[#allocation26 + $0x390] sm:$0xff]
        %v6540 = vld [vmem:[#allocation26 + $0x398] sm:$0xff]
        %v6541 = vld [vmem:[#allocation26 + $0x3a0] sm:$0xff]
        %v6542 = vld [vmem:[#allocation26 + $0x3a8] sm:$0xff]
        %v6543 = vld [vmem:[#allocation26 + $0x3b0] sm:$0xff]
        %v6544 = vld [vmem:[#allocation26 + $0x3b8] sm:$0xff]
        %v6545 = vld [vmem:[#allocation26 + $0x3c0] sm:$0xff]
        %v6546 = vld [vmem:[#allocation26 + $0x3c8] sm:$0xff]
        %v6547 = vld [vmem:[#allocation26 + $0x3d0] sm:$0xff]
        %v6548 = vld [vmem:[#allocation26 + $0x3d8] sm:$0xff]
        %v6549 = vld [vmem:[#allocation26 + $0x3e0] sm:$0xff]
        %v6550 = vld [vmem:[#allocation26 + $0x3e8] sm:$0xff]
        %v6551 = vld [vmem:[#allocation26 + $0x3f0] sm:$0xff]
        %v6552 = vld [vmem:[#allocation26 + $0x3f8] sm:$0xff]
        %v6553 = vld [vmem:[%s20] sm:$0xff]
        %v6555 = vlaneseq
        %v6556 = vshrl.u32 %v6555, 7
        %v6557 = vsub.s32 0, %v6556
        %v6558 = vrot.slane %v6553, %v6557
        %v6559 = vlaneseq
        %v6560 = vshrl.u32 %v6559, 7
        %v6561 = vsub.s32 1, %v6560
        %v6562 = vrot.slane %v6553, %v6561
        %v6563 = vlaneseq
        %v6564 = vshrl.u32 %v6563, 7
        %v6565 = vsub.s32 2, %v6564
        %v6566 = vrot.slane %v6553, %v6565
        %v6567 = vlaneseq
        %v6568 = vshrl.u32 %v6567, 7
        %v6569 = vsub.s32 3, %v6568
        %v6570 = vrot.slane %v6553, %v6569
        %v6571 = vlaneseq
        %v6572 = vshrl.u32 %v6571, 7
        %v6573 = vsub.s32 4, %v6572
        %v6574 = vrot.slane %v6553, %v6573
        %v6575 = vlaneseq
        %v6576 = vshrl.u32 %v6575, 7
        %v6577 = vsub.s32 5, %v6576
        %v6578 = vrot.slane %v6553, %v6577
        %v6579 = vlaneseq
        %v6580 = vshrl.u32 %v6579, 7
        %v6581 = vsub.s32 6, %v6580
        %v6582 = vrot.slane %v6553, %v6581
        %v6583 = vlaneseq
        %v6584 = vshrl.u32 %v6583, 7
        %v6585 = vsub.s32 7, %v6584
        %v6586 = vrot.slane %v6553, %v6585
        %v6723 = vunpack.c.l.b16 %v6425
        %v6724 = vunpack.c.h.b16 %v6425
        %v6725 = vunpack.c.l.b16 %v6426
        %v6726 = vunpack.c.h.b16 %v6426
        %v6727 = vunpack.c.l.b16 %v6427
        %v6728 = vunpack.c.h.b16 %v6427
        %v6729 = vunpack.c.l.b16 %v6428
        %v6730 = vunpack.c.h.b16 %v6428
        %v6731 = vunpack.c.l.b16 %v6429
        %v6732 = vunpack.c.h.b16 %v6429
        %v6733 = vunpack.c.l.b16 %v6430
        %v6734 = vunpack.c.h.b16 %v6430
        %v6735 = vunpack.c.l.b16 %v6431
        %v6736 = vunpack.c.h.b16 %v6431
        %v6737 = vunpack.c.l.b16 %v6432
        %v6738 = vunpack.c.h.b16 %v6432
        %v6739 = vunpack.c.l.b16 %v6433
        %v6740 = vunpack.c.h.b16 %v6433
        %v6741 = vunpack.c.l.b16 %v6434
        %v6742 = vunpack.c.h.b16 %v6434
        %v6743 = vunpack.c.l.b16 %v6435
        %v6744 = vunpack.c.h.b16 %v6435
        %v6745 = vunpack.c.l.b16 %v6436
        %v6746 = vunpack.c.h.b16 %v6436
        %v6747 = vunpack.c.l.b16 %v6437
        %v6748 = vunpack.c.h.b16 %v6437
        %v6749 = vunpack.c.l.b16 %v6438
        %v6750 = vunpack.c.h.b16 %v6438
        %v6751 = vunpack.c.l.b16 %v6439
        %v6752 = vunpack.c.h.b16 %v6439
        %v6753 = vunpack.c.l.b16 %v6440
        %v6754 = vunpack.c.h.b16 %v6440
        %v6755 = vunpack.c.l.b16 %v6441
        %v6756 = vunpack.c.h.b16 %v6441
        %v6757 = vunpack.c.l.b16 %v6442
        %v6758 = vunpack.c.h.b16 %v6442
        %v6759 = vunpack.c.l.b16 %v6443
        %v6760 = vunpack.c.h.b16 %v6443
        %v6761 = vunpack.c.l.b16 %v6444
        %v6762 = vunpack.c.h.b16 %v6444
        %v6763 = vunpack.c.l.b16 %v6445
        %v6764 = vunpack.c.h.b16 %v6445
        %v6765 = vunpack.c.l.b16 %v6446
        %v6766 = vunpack.c.h.b16 %v6446
        %v6767 = vunpack.c.l.b16 %v6447
        %v6768 = vunpack.c.h.b16 %v6447
        %v6769 = vunpack.c.l.b16 %v6448
        %v6770 = vunpack.c.h.b16 %v6448
        %v6771 = vunpack.c.l.b16 %v6449
        %v6772 = vunpack.c.h.b16 %v6449
        %v6773 = vunpack.c.l.b16 %v6450
        %v6774 = vunpack.c.h.b16 %v6450
        %v6775 = vunpack.c.l.b16 %v6451
        %v6776 = vunpack.c.h.b16 %v6451
        %v6777 = vunpack.c.l.b16 %v6452
        %v6778 = vunpack.c.h.b16 %v6452
        %v6779 = vunpack.c.l.b16 %v6453
        %v6780 = vunpack.c.h.b16 %v6453
        %v6781 = vunpack.c.l.b16 %v6454
        %v6782 = vunpack.c.h.b16 %v6454
        %v6783 = vunpack.c.l.b16 %v6455
        %v6784 = vunpack.c.h.b16 %v6455
        %v6785 = vunpack.c.l.b16 %v6456
        %v6786 = vunpack.c.h.b16 %v6456
        %v6787 = vunpack.c.l.b16 %v6457
        %v6788 = vunpack.c.h.b16 %v6457
        %v6789 = vunpack.c.l.b16 %v6458
        %v6790 = vunpack.c.h.b16 %v6458
        %v6791 = vunpack.c.l.b16 %v6459
        %v6792 = vunpack.c.h.b16 %v6459
        %v6793 = vunpack.c.l.b16 %v6460
        %v6794 = vunpack.c.h.b16 %v6460
        %v6795 = vunpack.c.l.b16 %v6461
        %v6796 = vunpack.c.h.b16 %v6461
        %v6797 = vunpack.c.l.b16 %v6462
        %v6798 = vunpack.c.h.b16 %v6462
        %v6799 = vunpack.c.l.b16 %v6463
        %v6800 = vunpack.c.h.b16 %v6463
        %v6801 = vunpack.c.l.b16 %v6464
        %v6802 = vunpack.c.h.b16 %v6464
        %v6803 = vunpack.c.l.b16 %v6465
        %v6804 = vunpack.c.h.b16 %v6465
        %v6805 = vunpack.c.l.b16 %v6466
        %v6806 = vunpack.c.h.b16 %v6466
        %v6807 = vunpack.c.l.b16 %v6467
        %v6808 = vunpack.c.h.b16 %v6467
        %v6809 = vunpack.c.l.b16 %v6468
        %v6810 = vunpack.c.h.b16 %v6468
        %v6811 = vunpack.c.l.b16 %v6469
        %v6812 = vunpack.c.h.b16 %v6469
        %v6813 = vunpack.c.l.b16 %v6470
        %v6814 = vunpack.c.h.b16 %v6470
        %v6815 = vunpack.c.l.b16 %v6471
        %v6816 = vunpack.c.h.b16 %v6471
        %v6817 = vunpack.c.l.b16 %v6472
        %v6818 = vunpack.c.h.b16 %v6472
        %v6819 = vunpack.c.l.b16 %v6473
        %v6820 = vunpack.c.h.b16 %v6473
        %v6821 = vunpack.c.l.b16 %v6474
        %v6822 = vunpack.c.h.b16 %v6474
        %v6823 = vunpack.c.l.b16 %v6475
        %v6824 = vunpack.c.h.b16 %v6475
        %v6825 = vunpack.c.l.b16 %v6476
        %v6826 = vunpack.c.h.b16 %v6476
        %v6827 = vunpack.c.l.b16 %v6477
        %v6828 = vunpack.c.h.b16 %v6477
        %v6829 = vunpack.c.l.b16 %v6478
        %v6830 = vunpack.c.h.b16 %v6478
        %v6831 = vunpack.c.l.b16 %v6479
        %v6832 = vunpack.c.h.b16 %v6479
        %v6833 = vunpack.c.l.b16 %v6480
        %v6834 = vunpack.c.h.b16 %v6480
        %v6835 = vunpack.c.l.b16 %v6481
        %v6836 = vunpack.c.h.b16 %v6481
        %v6837 = vunpack.c.l.b16 %v6482
        %v6838 = vunpack.c.h.b16 %v6482
        %v6839 = vunpack.c.l.b16 %v6483
        %v6840 = vunpack.c.h.b16 %v6483
        %v6841 = vunpack.c.l.b16 %v6484
        %v6842 = vunpack.c.h.b16 %v6484
        %v6843 = vunpack.c.l.b16 %v6485
        %v6844 = vunpack.c.h.b16 %v6485
        %v6845 = vunpack.c.l.b16 %v6486
        %v6846 = vunpack.c.h.b16 %v6486
        %v6847 = vunpack.c.l.b16 %v6487
        %v6848 = vunpack.c.h.b16 %v6487
        %v6849 = vunpack.c.l.b16 %v6488
        %v6850 = vunpack.c.h.b16 %v6488
        %v6851 = vunpack.c.l.b16 %v6489
        %v6852 = vunpack.c.h.b16 %v6489
        %v6853 = vunpack.c.l.b16 %v6490
        %v6854 = vunpack.c.h.b16 %v6490
        %v6855 = vunpack.c.l.b16 %v6491
        %v6856 = vunpack.c.h.b16 %v6491
        %v6857 = vunpack.c.l.b16 %v6492
        %v6858 = vunpack.c.h.b16 %v6492
        %v6859 = vunpack.c.l.b16 %v6493
        %v6860 = vunpack.c.h.b16 %v6493
        %v6861 = vunpack.c.l.b16 %v6494
        %v6862 = vunpack.c.h.b16 %v6494
        %v6863 = vunpack.c.l.b16 %v6495
        %v6864 = vunpack.c.h.b16 %v6495
        %v6865 = vunpack.c.l.b16 %v6496
        %v6866 = vunpack.c.h.b16 %v6496
        %v6867 = vunpack.c.l.b16 %v6497
        %v6868 = vunpack.c.h.b16 %v6497
        %v6869 = vunpack.c.l.b16 %v6498
        %v6870 = vunpack.c.h.b16 %v6498
        %v6871 = vunpack.c.l.b16 %v6499
        %v6872 = vunpack.c.h.b16 %v6499
        %v6873 = vunpack.c.l.b16 %v6500
        %v6874 = vunpack.c.h.b16 %v6500
        %v6875 = vunpack.c.l.b16 %v6501
        %v6876 = vunpack.c.h.b16 %v6501
        %v6877 = vunpack.c.l.b16 %v6502
        %v6878 = vunpack.c.h.b16 %v6502
        %v6879 = vunpack.c.l.b16 %v6503
        %v6880 = vunpack.c.h.b16 %v6503
        %v6881 = vunpack.c.l.b16 %v6504
        %v6882 = vunpack.c.h.b16 %v6504
        %v6883 = vunpack.c.l.b16 %v6505
        %v6884 = vunpack.c.h.b16 %v6505
        %v6885 = vunpack.c.l.b16 %v6506
        %v6886 = vunpack.c.h.b16 %v6506
        %v6887 = vunpack.c.l.b16 %v6507
        %v6888 = vunpack.c.h.b16 %v6507
        %v6889 = vunpack.c.l.b16 %v6508
        %v6890 = vunpack.c.h.b16 %v6508
        %v6891 = vunpack.c.l.b16 %v6509
        %v6892 = vunpack.c.h.b16 %v6509
        %v6893 = vunpack.c.l.b16 %v6510
        %v6894 = vunpack.c.h.b16 %v6510
        %v6895 = vunpack.c.l.b16 %v6511
        %v6896 = vunpack.c.h.b16 %v6511
        %v6897 = vunpack.c.l.b16 %v6512
        %v6898 = vunpack.c.h.b16 %v6512
        %v6899 = vunpack.c.l.b16 %v6513
        %v6900 = vunpack.c.h.b16 %v6513
        %v6901 = vunpack.c.l.b16 %v6514
        %v6902 = vunpack.c.h.b16 %v6514
        %v6903 = vunpack.c.l.b16 %v6515
        %v6904 = vunpack.c.h.b16 %v6515
        %v6905 = vunpack.c.l.b16 %v6516
        %v6906 = vunpack.c.h.b16 %v6516
        %v6907 = vunpack.c.l.b16 %v6517
        %v6908 = vunpack.c.h.b16 %v6517
        %v6909 = vunpack.c.l.b16 %v6518
        %v6910 = vunpack.c.h.b16 %v6518
        %v6911 = vunpack.c.l.b16 %v6519
        %v6912 = vunpack.c.h.b16 %v6519
        %v6913 = vunpack.c.l.b16 %v6520
        %v6914 = vunpack.c.h.b16 %v6520
        %v6915 = vunpack.c.l.b16 %v6521
        %v6916 = vunpack.c.h.b16 %v6521
        %v6917 = vunpack.c.l.b16 %v6522
        %v6918 = vunpack.c.h.b16 %v6522
        %v6919 = vunpack.c.l.b16 %v6523
        %v6920 = vunpack.c.h.b16 %v6523
        %v6921 = vunpack.c.l.b16 %v6524
        %v6922 = vunpack.c.h.b16 %v6524
        %v6923 = vunpack.c.l.b16 %v6525
        %v6924 = vunpack.c.h.b16 %v6525
        %v6925 = vunpack.c.l.b16 %v6526
        %v6926 = vunpack.c.h.b16 %v6526
        %v6927 = vunpack.c.l.b16 %v6527
        %v6928 = vunpack.c.h.b16 %v6527
        %v6929 = vunpack.c.l.b16 %v6528
        %v6930 = vunpack.c.h.b16 %v6528
        %v6931 = vunpack.c.l.b16 %v6529
        %v6932 = vunpack.c.h.b16 %v6529
        %v6933 = vunpack.c.l.b16 %v6530
        %v6934 = vunpack.c.h.b16 %v6530
        %v6935 = vunpack.c.l.b16 %v6531
        %v6936 = vunpack.c.h.b16 %v6531
        %v6937 = vunpack.c.l.b16 %v6532
        %v6938 = vunpack.c.h.b16 %v6532
        %v6939 = vunpack.c.l.b16 %v6533
        %v6940 = vunpack.c.h.b16 %v6533
        %v6941 = vunpack.c.l.b16 %v6534
        %v6942 = vunpack.c.h.b16 %v6534
        %v6943 = vunpack.c.l.b16 %v6535
        %v6944 = vunpack.c.h.b16 %v6535
        %v6945 = vunpack.c.l.b16 %v6536
        %v6946 = vunpack.c.h.b16 %v6536
        %v6947 = vunpack.c.l.b16 %v6537
        %v6948 = vunpack.c.h.b16 %v6537
        %v6949 = vunpack.c.l.b16 %v6538
        %v6950 = vunpack.c.h.b16 %v6538
        %v6951 = vunpack.c.l.b16 %v6539
        %v6952 = vunpack.c.h.b16 %v6539
        %v6953 = vunpack.c.l.b16 %v6540
        %v6954 = vunpack.c.h.b16 %v6540
        %v6955 = vunpack.c.l.b16 %v6541
        %v6956 = vunpack.c.h.b16 %v6541
        %v6957 = vunpack.c.l.b16 %v6542
        %v6958 = vunpack.c.h.b16 %v6542
        %v6959 = vunpack.c.l.b16 %v6543
        %v6960 = vunpack.c.h.b16 %v6543
        %v6961 = vunpack.c.l.b16 %v6544
        %v6962 = vunpack.c.h.b16 %v6544
        %v6963 = vunpack.c.l.b16 %v6545
        %v6964 = vunpack.c.h.b16 %v6545
        %v6965 = vunpack.c.l.b16 %v6546
        %v6966 = vunpack.c.h.b16 %v6546
        %v6967 = vunpack.c.l.b16 %v6547
        %v6968 = vunpack.c.h.b16 %v6547
        %v6969 = vunpack.c.l.b16 %v6548
        %v6970 = vunpack.c.h.b16 %v6548
        %v6971 = vunpack.c.l.b16 %v6549
        %v6972 = vunpack.c.h.b16 %v6549
        %v6973 = vunpack.c.l.b16 %v6550
        %v6974 = vunpack.c.h.b16 %v6550
        %v6975 = vunpack.c.l.b16 %v6551
        %v6976 = vunpack.c.h.b16 %v6551
        %v6977 = vunpack.c.l.b16 %v6552
        %v6978 = vunpack.c.h.b16 %v6552
        %v6979 = vpack.c.b16 %v6731, %v6723
        %v6980 = vpack.c.b16 %v6732, %v6724
        %v6981 = vpack.c.b16 %v6733, %v6725
        %v6982 = vpack.c.b16 %v6734, %v6726
        %v6983 = vpack.c.b16 %v6735, %v6727
        %v6984 = vpack.c.b16 %v6736, %v6728
        %v6985 = vpack.c.b16 %v6737, %v6729
        %v6986 = vpack.c.b16 %v6738, %v6730
        %v6987 = vpack.c.b16 %v6747, %v6739
        %v6988 = vpack.c.b16 %v6748, %v6740
        %v6989 = vpack.c.b16 %v6749, %v6741
        %v6990 = vpack.c.b16 %v6750, %v6742
        %v6991 = vpack.c.b16 %v6751, %v6743
        %v6992 = vpack.c.b16 %v6752, %v6744
        %v6993 = vpack.c.b16 %v6753, %v6745
        %v6994 = vpack.c.b16 %v6754, %v6746
        %v6995 = vpack.c.b16 %v6763, %v6755
        %v6996 = vpack.c.b16 %v6764, %v6756
        %v6997 = vpack.c.b16 %v6765, %v6757
        %v6998 = vpack.c.b16 %v6766, %v6758
        %v6999 = vpack.c.b16 %v6767, %v6759
        %v7000 = vpack.c.b16 %v6768, %v6760
        %v7001 = vpack.c.b16 %v6769, %v6761
        %v7002 = vpack.c.b16 %v6770, %v6762
        %v7003 = vpack.c.b16 %v6779, %v6771
        %v7004 = vpack.c.b16 %v6780, %v6772
        %v7005 = vpack.c.b16 %v6781, %v6773
        %v7006 = vpack.c.b16 %v6782, %v6774
        %v7007 = vpack.c.b16 %v6783, %v6775
        %v7008 = vpack.c.b16 %v6784, %v6776
        %v7009 = vpack.c.b16 %v6785, %v6777
        %v7010 = vpack.c.b16 %v6786, %v6778
        %v7011 = vpack.c.b16 %v6795, %v6787
        %v7012 = vpack.c.b16 %v6796, %v6788
        %v7013 = vpack.c.b16 %v6797, %v6789
        %v7014 = vpack.c.b16 %v6798, %v6790
        %v7015 = vpack.c.b16 %v6799, %v6791
        %v7016 = vpack.c.b16 %v6800, %v6792
        %v7017 = vpack.c.b16 %v6801, %v6793
        %v7018 = vpack.c.b16 %v6802, %v6794
        %v7019 = vpack.c.b16 %v6811, %v6803
        %v7020 = vpack.c.b16 %v6812, %v6804
        %v7021 = vpack.c.b16 %v6813, %v6805
        %v7022 = vpack.c.b16 %v6814, %v6806
        %v7023 = vpack.c.b16 %v6815, %v6807
        %v7024 = vpack.c.b16 %v6816, %v6808
        %v7025 = vpack.c.b16 %v6817, %v6809
        %v7026 = vpack.c.b16 %v6818, %v6810
        %v7027 = vpack.c.b16 %v6827, %v6819
        %v7028 = vpack.c.b16 %v6828, %v6820
        %v7029 = vpack.c.b16 %v6829, %v6821
        %v7030 = vpack.c.b16 %v6830, %v6822
        %v7031 = vpack.c.b16 %v6831, %v6823
        %v7032 = vpack.c.b16 %v6832, %v6824
        %v7033 = vpack.c.b16 %v6833, %v6825
        %v7034 = vpack.c.b16 %v6834, %v6826
        %v7035 = vpack.c.b16 %v6843, %v6835
        %v7036 = vpack.c.b16 %v6844, %v6836
        %v7037 = vpack.c.b16 %v6845, %v6837
        %v7038 = vpack.c.b16 %v6846, %v6838
        %v7039 = vpack.c.b16 %v6847, %v6839
        %v7040 = vpack.c.b16 %v6848, %v6840
        %v7041 = vpack.c.b16 %v6849, %v6841
        %v7042 = vpack.c.b16 %v6850, %v6842
        %v7043 = vpack.c.b16 %v6859, %v6851
        %v7044 = vpack.c.b16 %v6860, %v6852
        %v7045 = vpack.c.b16 %v6861, %v6853
        %v7046 = vpack.c.b16 %v6862, %v6854
        %v7047 = vpack.c.b16 %v6863, %v6855
        %v7048 = vpack.c.b16 %v6864, %v6856
        %v7049 = vpack.c.b16 %v6865, %v6857
        %v7050 = vpack.c.b16 %v6866, %v6858
        %v7051 = vpack.c.b16 %v6875, %v6867
        %v7052 = vpack.c.b16 %v6876, %v6868
        %v7053 = vpack.c.b16 %v6877, %v6869
        %v7054 = vpack.c.b16 %v6878, %v6870
        %v7055 = vpack.c.b16 %v6879, %v6871
        %v7056 = vpack.c.b16 %v6880, %v6872
        %v7057 = vpack.c.b16 %v6881, %v6873
        %v7058 = vpack.c.b16 %v6882, %v6874
        %v7059 = vpack.c.b16 %v6891, %v6883
        %v7060 = vpack.c.b16 %v6892, %v6884
        %v7061 = vpack.c.b16 %v6893, %v6885
        %v7062 = vpack.c.b16 %v6894, %v6886
        %v7063 = vpack.c.b16 %v6895, %v6887
        %v7064 = vpack.c.b16 %v6896, %v6888
        %v7065 = vpack.c.b16 %v6897, %v6889
        %v7066 = vpack.c.b16 %v6898, %v6890
        %v7067 = vpack.c.b16 %v6907, %v6899
        %v7068 = vpack.c.b16 %v6908, %v6900
        %v7069 = vpack.c.b16 %v6909, %v6901
        %v7070 = vpack.c.b16 %v6910, %v6902
        %v7071 = vpack.c.b16 %v6911, %v6903
        %v7072 = vpack.c.b16 %v6912, %v6904
        %v7073 = vpack.c.b16 %v6913, %v6905
        %v7074 = vpack.c.b16 %v6914, %v6906
        %v7075 = vpack.c.b16 %v6923, %v6915
        %v7076 = vpack.c.b16 %v6924, %v6916
        %v7077 = vpack.c.b16 %v6925, %v6917
        %v7078 = vpack.c.b16 %v6926, %v6918
        %v7079 = vpack.c.b16 %v6927, %v6919
        %v7080 = vpack.c.b16 %v6928, %v6920
        %v7081 = vpack.c.b16 %v6929, %v6921
        %v7082 = vpack.c.b16 %v6930, %v6922
        %v7083 = vpack.c.b16 %v6939, %v6931
        %v7084 = vpack.c.b16 %v6940, %v6932
        %v7085 = vpack.c.b16 %v6941, %v6933
        %v7086 = vpack.c.b16 %v6942, %v6934
        %v7087 = vpack.c.b16 %v6943, %v6935
        %v7088 = vpack.c.b16 %v6944, %v6936
        %v7089 = vpack.c.b16 %v6945, %v6937
        %v7090 = vpack.c.b16 %v6946, %v6938
        %v7091 = vpack.c.b16 %v6955, %v6947
        %v7092 = vpack.c.b16 %v6956, %v6948
        %v7093 = vpack.c.b16 %v6957, %v6949
        %v7094 = vpack.c.b16 %v6958, %v6950
        %v7095 = vpack.c.b16 %v6959, %v6951
        %v7096 = vpack.c.b16 %v6960, %v6952
        %v7097 = vpack.c.b16 %v6961, %v6953
        %v7098 = vpack.c.b16 %v6962, %v6954
        %v7099 = vpack.c.b16 %v6971, %v6963
        %v7100 = vpack.c.b16 %v6972, %v6964
        %v7101 = vpack.c.b16 %v6973, %v6965
        %v7102 = vpack.c.b16 %v6974, %v6966
        %v7103 = vpack.c.b16 %v6975, %v6967
        %v7104 = vpack.c.b16 %v6976, %v6968
        %v7105 = vpack.c.b16 %v6977, %v6969
        %v7106 = vpack.c.b16 %v6978, %v6970
        %7235 = vmatprep.subr.bf16.mxu0 %v7036
        %7236 = vmatpush1.bf16.msra.mxu0 %v7035
        %7237 = vmatprep.subr.bf16.mxu0 %v7028
        %7238 = vmatpush1.bf16.msra.mxu0 %v7027
        %7239 = vmatprep.subr.bf16.mxu0 %v7020
        %7240 = vmatpush1.bf16.msra.mxu0 %v7019
        %7241 = vmatprep.subr.bf16.mxu0 %v7012
        %7242 = vmatpush1.bf16.msra.mxu0 %v7011
        %7243 = vmatprep.subr.bf16.mxu0 %v7004
        %7244 = vmatpush1.bf16.msra.mxu0 %v7003
        %7245 = vmatprep.subr.bf16.mxu0 %v6996
        %7246 = vmatpush1.bf16.msra.mxu0 %v6995
        %7247 = vmatprep.subr.bf16.mxu0 %v6988
        %7248 = vmatpush1.bf16.msra.mxu0 %v6987
        %7249 = vmatprep.subr.bf16.mxu0 %v6980
        %7250 = vmatpush1.bf16.msra.mxu0 %v6979
        %7251 = vmatprep.subr.bf16.mxu0 %v7100
        %7252 = vmatpush2.bf16.msra.mxu0 %v7099
        %7253 = vmatprep.subr.bf16.mxu0 %v7092
        %7254 = vmatpush2.bf16.msra.mxu0 %v7091
        %7255 = vmatprep.subr.bf16.mxu0 %v7084
        %7256 = vmatpush2.bf16.msra.mxu0 %v7083
        %7257 = vmatprep.subr.bf16.mxu0 %v7076
        %7258 = vmatpush2.bf16.msra.mxu0 %v7075
        %7259 = vmatprep.subr.bf16.mxu0 %v7068
        %7260 = vmatpush2.bf16.msra.mxu0 %v7067
        %7261 = vmatprep.subr.bf16.mxu0 %v7060
        %7262 = vmatpush2.bf16.msra.mxu0 %v7059
        %7263 = vmatprep.subr.bf16.mxu0 %v7052
        %7264 = vmatpush2.bf16.msra.mxu0 %v7051
        %7265 = vmatprep.subr.bf16.mxu0 %v7044
        %7266 = vmatpush2.bf16.msra.mxu0 %v7043
        %7267 = vmatprep.mubr.bf16.mxu0 %v6424
        %7268 = vmatmul.mubr.bf16.gmra.mxu0 %v6423
        %v7269 = vpop.f32.mrf.mxu0
        %v7270 = vadd.f32 %v6558, %v7269
        %v7271 = vpop.f32.mrf.mxu0
        %v7272 = vadd.f32 %v6562, %v7271
        %v7273 = vpop.f32.mrf.mxu0
        %v7274 = vadd.f32 %v6558, %v7273
        %v7275 = vpop.f32.mrf.mxu0
        %v7276 = vadd.f32 %v6562, %v7275
        %7277 = vdwg.mxu0
        %7278 = vmatprep.subr.bf16.mxu0 %v7038
        %7279 = vmatpush1.bf16.msra.mxu0 %v7037
        %7280 = vmatprep.subr.bf16.mxu0 %v7030
        %7281 = vmatpush1.bf16.msra.mxu0 %v7029
        %7282 = vmatprep.subr.bf16.mxu0 %v7022
        %7283 = vmatpush1.bf16.msra.mxu0 %v7021
        %7284 = vmatprep.subr.bf16.mxu0 %v7014
        %7285 = vmatpush1.bf16.msra.mxu0 %v7013
        %7286 = vmatprep.subr.bf16.mxu0 %v7006
        %7287 = vmatpush1.bf16.msra.mxu0 %v7005
        %7288 = vmatprep.subr.bf16.mxu0 %v6998
        %7289 = vmatpush1.bf16.msra.mxu0 %v6997
        %7290 = vmatprep.subr.bf16.mxu0 %v6990
        %7291 = vmatpush1.bf16.msra.mxu0 %v6989
        %7292 = vmatprep.subr.bf16.mxu0 %v6982
        %7293 = vmatpush1.bf16.msra.mxu0 %v6981
        %7294 = vmatprep.subr.bf16.mxu0 %v7102
        %7295 = vmatpush2.bf16.msra.mxu0 %v7101
        %7296 = vmatprep.subr.bf16.mxu0 %v7094
        %7297 = vmatpush2.bf16.msra.mxu0 %v7093
        %7298 = vmatprep.subr.bf16.mxu0 %v7086
        %7299 = vmatpush2.bf16.msra.mxu0 %v7085
        %7300 = vmatprep.subr.bf16.mxu0 %v7078
        %7301 = vmatpush2.bf16.msra.mxu0 %v7077
        %7302 = vmatprep.subr.bf16.mxu0 %v7070
        %7303 = vmatpush2.bf16.msra.mxu0 %v7069
        %7304 = vmatprep.subr.bf16.mxu0 %v7062
        %7305 = vmatpush2.bf16.msra.mxu0 %v7061
        %7306 = vmatprep.subr.bf16.mxu0 %v7054
        %7307 = vmatpush2.bf16.msra.mxu0 %v7053
        %7308 = vmatprep.subr.bf16.mxu0 %v7046
        %7309 = vmatpush2.bf16.msra.mxu0 %v7045
        %7310 = vmatprep.mubr.bf16.mxu0 %v6424
        %7311 = vmatmul.mubr.bf16.gmra.mxu0 %v6423
        %v7312 = vpop.f32.mrf.mxu0
        %v7313 = vadd.f32 %v6566, %v7312
        %v7314 = vpop.f32.mrf.mxu0
        %v7315 = vadd.f32 %v6570, %v7314
        %v7316 = vpop.f32.mrf.mxu0
        %v7317 = vadd.f32 %v6566, %v7316
        %v7318 = vpop.f32.mrf.mxu0
        %v7319 = vadd.f32 %v6570, %v7318
        %7320 = vdwg.mxu0
        %7321 = vmatprep.subr.bf16.mxu0 %v7040
        %7322 = vmatpush1.bf16.msra.mxu0 %v7039
        %7323 = vmatprep.subr.bf16.mxu0 %v7032
        %7324 = vmatpush1.bf16.msra.mxu0 %v7031
        %7325 = vmatprep.subr.bf16.mxu0 %v7024
        %7326 = vmatpush1.bf16.msra.mxu0 %v7023
        %7327 = vmatprep.subr.bf16.mxu0 %v7016
        %7328 = vmatpush1.bf16.msra.mxu0 %v7015
        %7329 = vmatprep.subr.bf16.mxu0 %v7008
        %7330 = vmatpush1.bf16.msra.mxu0 %v7007
        %7331 = vmatprep.subr.bf16.mxu0 %v7000
        %7332 = vmatpush1.bf16.msra.mxu0 %v6999
        %7333 = vmatprep.subr.bf16.mxu0 %v6992
        %7334 = vmatpush1.bf16.msra.mxu0 %v6991
        %7335 = vmatprep.subr.bf16.mxu0 %v6984
        %7336 = vmatpush1.bf16.msra.mxu0 %v6983
        %7337 = vmatprep.subr.bf16.mxu0 %v7104
        %7338 = vmatpush2.bf16.msra.mxu0 %v7103
        %7339 = vmatprep.subr.bf16.mxu0 %v7096
        %7340 = vmatpush2.bf16.msra.mxu0 %v7095
        %7341 = vmatprep.subr.bf16.mxu0 %v7088
        %7342 = vmatpush2.bf16.msra.mxu0 %v7087
        %7343 = vmatprep.subr.bf16.mxu0 %v7080
        %7344 = vmatpush2.bf16.msra.mxu0 %v7079
        %7345 = vmatprep.subr.bf16.mxu0 %v7072
        %7346 = vmatpush2.bf16.msra.mxu0 %v7071
        %7347 = vmatprep.subr.bf16.mxu0 %v7064
        %7348 = vmatpush2.bf16.msra.mxu0 %v7063
        %7349 = vmatprep.subr.bf16.mxu0 %v7056
        %7350 = vmatpush2.bf16.msra.mxu0 %v7055
        %7351 = vmatprep.subr.bf16.mxu0 %v7048
        %7352 = vmatpush2.bf16.msra.mxu0 %v7047
        %7353 = vmatprep.mubr.bf16.mxu0 %v6424
        %7354 = vmatmul.mubr.bf16.gmra.mxu0 %v6423
        %v7355 = vpop.f32.mrf.mxu0
        %v7356 = vadd.f32 %v6574, %v7355
        %v7357 = vpop.f32.mrf.mxu0
        %v7358 = vadd.f32 %v6578, %v7357
        %v7359 = vpop.f32.mrf.mxu0
        %v7360 = vadd.f32 %v6574, %v7359
        %v7361 = vpop.f32.mrf.mxu0
        %v7362 = vadd.f32 %v6578, %v7361
        %7363 = vdwg.mxu0
        %7364 = vmatprep.subr.bf16.mxu0 %v7042
        %7365 = vmatpush1.bf16.msra.mxu0 %v7041
        %7366 = vmatprep.subr.bf16.mxu0 %v7034
        %7367 = vmatpush1.bf16.msra.mxu0 %v7033
        %7368 = vmatprep.subr.bf16.mxu0 %v7026
        %7369 = vmatpush1.bf16.msra.mxu0 %v7025
        %7370 = vmatprep.subr.bf16.mxu0 %v7018
        %7371 = vmatpush1.bf16.msra.mxu0 %v7017
        %7372 = vmatprep.subr.bf16.mxu0 %v7010
        %7373 = vmatpush1.bf16.msra.mxu0 %v7009
        %7374 = vmatprep.subr.bf16.mxu0 %v7002
        %7375 = vmatpush1.bf16.msra.mxu0 %v7001
        %7376 = vmatprep.subr.bf16.mxu0 %v6994
        %7377 = vmatpush1.bf16.msra.mxu0 %v6993
        %7378 = vmatprep.subr.bf16.mxu0 %v6986
        %7379 = vmatpush1.bf16.msra.mxu0 %v6985
        %7380 = vmatprep.subr.bf16.mxu0 %v7106
        %7381 = vmatpush2.bf16.msra.mxu0 %v7105
        %7382 = vmatprep.subr.bf16.mxu0 %v7098
        %7383 = vmatpush2.bf16.msra.mxu0 %v7097
        %7384 = vmatprep.subr.bf16.mxu0 %v7090
        %7385 = vmatpush2.bf16.msra.mxu0 %v7089
        %7386 = vmatprep.subr.bf16.mxu0 %v7082
        %7387 = vmatpush2.bf16.msra.mxu0 %v7081
        %7388 = vmatprep.subr.bf16.mxu0 %v7074
        %7389 = vmatpush2.bf16.msra.mxu0 %v7073
        %7390 = vmatprep.subr.bf16.mxu0 %v7066
        %7391 = vmatpush2.bf16.msra.mxu0 %v7065
        %7392 = vmatprep.subr.bf16.mxu0 %v7058
        %7393 = vmatpush2.bf16.msra.mxu0 %v7057
        %7394 = vmatprep.subr.bf16.mxu0 %v7050
        %7395 = vmatpush2.bf16.msra.mxu0 %v7049
        %7396 = vmatprep.mubr.bf16.mxu0 %v6424
        %7397 = vmatmul.mubr.bf16.gmra.mxu0 %v6423
        %v7398 = vpop.f32.mrf.mxu0
        %v7399 = vadd.f32 %v6582, %v7398
        %v7400 = vpop.f32.mrf.mxu0
        %v7401 = vadd.f32 %v6586, %v7400
        %v7402 = vpop.f32.mrf.mxu0
        %v7403 = vadd.f32 %v6582, %v7402
        %v7404 = vpop.f32.mrf.mxu0
        %v7405 = vadd.f32 %v6586, %v7404
        %7406 = vdwg.mxu0
        %v7407 = vmax.f32 %v7270, 0.0
        %v7408 = vmax.f32 %v7272, 0.0
        %v7409 = vmax.f32 %v7313, 0.0
        %v7410 = vmax.f32 %v7315, 0.0
        %v7411 = vmax.f32 %v7356, 0.0
        %v7412 = vmax.f32 %v7358, 0.0
        %v7413 = vmax.f32 %v7399, 0.0
        %v7414 = vmax.f32 %v7401, 0.0
        %v7415 = vmax.f32 %v7274, 0.0
        %v7416 = vmax.f32 %v7276, 0.0
        %v7417 = vmax.f32 %v7317, 0.0
        %v7418 = vmax.f32 %v7319, 0.0
        %v7419 = vmax.f32 %v7360, 0.0
        %v7420 = vmax.f32 %v7362, 0.0
        %v7421 = vmax.f32 %v7403, 0.0
        %v7422 = vmax.f32 %v7405, 0.0
        %v7423 = vpack.c.bf16 %v7415, %v7407
        %v7424 = vpack.c.bf16 %v7416, %v7408
        %v7425 = vpack.c.bf16 %v7417, %v7409
        %v7426 = vpack.c.bf16 %v7418, %v7410
        %v7427 = vpack.c.bf16 %v7419, %v7411
        %v7428 = vpack.c.bf16 %v7420, %v7412
        %v7429 = vpack.c.bf16 %v7421, %v7413
        %v7430 = vpack.c.bf16 %v7422, %v7414
        %v7431 = vld [vmem:[#allocation27] sm:$0xff]
        %v7432 = vld [vmem:[#allocation27 + $0x8] sm:$0xff]
        %v7433 = vld [vmem:[#allocation27 + $0x10] sm:$0xff]
        %v7434 = vld [vmem:[#allocation27 + $0x18] sm:$0xff]
        %v7435 = vld [vmem:[#allocation27 + $0x20] sm:$0xff]
        %v7436 = vld [vmem:[#allocation27 + $0x28] sm:$0xff]
        %v7437 = vld [vmem:[#allocation27 + $0x30] sm:$0xff]
        %v7438 = vld [vmem:[#allocation27 + $0x38] sm:$0xff]
        %v7439 = vld [vmem:[#allocation27 + $0x40] sm:$0xff]
        %v7440 = vld [vmem:[#allocation27 + $0x48] sm:$0xff]
        %v7441 = vld [vmem:[#allocation27 + $0x50] sm:$0xff]
        %v7442 = vld [vmem:[#allocation27 + $0x58] sm:$0xff]
        %v7443 = vld [vmem:[#allocation27 + $0x60] sm:$0xff]
        %v7444 = vld [vmem:[#allocation27 + $0x68] sm:$0xff]
        %v7445 = vld [vmem:[#allocation27 + $0x70] sm:$0xff]
        %v7446 = vld [vmem:[#allocation27 + $0x78] sm:$0xff]
        %v7447 = vld [vmem:[#allocation27 + $0x80] sm:$0xff]
        %v7448 = vld [vmem:[#allocation27 + $0x88] sm:$0xff]
        %v7449 = vld [vmem:[#allocation27 + $0x90] sm:$0xff]
        %v7450 = vld [vmem:[#allocation27 + $0x98] sm:$0xff]
        %v7451 = vld [vmem:[#allocation27 + $0xa0] sm:$0xff]
        %v7452 = vld [vmem:[#allocation27 + $0xa8] sm:$0xff]
        %v7453 = vld [vmem:[#allocation27 + $0xb0] sm:$0xff]
        %v7454 = vld [vmem:[#allocation27 + $0xb8] sm:$0xff]
        %v7455 = vld [vmem:[#allocation27 + $0xc0] sm:$0xff]
        %v7456 = vld [vmem:[#allocation27 + $0xc8] sm:$0xff]
        %v7457 = vld [vmem:[#allocation27 + $0xd0] sm:$0xff]
        %v7458 = vld [vmem:[#allocation27 + $0xd8] sm:$0xff]
        %v7459 = vld [vmem:[#allocation27 + $0xe0] sm:$0xff]
        %v7460 = vld [vmem:[#allocation27 + $0xe8] sm:$0xff]
        %v7461 = vld [vmem:[#allocation27 + $0xf0] sm:$0xff]
        %v7462 = vld [vmem:[#allocation27 + $0xf8] sm:$0xff]
        %v7463 = vld [vmem:[#allocation27 + $0x100] sm:$0xff]
        %v7464 = vld [vmem:[#allocation27 + $0x108] sm:$0xff]
        %v7465 = vld [vmem:[#allocation27 + $0x110] sm:$0xff]
        %v7466 = vld [vmem:[#allocation27 + $0x118] sm:$0xff]
        %v7467 = vld [vmem:[#allocation27 + $0x120] sm:$0xff]
        %v7468 = vld [vmem:[#allocation27 + $0x128] sm:$0xff]
        %v7469 = vld [vmem:[#allocation27 + $0x130] sm:$0xff]
        %v7470 = vld [vmem:[#allocation27 + $0x138] sm:$0xff]
        %v7471 = vld [vmem:[#allocation27 + $0x140] sm:$0xff]
        %v7472 = vld [vmem:[#allocation27 + $0x148] sm:$0xff]
        %v7473 = vld [vmem:[#allocation27 + $0x150] sm:$0xff]
        %v7474 = vld [vmem:[#allocation27 + $0x158] sm:$0xff]
        %v7475 = vld [vmem:[#allocation27 + $0x160] sm:$0xff]
        %v7476 = vld [vmem:[#allocation27 + $0x168] sm:$0xff]
        %v7477 = vld [vmem:[#allocation27 + $0x170] sm:$0xff]
        %v7478 = vld [vmem:[#allocation27 + $0x178] sm:$0xff]
        %v7479 = vld [vmem:[#allocation27 + $0x180] sm:$0xff]
        %v7480 = vld [vmem:[#allocation27 + $0x188] sm:$0xff]
        %v7481 = vld [vmem:[#allocation27 + $0x190] sm:$0xff]
        %v7482 = vld [vmem:[#allocation27 + $0x198] sm:$0xff]
        %v7483 = vld [vmem:[#allocation27 + $0x1a0] sm:$0xff]
        %v7484 = vld [vmem:[#allocation27 + $0x1a8] sm:$0xff]
        %v7485 = vld [vmem:[#allocation27 + $0x1b0] sm:$0xff]
        %v7486 = vld [vmem:[#allocation27 + $0x1b8] sm:$0xff]
        %v7487 = vld [vmem:[#allocation27 + $0x1c0] sm:$0xff]
        %v7488 = vld [vmem:[#allocation27 + $0x1c8] sm:$0xff]
        %v7489 = vld [vmem:[#allocation27 + $0x1d0] sm:$0xff]
        %v7490 = vld [vmem:[#allocation27 + $0x1d8] sm:$0xff]
        %v7491 = vld [vmem:[#allocation27 + $0x1e0] sm:$0xff]
        %v7492 = vld [vmem:[#allocation27 + $0x1e8] sm:$0xff]
        %v7493 = vld [vmem:[#allocation27 + $0x1f0] sm:$0xff]
        %v7494 = vld [vmem:[#allocation27 + $0x1f8] sm:$0xff]
        %v7495 = vld [vmem:[#allocation27 + $0x200] sm:$0xff]
        %v7496 = vld [vmem:[#allocation27 + $0x208] sm:$0xff]
        %v7497 = vld [vmem:[#allocation27 + $0x210] sm:$0xff]
        %v7498 = vld [vmem:[#allocation27 + $0x218] sm:$0xff]
        %v7499 = vld [vmem:[#allocation27 + $0x220] sm:$0xff]
        %v7500 = vld [vmem:[#allocation27 + $0x228] sm:$0xff]
        %v7501 = vld [vmem:[#allocation27 + $0x230] sm:$0xff]
        %v7502 = vld [vmem:[#allocation27 + $0x238] sm:$0xff]
        %v7503 = vld [vmem:[#allocation27 + $0x240] sm:$0xff]
        %v7504 = vld [vmem:[#allocation27 + $0x248] sm:$0xff]
        %v7505 = vld [vmem:[#allocation27 + $0x250] sm:$0xff]
        %v7506 = vld [vmem:[#allocation27 + $0x258] sm:$0xff]
        %v7507 = vld [vmem:[#allocation27 + $0x260] sm:$0xff]
        %v7508 = vld [vmem:[#allocation27 + $0x268] sm:$0xff]
        %v7509 = vld [vmem:[#allocation27 + $0x270] sm:$0xff]
        %v7510 = vld [vmem:[#allocation27 + $0x278] sm:$0xff]
        %v7511 = vld [vmem:[#allocation27 + $0x280] sm:$0xff]
        %v7512 = vld [vmem:[#allocation27 + $0x288] sm:$0xff]
        %v7513 = vld [vmem:[#allocation27 + $0x290] sm:$0xff]
        %v7514 = vld [vmem:[#allocation27 + $0x298] sm:$0xff]
        %v7515 = vld [vmem:[#allocation27 + $0x2a0] sm:$0xff]
        %v7516 = vld [vmem:[#allocation27 + $0x2a8] sm:$0xff]
        %v7517 = vld [vmem:[#allocation27 + $0x2b0] sm:$0xff]
        %v7518 = vld [vmem:[#allocation27 + $0x2b8] sm:$0xff]
        %v7519 = vld [vmem:[#allocation27 + $0x2c0] sm:$0xff]
        %v7520 = vld [vmem:[#allocation27 + $0x2c8] sm:$0xff]
        %v7521 = vld [vmem:[#allocation27 + $0x2d0] sm:$0xff]
        %v7522 = vld [vmem:[#allocation27 + $0x2d8] sm:$0xff]
        %v7523 = vld [vmem:[#allocation27 + $0x2e0] sm:$0xff]
        %v7524 = vld [vmem:[#allocation27 + $0x2e8] sm:$0xff]
        %v7525 = vld [vmem:[#allocation27 + $0x2f0] sm:$0xff]
        %v7526 = vld [vmem:[#allocation27 + $0x2f8] sm:$0xff]
        %v7527 = vld [vmem:[#allocation27 + $0x300] sm:$0xff]
        %v7528 = vld [vmem:[#allocation27 + $0x308] sm:$0xff]
        %v7529 = vld [vmem:[#allocation27 + $0x310] sm:$0xff]
        %v7530 = vld [vmem:[#allocation27 + $0x318] sm:$0xff]
        %v7531 = vld [vmem:[#allocation27 + $0x320] sm:$0xff]
        %v7532 = vld [vmem:[#allocation27 + $0x328] sm:$0xff]
        %v7533 = vld [vmem:[#allocation27 + $0x330] sm:$0xff]
        %v7534 = vld [vmem:[#allocation27 + $0x338] sm:$0xff]
        %v7535 = vld [vmem:[#allocation27 + $0x340] sm:$0xff]
        %v7536 = vld [vmem:[#allocation27 + $0x348] sm:$0xff]
        %v7537 = vld [vmem:[#allocation27 + $0x350] sm:$0xff]
        %v7538 = vld [vmem:[#allocation27 + $0x358] sm:$0xff]
        %v7539 = vld [vmem:[#allocation27 + $0x360] sm:$0xff]
        %v7540 = vld [vmem:[#allocation27 + $0x368] sm:$0xff]
        %v7541 = vld [vmem:[#allocation27 + $0x370] sm:$0xff]
        %v7542 = vld [vmem:[#allocation27 + $0x378] sm:$0xff]
        %v7543 = vld [vmem:[#allocation27 + $0x380] sm:$0xff]
        %v7544 = vld [vmem:[#allocation27 + $0x388] sm:$0xff]
        %v7545 = vld [vmem:[#allocation27 + $0x390] sm:$0xff]
        %v7546 = vld [vmem:[#allocation27 + $0x398] sm:$0xff]
        %v7547 = vld [vmem:[#allocation27 + $0x3a0] sm:$0xff]
        %v7548 = vld [vmem:[#allocation27 + $0x3a8] sm:$0xff]
        %v7549 = vld [vmem:[#allocation27 + $0x3b0] sm:$0xff]
        %v7550 = vld [vmem:[#allocation27 + $0x3b8] sm:$0xff]
        %v7551 = vld [vmem:[#allocation27 + $0x3c0] sm:$0xff]
        %v7552 = vld [vmem:[#allocation27 + $0x3c8] sm:$0xff]
        %v7553 = vld [vmem:[#allocation27 + $0x3d0] sm:$0xff]
        %v7554 = vld [vmem:[#allocation27 + $0x3d8] sm:$0xff]
        %v7555 = vld [vmem:[#allocation27 + $0x3e0] sm:$0xff]
        %v7556 = vld [vmem:[#allocation27 + $0x3e8] sm:$0xff]
        %v7557 = vld [vmem:[#allocation27 + $0x3f0] sm:$0xff]
        %v7558 = vld [vmem:[#allocation27 + $0x3f8] sm:$0xff]
        %v7559 = vld [vmem:[%s22] sm:$0x3]
        %v7561 = vlaneseq
        %v7562 = vshrl.u32 %v7561, 7
        %v7563 = vsub.s32 0, %v7562
        %v7564 = vrot.slane %v7559, %v7563
        %v7565 = vlaneseq
        %v7566 = vshrl.u32 %v7565, 7
        %v7567 = vsub.s32 1, %v7566
        %v7568 = vrot.slane %v7559, %v7567
        %v7699 = vunpack.c.l.b16 %v7431
        %v7700 = vunpack.c.h.b16 %v7431
        %v7701 = vunpack.c.l.b16 %v7432
        %v7702 = vunpack.c.h.b16 %v7432
        %v7703 = vunpack.c.l.b16 %v7433
        %v7704 = vunpack.c.h.b16 %v7433
        %v7705 = vunpack.c.l.b16 %v7434
        %v7706 = vunpack.c.h.b16 %v7434
        %v7707 = vunpack.c.l.b16 %v7435
        %v7708 = vunpack.c.h.b16 %v7435
        %v7709 = vunpack.c.l.b16 %v7436
        %v7710 = vunpack.c.h.b16 %v7436
        %v7711 = vunpack.c.l.b16 %v7437
        %v7712 = vunpack.c.h.b16 %v7437
        %v7713 = vunpack.c.l.b16 %v7438
        %v7714 = vunpack.c.h.b16 %v7438
        %v7715 = vunpack.c.l.b16 %v7439
        %v7716 = vunpack.c.h.b16 %v7439
        %v7717 = vunpack.c.l.b16 %v7440
        %v7718 = vunpack.c.h.b16 %v7440
        %v7719 = vunpack.c.l.b16 %v7441
        %v7720 = vunpack.c.h.b16 %v7441
        %v7721 = vunpack.c.l.b16 %v7442
        %v7722 = vunpack.c.h.b16 %v7442
        %v7723 = vunpack.c.l.b16 %v7443
        %v7724 = vunpack.c.h.b16 %v7443
        %v7725 = vunpack.c.l.b16 %v7444
        %v7726 = vunpack.c.h.b16 %v7444
        %v7727 = vunpack.c.l.b16 %v7445
        %v7728 = vunpack.c.h.b16 %v7445
        %v7729 = vunpack.c.l.b16 %v7446
        %v7730 = vunpack.c.h.b16 %v7446
        %v7731 = vunpack.c.l.b16 %v7447
        %v7732 = vunpack.c.h.b16 %v7447
        %v7733 = vunpack.c.l.b16 %v7448
        %v7734 = vunpack.c.h.b16 %v7448
        %v7735 = vunpack.c.l.b16 %v7449
        %v7736 = vunpack.c.h.b16 %v7449
        %v7737 = vunpack.c.l.b16 %v7450
        %v7738 = vunpack.c.h.b16 %v7450
        %v7739 = vunpack.c.l.b16 %v7451
        %v7740 = vunpack.c.h.b16 %v7451
        %v7741 = vunpack.c.l.b16 %v7452
        %v7742 = vunpack.c.h.b16 %v7452
        %v7743 = vunpack.c.l.b16 %v7453
        %v7744 = vunpack.c.h.b16 %v7453
        %v7745 = vunpack.c.l.b16 %v7454
        %v7746 = vunpack.c.h.b16 %v7454
        %v7747 = vunpack.c.l.b16 %v7455
        %v7748 = vunpack.c.h.b16 %v7455
        %v7749 = vunpack.c.l.b16 %v7456
        %v7750 = vunpack.c.h.b16 %v7456
        %v7751 = vunpack.c.l.b16 %v7457
        %v7752 = vunpack.c.h.b16 %v7457
        %v7753 = vunpack.c.l.b16 %v7458
        %v7754 = vunpack.c.h.b16 %v7458
        %v7755 = vunpack.c.l.b16 %v7459
        %v7756 = vunpack.c.h.b16 %v7459
        %v7757 = vunpack.c.l.b16 %v7460
        %v7758 = vunpack.c.h.b16 %v7460
        %v7759 = vunpack.c.l.b16 %v7461
        %v7760 = vunpack.c.h.b16 %v7461
        %v7761 = vunpack.c.l.b16 %v7462
        %v7762 = vunpack.c.h.b16 %v7462
        %v7763 = vunpack.c.l.b16 %v7463
        %v7764 = vunpack.c.h.b16 %v7463
        %v7765 = vunpack.c.l.b16 %v7464
        %v7766 = vunpack.c.h.b16 %v7464
        %v7767 = vunpack.c.l.b16 %v7465
        %v7768 = vunpack.c.h.b16 %v7465
        %v7769 = vunpack.c.l.b16 %v7466
        %v7770 = vunpack.c.h.b16 %v7466
        %v7771 = vunpack.c.l.b16 %v7467
        %v7772 = vunpack.c.h.b16 %v7467
        %v7773 = vunpack.c.l.b16 %v7468
        %v7774 = vunpack.c.h.b16 %v7468
        %v7775 = vunpack.c.l.b16 %v7469
        %v7776 = vunpack.c.h.b16 %v7469
        %v7777 = vunpack.c.l.b16 %v7470
        %v7778 = vunpack.c.h.b16 %v7470
        %v7779 = vunpack.c.l.b16 %v7471
        %v7780 = vunpack.c.h.b16 %v7471
        %v7781 = vunpack.c.l.b16 %v7472
        %v7782 = vunpack.c.h.b16 %v7472
        %v7783 = vunpack.c.l.b16 %v7473
        %v7784 = vunpack.c.h.b16 %v7473
        %v7785 = vunpack.c.l.b16 %v7474
        %v7786 = vunpack.c.h.b16 %v7474
        %v7787 = vunpack.c.l.b16 %v7475
        %v7788 = vunpack.c.h.b16 %v7475
        %v7789 = vunpack.c.l.b16 %v7476
        %v7790 = vunpack.c.h.b16 %v7476
        %v7791 = vunpack.c.l.b16 %v7477
        %v7792 = vunpack.c.h.b16 %v7477
        %v7793 = vunpack.c.l.b16 %v7478
        %v7794 = vunpack.c.h.b16 %v7478
        %v7795 = vunpack.c.l.b16 %v7479
        %v7796 = vunpack.c.h.b16 %v7479
        %v7797 = vunpack.c.l.b16 %v7480
        %v7798 = vunpack.c.h.b16 %v7480
        %v7799 = vunpack.c.l.b16 %v7481
        %v7800 = vunpack.c.h.b16 %v7481
        %v7801 = vunpack.c.l.b16 %v7482
        %v7802 = vunpack.c.h.b16 %v7482
        %v7803 = vunpack.c.l.b16 %v7483
        %v7804 = vunpack.c.h.b16 %v7483
        %v7805 = vunpack.c.l.b16 %v7484
        %v7806 = vunpack.c.h.b16 %v7484
        %v7807 = vunpack.c.l.b16 %v7485
        %v7808 = vunpack.c.h.b16 %v7485
        %v7809 = vunpack.c.l.b16 %v7486
        %v7810 = vunpack.c.h.b16 %v7486
        %v7811 = vunpack.c.l.b16 %v7487
        %v7812 = vunpack.c.h.b16 %v7487
        %v7813 = vunpack.c.l.b16 %v7488
        %v7814 = vunpack.c.h.b16 %v7488
        %v7815 = vunpack.c.l.b16 %v7489
        %v7816 = vunpack.c.h.b16 %v7489
        %v7817 = vunpack.c.l.b16 %v7490
        %v7818 = vunpack.c.h.b16 %v7490
        %v7819 = vunpack.c.l.b16 %v7491
        %v7820 = vunpack.c.h.b16 %v7491
        %v7821 = vunpack.c.l.b16 %v7492
        %v7822 = vunpack.c.h.b16 %v7492
        %v7823 = vunpack.c.l.b16 %v7493
        %v7824 = vunpack.c.h.b16 %v7493
        %v7825 = vunpack.c.l.b16 %v7494
        %v7826 = vunpack.c.h.b16 %v7494
        %v7827 = vunpack.c.l.b16 %v7495
        %v7828 = vunpack.c.h.b16 %v7495
        %v7829 = vunpack.c.l.b16 %v7496
        %v7830 = vunpack.c.h.b16 %v7496
        %v7831 = vunpack.c.l.b16 %v7497
        %v7832 = vunpack.c.h.b16 %v7497
        %v7833 = vunpack.c.l.b16 %v7498
        %v7834 = vunpack.c.h.b16 %v7498
        %v7835 = vunpack.c.l.b16 %v7499
        %v7836 = vunpack.c.h.b16 %v7499
        %v7837 = vunpack.c.l.b16 %v7500
        %v7838 = vunpack.c.h.b16 %v7500
        %v7839 = vunpack.c.l.b16 %v7501
        %v7840 = vunpack.c.h.b16 %v7501
        %v7841 = vunpack.c.l.b16 %v7502
        %v7842 = vunpack.c.h.b16 %v7502
        %v7843 = vunpack.c.l.b16 %v7503
        %v7844 = vunpack.c.h.b16 %v7503
        %v7845 = vunpack.c.l.b16 %v7504
        %v7846 = vunpack.c.h.b16 %v7504
        %v7847 = vunpack.c.l.b16 %v7505
        %v7848 = vunpack.c.h.b16 %v7505
        %v7849 = vunpack.c.l.b16 %v7506
        %v7850 = vunpack.c.h.b16 %v7506
        %v7851 = vunpack.c.l.b16 %v7507
        %v7852 = vunpack.c.h.b16 %v7507
        %v7853 = vunpack.c.l.b16 %v7508
        %v7854 = vunpack.c.h.b16 %v7508
        %v7855 = vunpack.c.l.b16 %v7509
        %v7856 = vunpack.c.h.b16 %v7509
        %v7857 = vunpack.c.l.b16 %v7510
        %v7858 = vunpack.c.h.b16 %v7510
        %v7859 = vunpack.c.l.b16 %v7511
        %v7860 = vunpack.c.h.b16 %v7511
        %v7861 = vunpack.c.l.b16 %v7512
        %v7862 = vunpack.c.h.b16 %v7512
        %v7863 = vunpack.c.l.b16 %v7513
        %v7864 = vunpack.c.h.b16 %v7513
        %v7865 = vunpack.c.l.b16 %v7514
        %v7866 = vunpack.c.h.b16 %v7514
        %v7867 = vunpack.c.l.b16 %v7515
        %v7868 = vunpack.c.h.b16 %v7515
        %v7869 = vunpack.c.l.b16 %v7516
        %v7870 = vunpack.c.h.b16 %v7516
        %v7871 = vunpack.c.l.b16 %v7517
        %v7872 = vunpack.c.h.b16 %v7517
        %v7873 = vunpack.c.l.b16 %v7518
        %v7874 = vunpack.c.h.b16 %v7518
        %v7875 = vunpack.c.l.b16 %v7519
        %v7876 = vunpack.c.h.b16 %v7519
        %v7877 = vunpack.c.l.b16 %v7520
        %v7878 = vunpack.c.h.b16 %v7520
        %v7879 = vunpack.c.l.b16 %v7521
        %v7880 = vunpack.c.h.b16 %v7521
        %v7881 = vunpack.c.l.b16 %v7522
        %v7882 = vunpack.c.h.b16 %v7522
        %v7883 = vunpack.c.l.b16 %v7523
        %v7884 = vunpack.c.h.b16 %v7523
        %v7885 = vunpack.c.l.b16 %v7524
        %v7886 = vunpack.c.h.b16 %v7524
        %v7887 = vunpack.c.l.b16 %v7525
        %v7888 = vunpack.c.h.b16 %v7525
        %v7889 = vunpack.c.l.b16 %v7526
        %v7890 = vunpack.c.h.b16 %v7526
        %v7891 = vunpack.c.l.b16 %v7527
        %v7892 = vunpack.c.h.b16 %v7527
        %v7893 = vunpack.c.l.b16 %v7528
        %v7894 = vunpack.c.h.b16 %v7528
        %v7895 = vunpack.c.l.b16 %v7529
        %v7896 = vunpack.c.h.b16 %v7529
        %v7897 = vunpack.c.l.b16 %v7530
        %v7898 = vunpack.c.h.b16 %v7530
        %v7899 = vunpack.c.l.b16 %v7531
        %v7900 = vunpack.c.h.b16 %v7531
        %v7901 = vunpack.c.l.b16 %v7532
        %v7902 = vunpack.c.h.b16 %v7532
        %v7903 = vunpack.c.l.b16 %v7533
        %v7904 = vunpack.c.h.b16 %v7533
        %v7905 = vunpack.c.l.b16 %v7534
        %v7906 = vunpack.c.h.b16 %v7534
        %v7907 = vunpack.c.l.b16 %v7535
        %v7908 = vunpack.c.h.b16 %v7535
        %v7909 = vunpack.c.l.b16 %v7536
        %v7910 = vunpack.c.h.b16 %v7536
        %v7911 = vunpack.c.l.b16 %v7537
        %v7912 = vunpack.c.h.b16 %v7537
        %v7913 = vunpack.c.l.b16 %v7538
        %v7914 = vunpack.c.h.b16 %v7538
        %v7915 = vunpack.c.l.b16 %v7539
        %v7916 = vunpack.c.h.b16 %v7539
        %v7917 = vunpack.c.l.b16 %v7540
        %v7918 = vunpack.c.h.b16 %v7540
        %v7919 = vunpack.c.l.b16 %v7541
        %v7920 = vunpack.c.h.b16 %v7541
        %v7921 = vunpack.c.l.b16 %v7542
        %v7922 = vunpack.c.h.b16 %v7542
        %v7923 = vunpack.c.l.b16 %v7543
        %v7924 = vunpack.c.h.b16 %v7543
        %v7925 = vunpack.c.l.b16 %v7544
        %v7926 = vunpack.c.h.b16 %v7544
        %v7927 = vunpack.c.l.b16 %v7545
        %v7928 = vunpack.c.h.b16 %v7545
        %v7929 = vunpack.c.l.b16 %v7546
        %v7930 = vunpack.c.h.b16 %v7546
        %v7931 = vunpack.c.l.b16 %v7547
        %v7932 = vunpack.c.h.b16 %v7547
        %v7933 = vunpack.c.l.b16 %v7548
        %v7934 = vunpack.c.h.b16 %v7548
        %v7935 = vunpack.c.l.b16 %v7549
        %v7936 = vunpack.c.h.b16 %v7549
        %v7937 = vunpack.c.l.b16 %v7550
        %v7938 = vunpack.c.h.b16 %v7550
        %v7939 = vunpack.c.l.b16 %v7551
        %v7940 = vunpack.c.h.b16 %v7551
        %v7941 = vunpack.c.l.b16 %v7552
        %v7942 = vunpack.c.h.b16 %v7552
        %v7943 = vunpack.c.l.b16 %v7553
        %v7944 = vunpack.c.h.b16 %v7553
        %v7945 = vunpack.c.l.b16 %v7554
        %v7946 = vunpack.c.h.b16 %v7554
        %v7947 = vunpack.c.l.b16 %v7555
        %v7948 = vunpack.c.h.b16 %v7555
        %v7949 = vunpack.c.l.b16 %v7556
        %v7950 = vunpack.c.h.b16 %v7556
        %v7951 = vunpack.c.l.b16 %v7557
        %v7952 = vunpack.c.h.b16 %v7557
        %v7953 = vunpack.c.l.b16 %v7558
        %v7954 = vunpack.c.h.b16 %v7558
        %v7955 = vpack.c.b16 %v7701, %v7699
        %v7956 = vpack.c.b16 %v7702, %v7700
        %v7957 = vpack.c.b16 %v7705, %v7703
        %v7958 = vpack.c.b16 %v7706, %v7704
        %v7959 = vpack.c.b16 %v7709, %v7707
        %v7960 = vpack.c.b16 %v7710, %v7708
        %v7961 = vpack.c.b16 %v7713, %v7711
        %v7962 = vpack.c.b16 %v7714, %v7712
        %v7963 = vpack.c.b16 %v7717, %v7715
        %v7964 = vpack.c.b16 %v7718, %v7716
        %v7965 = vpack.c.b16 %v7721, %v7719
        %v7966 = vpack.c.b16 %v7722, %v7720
        %v7967 = vpack.c.b16 %v7725, %v7723
        %v7968 = vpack.c.b16 %v7726, %v7724
        %v7969 = vpack.c.b16 %v7729, %v7727
        %v7970 = vpack.c.b16 %v7730, %v7728
        %v7971 = vpack.c.b16 %v7733, %v7731
        %v7972 = vpack.c.b16 %v7734, %v7732
        %v7973 = vpack.c.b16 %v7737, %v7735
        %v7974 = vpack.c.b16 %v7738, %v7736
        %v7975 = vpack.c.b16 %v7741, %v7739
        %v7976 = vpack.c.b16 %v7742, %v7740
        %v7977 = vpack.c.b16 %v7745, %v7743
        %v7978 = vpack.c.b16 %v7746, %v7744
        %v7979 = vpack.c.b16 %v7749, %v7747
        %v7980 = vpack.c.b16 %v7750, %v7748
        %v7981 = vpack.c.b16 %v7753, %v7751
        %v7982 = vpack.c.b16 %v7754, %v7752
        %v7983 = vpack.c.b16 %v7757, %v7755
        %v7984 = vpack.c.b16 %v7758, %v7756
        %v7985 = vpack.c.b16 %v7761, %v7759
        %v7986 = vpack.c.b16 %v7762, %v7760
        %v7987 = vpack.c.b16 %v7765, %v7763
        %v7988 = vpack.c.b16 %v7766, %v7764
        %v7989 = vpack.c.b16 %v7769, %v7767
        %v7990 = vpack.c.b16 %v7770, %v7768
        %v7991 = vpack.c.b16 %v7773, %v7771
        %v7992 = vpack.c.b16 %v7774, %v7772
        %v7993 = vpack.c.b16 %v7777, %v7775
        %v7994 = vpack.c.b16 %v7778, %v7776
        %v7995 = vpack.c.b16 %v7781, %v7779
        %v7996 = vpack.c.b16 %v7782, %v7780
        %v7997 = vpack.c.b16 %v7785, %v7783
        %v7998 = vpack.c.b16 %v7786, %v7784
        %v7999 = vpack.c.b16 %v7789, %v7787
        %v8000 = vpack.c.b16 %v7790, %v7788
        %v8001 = vpack.c.b16 %v7793, %v7791
        %v8002 = vpack.c.b16 %v7794, %v7792
        %v8003 = vpack.c.b16 %v7797, %v7795
        %v8004 = vpack.c.b16 %v7798, %v7796
        %v8005 = vpack.c.b16 %v7801, %v7799
        %v8006 = vpack.c.b16 %v7802, %v7800
        %v8007 = vpack.c.b16 %v7805, %v7803
        %v8008 = vpack.c.b16 %v7806, %v7804
        %v8009 = vpack.c.b16 %v7809, %v7807
        %v8010 = vpack.c.b16 %v7810, %v7808
        %v8011 = vpack.c.b16 %v7813, %v7811
        %v8012 = vpack.c.b16 %v7814, %v7812
        %v8013 = vpack.c.b16 %v7817, %v7815
        %v8014 = vpack.c.b16 %v7818, %v7816
        %v8015 = vpack.c.b16 %v7821, %v7819
        %v8016 = vpack.c.b16 %v7822, %v7820
        %v8017 = vpack.c.b16 %v7825, %v7823
        %v8018 = vpack.c.b16 %v7826, %v7824
        %v8019 = vpack.c.b16 %v7829, %v7827
        %v8020 = vpack.c.b16 %v7830, %v7828
        %v8021 = vpack.c.b16 %v7833, %v7831
        %v8022 = vpack.c.b16 %v7834, %v7832
        %v8023 = vpack.c.b16 %v7837, %v7835
        %v8024 = vpack.c.b16 %v7838, %v7836
        %v8025 = vpack.c.b16 %v7841, %v7839
        %v8026 = vpack.c.b16 %v7842, %v7840
        %v8027 = vpack.c.b16 %v7845, %v7843
        %v8028 = vpack.c.b16 %v7846, %v7844
        %v8029 = vpack.c.b16 %v7849, %v7847
        %v8030 = vpack.c.b16 %v7850, %v7848
        %v8031 = vpack.c.b16 %v7853, %v7851
        %v8032 = vpack.c.b16 %v7854, %v7852
        %v8033 = vpack.c.b16 %v7857, %v7855
        %v8034 = vpack.c.b16 %v7858, %v7856
        %v8035 = vpack.c.b16 %v7861, %v7859
        %v8036 = vpack.c.b16 %v7862, %v7860
        %v8037 = vpack.c.b16 %v7865, %v7863
        %v8038 = vpack.c.b16 %v7866, %v7864
        %v8039 = vpack.c.b16 %v7869, %v7867
        %v8040 = vpack.c.b16 %v7870, %v7868
        %v8041 = vpack.c.b16 %v7873, %v7871
        %v8042 = vpack.c.b16 %v7874, %v7872
        %v8043 = vpack.c.b16 %v7877, %v7875
        %v8044 = vpack.c.b16 %v7878, %v7876
        %v8045 = vpack.c.b16 %v7881, %v7879
        %v8046 = vpack.c.b16 %v7882, %v7880
        %v8047 = vpack.c.b16 %v7885, %v7883
        %v8048 = vpack.c.b16 %v7886, %v7884
        %v8049 = vpack.c.b16 %v7889, %v7887
        %v8050 = vpack.c.b16 %v7890, %v7888
        %v8051 = vpack.c.b16 %v7893, %v7891
        %v8052 = vpack.c.b16 %v7894, %v7892
        %v8053 = vpack.c.b16 %v7897, %v7895
        %v8054 = vpack.c.b16 %v7898, %v7896
        %v8055 = vpack.c.b16 %v7901, %v7899
        %v8056 = vpack.c.b16 %v7902, %v7900
        %v8057 = vpack.c.b16 %v7905, %v7903
        %v8058 = vpack.c.b16 %v7906, %v7904
        %v8059 = vpack.c.b16 %v7909, %v7907
        %v8060 = vpack.c.b16 %v7910, %v7908
        %v8061 = vpack.c.b16 %v7913, %v7911
        %v8062 = vpack.c.b16 %v7914, %v7912
        %v8063 = vpack.c.b16 %v7917, %v7915
        %v8064 = vpack.c.b16 %v7918, %v7916
        %v8065 = vpack.c.b16 %v7921, %v7919
        %v8066 = vpack.c.b16 %v7922, %v7920
        %v8067 = vpack.c.b16 %v7925, %v7923
        %v8068 = vpack.c.b16 %v7926, %v7924
        %v8069 = vpack.c.b16 %v7929, %v7927
        %v8070 = vpack.c.b16 %v7930, %v7928
        %v8071 = vpack.c.b16 %v7933, %v7931
        %v8072 = vpack.c.b16 %v7934, %v7932
        %v8073 = vpack.c.b16 %v7937, %v7935
        %v8074 = vpack.c.b16 %v7938, %v7936
        %v8075 = vpack.c.b16 %v7941, %v7939
        %v8076 = vpack.c.b16 %v7942, %v7940
        %v8077 = vpack.c.b16 %v7945, %v7943
        %v8078 = vpack.c.b16 %v7946, %v7944
        %v8079 = vpack.c.b16 %v7949, %v7947
        %v8080 = vpack.c.b16 %v7950, %v7948
        %v8081 = vpack.c.b16 %v7953, %v7951
        %v8082 = vpack.c.b16 %v7954, %v7952
        %8211 = vmatprep.subr.bf16.mxu0 %v7970
        %8212 = vmatpush1.bf16.msra.mxu0 %v7969
        %8213 = vmatprep.subr.bf16.mxu0 %v7968
        %8214 = vmatpush1.bf16.msra.mxu0 %v7967
        %8215 = vmatprep.subr.bf16.mxu0 %v7966
        %8216 = vmatpush1.bf16.msra.mxu0 %v7965
        %8217 = vmatprep.subr.bf16.mxu0 %v7964
        %8218 = vmatpush1.bf16.msra.mxu0 %v7963
        %8219 = vmatprep.subr.bf16.mxu0 %v7962
        %8220 = vmatpush1.bf16.msra.mxu0 %v7961
        %8221 = vmatprep.subr.bf16.mxu0 %v7960
        %8222 = vmatpush1.bf16.msra.mxu0 %v7959
        %8223 = vmatprep.subr.bf16.mxu0 %v7958
        %8224 = vmatpush1.bf16.msra.mxu0 %v7957
        %8225 = vmatprep.subr.bf16.mxu0 %v7956
        %8226 = vmatpush1.bf16.msra.mxu0 %v7955
        %8227 = vmatprep.subr.bf16.mxu0 %v7986
        %8228 = vmatpush2.bf16.msra.mxu0 %v7985
        %8229 = vmatprep.subr.bf16.mxu0 %v7984
        %8230 = vmatpush2.bf16.msra.mxu0 %v7983
        %8231 = vmatprep.subr.bf16.mxu0 %v7982
        %8232 = vmatpush2.bf16.msra.mxu0 %v7981
        %8233 = vmatprep.subr.bf16.mxu0 %v7980
        %8234 = vmatpush2.bf16.msra.mxu0 %v7979
        %8235 = vmatprep.subr.bf16.mxu0 %v7978
        %8236 = vmatpush2.bf16.msra.mxu0 %v7977
        %8237 = vmatprep.subr.bf16.mxu0 %v7976
        %8238 = vmatpush2.bf16.msra.mxu0 %v7975
        %8239 = vmatprep.subr.bf16.mxu0 %v7974
        %8240 = vmatpush2.bf16.msra.mxu0 %v7973
        %8241 = vmatprep.subr.bf16.mxu0 %v7972
        %8242 = vmatpush2.bf16.msra.mxu0 %v7971
        %8243 = vmatprep.mubr.bf16.mxu0 %v7424
        %8244 = vmatmul.mubr.bf16.gmra.mxu0 %v7423
        %v8245 = vpop.f32.mrf.mxu0
        %v8246 = vadd.f32 %v7564, %v8245
        %v8247 = vpop.f32.mrf.mxu0
        %v8248 = vadd.f32 %v7568, %v8247
        %v8249 = vpop.f32.mrf.mxu0
        %v8250 = vadd.f32 %v7564, %v8249
        %v8251 = vpop.f32.mrf.mxu0
        %v8252 = vadd.f32 %v7568, %v8251
        %8253 = vdwg.mxu0
        %8254 = vmatprep.subr.bf16.mxu0 %v8002
        %8255 = vmatpush1.bf16.msra.mxu0 %v8001
        %8256 = vmatprep.subr.bf16.mxu0 %v8000
        %8257 = vmatpush1.bf16.msra.mxu0 %v7999
        %8258 = vmatprep.subr.bf16.mxu0 %v7998
        %8259 = vmatpush1.bf16.msra.mxu0 %v7997
        %8260 = vmatprep.subr.bf16.mxu0 %v7996
        %8261 = vmatpush1.bf16.msra.mxu0 %v7995
        %8262 = vmatprep.subr.bf16.mxu0 %v7994
        %8263 = vmatpush1.bf16.msra.mxu0 %v7993
        %8264 = vmatprep.subr.bf16.mxu0 %v7992
        %8265 = vmatpush1.bf16.msra.mxu0 %v7991
        %8266 = vmatprep.subr.bf16.mxu0 %v7990
        %8267 = vmatpush1.bf16.msra.mxu0 %v7989
        %8268 = vmatprep.subr.bf16.mxu0 %v7988
        %8269 = vmatpush1.bf16.msra.mxu0 %v7987
        %8270 = vmatprep.subr.bf16.mxu0 %v8018
        %8271 = vmatpush2.bf16.msra.mxu0 %v8017
        %8272 = vmatprep.subr.bf16.mxu0 %v8016
        %8273 = vmatpush2.bf16.msra.mxu0 %v8015
        %8274 = vmatprep.subr.bf16.mxu0 %v8014
        %8275 = vmatpush2.bf16.msra.mxu0 %v8013
        %8276 = vmatprep.subr.bf16.mxu0 %v8012
        %8277 = vmatpush2.bf16.msra.mxu0 %v8011
        %8278 = vmatprep.subr.bf16.mxu0 %v8010
        %8279 = vmatpush2.bf16.msra.mxu0 %v8009
        %8280 = vmatprep.subr.bf16.mxu0 %v8008
        %8281 = vmatpush2.bf16.msra.mxu0 %v8007
        %8282 = vmatprep.subr.bf16.mxu0 %v8006
        %8283 = vmatpush2.bf16.msra.mxu0 %v8005
        %8284 = vmatprep.subr.bf16.mxu0 %v8004
        %8285 = vmatpush2.bf16.msra.mxu0 %v8003
        %8286 = vmatprep.mubr.bf16.mxu0 %v7426
        %8287 = vmatmul.mubr.bf16.gmra.mxu0 %v7425
        %v8288 = vpop.f32.mrf.mxu0
        %v8289 = vadd.f32 %v8246, %v8288
        %v8290 = vpop.f32.mrf.mxu0
        %v8291 = vadd.f32 %v8248, %v8290
        %v8292 = vpop.f32.mrf.mxu0
        %v8293 = vadd.f32 %v8250, %v8292
        %v8294 = vpop.f32.mrf.mxu0
        %v8295 = vadd.f32 %v8252, %v8294
        %8296 = vdwg.mxu0
        %8297 = vmatprep.subr.bf16.mxu0 %v8034
        %8298 = vmatpush1.bf16.msra.mxu0 %v8033
        %8299 = vmatprep.subr.bf16.mxu0 %v8032
        %8300 = vmatpush1.bf16.msra.mxu0 %v8031
        %8301 = vmatprep.subr.bf16.mxu0 %v8030
        %8302 = vmatpush1.bf16.msra.mxu0 %v8029
        %8303 = vmatprep.subr.bf16.mxu0 %v8028
        %8304 = vmatpush1.bf16.msra.mxu0 %v8027
        %8305 = vmatprep.subr.bf16.mxu0 %v8026
        %8306 = vmatpush1.bf16.msra.mxu0 %v8025
        %8307 = vmatprep.subr.bf16.mxu0 %v8024
        %8308 = vmatpush1.bf16.msra.mxu0 %v8023
        %8309 = vmatprep.subr.bf16.mxu0 %v8022
        %8310 = vmatpush1.bf16.msra.mxu0 %v8021
        %8311 = vmatprep.subr.bf16.mxu0 %v8020
        %8312 = vmatpush1.bf16.msra.mxu0 %v8019
        %8313 = vmatprep.subr.bf16.mxu0 %v8050
        %8314 = vmatpush2.bf16.msra.mxu0 %v8049
        %8315 = vmatprep.subr.bf16.mxu0 %v8048
        %8316 = vmatpush2.bf16.msra.mxu0 %v8047
        %8317 = vmatprep.subr.bf16.mxu0 %v8046
        %8318 = vmatpush2.bf16.msra.mxu0 %v8045
        %8319 = vmatprep.subr.bf16.mxu0 %v8044
        %8320 = vmatpush2.bf16.msra.mxu0 %v8043
        %8321 = vmatprep.subr.bf16.mxu0 %v8042
        %8322 = vmatpush2.bf16.msra.mxu0 %v8041
        %8323 = vmatprep.subr.bf16.mxu0 %v8040
        %8324 = vmatpush2.bf16.msra.mxu0 %v8039
        %8325 = vmatprep.subr.bf16.mxu0 %v8038
        %8326 = vmatpush2.bf16.msra.mxu0 %v8037
        %8327 = vmatprep.subr.bf16.mxu0 %v8036
        %8328 = vmatpush2.bf16.msra.mxu0 %v8035
        %8329 = vmatprep.mubr.bf16.mxu0 %v7428
        %8330 = vmatmul.mubr.bf16.gmra.mxu0 %v7427
        %v8331 = vpop.f32.mrf.mxu0
        %v8332 = vadd.f32 %v8289, %v8331
        %v8333 = vpop.f32.mrf.mxu0
        %v8334 = vadd.f32 %v8291, %v8333
        %v8335 = vpop.f32.mrf.mxu0
        %v8336 = vadd.f32 %v8293, %v8335
        %v8337 = vpop.f32.mrf.mxu0
        %v8338 = vadd.f32 %v8295, %v8337
        %8339 = vdwg.mxu0
        %8340 = vmatprep.subr.bf16.mxu0 %v8066
        %8341 = vmatpush1.bf16.msra.mxu0 %v8065
        %8342 = vmatprep.subr.bf16.mxu0 %v8064
        %8343 = vmatpush1.bf16.msra.mxu0 %v8063
        %8344 = vmatprep.subr.bf16.mxu0 %v8062
        %8345 = vmatpush1.bf16.msra.mxu0 %v8061
        %8346 = vmatprep.subr.bf16.mxu0 %v8060
        %8347 = vmatpush1.bf16.msra.mxu0 %v8059
        %8348 = vmatprep.subr.bf16.mxu0 %v8058
        %8349 = vmatpush1.bf16.msra.mxu0 %v8057
        %8350 = vmatprep.subr.bf16.mxu0 %v8056
        %8351 = vmatpush1.bf16.msra.mxu0 %v8055
        %8352 = vmatprep.subr.bf16.mxu0 %v8054
        %8353 = vmatpush1.bf16.msra.mxu0 %v8053
        %8354 = vmatprep.subr.bf16.mxu0 %v8052
        %8355 = vmatpush1.bf16.msra.mxu0 %v8051
        %8356 = vmatprep.subr.bf16.mxu0 %v8082
        %8357 = vmatpush2.bf16.msra.mxu0 %v8081
        %8358 = vmatprep.subr.bf16.mxu0 %v8080
        %8359 = vmatpush2.bf16.msra.mxu0 %v8079
        %8360 = vmatprep.subr.bf16.mxu0 %v8078
        %8361 = vmatpush2.bf16.msra.mxu0 %v8077
        %8362 = vmatprep.subr.bf16.mxu0 %v8076
        %8363 = vmatpush2.bf16.msra.mxu0 %v8075
        %8364 = vmatprep.subr.bf16.mxu0 %v8074
        %8365 = vmatpush2.bf16.msra.mxu0 %v8073
        %8366 = vmatprep.subr.bf16.mxu0 %v8072
        %8367 = vmatpush2.bf16.msra.mxu0 %v8071
        %8368 = vmatprep.subr.bf16.mxu0 %v8070
        %8369 = vmatpush2.bf16.msra.mxu0 %v8069
        %8370 = vmatprep.subr.bf16.mxu0 %v8068
        %8371 = vmatpush2.bf16.msra.mxu0 %v8067
        %8372 = vmatprep.mubr.bf16.mxu0 %v7430
        %8373 = vmatmul.mubr.bf16.gmra.mxu0 %v7429
        %v8374 = vpop.f32.mrf.mxu0
        %v8375 = vadd.f32 %v8332, %v8374
        %v8376 = vpop.f32.mrf.mxu0
        %v8377 = vadd.f32 %v8334, %v8376
        %v8378 = vpop.f32.mrf.mxu0
        %v8379 = vadd.f32 %v8336, %v8378
        %v8380 = vpop.f32.mrf.mxu0
        %v8381 = vadd.f32 %v8338, %v8380
        %8382 = vdwg.mxu0
        %v8383 = vadd.f32 %v6419, %v8375
        %v8384 = vadd.f32 %v6420, %v8377
        %v8385 = vadd.f32 %v6421, %v8379
        %v8386 = vadd.f32 %v6422, %v8381
        %v8387 = vld [vmem:[%s23] sm:$0x3]
        %v8388 = vld [vmem:[%s24] sm:$0x3]
        %v8389 = vadd.f32 %v8383, %v8384
        %8390 = vadd.xlane.f32.xlu0 %v8389
        %v8391 = vpop.xlane.xlu0 %8390
        %v8392 = vadd.f32 %v8385, %v8386
        %8393 = vadd.xlane.f32.xlu0 %v8392
        %v8394 = vpop.xlane.xlu0 %8393
        %v8395 = vmul.f32 %v8391, %v5231
        %v8396 = vmul.f32 %v8394, %v5231
        %v8397 = vsub.f32 %v8383, %v8395
        %v8398 = vsub.f32 %v8384, %v8395
        %v8399 = vsub.f32 %v8385, %v8396
        %v8400 = vsub.f32 %v8386, %v8396
        %v8401 = vmul.f32 %v8397, %v8397
        %v8402 = vmul.f32 %v8398, %v8398
        %v8403 = vmul.f32 %v8399, %v8399
        %v8404 = vmul.f32 %v8400, %v8400
        %v8405 = vadd.f32 %v8401, %v8402
        %8406 = vadd.xlane.f32.xlu0 %v8405
        %v8407 = vpop.xlane.xlu0 %8406
        %v8408 = vadd.f32 %v8403, %v8404
        %8409 = vadd.xlane.f32.xlu0 %v8408
        %v8410 = vpop.xlane.xlu0 %8409
        %v8411 = vmul.f32 %v8407, %v5231
        %v8412 = vmul.f32 %v8410, %v5231
        %v8413 = vadd.f32 %v8411, 1e-12
        %v8414 = vadd.f32 %v8412, 1e-12
        %v8415 = vrsqrt.pop %v8413
        %v8416 = vrsqrt.pop %v8414
        %v8417 = vmul.f32 %v8397, %v8415
        %v8418 = vmul.f32 %v8398, %v8415
        %v8419 = vmul.f32 %v8399, %v8416
        %v8420 = vmul.f32 %v8400, %v8416
        %v8422 = vlaneseq
        %v8423 = vshrl.u32 %v8422, 7
        %v8424 = vsub.s32 0, %v8423
        %v8425 = vrot.slane %v8387, %v8424
        %v8426 = vlaneseq
        %v8427 = vshrl.u32 %v8426, 7
        %v8428 = vsub.s32 1, %v8427
        %v8429 = vrot.slane %v8387, %v8428
        %v8432 = vmul.f32 %v8417, %v8425
        %v8433 = vmul.f32 %v8418, %v8429
        %v8434 = vmul.f32 %v8419, %v8425
        %v8435 = vmul.f32 %v8420, %v8429
        %v8437 = vlaneseq
        %v8438 = vshrl.u32 %v8437, 7
        %v8439 = vsub.s32 0, %v8438
        %v8440 = vrot.slane %v8388, %v8439
        %v8441 = vlaneseq
        %v8442 = vshrl.u32 %v8441, 7
        %v8443 = vsub.s32 1, %v8442
        %v8444 = vrot.slane %v8388, %v8443
        %v8447 = vadd.f32 %v8432, %v8440
        %v8448 = vadd.f32 %v8433, %v8444
        %v8449 = vadd.f32 %v8434, %v8440
        %v8450 = vadd.f32 %v8435, %v8444
        %8451 = vst [vmem:[%s1032] sm:$0xff] %v8447
        %8452 = vst [vmem:[%s1032 + $0x8] sm:$0xff] %v8448
        %8453 = vst [vmem:[%s1032 + $0x10] sm:$0xff] %v8449
        %8454 = vst [vmem:[%s1032 + $0x18] sm:$0xff] %v8450
        %s8455 = sand.u32 %s615, 1
        %s8456 = scalar_lea.sflag [#allocation8], %s8455
        %s8457 = sand.u32 %s615, 1
        %s8458 = smul.addr %s8457, 32
        %s8459 = scalar_lea.vmem [#allocation29], %s8458
        // Predicated region
        $region181: #{tpu_custom_call.1} parent=119 // pred_check
          %p8460 = pneg %p625
        $region182: #{tpu_custom_call.1} parent=119 // pred_check_branch
          %8462 = sbr.rel (%p8460) target = $region184
        $region183: #{tpu_custom_call.1} parent=119 // pred_region
          %s8463 = smul.u32 2, %s56
          %s8465 = ssub.s32 512, 512
          %8466 = vsyncadd %s8456, %s8465
          %s8467 = smul.addr %s8463, 2
          %s8468 = smul.addr %s55, 8
          %s8469 = sadd.s32 %s8467, %s8468
          %s8470 = smul.addr %s8469, 128
          %s8471 = scalar_lea.hbm %s25, %s8470
          %s8472 = sshll.u32 %s8459, 4
          %s8473 = int_to_ptr.vmem [resolvable:$true] %s8472
          %8478 = dma.vmem_to_hbm [thread:$0]  %s8473, 512, %s8471, %s8456, 256, 256, 16
        $region184: #{tpu_custom_call.1} parent=119 // pred_fallthru
          _
      $region120: #{tpu_custom_call.1} parent=5 // pred_fallthru
        _
      %p8479 = scmp.le.s32.totalorder 2, %s46
      // Predicated region
      $region185: #{tpu_custom_call.1} parent=5 // pred_check
        %p8480 = pneg %p8479
      $region186: #{tpu_custom_call.1} parent=5 // pred_check_branch
        %8482 = sbr.rel (%p8480) target = $region188
      $region187: #{tpu_custom_call.1} parent=5 // pred_region
        %s8483 = ssub.s32 %s46, 2
        // Predicated region
        $region189: #{tpu_custom_call.1} parent=187 // pred_check
          %p8484 = pneg %p631
        $region190: #{tpu_custom_call.1} parent=187 // pred_check_branch
          %8486 = sbr.rel (%p8484) target = $region192
        $region191: #{tpu_custom_call.1} parent=187 // pred_region
          %s8487 = sand.u32 %s616, 1
          %s8488 = scalar_lea.sflag [#allocation8], %s8487
          %s8489 = sand.u32 %s616, 1
          %s8490 = smul.addr %s8489, 32
          %s8491 = scalar_lea.vmem [#allocation29], %s8490
          %8492 = dma.done %s8488, 512
        $region192: #{tpu_custom_call.1} parent=187 // pred_fallthru
          _
      $region188: #{tpu_custom_call.1} parent=5 // pred_fallthru
        _
    $region6: #{tpu_custom_call.1} parent=1 // loop_footer
      %s50 = sadd.s32 1, %s46
    $region7: #{tpu_custom_call.1} parent=1 // loop_footer_branch
      %45 = sbr.rel target = $region3
    $region8: #{tpu_custom_call.1} parent=1 // loop_exit
      _
    %8493 = vsyncpa [#allocation7], 1
    %s8494 = scalar_lea.sflag [#allocation7], 1
    %8495 = vsyncpa %s8494, 1
    %8496 = vsyncpa [#allocation10], 1
    %s8497 = scalar_lea.sflag [#allocation10], 1
    %8498 = vsyncpa %s8497, 1
    %8499 = vsyncpa [#allocation13], 1
    %8500 = vsyncpa [#allocation16], 1
    %8501 = vsyncpa [#allocation19], 1
    %8502 = vsyncpa [#allocation22], 1
    %8503 = vsyncpa [#allocation25], 1
    %8504 = vsyncpa [#allocation28], 1
    %8505 = vsyncpa [#allocation8], 1
    %s8506 = scalar_lea.sflag [#allocation8], 1
    %8507 = vsyncpa %s8506, 1

</llo_original>
